<compile_context>
chip_gen: v7x
topology: tpu7x:2x2x1
jax: 0.10.0
libtpu: 0.0.40
codegen_flags: <defaults>
</compile_context>

<pallas_src>
import jax
import jax.numpy as jnp
import numpy as np
from jax import lax
from jax.experimental import pallas as pl
from jax.experimental.pallas import tpu as pltpu

EPS = 1e-3


# ----------------------------- Pallas kernels ------------------------------

def conv3x3_s2_kernel(xs_ref, w_ref, s_ref, b_ref, o_ref):
    """3x3 / stride-2 / pad-1 conv + folded-BN + ReLU for one image.

    xs_ref: (1, 4, Hq, Wq, C) bf16  space-to-depth input, parity k = 2*(r%2)+(c%2)
    w_ref : (9, C, Cout)      bf16  per-tap weights (tap t = 3*i + j)
    s_ref, b_ref: (1, Cout)   f32   folded BN scale / shift
    o_ref : (1, Ho, Wo, Cout)
    """
    hq, wq, c = xs_ref.shape[2], xs_ref.shape[3], xs_ref.shape[4]
    ho, wo = hq - 1, wq - 1
    cout = w_ref.shape[2]
    acc = jnp.zeros((ho * wo, cout), jnp.float32)
    for t in range(9):                      # static unroll -> 9 MXU dots
        i, j = t // 3, t % 3
        qi, ri = i // 2, i % 2
        qj, rj = j // 2, j % 2
        xt = xs_ref[0, 2 * ri + rj, qi:qi + ho, qj:qj + wo, :]
        acc = acc + jnp.dot(xt.reshape(ho * wo, c), w_ref[t],
                            preferred_element_type=jnp.float32)
    y = jnp.maximum(acc * s_ref[...] + b_ref[...], 0.0)
    o_ref[...] = y.reshape(1, ho, wo, cout).astype(o_ref.dtype)


def dbl12_kernel(x_ref, w1_ref, s1_ref, b1_ref, w2_ref, s2_ref, b2_ref,
                 o_ref, y1p_ref):
    """Fused branch3x3dbl_1 (1x1) + branch3x3dbl_2 (3x3, pad 1) for one image.

    The zero-padded 64-channel intermediate lives only in VMEM scratch.
    """
    _, h, w, cin = x_ref.shape
    cmid = w1_ref.shape[1]
    cout = w2_ref.shape[2]
    # 1x1 conv + BN + ReLU (branch3x3dbl_1)
    a1 = jnp.dot(x_ref[...].reshape(h * w, cin), w1_ref[...],
                 preferred_element_type=jnp.float32)
    y1 = jnp.maximum(a1 * s1_ref[...] + b1_ref[...], 0.0)
    # zero-pad (pad=1) intermediate in VMEM
    y1p_ref[...] = jnp.zeros_like(y1p_ref)
    y1p_ref[1:h + 1, 1:w + 1, :] = y1.reshape(h, w, cmid).astype(y1p_ref.dtype)
    # 3x3 / stride-1 conv (branch3x3dbl_2) as 9-tap accumulation
    acc = jnp.zeros((h * w, cout), jnp.float32)
    for t in range(9):
        i, j = t // 3, t % 3
        xt = y1p_ref[i:i + h, j:j + w, :]
        acc = acc + jnp.dot(xt.reshape(h * w, cmid), w2_ref[t],
                            preferred_element_type=jnp.float32)
    y2 = jnp.maximum(acc * s2_ref[...] + b2_ref[...], 0.0)
    o_ref[...] = y2.reshape(1, h, w, cout).astype(o_ref.dtype)


def maxpool3x3_s2_kernel(xs_ref, o_ref):
    """3x3 / stride-2 / pad-1 max-pool for one image (space-to-depth input)."""
    hq, wq = xs_ref.shape[2], xs_ref.shape[3]
    ho, wo = hq - 1, wq - 1
    acc = None
    for t in range(9):
        i, j = t // 3, t % 3
        qi, ri = i // 2, i % 2
        qj, rj = j // 2, j % 2
        xt = xs_ref[0, 2 * ri + rj, qi:qi + ho, qj:qj + wo, :]
        acc = xt if acc is None else jnp.maximum(acc, xt)
    o_ref[...] = acc[None].astype(o_ref.dtype)


# ------------------------------- glue (JAX) --------------------------------

def _pad_axis(a, axis, target):
    extra = target - a.shape[axis]
    if extra <= 0:
        return a
    widths = [(0, 0)] * a.ndim
    widths[axis] = (0, extra)
    return jnp.pad(a, widths)


def _bn_scale_shift(p, cout_pad=None):
    scale = (p["gamma"] / jnp.sqrt(p["var"] + EPS)).astype(jnp.float32)
    shift = (p["beta"] - p["mean"] * scale).astype(jnp.float32)
    cp = scale.shape[0] if cout_pad is None else cout_pad
    return (_pad_axis(scale, 0, cp).reshape(1, cp),
            _pad_axis(shift, 0, cp).reshape(1, cp))


def _space_to_depth_s2(x, pad_val):
    """(N,H,W,C) -> (N,4,Ho+1,Wo+1,C) parity view of the pad-1 input.

    Element [n, 2*a+b, hh, ww, c] == padded_x[n, 2*hh+a, 2*ww+b, c], so every
    tap (i,j) of a 3x3/stride-2 window is the contiguous slice
    [i//2 : i//2+Ho, j//2 : j//2+Wo] of parity plane 2*(i%2)+(j%2).
    One pad + transpose in XLA (~1x input traffic) replaces the 9x im2col.
    """
    n, h, w, c = x.shape
    ho = (h - 1) // 2 + 1
    wo = (w - 1) // 2 + 1
    hq, wq = ho + 1, wo + 1
    xp = jnp.pad(x, ((0, 0), (1, 2 * hq - h - 1), (1, 2 * wq - w - 1), (0, 0)),
                 constant_values=pad_val)
    xs = xp.reshape(n, hq, 2, wq, 2, c).transpose(0, 2, 4, 1, 3, 5)
    return xs.reshape(n, 4, hq, wq, c), ho, wo


def conv3x3_s2_bn_relu(x, p, *, cin_pad=None, cout_pad=None,
                       out_dtype=jnp.float32):
    """BasicConv2d with kernel 3x3, stride 2, padding 1 (eval-mode BN folded)."""
    n, h, _, c = x.shape
    w = p["w"]
    if cin_pad is not None:
        w = _pad_axis(w, 2, cin_pad)
    cout = w.shape[3]
    cp = cout if cout_pad is None else cout_pad
    w = _pad_axis(w, 3, cp)
    cin = w.shape[2]
    assert cin == c, (cin, c)
    w9 = w.reshape(9, cin, cp).astype(jnp.bfloat16)
    scale, shift = _bn_scale_shift(p, cp)

    xs, ho, wo = _space_to_depth_s2(x.astype(jnp.bfloat16), 0.0)
    hq, wq = ho + 1, wo + 1

    flops = 2 * n * ho * wo * 9 * cin * cp
    bytes_accessed = (xs.size * 2 + w9.size * 2 + (scale.size + shift.size) * 4
                      + n * ho * wo * cp * jnp.dtype(out_dtype).itemsize)

    return pl.pallas_call(
        conv3x3_s2_kernel,
        out_shape=jax.ShapeDtypeStruct((n, ho, wo, cp), out_dtype),
        grid_spec=pltpu.PrefetchScalarGridSpec(
            num_scalar_prefetch=0,
            grid=(n,),
            in_specs=[
                pl.BlockSpec((1, 4, hq, wq, cin), lambda i: (i, 0, 0, 0, 0)),
                pl.BlockSpec((9, cin, cp), lambda i: (0, 0, 0)),
                pl.BlockSpec((1, cp), lambda i: (0, 0)),
                pl.BlockSpec((1, cp), lambda i: (0, 0)),
            ],
            out_specs=pl.BlockSpec((1, ho, wo, cp), lambda i: (i, 0, 0, 0)),
        ),
        compiler_params=pltpu.CompilerParams(
            dimension_semantics=("parallel",)),
        cost_estimate=pl.CostEstimate(flops=flops, transcendentals=0,
                                      bytes_accessed=bytes_accessed),
    )(xs, w9, scale, shift)


def dbl12_fused(x, p1, p2, *, cout_pad=128):
    """branch3x3dbl_1 (1x1) fused with branch3x3dbl_2 (3x3, pad 1); bf16 out."""
    n, h, w, c = x.shape
    cmid = p1["w"].shape[3]
    cp2 = max(cout_pad, p2["w"].shape[3])
    xb = x.astype(jnp.bfloat16)
    w1 = p1["w"].reshape(c, cmid).astype(jnp.bfloat16)
    s1, b1 = _bn_scale_shift(p1)
    w2 = _pad_axis(p2["w"], 3, cp2).reshape(9, cmid, cp2).astype(jnp.bfloat16)
    s2, b2 = _bn_scale_shift(p2, cp2)

    flops = 2 * n * h * w * (c * cmid + 9 * cmid * cp2)
    bytes_accessed = (xb.size * 2 + w1.size * 2 + w2.size * 2
                      + n * h * w * cp2 * 2)

    return pl.pallas_call(
        dbl12_kernel,
        out_shape=jax.ShapeDtypeStruct((n, h, w, cp2), jnp.bfloat16),
        grid_spec=pltpu.PrefetchScalarGridSpec(
            num_scalar_prefetch=0,
            grid=(n,),
            in_specs=[
                pl.BlockSpec((1, h, w, c), lambda i: (i, 0, 0, 0)),
                pl.BlockSpec((c, cmid), lambda i: (0, 0)),
                pl.BlockSpec((1, cmid), lambda i: (0, 0)),
                pl.BlockSpec((1, cmid), lambda i: (0, 0)),
                pl.BlockSpec((9, cmid, cp2), lambda i: (0, 0, 0)),
                pl.BlockSpec((1, cp2), lambda i: (0, 0)),
                pl.BlockSpec((1, cp2), lambda i: (0, 0)),
            ],
            out_specs=pl.BlockSpec((1, h, w, cp2), lambda i: (i, 0, 0, 0)),
            scratch_shapes=[pltpu.VMEM((h + 2, w + 2, cmid), jnp.bfloat16)],
        ),
        compiler_params=pltpu.CompilerParams(
            dimension_semantics=("parallel",)),
        cost_estimate=pl.CostEstimate(flops=flops, transcendentals=0,
                                      bytes_accessed=bytes_accessed),
    )(xb, w1, s1, b1, w2, s2, b2)


def max_pool_3x3_s2_p1(x):
    n, h, w, c = x.shape
    # finite "-inf": every 3x3/s2/p1 window contains at least one real element
    xs, ho, wo = _space_to_depth_s2(x, -1e30)
    hq, wq = ho + 1, wo + 1
    return pl.pallas_call(
        maxpool3x3_s2_kernel,
        out_shape=jax.ShapeDtypeStruct((n, ho, wo, c), x.dtype),
        grid_spec=pltpu.PrefetchScalarGridSpec(
            num_scalar_prefetch=0,
            grid=(n,),
            in_specs=[pl.BlockSpec((1, 4, hq, wq, c),
                                   lambda i: (i, 0, 0, 0, 0))],
            out_specs=pl.BlockSpec((1, ho, wo, c), lambda i: (i, 0, 0, 0)),
        ),
        compiler_params=pltpu.CompilerParams(
            dimension_semantics=("parallel",)),
    )(xs)


# --------------------------- InceptionB module -----------------------------

def _init_conv_block(key, kh, kw, cin, cout):
    kw_, kg, kb, km, kv = jax.random.split(key, 5)
    fan_in = kh * kw * cin
    return dict(
        w=jax.random.normal(kw_, (kh, kw, cin, cout), jnp.float32)
        / np.sqrt(fan_in),
        gamma=1.0 + 0.1 * jax.random.normal(kg, (cout,), jnp.float32),
        beta=0.1 * jax.random.normal(kb, (cout,), jnp.float32),
        mean=0.1 * jax.random.normal(km, (cout,), jnp.float32),
        var=jnp.abs(jax.random.normal(kv, (cout,), jnp.float32)) + 0.5,
    )


def init_inception_b(key, in_channels):
    k1, k2, k3, k4 = jax.random.split(key, 4)
    return dict(
        branch3x3=_init_conv_block(k1, 3, 3, in_channels, 384),
        dbl_1=_init_conv_block(k2, 1, 1, in_channels, 64),
        dbl_2=_init_conv_block(k3, 3, 3, 64, 96),
        dbl_3=_init_conv_block(k4, 3, 3, 96, 96),
    )


def inception_b_forward(params, x):
    """x: (N, H, W, Cin) NHWC; returns (N, Ho, Wo, 384 + 96 + Cin)."""
    b3x3 = conv3x3_s2_bn_relu(x, params["branch3x3"])                   # (N,Ho,Wo,384)
    d = dbl12_fused(x, params["dbl_1"], params["dbl_2"], cout_pad=128)  # (N,H,W,128) bf16
    d = conv3x3_s2_bn_relu(d, params["dbl_3"], cin_pad=128, cout_pad=128)
    d = d[..., :96]                                                     # drop zero lanes
    pool = max_pool_3x3_s2_p1(x)                                        # (N,Ho,Wo,Cin)
    # TODO(synk): the concat could be fused by writing each branch directly into
    # channel slices of one preallocated output buffer; left to XLA here.
    return jnp.concatenate([b3x3, d, pool], axis=-1)


# ------------------------------- reference ---------------------------------

def _ref_conv_bn_relu(x, p, stride, pad):
    y = lax.conv_general_dilated(
        x.astype(jnp.bfloat16), p["w"].astype(jnp.bfloat16),
        window_strides=(stride, stride), padding=[(pad, pad), (pad, pad)],
        dimension_numbers=("NHWC", "HWIO", "NHWC"),
        preferred_element_type=jnp.float32)
    scale = p["gamma"] / jnp.sqrt(p["var"] + EPS)
    shift = p["beta"] - p["mean"] * scale
    return jnp.maximum(y * scale + shift, 0.0)


def _ref_forward(params, x):
    b3x3 = _ref_conv_bn_relu(x, params["branch3x3"], 2, 1)
    d = _ref_conv_bn_relu(x, params["dbl_1"], 1, 0)
    d = _ref_conv_bn_relu(d.astype(jnp.bfloat16), params["dbl_2"], 1, 1)
    d = _ref_conv_bn_relu(d.astype(jnp.bfloat16), params["dbl_3"], 2, 1)
    pool = lax.reduce_window(x, -jnp.inf, lax.max, (1, 3, 3, 1), (1, 2, 2, 1),
                             [(0, 0), (1, 1), (1, 1), (0, 0)])
    return jnp.concatenate([b3x3, d, pool], axis=-1)


# --------------------------------- main -------------------------------------

if __name__ == "__main__":
    key = jax.random.PRNGKey(0)
    kx, kp = jax.random.split(key)

    N, C_in, H, W = 2, 4, 16, 16            # PyTorch NCHW view of the input
    x_nchw = jax.random.normal(kx, (N, C_in, H, W), jnp.float32)
    x = jnp.transpose(x_nchw, (0, 2, 3, 1))  # -> NHWC for the kernels

    params = init_inception_b(kp, C_in)

    out = jax.block_until_ready(jax.jit(inception_b_forward)(params, x))
    ref = jax.block_until_ready(_ref_forward(params, x))

    assert out.shape == (N, 8, 8, 384 + 96 + C_in), out.shape
    np.testing.assert_allclose(np.asarray(out), np.asarray(ref),
                               rtol=5e-3, atol=5e-3)

    print("KERNEL_OK")
</pallas_src>

<mosaic_0001>
module attributes {stable_mosaic.version = 11 : i64} {
  func.func @maxpool3x3_s2_kernel(%arg0: i32, %arg1: memref<1x4x9x9x4xf32, #tpu.memory_space<vmem>>, %arg2: memref<1x8x8x4xf32, #tpu.memory_space<vmem>>) attributes {dimension_semantics = [#tpu.dimension_semantics<parallel>], iteration_bounds = array<i64: 2>, scalar_prefetch = 0 : i64, scratch_operands = 0 : i64, tpu.core_type = #tpu.core_type<tc>, window_params = [{transform_indices = @transform_0, window_bounds = array<i64: 1, 4, 9, 9, 4>}, {transform_indices = @transform_1, window_bounds = array<i64: 1, 8, 8, 4>}]} {
    %c0 = arith.constant 0 : index
    %c0_0 = arith.constant 0 : index
    %c0_1 = arith.constant 0 : index
    %c0_2 = arith.constant 0 : index
    %c0_3 = arith.constant 0 : index
    %0 = vector.load %arg1[%c0, %c0_0, %c0_1, %c0_2, %c0_3] : memref<1x4x9x9x4xf32, #tpu.memory_space<vmem>>, vector<1x1x8x8x4xf32>
    %1 = vector.shape_cast %0 : vector<1x1x8x8x4xf32> to vector<8x8x4xf32>
    %c0_4 = arith.constant 0 : index
    %c1 = arith.constant 1 : index
    %c0_5 = arith.constant 0 : index
    %c0_6 = arith.constant 0 : index
    %c0_7 = arith.constant 0 : index
    %2 = vector.load %arg1[%c0_4, %c1, %c0_5, %c0_6, %c0_7] : memref<1x4x9x9x4xf32, #tpu.memory_space<vmem>>, vector<1x1x8x8x4xf32>
    %3 = vector.shape_cast %2 : vector<1x1x8x8x4xf32> to vector<8x8x4xf32>
    %4 = arith.maximumf %1, %3 : vector<8x8x4xf32>
    %c0_8 = arith.constant 0 : index
    %c0_9 = arith.constant 0 : index
    %c0_10 = arith.constant 0 : index
    %c1_11 = arith.constant 1 : index
    %c0_12 = arith.constant 0 : index
    %5 = vector.load %arg1[%c0_8, %c0_9, %c0_10, %c1_11, %c0_12] : memref<1x4x9x9x4xf32, #tpu.memory_space<vmem>>, vector<1x1x8x8x4xf32>
    %6 = vector.shape_cast %5 : vector<1x1x8x8x4xf32> to vector<8x8x4xf32>
    %7 = arith.maximumf %4, %6 : vector<8x8x4xf32>
    %c0_13 = arith.constant 0 : index
    %c2 = arith.constant 2 : index
    %c0_14 = arith.constant 0 : index
    %c0_15 = arith.constant 0 : index
    %c0_16 = arith.constant 0 : index
    %8 = vector.load %arg1[%c0_13, %c2, %c0_14, %c0_15, %c0_16] : memref<1x4x9x9x4xf32, #tpu.memory_space<vmem>>, vector<1x1x8x8x4xf32>
    %9 = vector.shape_cast %8 : vector<1x1x8x8x4xf32> to vector<8x8x4xf32>
    %10 = arith.maximumf %7, %9 : vector<8x8x4xf32>
    %c0_17 = arith.constant 0 : index
    %c3 = arith.constant 3 : index
    %c0_18 = arith.constant 0 : index
    %c0_19 = arith.constant 0 : index
    %c0_20 = arith.constant 0 : index
    %11 = vector.load %arg1[%c0_17, %c3, %c0_18, %c0_19, %c0_20] : memref<1x4x9x9x4xf32, #tpu.memory_space<vmem>>, vector<1x1x8x8x4xf32>
    %12 = vector.shape_cast %11 : vector<1x1x8x8x4xf32> to vector<8x8x4xf32>
    %13 = arith.maximumf %10, %12 : vector<8x8x4xf32>
    %c0_21 = arith.constant 0 : index
    %c2_22 = arith.constant 2 : index
    %c0_23 = arith.constant 0 : index
    %c1_24 = arith.constant 1 : index
    %c0_25 = arith.constant 0 : index
    %14 = vector.load %arg1[%c0_21, %c2_22, %c0_23, %c1_24, %c0_25] : memref<1x4x9x9x4xf32, #tpu.memory_space<vmem>>, vector<1x1x8x8x4xf32>
    %15 = vector.shape_cast %14 : vector<1x1x8x8x4xf32> to vector<8x8x4xf32>
    %16 = arith.maximumf %13, %15 : vector<8x8x4xf32>
    %c0_26 = arith.constant 0 : index
    %c0_27 = arith.constant 0 : index
    %c1_28 = arith.constant 1 : index
    %c0_29 = arith.constant 0 : index
    %c0_30 = arith.constant 0 : index
    %17 = vector.load %arg1[%c0_26, %c0_27, %c1_28, %c0_29, %c0_30] : memref<1x4x9x9x4xf32, #tpu.memory_space<vmem>>, vector<1x1x8x8x4xf32>
    %18 = vector.shape_cast %17 : vector<1x1x8x8x4xf32> to vector<8x8x4xf32>
    %19 = arith.maximumf %16, %18 : vector<8x8x4xf32>
    %c0_31 = arith.constant 0 : index
    %c1_32 = arith.constant 1 : index
    %c1_33 = arith.constant 1 : index
    %c0_34 = arith.constant 0 : index
    %c0_35 = arith.constant 0 : index
    %20 = vector.load %arg1[%c0_31, %c1_32, %c1_33, %c0_34, %c0_35] : memref<1x4x9x9x4xf32, #tpu.memory_space<vmem>>, vector<1x1x8x8x4xf32>
    %21 = vector.shape_cast %20 : vector<1x1x8x8x4xf32> to vector<8x8x4xf32>
    %22 = arith.maximumf %19, %21 : vector<8x8x4xf32>
    %c0_36 = arith.constant 0 : index
    %c0_37 = arith.constant 0 : index
    %c1_38 = arith.constant 1 : index
    %c1_39 = arith.constant 1 : index
    %c0_40 = arith.constant 0 : index
    %23 = vector.load %arg1[%c0_36, %c0_37, %c1_38, %c1_39, %c0_40] : memref<1x4x9x9x4xf32, #tpu.memory_space<vmem>>, vector<1x1x8x8x4xf32>
    %24 = vector.shape_cast %23 : vector<1x1x8x8x4xf32> to vector<8x8x4xf32>
    %25 = arith.maximumf %22, %24 : vector<8x8x4xf32>
    %26 = vector.shape_cast %25 : vector<8x8x4xf32> to vector<1x8x8x4xf32>
    %c0_41 = arith.constant 0 : index
    %c0_42 = arith.constant 0 : index
    %c0_43 = arith.constant 0 : index
    %c0_44 = arith.constant 0 : index
    %27 = vector.load %arg2[%c0_41, %c0_42, %c0_43, %c0_44] : memref<1x8x8x4xf32, #tpu.memory_space<vmem>>, vector<1x8x8x4xf32>
    tpu.vector_store %arg2[%c0_41, %c0_42, %c0_43, %c0_44], %26 {strides = array<i32>} : memref<1x8x8x4xf32, #tpu.memory_space<vmem>>, vector<1x8x8x4xf32>,
    return
  }
  func.func @transform_0(%arg0: i32) -> (i32, i32, i32, i32, i32) {
    %c0_i32 = arith.constant 0 : i32
    %c0_i32_0 = arith.constant 0 : i32
    %c0_i32_1 = arith.constant 0 : i32
    %c0_i32_2 = arith.constant 0 : i32
    %c0_i32_3 = arith.constant 0 : i32
    return %arg0, %c0_i32, %c0_i32_0, %c0_i32_1, %c0_i32_2 : i32, i32, i32, i32, i32
  }
  func.func @transform_1(%arg0: i32) -> (i32, i32, i32, i32) {
    %c0_i32 = arith.constant 0 : i32
    %c0_i32_0 = arith.constant 0 : i32
    %c0_i32_1 = arith.constant 0 : i32
    %c0_i32_2 = arith.constant 0 : i32
    return %arg0, %c0_i32, %c0_i32_0, %c0_i32_1 : i32, i32, i32, i32
  }
}

module attributes {stable_mosaic.version = 11 : i64} {
  func.func @dbl12_kernel(%arg0: i32, %arg1: memref<1x16x16x4xbf16, #tpu.memory_space<vmem>>, %arg2: memref<4x64xbf16, #tpu.memory_space<vmem>>, %arg3: memref<1x64xf32, #tpu.memory_space<vmem>>, %arg4: memref<1x64xf32, #tpu.memory_space<vmem>>, %arg5: memref<9x64x128xbf16, #tpu.memory_space<vmem>>, %arg6: memref<1x128xf32, #tpu.memory_space<vmem>>, %arg7: memref<1x128xf32, #tpu.memory_space<vmem>>, %arg8: memref<1x16x16x128xbf16, #tpu.memory_space<vmem>>, %arg9: memref<18x18x64xbf16, #tpu.memory_space<vmem>>) attributes {dimension_semantics = [#tpu.dimension_semantics<parallel>], iteration_bounds = array<i64: 2>, scalar_prefetch = 0 : i64, scratch_operands = 1 : i64, tpu.core_type = #tpu.core_type<tc>, window_params = [{transform_indices = @transform_0, window_bounds = array<i64: 1, 16, 16, 4>}, {pipeline_mode = #tpu.pipeline_mode<synchronous>, transform_indices = @transform_1, window_bounds = array<i64: 4, 64>}, {pipeline_mode = #tpu.pipeline_mode<synchronous>, transform_indices = @transform_2, window_bounds = array<i64: 1, 64>}, {pipeline_mode = #tpu.pipeline_mode<synchronous>, transform_indices = @transform_3, window_bounds = array<i64: 1, 64>}, {pipeline_mode = #tpu.pipeline_mode<synchronous>, transform_indices = @transform_4, window_bounds = array<i64: 9, 64, 128>}, {pipeline_mode = #tpu.pipeline_mode<synchronous>, transform_indices = @transform_5, window_bounds = array<i64: 1, 128>}, {pipeline_mode = #tpu.pipeline_mode<synchronous>, transform_indices = @transform_6, window_bounds = array<i64: 1, 128>}, {transform_indices = @transform_7, window_bounds = array<i64: 1, 16, 16, 128>}]} {
    %c0 = arith.constant 0 : index
    %c0_0 = arith.constant 0 : index
    %c0_1 = arith.constant 0 : index
    %c0_2 = arith.constant 0 : index
    %0 = vector.load %arg1[%c0, %c0_0, %c0_1, %c0_2] : memref<1x16x16x4xbf16, #tpu.memory_space<vmem>>, vector<1x16x16x4xbf16>
    %1 = vector.shape_cast %0 : vector<1x16x16x4xbf16> to vector<256x4xbf16>
    %c0_3 = arith.constant 0 : index
    %c0_4 = arith.constant 0 : index
    %2 = vector.load %arg2[%c0_3, %c0_4] : memref<4x64xbf16, #tpu.memory_space<vmem>>, vector<4x64xbf16>
    %cst = arith.constant dense<0.000000e+00> : vector<256x64xf32>
    %3 = tpu.matmul %1, %2, %cst {dimension_numbers = #tpu.dot_dimension_numbers<[1], [0], [0], [1], [0, 0, 1, 1], [], []>} : vector<256x4xbf16>, vector<4x64xbf16>, vector<256x64xf32> -> vector<256x64xf32>
    %c0_5 = arith.constant 0 : index
    %c0_6 = arith.constant 0 : index
    %4 = vector.load %arg3[%c0_5, %c0_6] : memref<1x64xf32, #tpu.memory_space<vmem>>, vector<1x64xf32>
    %5 = vector.broadcast %4 : vector<1x64xf32> to vector<256x64xf32>
    %6 = arith.mulf %3, %5 : vector<256x64xf32>
    %c0_7 = arith.constant 0 : index
    %c0_8 = arith.constant 0 : index
    %7 = vector.load %arg4[%c0_7, %c0_8] : memref<1x64xf32, #tpu.memory_space<vmem>>, vector<1x64xf32>
    %8 = vector.broadcast %7 : vector<1x64xf32> to vector<256x64xf32>
    %9 = arith.addf %6, %8 : vector<256x64xf32>
    %cst_9 = arith.constant 0.000000e+00 : f32
    %10 = vector.broadcast %cst_9 : f32 to vector<256x64xf32>
    %11 = arith.maximumf %9, %10 : vector<256x64xf32>
    %cst_10 = arith.constant 0.000000e+00 : bf16
    %12 = vector.broadcast %cst_10 : bf16 to vector<18x18x64xbf16>
    %c0_11 = arith.constant 0 : index
    %c0_12 = arith.constant 0 : index
    %c0_13 = arith.constant 0 : index
    %13 = vector.load %arg9[%c0_11, %c0_12, %c0_13] : memref<18x18x64xbf16, #tpu.memory_space<vmem>>, vector<18x18x64xbf16>
    tpu.vector_store %arg9[%c0_11, %c0_12, %c0_13], %12 {strides = array<i32>} : memref<18x18x64xbf16, #tpu.memory_space<vmem>>, vector<18x18x64xbf16>,
    %14 = vector.shape_cast %11 : vector<256x64xf32> to vector<16x16x64xf32>
    %15 = arith.truncf %14 : vector<16x16x64xf32> to vector<16x16x64xbf16>
    %c1 = arith.constant 1 : index
    %c1_14 = arith.constant 1 : index
    %c0_15 = arith.constant 0 : index
    %16 = vector.load %arg9[%c1, %c1_14, %c0_15] : memref<18x18x64xbf16, #tpu.memory_space<vmem>>, vector<16x16x64xbf16>
    tpu.vector_store %arg9[%c1, %c1_14, %c0_15], %15 {strides = array<i32>} : memref<18x18x64xbf16, #tpu.memory_space<vmem>>, vector<16x16x64xbf16>,
    %cst_16 = arith.constant 0.000000e+00 : f32
    %17 = vector.broadcast %cst_16 : f32 to vector<256x128xf32>
    %c0_17 = arith.constant 0 : index
    %c0_18 = arith.constant 0 : index
    %c0_19 = arith.constant 0 : index
    %18 = vector.load %arg9[%c0_17, %c0_18, %c0_19] : memref<18x18x64xbf16, #tpu.memory_space<vmem>>, vector<16x16x64xbf16>
    %19 = vector.shape_cast %18 : vector<16x16x64xbf16> to vector<256x64xbf16>
    %c0_20 = arith.constant 0 : index
    %c0_21 = arith.constant 0 : index
    %c0_22 = arith.constant 0 : index
    %20 = vector.load %arg5[%c0_20, %c0_21, %c0_22] : memref<9x64x128xbf16, #tpu.memory_space<vmem>>, vector<1x64x128xbf16>
    %21 = vector.shape_cast %20 : vector<1x64x128xbf16> to vector<64x128xbf16>
    %cst_23 = arith.constant dense<0.000000e+00> : vector<256x128xf32>
    %22 = tpu.matmul %19, %21, %cst_23 {dimension_numbers = #tpu.dot_dimension_numbers<[1], [0], [0], [1], [0, 0, 1, 1], [], []>} : vector<256x64xbf16>, vector<64x128xbf16>, vector<256x128xf32> -> vector<256x128xf32>
    %23 = arith.addf %17, %22 : vector<256x128xf32>
    %c0_24 = arith.constant 0 : index
    %c1_25 = arith.constant 1 : index
    %c0_26 = arith.constant 0 : index
    %24 = vector.load %arg9[%c0_24, %c1_25, %c0_26] : memref<18x18x64xbf16, #tpu.memory_space<vmem>>, vector<16x16x64xbf16>
    %25 = vector.shape_cast %24 : vector<16x16x64xbf16> to vector<256x64xbf16>
    %c1_27 = arith.constant 1 : index
    %c0_28 = arith.constant 0 : index
    %c0_29 = arith.constant 0 : index
    %26 = vector.load %arg5[%c1_27, %c0_28, %c0_29] : memref<9x64x128xbf16, #tpu.memory_space<vmem>>, vector<1x64x128xbf16>
    %27 = vector.shape_cast %26 : vector<1x64x128xbf16> to vector<64x128xbf16>
    %cst_30 = arith.constant dense<0.000000e+00> : vector<256x128xf32>
    %28 = tpu.matmul %25, %27, %cst_30 {dimension_numbers = #tpu.dot_dimension_numbers<[1], [0], [0], [1], [0, 0, 1, 1], [], []>} : vector<256x64xbf16>, vector<64x128xbf16>, vector<256x128xf32> -> vector<256x128xf32>
    %29 = arith.addf %23, %28 : vector<256x128xf32>
    %c0_31 = arith.constant 0 : index
    %c2 = arith.constant 2 : index
    %c0_32 = arith.constant 0 : index
    %30 = vector.load %arg9[%c0_31, %c2, %c0_32] : memref<18x18x64xbf16, #tpu.memory_space<vmem>>, vector<16x16x64xbf16>
    %31 = vector.shape_cast %30 : vector<16x16x64xbf16> to vector<256x64xbf16>
    %c2_33 = arith.constant 2 : index
    %c0_34 = arith.constant 0 : index
    %c0_35 = arith.constant 0 : index
    %32 = vector.load %arg5[%c2_33, %c0_34, %c0_35] : memref<9x64x128xbf16, #tpu.memory_space<vmem>>, vector<1x64x128xbf16>
    %33 = vector.shape_cast %32 : vector<1x64x128xbf16> to vector<64x128xbf16>
    %cst_36 = arith.constant dense<0.000000e+00> : vector<256x128xf32>
    %34 = tpu.matmul %31, %33, %cst_36 {dimension_numbers = #tpu.dot_dimension_numbers<[1], [0], [0], [1], [0, 0, 1, 1], [], []>} : vector<256x64xbf16>, vector<64x128xbf16>, vector<256x128xf32> -> vector<256x128xf32>
    %35 = arith.addf %29, %34 : vector<256x128xf32>
    %c1_37 = arith.constant 1 : index
    %c0_38 = arith.constant 0 : index
    %c0_39 = arith.constant 0 : index
    %36 = vector.load %arg9[%c1_37, %c0_38, %c0_39] : memref<18x18x64xbf16, #tpu.memory_space<vmem>>, vector<16x16x64xbf16>
    %37 = vector.shape_cast %36 : vector<16x16x64xbf16> to vector<256x64xbf16>
    %c3 = arith.constant 3 : index
    %c0_40 = arith.constant 0 : index
    %c0_41 = arith.constant 0 : index
    %38 = vector.load %arg5[%c3, %c0_40, %c0_41] : memref<9x64x128xbf16, #tpu.memory_space<vmem>>, vector<1x64x128xbf16>
    %39 = vector.shape_cast %38 : vector<1x64x128xbf16> to vector<64x128xbf16>
    %cst_42 = arith.constant dense<0.000000e+00> : vector<256x128xf32>
    %40 = tpu.matmul %37, %39, %cst_42 {dimension_numbers = #tpu.dot_dimension_numbers<[1], [0], [0], [1], [0, 0, 1, 1], [], []>} : vector<256x64xbf16>, vector<64x128xbf16>, vector<256x128xf32> -> vector<256x128xf32>
    %41 = arith.addf %35, %40 : vector<256x128xf32>
    %c1_43 = arith.constant 1 : index
    %c1_44 = arith.constant 1 : index
    %c0_45 = arith.constant 0 : index
    %42 = vector.load %arg9[%c1_43, %c1_44, %c0_45] : memref<18x18x64xbf16, #tpu.memory_space<vmem>>, vector<16x16x64xbf16>
    %43 = vector.shape_cast %42 : vector<16x16x64xbf16> to vector<256x64xbf16>
    %c4 = arith.constant 4 : index
    %c0_46 = arith.constant 0 : index
    %c0_47 = arith.constant 0 : index
    %44 = vector.load %arg5[%c4, %c0_46, %c0_47] : memref<9x64x128xbf16, #tpu.memory_space<vmem>>, vector<1x64x128xbf16>
    %45 = vector.shape_cast %44 : vector<1x64x128xbf16> to vector<64x128xbf16>
    %cst_48 = arith.constant dense<0.000000e+00> : vector<256x128xf32>
    %46 = tpu.matmul %43, %45, %cst_48 {dimension_numbers = #tpu.dot_dimension_numbers<[1], [0], [0], [1], [0, 0, 1, 1], [], []>} : vector<256x64xbf16>, vector<64x128xbf16>, vector<256x128xf32> -> vector<256x128xf32>
    %47 = arith.addf %41, %46 : vector<256x128xf32>
    %c1_49 = arith.constant 1 : index
    %c2_50 = arith.constant 2 : index
    %c0_51 = arith.constant 0 : index
    %48 = vector.load %arg9[%c1_49, %c2_50, %c0_51] : memref<18x18x64xbf16, #tpu.memory_space<vmem>>, vector<16x16x64xbf16>
    %49 = vector.shape_cast %48 : vector<16x16x64xbf16> to vector<256x64xbf16>
    %c5 = arith.constant 5 : index
    %c0_52 = arith.constant 0 : index
    %c0_53 = arith.constant 0 : index
    %50 = vector.load %arg5[%c5, %c0_52, %c0_53] : memref<9x64x128xbf16, #tpu.memory_space<vmem>>, vector<1x64x128xbf16>
    %51 = vector.shape_cast %50 : vector<1x64x128xbf16> to vector<64x128xbf16>
    %cst_54 = arith.constant dense<0.000000e+00> : vector<256x128xf32>
    %52 = tpu.matmul %49, %51, %cst_54 {dimension_numbers = #tpu.dot_dimension_numbers<[1], [0], [0], [1], [0, 0, 1, 1], [], []>} : vector<256x64xbf16>, vector<64x128xbf16>, vector<256x128xf32> -> vector<256x128xf32>
    %53 = arith.addf %47, %52 : vector<256x128xf32>
    %c2_55 = arith.constant 2 : index
    %c0_56 = arith.constant 0 : index
    %c0_57 = arith.constant 0 : index
    %54 = vector.load %arg9[%c2_55, %c0_56, %c0_57] : memref<18x18x64xbf16, #tpu.memory_space<vmem>>, vector<16x16x64xbf16>
    %55 = vector.shape_cast %54 : vector<16x16x64xbf16> to vector<256x64xbf16>
    %c6 = arith.constant 6 : index
    %c0_58 = arith.constant 0 : index
    %c0_59 = arith.constant 0 : index
    %56 = vector.load %arg5[%c6, %c0_58, %c0_59] : memref<9x64x128xbf16, #tpu.memory_space<vmem>>, vector<1x64x128xbf16>
    %57 = vector.shape_cast %56 : vector<1x64x128xbf16> to vector<64x128xbf16>
    %cst_60 = arith.constant dense<0.000000e+00> : vector<256x128xf32>
    %58 = tpu.matmul %55, %57, %cst_60 {dimension_numbers = #tpu.dot_dimension_numbers<[1], [0], [0], [1], [0, 0, 1, 1], [], []>} : vector<256x64xbf16>, vector<64x128xbf16>, vector<256x128xf32> -> vector<256x128xf32>
    %59 = arith.addf %53, %58 : vector<256x128xf32>
    %c2_61 = arith.constant 2 : index
    %c1_62 = arith.constant 1 : index
    %c0_63 = arith.constant 0 : index
    %60 = vector.load %arg9[%c2_61, %c1_62, %c0_63] : memref<18x18x64xbf16, #tpu.memory_space<vmem>>, vector<16x16x64xbf16>
    %61 = vector.shape_cast %60 : vector<16x16x64xbf16> to vector<256x64xbf16>
    %c7 = arith.constant 7 : index
    %c0_64 = arith.constant 0 : index
    %c0_65 = arith.constant 0 : index
    %62 = vector.load %arg5[%c7, %c0_64, %c0_65] : memref<9x64x128xbf16, #tpu.memory_space<vmem>>, vector<1x64x128xbf16>
    %63 = vector.shape_cast %62 : vector<1x64x128xbf16> to vector<64x128xbf16>
    %cst_66 = arith.constant dense<0.000000e+00> : vector<256x128xf32>
    %64 = tpu.matmul %61, %63, %cst_66 {dimension_numbers = #tpu.dot_dimension_numbers<[1], [0], [0], [1], [0, 0, 1, 1], [], []>} : vector<256x64xbf16>, vector<64x128xbf16>, vector<256x128xf32> -> vector<256x128xf32>
    %65 = arith.addf %59, %64 : vector<256x128xf32>
    %c2_67 = arith.constant 2 : index
    %c2_68 = arith.constant 2 : index
    %c0_69 = arith.constant 0 : index
    %66 = vector.load %arg9[%c2_67, %c2_68, %c0_69] : memref<18x18x64xbf16, #tpu.memory_space<vmem>>, vector<16x16x64xbf16>
    %67 = vector.shape_cast %66 : vector<16x16x64xbf16> to vector<256x64xbf16>
    %c8 = arith.constant 8 : index
    %c0_70 = arith.constant 0 : index
    %c0_71 = arith.constant 0 : index
    %68 = vector.load %arg5[%c8, %c0_70, %c0_71] : memref<9x64x128xbf16, #tpu.memory_space<vmem>>, vector<1x64x128xbf16>
    %69 = vector.shape_cast %68 : vector<1x64x128xbf16> to vector<64x128xbf16>
    %cst_72 = arith.constant dense<0.000000e+00> : vector<256x128xf32>
    %70 = tpu.matmul %67, %69, %cst_72 {dimension_numbers = #tpu.dot_dimension_numbers<[1], [0], [0], [1], [0, 0, 1, 1], [], []>} : vector<256x64xbf16>, vector<64x128xbf16>, vector<256x128xf32> -> vector<256x128xf32>
    %71 = arith.addf %65, %70 : vector<256x128xf32>
    %c0_73 = arith.constant 0 : index
    %c0_74 = arith.constant 0 : index
    %72 = vector.load %arg6[%c0_73, %c0_74] : memref<1x128xf32, #tpu.memory_space<vmem>>, vector<1x128xf32>
    %73 = vector.broadcast %72 : vector<1x128xf32> to vector<256x128xf32>
    %74 = arith.mulf %71, %73 : vector<256x128xf32>
    %c0_75 = arith.constant 0 : index
    %c0_76 = arith.constant 0 : index
    %75 = vector.load %arg7[%c0_75, %c0_76] : memref<1x128xf32, #tpu.memory_space<vmem>>, vector<1x128xf32>
    %76 = vector.broadcast %75 : vector<1x128xf32> to vector<256x128xf32>
    %77 = arith.addf %74, %76 : vector<256x128xf32>
    %cst_77 = arith.constant 0.000000e+00 : f32
    %78 = vector.broadcast %cst_77 : f32 to vector<256x128xf32>
    %79 = arith.maximumf %77, %78 : vector<256x128xf32>
    %80 = vector.shape_cast %79 : vector<256x128xf32> to vector<1x16x16x128xf32>
    %81 = arith.truncf %80 : vector<1x16x16x128xf32> to vector<1x16x16x128xbf16>
    %c0_78 = arith.constant 0 : index
    %c0_79 = arith.constant 0 : index
    %c0_80 = arith.constant 0 : index
    %c0_81 = arith.constant 0 : index
    %82 = vector.load %arg8[%c0_78, %c0_79, %c0_80, %c0_81] : memref<1x16x16x128xbf16, #tpu.memory_space<vmem>>, vector<1x16x16x128xbf16>
    tpu.vector_store %arg8[%c0_78, %c0_79, %c0_80, %c0_81], %81 {strides = array<i32>} : memref<1x16x16x128xbf16, #tpu.memory_space<vmem>>, vector<1x16x16x128xbf16>,
    return
  }
  func.func @transform_0(%arg0: i32) -> (i32, i32, i32, i32) {
    %c0_i32 = arith.constant 0 : i32
    %c0_i32_0 = arith.constant 0 : i32
    %c0_i32_1 = arith.constant 0 : i32
    %c0_i32_2 = arith.constant 0 : i32
    return %arg0, %c0_i32, %c0_i32_0, %c0_i32_1 : i32, i32, i32, i32
  }
  func.func @transform_1(%arg0: i32) -> (i32, i32) {
    %c0_i32 = arith.constant 0 : i32
    %c0_i32_0 = arith.constant 0 : i32
    %c0_i32_1 = arith.constant 0 : i32
    return %c0_i32, %c0_i32_0 : i32, i32
  }
  func.func @transform_2(%arg0: i32) -> (i32, i32) {
    %c0_i32 = arith.constant 0 : i32
    %c0_i32_0 = arith.constant 0 : i32
    %c0_i32_1 = arith.constant 0 : i32
    return %c0_i32, %c0_i32_0 : i32, i32
  }
  func.func @transform_3(%arg0: i32) -> (i32, i32) {
    %c0_i32 = arith.constant 0 : i32
    %c0_i32_0 = arith.constant 0 : i32
    %c0_i32_1 = arith.constant 0 : i32
    return %c0_i32, %c0_i32_0 : i32, i32
  }
  func.func @transform_4(%arg0: i32) -> (i32, i32, i32) {
    %c0_i32 = arith.constant 0 : i32
    %c0_i32_0 = arith.constant 0 : i32
    %c0_i32_1 = arith.constant 0 : i32
    %c0_i32_2 = arith.constant 0 : i32
    return %c0_i32, %c0_i32_0, %c0_i32_1 : i32, i32, i32
  }
  func.func @transform_5(%arg0: i32) -> (i32, i32) {
    %c0_i32 = arith.constant 0 : i32
    %c0_i32_0 = arith.constant 0 : i32
    %c0_i32_1 = arith.constant 0 : i32
    return %c0_i32, %c0_i32_0 : i32, i32
  }
  func.func @transform_6(%arg0: i32) -> (i32, i32) {
    %c0_i32 = arith.constant 0 : i32
    %c0_i32_0 = arith.constant 0 : i32
    %c0_i32_1 = arith.constant 0 : i32
    return %c0_i32, %c0_i32_0 : i32, i32
  }
  func.func @transform_7(%arg0: i32) -> (i32, i32, i32, i32) {
    %c0_i32 = arith.constant 0 : i32
    %c0_i32_0 = arith.constant 0 : i32
    %c0_i32_1 = arith.constant 0 : i32
    %c0_i32_2 = arith.constant 0 : i32
    return %arg0, %c0_i32, %c0_i32_0, %c0_i32_1 : i32, i32, i32, i32
  }
}

module attributes {stable_mosaic.version = 11 : i64} {
  func.func @conv3x3_s2_kernel(%arg0: i32, %arg1: memref<1x4x9x9x128xbf16, #tpu.memory_space<vmem>>, %arg2: memref<9x128x128xbf16, #tpu.memory_space<vmem>>, %arg3: memref<1x128xf32, #tpu.memory_space<vmem>>, %arg4: memref<1x128xf32, #tpu.memory_space<vmem>>, %arg5: memref<1x8x8x128xf32, #tpu.memory_space<vmem>>) attributes {dimension_semantics = [#tpu.dimension_semantics<parallel>], iteration_bounds = array<i64: 2>, scalar_prefetch = 0 : i64, scratch_operands = 0 : i64, tpu.core_type = #tpu.core_type<tc>, window_params = [{transform_indices = @transform_0, window_bounds = array<i64: 1, 4, 9, 9, 128>}, {pipeline_mode = #tpu.pipeline_mode<synchronous>, transform_indices = @transform_1, window_bounds = array<i64: 9, 128, 128>}, {pipeline_mode = #tpu.pipeline_mode<synchronous>, transform_indices = @transform_2, window_bounds = array<i64: 1, 128>}, {pipeline_mode = #tpu.pipeline_mode<synchronous>, transform_indices = @transform_3, window_bounds = array<i64: 1, 128>}, {transform_indices = @transform_4, window_bounds = array<i64: 1, 8, 8, 128>}]} {
    %cst = arith.constant 0.000000e+00 : f32
    %0 = vector.broadcast %cst : f32 to vector<64x128xf32>
    %c0 = arith.constant 0 : index
    %c0_0 = arith.constant 0 : index
    %c0_1 = arith.constant 0 : index
    %c0_2 = arith.constant 0 : index
    %c0_3 = arith.constant 0 : index
    %1 = vector.load %arg1[%c0, %c0_0, %c0_1, %c0_2, %c0_3] : memref<1x4x9x9x128xbf16, #tpu.memory_space<vmem>>, vector<1x1x8x8x128xbf16>
    %2 = vector.shape_cast %1 : vector<1x1x8x8x128xbf16> to vector<8x8x128xbf16>
    %3 = vector.shape_cast %2 : vector<8x8x128xbf16> to vector<64x128xbf16>
    %c0_4 = arith.constant 0 : index
    %c0_5 = arith.constant 0 : index
    %c0_6 = arith.constant 0 : index
    %4 = vector.load %arg2[%c0_4, %c0_5, %c0_6] : memref<9x128x128xbf16, #tpu.memory_space<vmem>>, vector<1x128x128xbf16>
    %5 = vector.shape_cast %4 : vector<1x128x128xbf16> to vector<128x128xbf16>
    %cst_7 = arith.constant dense<0.000000e+00> : vector<64x128xf32>
    %6 = tpu.matmul %3, %5, %cst_7 {dimension_numbers = #tpu.dot_dimension_numbers<[1], [0], [0], [1], [0, 0, 1, 1], [], []>} : vector<64x128xbf16>, vector<128x128xbf16>, vector<64x128xf32> -> vector<64x128xf32>
    %7 = arith.addf %0, %6 : vector<64x128xf32>
    %c0_8 = arith.constant 0 : index
    %c1 = arith.constant 1 : index
    %c0_9 = arith.constant 0 : index
    %c0_10 = arith.constant 0 : index
    %c0_11 = arith.constant 0 : index
    %8 = vector.load %arg1[%c0_8, %c1, %c0_9, %c0_10, %c0_11] : memref<1x4x9x9x128xbf16, #tpu.memory_space<vmem>>, vector<1x1x8x8x128xbf16>
    %9 = vector.shape_cast %8 : vector<1x1x8x8x128xbf16> to vector<8x8x128xbf16>
    %10 = vector.shape_cast %9 : vector<8x8x128xbf16> to vector<64x128xbf16>
    %c1_12 = arith.constant 1 : index
    %c0_13 = arith.constant 0 : index
    %c0_14 = arith.constant 0 : index
    %11 = vector.load %arg2[%c1_12, %c0_13, %c0_14] : memref<9x128x128xbf16, #tpu.memory_space<vmem>>, vector<1x128x128xbf16>
    %12 = vector.shape_cast %11 : vector<1x128x128xbf16> to vector<128x128xbf16>
    %cst_15 = arith.constant dense<0.000000e+00> : vector<64x128xf32>
    %13 = tpu.matmul %10, %12, %cst_15 {dimension_numbers = #tpu.dot_dimension_numbers<[1], [0], [0], [1], [0, 0, 1, 1], [], []>} : vector<64x128xbf16>, vector<128x128xbf16>, vector<64x128xf32> -> vector<64x128xf32>
    %14 = arith.addf %7, %13 : vector<64x128xf32>
    %c0_16 = arith.constant 0 : index
    %c0_17 = arith.constant 0 : index
    %c0_18 = arith.constant 0 : index
    %c1_19 = arith.constant 1 : index
    %c0_20 = arith.constant 0 : index
    %15 = vector.load %arg1[%c0_16, %c0_17, %c0_18, %c1_19, %c0_20] : memref<1x4x9x9x128xbf16, #tpu.memory_space<vmem>>, vector<1x1x8x8x128xbf16>
    %16 = vector.shape_cast %15 : vector<1x1x8x8x128xbf16> to vector<8x8x128xbf16>
    %17 = vector.shape_cast %16 : vector<8x8x128xbf16> to vector<64x128xbf16>
    %c2 = arith.constant 2 : index
    %c0_21 = arith.constant 0 : index
    %c0_22 = arith.constant 0 : index
    %18 = vector.load %arg2[%c2, %c0_21, %c0_22] : memref<9x128x128xbf16, #tpu.memory_space<vmem>>, vector<1x128x128xbf16>
    %19 = vector.shape_cast %18 : vector<1x128x128xbf16> to vector<128x128xbf16>
    %cst_23 = arith.constant dense<0.000000e+00> : vector<64x128xf32>
    %20 = tpu.matmul %17, %19, %cst_23 {dimension_numbers = #tpu.dot_dimension_numbers<[1], [0], [0], [1], [0, 0, 1, 1], [], []>} : vector<64x128xbf16>, vector<128x128xbf16>, vector<64x128xf32> -> vector<64x128xf32>
    %21 = arith.addf %14, %20 : vector<64x128xf32>
    %c0_24 = arith.constant 0 : index
    %c2_25 = arith.constant 2 : index
    %c0_26 = arith.constant 0 : index
    %c0_27 = arith.constant 0 : index
    %c0_28 = arith.constant 0 : index
    %22 = vector.load %arg1[%c0_24, %c2_25, %c0_26, %c0_27, %c0_28] : memref<1x4x9x9x128xbf16, #tpu.memory_space<vmem>>, vector<1x1x8x8x128xbf16>
    %23 = vector.shape_cast %22 : vector<1x1x8x8x128xbf16> to vector<8x8x128xbf16>
    %24 = vector.shape_cast %23 : vector<8x8x128xbf16> to vector<64x128xbf16>
    %c3 = arith.constant 3 : index
    %c0_29 = arith.constant 0 : index
    %c0_30 = arith.constant 0 : index
    %25 = vector.load %arg2[%c3, %c0_29, %c0_30] : memref<9x128x128xbf16, #tpu.memory_space<vmem>>, vector<1x128x128xbf16>
    %26 = vector.shape_cast %25 : vector<1x128x128xbf16> to vector<128x128xbf16>
    %cst_31 = arith.constant dense<0.000000e+00> : vector<64x128xf32>
    %27 = tpu.matmul %24, %26, %cst_31 {dimension_numbers = #tpu.dot_dimension_numbers<[1], [0], [0], [1], [0, 0, 1, 1], [], []>} : vector<64x128xbf16>, vector<128x128xbf16>, vector<64x128xf32> -> vector<64x128xf32>
    %28 = arith.addf %21, %27 : vector<64x128xf32>
    %c0_32 = arith.constant 0 : index
    %c3_33 = arith.constant 3 : index
    %c0_34 = arith.constant 0 : index
    %c0_35 = arith.constant 0 : index
    %c0_36 = arith.constant 0 : index
    %29 = vector.load %arg1[%c0_32, %c3_33, %c0_34, %c0_35, %c0_36] : memref<1x4x9x9x128xbf16, #tpu.memory_space<vmem>>, vector<1x1x8x8x128xbf16>
    %30 = vector.shape_cast %29 : vector<1x1x8x8x128xbf16> to vector<8x8x128xbf16>
    %31 = vector.shape_cast %30 : vector<8x8x128xbf16> to vector<64x128xbf16>
    %c4 = arith.constant 4 : index
    %c0_37 = arith.constant 0 : index
    %c0_38 = arith.constant 0 : index
    %32 = vector.load %arg2[%c4, %c0_37, %c0_38] : memref<9x128x128xbf16, #tpu.memory_space<vmem>>, vector<1x128x128xbf16>
    %33 = vector.shape_cast %32 : vector<1x128x128xbf16> to vector<128x128xbf16>
    %cst_39 = arith.constant dense<0.000000e+00> : vector<64x128xf32>
    %34 = tpu.matmul %31, %33, %cst_39 {dimension_numbers = #tpu.dot_dimension_numbers<[1], [0], [0], [1], [0, 0, 1, 1], [], []>} : vector<64x128xbf16>, vector<128x128xbf16>, vector<64x128xf32> -> vector<64x128xf32>
    %35 = arith.addf %28, %34 : vector<64x128xf32>
    %c0_40 = arith.constant 0 : index
    %c2_41 = arith.constant 2 : index
    %c0_42 = arith.constant 0 : index
    %c1_43 = arith.constant 1 : index
    %c0_44 = arith.constant 0 : index
    %36 = vector.load %arg1[%c0_40, %c2_41, %c0_42, %c1_43, %c0_44] : memref<1x4x9x9x128xbf16, #tpu.memory_space<vmem>>, vector<1x1x8x8x128xbf16>
    %37 = vector.shape_cast %36 : vector<1x1x8x8x128xbf16> to vector<8x8x128xbf16>
    %38 = vector.shape_cast %37 : vector<8x8x128xbf16> to vector<64x128xbf16>
    %c5 = arith.constant 5 : index
    %c0_45 = arith.constant 0 : index
    %c0_46 = arith.constant 0 : index
    %39 = vector.load %arg2[%c5, %c0_45, %c0_46] : memref<9x128x128xbf16, #tpu.memory_space<vmem>>, vector<1x128x128xbf16>
    %40 = vector.shape_cast %39 : vector<1x128x128xbf16> to vector<128x128xbf16>
    %cst_47 = arith.constant dense<0.000000e+00> : vector<64x128xf32>
    %41 = tpu.matmul %38, %40, %cst_47 {dimension_numbers = #tpu.dot_dimension_numbers<[1], [0], [0], [1], [0, 0, 1, 1], [], []>} : vector<64x128xbf16>, vector<128x128xbf16>, vector<64x128xf32> -> vector<64x128xf32>
    %42 = arith.addf %35, %41 : vector<64x128xf32>
    %c0_48 = arith.constant 0 : index
    %c0_49 = arith.constant 0 : index
    %c1_50 = arith.constant 1 : index
    %c0_51 = arith.constant 0 : index
    %c0_52 = arith.constant 0 : index
    %43 = vector.load %arg1[%c0_48, %c0_49, %c1_50, %c0_51, %c0_52] : memref<1x4x9x9x128xbf16, #tpu.memory_space<vmem>>, vector<1x1x8x8x128xbf16>
    %44 = vector.shape_cast %43 : vector<1x1x8x8x128xbf16> to vector<8x8x128xbf16>
    %45 = vector.shape_cast %44 : vector<8x8x128xbf16> to vector<64x128xbf16>
    %c6 = arith.constant 6 : index
    %c0_53 = arith.constant 0 : index
    %c0_54 = arith.constant 0 : index
    %46 = vector.load %arg2[%c6, %c0_53, %c0_54] : memref<9x128x128xbf16, #tpu.memory_space<vmem>>, vector<1x128x128xbf16>
    %47 = vector.shape_cast %46 : vector<1x128x128xbf16> to vector<128x128xbf16>
    %cst_55 = arith.constant dense<0.000000e+00> : vector<64x128xf32>
    %48 = tpu.matmul %45, %47, %cst_55 {dimension_numbers = #tpu.dot_dimension_numbers<[1], [0], [0], [1], [0, 0, 1, 1], [], []>} : vector<64x128xbf16>, vector<128x128xbf16>, vector<64x128xf32> -> vector<64x128xf32>
    %49 = arith.addf %42, %48 : vector<64x128xf32>
    %c0_56 = arith.constant 0 : index
    %c1_57 = arith.constant 1 : index
    %c1_58 = arith.constant 1 : index
    %c0_59 = arith.constant 0 : index
    %c0_60 = arith.constant 0 : index
    %50 = vector.load %arg1[%c0_56, %c1_57, %c1_58, %c0_59, %c0_60] : memref<1x4x9x9x128xbf16, #tpu.memory_space<vmem>>, vector<1x1x8x8x128xbf16>
    %51 = vector.shape_cast %50 : vector<1x1x8x8x128xbf16> to vector<8x8x128xbf16>
    %52 = vector.shape_cast %51 : vector<8x8x128xbf16> to vector<64x128xbf16>
    %c7 = arith.constant 7 : index
    %c0_61 = arith.constant 0 : index
    %c0_62 = arith.constant 0 : index
    %53 = vector.load %arg2[%c7, %c0_61, %c0_62] : memref<9x128x128xbf16, #tpu.memory_space<vmem>>, vector<1x128x128xbf16>
    %54 = vector.shape_cast %53 : vector<1x128x128xbf16> to vector<128x128xbf16>
    %cst_63 = arith.constant dense<0.000000e+00> : vector<64x128xf32>
    %55 = tpu.matmul %52, %54, %cst_63 {dimension_numbers = #tpu.dot_dimension_numbers<[1], [0], [0], [1], [0, 0, 1, 1], [], []>} : vector<64x128xbf16>, vector<128x128xbf16>, vector<64x128xf32> -> vector<64x128xf32>
    %56 = arith.addf %49, %55 : vector<64x128xf32>
    %c0_64 = arith.constant 0 : index
    %c0_65 = arith.constant 0 : index
    %c1_66 = arith.constant 1 : index
    %c1_67 = arith.constant 1 : index
    %c0_68 = arith.constant 0 : index
    %57 = vector.load %arg1[%c0_64, %c0_65, %c1_66, %c1_67, %c0_68] : memref<1x4x9x9x128xbf16, #tpu.memory_space<vmem>>, vector<1x1x8x8x128xbf16>
    %58 = vector.shape_cast %57 : vector<1x1x8x8x128xbf16> to vector<8x8x128xbf16>
    %59 = vector.shape_cast %58 : vector<8x8x128xbf16> to vector<64x128xbf16>
    %c8 = arith.constant 8 : index
    %c0_69 = arith.constant 0 : index
    %c0_70 = arith.constant 0 : index
    %60 = vector.load %arg2[%c8, %c0_69, %c0_70] : memref<9x128x128xbf16, #tpu.memory_space<vmem>>, vector<1x128x128xbf16>
    %61 = vector.shape_cast %60 : vector<1x128x128xbf16> to vector<128x128xbf16>
    %cst_71 = arith.constant dense<0.000000e+00> : vector<64x128xf32>
    %62 = tpu.matmul %59, %61, %cst_71 {dimension_numbers = #tpu.dot_dimension_numbers<[1], [0], [0], [1], [0, 0, 1, 1], [], []>} : vector<64x128xbf16>, vector<128x128xbf16>, vector<64x128xf32> -> vector<64x128xf32>
    %63 = arith.addf %56, %62 : vector<64x128xf32>
    %c0_72 = arith.constant 0 : index
    %c0_73 = arith.constant 0 : index
    %64 = vector.load %arg3[%c0_72, %c0_73] : memref<1x128xf32, #tpu.memory_space<vmem>>, vector<1x128xf32>
    %65 = vector.broadcast %64 : vector<1x128xf32> to vector<64x128xf32>
    %66 = arith.mulf %63, %65 : vector<64x128xf32>
    %c0_74 = arith.constant 0 : index
    %c0_75 = arith.constant 0 : index
    %67 = vector.load %arg4[%c0_74, %c0_75] : memref<1x128xf32, #tpu.memory_space<vmem>>, vector<1x128xf32>
    %68 = vector.broadcast %67 : vector<1x128xf32> to vector<64x128xf32>
    %69 = arith.addf %66, %68 : vector<64x128xf32>
    %cst_76 = arith.constant 0.000000e+00 : f32
    %70 = vector.broadcast %cst_76 : f32 to vector<64x128xf32>
    %71 = arith.maximumf %69, %70 : vector<64x128xf32>
    %72 = vector.shape_cast %71 : vector<64x128xf32> to vector<1x8x8x128xf32>
    %c0_77 = arith.constant 0 : index
    %c0_78 = arith.constant 0 : index
    %c0_79 = arith.constant 0 : index
    %c0_80 = arith.constant 0 : index
    %73 = vector.load %arg5[%c0_77, %c0_78, %c0_79, %c0_80] : memref<1x8x8x128xf32, #tpu.memory_space<vmem>>, vector<1x8x8x128xf32>
    tpu.vector_store %arg5[%c0_77, %c0_78, %c0_79, %c0_80], %72 {strides = array<i32>} : memref<1x8x8x128xf32, #tpu.memory_space<vmem>>, vector<1x8x8x128xf32>,
    return
  }
  func.func @transform_0(%arg0: i32) -> (i32, i32, i32, i32, i32) {
    %c0_i32 = arith.constant 0 : i32
    %c0_i32_0 = arith.constant 0 : i32
    %c0_i32_1 = arith.constant 0 : i32
    %c0_i32_2 = arith.constant 0 : i32
    %c0_i32_3 = arith.constant 0 : i32
    return %arg0, %c0_i32, %c0_i32_0, %c0_i32_1, %c0_i32_2 : i32, i32, i32, i32, i32
  }
  func.func @transform_1(%arg0: i32) -> (i32, i32, i32) {
    %c0_i32 = arith.constant 0 : i32
    %c0_i32_0 = arith.constant 0 : i32
    %c0_i32_1 = arith.constant 0 : i32
    %c0_i32_2 = arith.constant 0 : i32
    return %c0_i32, %c0_i32_0, %c0_i32_1 : i32, i32, i32
  }
  func.func @transform_2(%arg0: i32) -> (i32, i32) {
    %c0_i32 = arith.constant 0 : i32
    %c0_i32_0 = arith.constant 0 : i32
    %c0_i32_1 = arith.constant 0 : i32
    return %c0_i32, %c0_i32_0 : i32, i32
  }
  func.func @transform_3(%arg0: i32) -> (i32, i32) {
    %c0_i32 = arith.constant 0 : i32
    %c0_i32_0 = arith.constant 0 : i32
    %c0_i32_1 = arith.constant 0 : i32
    return %c0_i32, %c0_i32_0 : i32, i32
  }
  func.func @transform_4(%arg0: i32) -> (i32, i32, i32, i32) {
    %c0_i32 = arith.constant 0 : i32
    %c0_i32_0 = arith.constant 0 : i32
    %c0_i32_1 = arith.constant 0 : i32
    %c0_i32_2 = arith.constant 0 : i32
    return %arg0, %c0_i32, %c0_i32_0, %c0_i32_1 : i32, i32, i32, i32
  }
}

module attributes {stable_mosaic.version = 11 : i64} {
  func.func @conv3x3_s2_kernel(%arg0: i32, %arg1: memref<1x4x9x9x4xbf16, #tpu.memory_space<vmem>>, %arg2: memref<9x4x384xbf16, #tpu.memory_space<vmem>>, %arg3: memref<1x384xf32, #tpu.memory_space<vmem>>, %arg4: memref<1x384xf32, #tpu.memory_space<vmem>>, %arg5: memref<1x8x8x384xf32, #tpu.memory_space<vmem>>) attributes {dimension_semantics = [#tpu.dimension_semantics<parallel>], iteration_bounds = array<i64: 2>, scalar_prefetch = 0 : i64, scratch_operands = 0 : i64, tpu.core_type = #tpu.core_type<tc>, window_params = [{transform_indices = @transform_0, window_bounds = array<i64: 1, 4, 9, 9, 4>}, {pipeline_mode = #tpu.pipeline_mode<synchronous>, transform_indices = @transform_1, window_bounds = array<i64: 9, 4, 384>}, {pipeline_mode = #tpu.pipeline_mode<synchronous>, transform_indices = @transform_2, window_bounds = array<i64: 1, 384>}, {pipeline_mode = #tpu.pipeline_mode<synchronous>, transform_indices = @transform_3, window_bounds = array<i64: 1, 384>}, {transform_indices = @transform_4, window_bounds = array<i64: 1, 8, 8, 384>}]} {
    %cst = arith.constant 0.000000e+00 : f32
    %0 = vector.broadcast %cst : f32 to vector<64x384xf32>
    %c0 = arith.constant 0 : index
    %c0_0 = arith.constant 0 : index
    %c0_1 = arith.constant 0 : index
    %c0_2 = arith.constant 0 : index
    %c0_3 = arith.constant 0 : index
    %1 = vector.load %arg1[%c0, %c0_0, %c0_1, %c0_2, %c0_3] : memref<1x4x9x9x4xbf16, #tpu.memory_space<vmem>>, vector<1x1x8x8x4xbf16>
    %2 = vector.shape_cast %1 : vector<1x1x8x8x4xbf16> to vector<8x8x4xbf16>
    %3 = vector.shape_cast %2 : vector<8x8x4xbf16> to vector<64x4xbf16>
    %c0_4 = arith.constant 0 : index
    %c0_5 = arith.constant 0 : index
    %c0_6 = arith.constant 0 : index
    %4 = vector.load %arg2[%c0_4, %c0_5, %c0_6] : memref<9x4x384xbf16, #tpu.memory_space<vmem>>, vector<1x4x384xbf16>
    %5 = vector.shape_cast %4 : vector<1x4x384xbf16> to vector<4x384xbf16>
    %cst_7 = arith.constant dense<0.000000e+00> : vector<64x384xf32>
    %6 = tpu.matmul %3, %5, %cst_7 {dimension_numbers = #tpu.dot_dimension_numbers<[1], [0], [0], [1], [0, 0, 1, 1], [], []>} : vector<64x4xbf16>, vector<4x384xbf16>, vector<64x384xf32> -> vector<64x384xf32>
    %7 = arith.addf %0, %6 : vector<64x384xf32>
    %c0_8 = arith.constant 0 : index
    %c1 = arith.constant 1 : index
    %c0_9 = arith.constant 0 : index
    %c0_10 = arith.constant 0 : index
    %c0_11 = arith.constant 0 : index
    %8 = vector.load %arg1[%c0_8, %c1, %c0_9, %c0_10, %c0_11] : memref<1x4x9x9x4xbf16, #tpu.memory_space<vmem>>, vector<1x1x8x8x4xbf16>
    %9 = vector.shape_cast %8 : vector<1x1x8x8x4xbf16> to vector<8x8x4xbf16>
    %10 = vector.shape_cast %9 : vector<8x8x4xbf16> to vector<64x4xbf16>
    %c1_12 = arith.constant 1 : index
    %c0_13 = arith.constant 0 : index
    %c0_14 = arith.constant 0 : index
    %11 = vector.load %arg2[%c1_12, %c0_13, %c0_14] : memref<9x4x384xbf16, #tpu.memory_space<vmem>>, vector<1x4x384xbf16>
    %12 = vector.shape_cast %11 : vector<1x4x384xbf16> to vector<4x384xbf16>
    %cst_15 = arith.constant dense<0.000000e+00> : vector<64x384xf32>
    %13 = tpu.matmul %10, %12, %cst_15 {dimension_numbers = #tpu.dot_dimension_numbers<[1], [0], [0], [1], [0, 0, 1, 1], [], []>} : vector<64x4xbf16>, vector<4x384xbf16>, vector<64x384xf32> -> vector<64x384xf32>
    %14 = arith.addf %7, %13 : vector<64x384xf32>
    %c0_16 = arith.constant 0 : index
    %c0_17 = arith.constant 0 : index
    %c0_18 = arith.constant 0 : index
    %c1_19 = arith.constant 1 : index
    %c0_20 = arith.constant 0 : index
    %15 = vector.load %arg1[%c0_16, %c0_17, %c0_18, %c1_19, %c0_20] : memref<1x4x9x9x4xbf16, #tpu.memory_space<vmem>>, vector<1x1x8x8x4xbf16>
    %16 = vector.shape_cast %15 : vector<1x1x8x8x4xbf16> to vector<8x8x4xbf16>
    %17 = vector.shape_cast %16 : vector<8x8x4xbf16> to vector<64x4xbf16>
    %c2 = arith.constant 2 : index
    %c0_21 = arith.constant 0 : index
    %c0_22 = arith.constant 0 : index
    %18 = vector.load %arg2[%c2, %c0_21, %c0_22] : memref<9x4x384xbf16, #tpu.memory_space<vmem>>, vector<1x4x384xbf16>
    %19 = vector.shape_cast %18 : vector<1x4x384xbf16> to vector<4x384xbf16>
    %cst_23 = arith.constant dense<0.000000e+00> : vector<64x384xf32>
    %20 = tpu.matmul %17, %19, %cst_23 {dimension_numbers = #tpu.dot_dimension_numbers<[1], [0], [0], [1], [0, 0, 1, 1], [], []>} : vector<64x4xbf16>, vector<4x384xbf16>, vector<64x384xf32> -> vector<64x384xf32>
    %21 = arith.addf %14, %20 : vector<64x384xf32>
    %c0_24 = arith.constant 0 : index
    %c2_25 = arith.constant 2 : index
    %c0_26 = arith.constant 0 : index
    %c0_27 = arith.constant 0 : index
    %c0_28 = arith.constant 0 : index
    %22 = vector.load %arg1[%c0_24, %c2_25, %c0_26, %c0_27, %c0_28] : memref<1x4x9x9x4xbf16, #tpu.memory_space<vmem>>, vector<1x1x8x8x4xbf16>
    %23 = vector.shape_cast %22 : vector<1x1x8x8x4xbf16> to vector<8x8x4xbf16>
    %24 = vector.shape_cast %23 : vector<8x8x4xbf16> to vector<64x4xbf16>
    %c3 = arith.constant 3 : index
    %c0_29 = arith.constant 0 : index
    %c0_30 = arith.constant 0 : index
    %25 = vector.load %arg2[%c3, %c0_29, %c0_30] : memref<9x4x384xbf16, #tpu.memory_space<vmem>>, vector<1x4x384xbf16>
    %26 = vector.shape_cast %25 : vector<1x4x384xbf16> to vector<4x384xbf16>
    %cst_31 = arith.constant dense<0.000000e+00> : vector<64x384xf32>
    %27 = tpu.matmul %24, %26, %cst_31 {dimension_numbers = #tpu.dot_dimension_numbers<[1], [0], [0], [1], [0, 0, 1, 1], [], []>} : vector<64x4xbf16>, vector<4x384xbf16>, vector<64x384xf32> -> vector<64x384xf32>
    %28 = arith.addf %21, %27 : vector<64x384xf32>
    %c0_32 = arith.constant 0 : index
    %c3_33 = arith.constant 3 : index
    %c0_34 = arith.constant 0 : index
    %c0_35 = arith.constant 0 : index
    %c0_36 = arith.constant 0 : index
    %29 = vector.load %arg1[%c0_32, %c3_33, %c0_34, %c0_35, %c0_36] : memref<1x4x9x9x4xbf16, #tpu.memory_space<vmem>>, vector<1x1x8x8x4xbf16>
    %30 = vector.shape_cast %29 : vector<1x1x8x8x4xbf16> to vector<8x8x4xbf16>
    %31 = vector.shape_cast %30 : vector<8x8x4xbf16> to vector<64x4xbf16>
    %c4 = arith.constant 4 : index
    %c0_37 = arith.constant 0 : index
    %c0_38 = arith.constant 0 : index
    %32 = vector.load %arg2[%c4, %c0_37, %c0_38] : memref<9x4x384xbf16, #tpu.memory_space<vmem>>, vector<1x4x384xbf16>
    %33 = vector.shape_cast %32 : vector<1x4x384xbf16> to vector<4x384xbf16>
    %cst_39 = arith.constant dense<0.000000e+00> : vector<64x384xf32>
    %34 = tpu.matmul %31, %33, %cst_39 {dimension_numbers = #tpu.dot_dimension_numbers<[1], [0], [0], [1], [0, 0, 1, 1], [], []>} : vector<64x4xbf16>, vector<4x384xbf16>, vector<64x384xf32> -> vector<64x384xf32>
    %35 = arith.addf %28, %34 : vector<64x384xf32>
    %c0_40 = arith.constant 0 : index
    %c2_41 = arith.constant 2 : index
    %c0_42 = arith.constant 0 : index
    %c1_43 = arith.constant 1 : index
    %c0_44 = arith.constant 0 : index
    %36 = vector.load %arg1[%c0_40, %c2_41, %c0_42, %c1_43, %c0_44] : memref<1x4x9x9x4xbf16, #tpu.memory_space<vmem>>, vector<1x1x8x8x4xbf16>
    %37 = vector.shape_cast %36 : vector<1x1x8x8x4xbf16> to vector<8x8x4xbf16>
    %38 = vector.shape_cast %37 : vector<8x8x4xbf16> to vector<64x4xbf16>
    %c5 = arith.constant 5 : index
    %c0_45 = arith.constant 0 : index
    %c0_46 = arith.constant 0 : index
    %39 = vector.load %arg2[%c5, %c0_45, %c0_46] : memref<9x4x384xbf16, #tpu.memory_space<vmem>>, vector<1x4x384xbf16>
    %40 = vector.shape_cast %39 : vector<1x4x384xbf16> to vector<4x384xbf16>
    %cst_47 = arith.constant dense<0.000000e+00> : vector<64x384xf32>
    %41 = tpu.matmul %38, %40, %cst_47 {dimension_numbers = #tpu.dot_dimension_numbers<[1], [0], [0], [1], [0, 0, 1, 1], [], []>} : vector<64x4xbf16>, vector<4x384xbf16>, vector<64x384xf32> -> vector<64x384xf32>
    %42 = arith.addf %35, %41 : vector<64x384xf32>
    %c0_48 = arith.constant 0 : index
    %c0_49 = arith.constant 0 : index
    %c1_50 = arith.constant 1 : index
    %c0_51 = arith.constant 0 : index
    %c0_52 = arith.constant 0 : index
    %43 = vector.load %arg1[%c0_48, %c0_49, %c1_50, %c0_51, %c0_52] : memref<1x4x9x9x4xbf16, #tpu.memory_space<vmem>>, vector<1x1x8x8x4xbf16>
    %44 = vector.shape_cast %43 : vector<1x1x8x8x4xbf16> to vector<8x8x4xbf16>
    %45 = vector.shape_cast %44 : vector<8x8x4xbf16> to vector<64x4xbf16>
    %c6 = arith.constant 6 : index
    %c0_53 = arith.constant 0 : index
    %c0_54 = arith.constant 0 : index
    %46 = vector.load %arg2[%c6, %c0_53, %c0_54] : memref<9x4x384xbf16, #tpu.memory_space<vmem>>, vector<1x4x384xbf16>
    %47 = vector.shape_cast %46 : vector<1x4x384xbf16> to vector<4x384xbf16>
    %cst_55 = arith.constant dense<0.000000e+00> : vector<64x384xf32>
    %48 = tpu.matmul %45, %47, %cst_55 {dimension_numbers = #tpu.dot_dimension_numbers<[1], [0], [0], [1], [0, 0, 1, 1], [], []>} : vector<64x4xbf16>, vector<4x384xbf16>, vector<64x384xf32> -> vector<64x384xf32>
    %49 = arith.addf %42, %48 : vector<64x384xf32>
    %c0_56 = arith.constant 0 : index
    %c1_57 = arith.constant 1 : index
    %c1_58 = arith.constant 1 : index
    %c0_59 = arith.constant 0 : index
    %c0_60 = arith.constant 0 : index
    %50 = vector.load %arg1[%c0_56, %c1_57, %c1_58, %c0_59, %c0_60] : memref<1x4x9x9x4xbf16, #tpu.memory_space<vmem>>, vector<1x1x8x8x4xbf16>
    %51 = vector.shape_cast %50 : vector<1x1x8x8x4xbf16> to vector<8x8x4xbf16>
    %52 = vector.shape_cast %51 : vector<8x8x4xbf16> to vector<64x4xbf16>
    %c7 = arith.constant 7 : index
    %c0_61 = arith.constant 0 : index
    %c0_62 = arith.constant 0 : index
    %53 = vector.load %arg2[%c7, %c0_61, %c0_62] : memref<9x4x384xbf16, #tpu.memory_space<vmem>>, vector<1x4x384xbf16>
    %54 = vector.shape_cast %53 : vector<1x4x384xbf16> to vector<4x384xbf16>
    %cst_63 = arith.constant dense<0.000000e+00> : vector<64x384xf32>
    %55 = tpu.matmul %52, %54, %cst_63 {dimension_numbers = #tpu.dot_dimension_numbers<[1], [0], [0], [1], [0, 0, 1, 1], [], []>} : vector<64x4xbf16>, vector<4x384xbf16>, vector<64x384xf32> -> vector<64x384xf32>
    %56 = arith.addf %49, %55 : vector<64x384xf32>
    %c0_64 = arith.constant 0 : index
    %c0_65 = arith.constant 0 : index
    %c1_66 = arith.constant 1 : index
    %c1_67 = arith.constant 1 : index
    %c0_68 = arith.constant 0 : index
    %57 = vector.load %arg1[%c0_64, %c0_65, %c1_66, %c1_67, %c0_68] : memref<1x4x9x9x4xbf16, #tpu.memory_space<vmem>>, vector<1x1x8x8x4xbf16>
    %58 = vector.shape_cast %57 : vector<1x1x8x8x4xbf16> to vector<8x8x4xbf16>
    %59 = vector.shape_cast %58 : vector<8x8x4xbf16> to vector<64x4xbf16>
    %c8 = arith.constant 8 : index
    %c0_69 = arith.constant 0 : index
    %c0_70 = arith.constant 0 : index
    %60 = vector.load %arg2[%c8, %c0_69, %c0_70] : memref<9x4x384xbf16, #tpu.memory_space<vmem>>, vector<1x4x384xbf16>
    %61 = vector.shape_cast %60 : vector<1x4x384xbf16> to vector<4x384xbf16>
    %cst_71 = arith.constant dense<0.000000e+00> : vector<64x384xf32>
    %62 = tpu.matmul %59, %61, %cst_71 {dimension_numbers = #tpu.dot_dimension_numbers<[1], [0], [0], [1], [0, 0, 1, 1], [], []>} : vector<64x4xbf16>, vector<4x384xbf16>, vector<64x384xf32> -> vector<64x384xf32>
    %63 = arith.addf %56, %62 : vector<64x384xf32>
    %c0_72 = arith.constant 0 : index
    %c0_73 = arith.constant 0 : index
    %64 = vector.load %arg3[%c0_72, %c0_73] : memref<1x384xf32, #tpu.memory_space<vmem>>, vector<1x384xf32>
    %65 = vector.broadcast %64 : vector<1x384xf32> to vector<64x384xf32>
    %66 = arith.mulf %63, %65 : vector<64x384xf32>
    %c0_74 = arith.constant 0 : index
    %c0_75 = arith.constant 0 : index
    %67 = vector.load %arg4[%c0_74, %c0_75] : memref<1x384xf32, #tpu.memory_space<vmem>>, vector<1x384xf32>
    %68 = vector.broadcast %67 : vector<1x384xf32> to vector<64x384xf32>
    %69 = arith.addf %66, %68 : vector<64x384xf32>
    %cst_76 = arith.constant 0.000000e+00 : f32
    %70 = vector.broadcast %cst_76 : f32 to vector<64x384xf32>
    %71 = arith.maximumf %69, %70 : vector<64x384xf32>
    %72 = vector.shape_cast %71 : vector<64x384xf32> to vector<1x8x8x384xf32>
    %c0_77 = arith.constant 0 : index
    %c0_78 = arith.constant 0 : index
    %c0_79 = arith.constant 0 : index
    %c0_80 = arith.constant 0 : index
    %73 = vector.load %arg5[%c0_77, %c0_78, %c0_79, %c0_80] : memref<1x8x8x384xf32, #tpu.memory_space<vmem>>, vector<1x8x8x384xf32>
    tpu.vector_store %arg5[%c0_77, %c0_78, %c0_79, %c0_80], %72 {strides = array<i32>} : memref<1x8x8x384xf32, #tpu.memory_space<vmem>>, vector<1x8x8x384xf32>,
    return
  }
  func.func @transform_0(%arg0: i32) -> (i32, i32, i32, i32, i32) {
    %c0_i32 = arith.constant 0 : i32
    %c0_i32_0 = arith.constant 0 : i32
    %c0_i32_1 = arith.constant 0 : i32
    %c0_i32_2 = arith.constant 0 : i32
    %c0_i32_3 = arith.constant 0 : i32
    return %arg0, %c0_i32, %c0_i32_0, %c0_i32_1, %c0_i32_2 : i32, i32, i32, i32, i32
  }
  func.func @transform_1(%arg0: i32) -> (i32, i32, i32) {
    %c0_i32 = arith.constant 0 : i32
    %c0_i32_0 = arith.constant 0 : i32
    %c0_i32_1 = arith.constant 0 : i32
    %c0_i32_2 = arith.constant 0 : i32
    return %c0_i32, %c0_i32_0, %c0_i32_1 : i32, i32, i32
  }
  func.func @transform_2(%arg0: i32) -> (i32, i32) {
    %c0_i32 = arith.constant 0 : i32
    %c0_i32_0 = arith.constant 0 : i32
    %c0_i32_1 = arith.constant 0 : i32
    return %c0_i32, %c0_i32_0 : i32, i32
  }
  func.func @transform_3(%arg0: i32) -> (i32, i32) {
    %c0_i32 = arith.constant 0 : i32
    %c0_i32_0 = arith.constant 0 : i32
    %c0_i32_1 = arith.constant 0 : i32
    return %c0_i32, %c0_i32_0 : i32, i32
  }
  func.func @transform_4(%arg0: i32) -> (i32, i32, i32, i32) {
    %c0_i32 = arith.constant 0 : i32
    %c0_i32_0 = arith.constant 0 : i32
    %c0_i32_1 = arith.constant 0 : i32
    %c0_i32_2 = arith.constant 0 : i32
    return %arg0, %c0_i32, %c0_i32_0, %c0_i32_1 : i32, i32, i32, i32
  }
}

</mosaic_0001>

<llo_original>
// kernel: inception_b_forward.7
$region0: #{inception_b_forward.7}
  #allocation0 [shape = 'u32[]', space=smem, size = 0x4, offset = 0x4, fixed_abs, tag = 'smem constant byte address 0x4 - core index']
  #allocation1 [shape = 'u32[144,128]{1,0:T(1,128)}', space=vmem, size = 0x12000, scoped, tag = 'internal scratch']
  %s0 = inlined_call_operand.vmem [shape: f32[2,4,9,9,4], index: 0, kind: input, shape index: {}]
  %s1 = inlined_call_operand.vmem [shape: f32[2,8,8,4], index: 1, kind: output, shape index: {}]
  %s2 = sld [smem:[#allocation0]]
  $region37: #{inception_b_forward.7} parent=0
    _
  %s4 = ssub.s32 1, %s2
  %s5 = scalar_select 0, %s4, %s2
  loop: start=0, step=1, limit=4
  $region2: #{inception_b_forward.7} parent=0 // loop_pre_header
    _
  $region3: #{inception_b_forward.7} parent=0 // loop_header
    %s7 = sphi 0, %s11
    %p8 = scmp.ge.s32.totalorder %s7, 4
    %s17 = sphi 0, %s19
    %s20 = sphi 0, %s17
    %s21 = sphi 0, %s20
    %s37 = sphi 0, %s21
    %s43 = sphi 0, %s45
    %s46 = sphi 0, %s43
    %s47 = sphi 0, %s46
    %s63 = sphi 0, %s47
  $region4: #{inception_b_forward.7} parent=0 // loop_header_branch
    %10 = sbr.rel (%p8) target = $region8
  $region5: #{inception_b_forward.7} parent=0 // loop_body
    %s12 = ssub.s32 %s7, 1
    %s13 = ssub.s32 %s7, 2
    %s14 = sadd.s32 %s7, 1
    %s15 = ssub.s32 %s7, %s14
    %p16 = scmp.eq.s32.totalorder %s15, 0
    %s18 = sadd.s32 %s17, 1
    %s19 = scalar_select %p16, %s17, %s18
    %p22 = pneg %p16
    %p23 = scmp.eq.s32.totalorder %s7, 1
    %p24 = por %p22, %p23
    %p25 = scmp.ne.s32.totalorder %s17, %s20
    %p26 = scmp.eq.s32.totalorder %s7, 0
    %p27 = por %p25, %p26
    %p28 = scmp.ne.s32.totalorder %s17, %s20
    %p29 = scmp.eq.s32.totalorder %s12, 1
    %p30 = por %p28, %p29
    %p31 = scmp.ne.s32.totalorder %s20, %s21
    %p32 = scmp.eq.s32.totalorder %s12, 0
    %p33 = por %p31, %p32
    %p34 = scmp.ne.s32.totalorder %s20, %s21
    %p35 = scmp.eq.s32.totalorder %s13, 1
    %p36 = por %p34, %p35
    %p38 = scmp.ne.s32.totalorder %s21, %s37
    %p39 = scmp.eq.s32.totalorder %s13, 0
    %p40 = por %p38, %p39
    %s41 = ssub.s32 %s7, %s14
    %p42 = scmp.eq.s32.totalorder %s41, 0
    %s44 = sadd.s32 %s43, 1
    %s45 = scalar_select %p42, %s43, %s44
    %p48 = pneg %p42
    %p49 = scmp.eq.s32.totalorder %s7, 1
    %p50 = por %p48, %p49
    %p51 = scmp.ne.s32.totalorder %s43, %s46
    %p52 = scmp.eq.s32.totalorder %s7, 0
    %p53 = por %p51, %p52
    %p54 = scmp.ne.s32.totalorder %s43, %s46
    %p55 = scmp.eq.s32.totalorder %s12, 1
    %p56 = por %p54, %p55
    %p57 = scmp.ne.s32.totalorder %s46, %s47
    %p58 = scmp.eq.s32.totalorder %s12, 0
    %p59 = por %p57, %p58
    %p60 = scmp.ne.s32.totalorder %s46, %s47
    %p61 = scmp.eq.s32.totalorder %s13, 1
    %p62 = por %p60, %p61
    %p64 = scmp.ne.s32.totalorder %s47, %s63
    %p65 = scmp.eq.s32.totalorder %s13, 0
    %p66 = por %p64, %p65
    %p67 = scmp.le.s32.totalorder 1, %s7
    %p68 = scmp.lt.s32.totalorder %s7, 3
    %p69 = pnand %p67, %p68
    %p70 = pneg %p69
    // Predicated region
    $region9: #{inception_b_forward.7} parent=5 // pred_check
      _
    $region10: #{inception_b_forward.7} parent=5 // pred_check_branch
      %72 = sbr.rel (%p69) target = $region12
    $region11: #{inception_b_forward.7} parent=5 // pred_region
      %s73 = ssub.s32 %s7, 1
    $region12: #{inception_b_forward.7} parent=5 // pred_fallthru
      _
    %p74 = scmp.lt.s32.totalorder %s7, 2
    // Predicated region
    $region13: #{inception_b_forward.7} parent=5 // pred_check
      %p75 = pneg %p74
    $region14: #{inception_b_forward.7} parent=5 // pred_check_branch
      %77 = sbr.rel (%p75) target = $region16
    $region15: #{inception_b_forward.7} parent=5 // pred_region
      // Predicated region
      $region17: #{inception_b_forward.7} parent=15 // pred_check
        %p78 = pneg %p27
      $region18: #{inception_b_forward.7} parent=15 // pred_check_branch
        %80 = sbr.rel (%p78) target = $region20
      $region19: #{inception_b_forward.7} parent=15 // pred_region
        %p81 = scmp.lt.s32.totalorder %s7, 1
        %s82 = scalar_select %p81, %s7, 1
        %s83 = smul.addr %s82, 72
        %s84 = smul.addr %s83, 8
        %s85 = scalar_lea.vmem %s0, %s84
      $region20: #{inception_b_forward.7} parent=15 // pred_fallthru
        _
    $region16: #{inception_b_forward.7} parent=5 // pred_fallthru
      _
    %p86 = scmp.le.s32.totalorder 1, %s7
    %p87 = scmp.lt.s32.totalorder %s7, 3
    %p88 = pnand %p86, %p87
    %p89 = pneg %p88
    // Predicated region
    $region21: #{inception_b_forward.7} parent=5 // pred_check
      _
    $region22: #{inception_b_forward.7} parent=5 // pred_check_branch
      %91 = sbr.rel (%p88) target = $region24
    $region23: #{inception_b_forward.7} parent=5 // pred_region
      %s92 = ssub.s32 %s7, 1
      %p93 = scmp.lt.s32.totalorder %s12, 1
      %s94 = scalar_select %p93, %s12, 1
      %s95 = smul.addr %s94, 72
      %s96 = smul.addr %s95, 8
      %s97 = scalar_lea.vmem %s0, %s96
      %p98 = pneg %p33
      %p99 = pneg %p30
      %p100 = pneg %p59
      %p101 = pneg %p56
      %p102 = scmp.lt.s32.totalorder %s12, 1
      %s103 = scalar_select %p102, %s12, 1
      %s104 = smul.addr %s103, 8
      %s105 = smul.addr %s104, 8
      %s106 = scalar_lea.vmem %s1, %s105
      %p107 = scmp.lt.s32.totalorder %s12, 1
      %s108 = scalar_select %p107, %s12, 1
      %s109 = smul.addr %s108, 72
      %s110 = smul.addr %s109, 8
      %s111 = scalar_lea.vmem %s0, %s110
      %p112 = scmp.lt.s32.totalorder %s12, 1
      %s113 = scalar_select %p112, %s12, 1
      %s114 = smul.addr %s113, 8
      %s115 = smul.addr %s114, 8
      %s116 = scalar_lea.vmem %s1, %s115
      %v117 = vld [vmem:[%s111] sm:$0xff]
      %v118 = vld [vmem:[%s111 + $0x10] sm:$0xff]
      %v119 = vld [vmem:[%s111 + $0x20] sm:$0xff]
      %v120 = vld [vmem:[%s111 + $0x30] sm:$0xff]
      %v121 = vld [vmem:[%s111 + $0x40] sm:$0xff]
      %v122 = vld [vmem:[%s111 + $0x50] sm:$0xff]
      %v123 = vld [vmem:[%s111 + $0x60] sm:$0xff]
      %v124 = vld [vmem:[%s111 + $0x70] sm:$0xff]
      %s125 = scalar_lea.vmem %s111, 144
      %v126 = vld [vmem:[%s125] sm:$0xff]
      %v127 = vld [vmem:[%s125 + $0x10] sm:$0xff]
      %v128 = vld [vmem:[%s125 + $0x20] sm:$0xff]
      %v129 = vld [vmem:[%s125 + $0x30] sm:$0xff]
      %v130 = vld [vmem:[%s125 + $0x40] sm:$0xff]
      %v131 = vld [vmem:[%s125 + $0x50] sm:$0xff]
      %v132 = vld [vmem:[%s125 + $0x60] sm:$0xff]
      %v133 = vld [vmem:[%s125 + $0x70] sm:$0xff]
      %v134 = vmax.f32 %v117, %v126
      %v135 = vmax.f32 %v118, %v127
      %v136 = vmax.f32 %v119, %v128
      %v137 = vmax.f32 %v120, %v129
      %v138 = vmax.f32 %v121, %v130
      %v139 = vmax.f32 %v122, %v131
      %v140 = vmax.f32 %v123, %v132
      %v141 = vmax.f32 %v124, %v133
      %v142 = vld [vmem:[%s111 + $0x1] sm:$0xff]
      %v143 = vld [vmem:[%s111 + $0x11] sm:$0xff]
      %v144 = vld [vmem:[%s111 + $0x21] sm:$0xff]
      %v145 = vld [vmem:[%s111 + $0x31] sm:$0xff]
      %v146 = vld [vmem:[%s111 + $0x41] sm:$0xff]
      %v147 = vld [vmem:[%s111 + $0x51] sm:$0xff]
      %v148 = vld [vmem:[%s111 + $0x61] sm:$0xff]
      %v149 = vld [vmem:[%s111 + $0x71] sm:$0xff]
      %v150 = vmax.f32 %v134, %v142
      %v151 = vmax.f32 %v135, %v143
      %v152 = vmax.f32 %v136, %v144
      %v153 = vmax.f32 %v137, %v145
      %v154 = vmax.f32 %v138, %v146
      %v155 = vmax.f32 %v139, %v147
      %v156 = vmax.f32 %v140, %v148
      %v157 = vmax.f32 %v141, %v149
      %s158 = scalar_lea.vmem %s111, 288
      %v159 = vld [vmem:[%s158] sm:$0xff]
      %v160 = vld [vmem:[%s158 + $0x10] sm:$0xff]
      %v161 = vld [vmem:[%s158 + $0x20] sm:$0xff]
      %v162 = vld [vmem:[%s158 + $0x30] sm:$0xff]
      %v163 = vld [vmem:[%s158 + $0x40] sm:$0xff]
      %v164 = vld [vmem:[%s158 + $0x50] sm:$0xff]
      %v165 = vld [vmem:[%s158 + $0x60] sm:$0xff]
      %v166 = vld [vmem:[%s158 + $0x70] sm:$0xff]
      %v167 = vmax.f32 %v150, %v159
      %v168 = vmax.f32 %v151, %v160
      %v169 = vmax.f32 %v152, %v161
      %v170 = vmax.f32 %v153, %v162
      %v171 = vmax.f32 %v154, %v163
      %v172 = vmax.f32 %v155, %v164
      %v173 = vmax.f32 %v156, %v165
      %v174 = vmax.f32 %v157, %v166
      %s175 = scalar_lea.vmem %s111, 432
      %v176 = vld [vmem:[%s175] sm:$0xff]
      %v177 = vld [vmem:[%s175 + $0x10] sm:$0xff]
      %v178 = vld [vmem:[%s175 + $0x20] sm:$0xff]
      %v179 = vld [vmem:[%s175 + $0x30] sm:$0xff]
      %v180 = vld [vmem:[%s175 + $0x40] sm:$0xff]
      %v181 = vld [vmem:[%s175 + $0x50] sm:$0xff]
      %v182 = vld [vmem:[%s175 + $0x60] sm:$0xff]
      %v183 = vld [vmem:[%s175 + $0x70] sm:$0xff]
      %v184 = vmax.f32 %v167, %v176
      %v185 = vmax.f32 %v168, %v177
      %v186 = vmax.f32 %v169, %v178
      %v187 = vmax.f32 %v170, %v179
      %v188 = vmax.f32 %v171, %v180
      %v189 = vmax.f32 %v172, %v181
      %v190 = vmax.f32 %v173, %v182
      %v191 = vmax.f32 %v174, %v183
      %v192 = vld [vmem:[%s158 + $0x1] sm:$0xff]
      %v193 = vld [vmem:[%s158 + $0x11] sm:$0xff]
      %v194 = vld [vmem:[%s158 + $0x21] sm:$0xff]
      %v195 = vld [vmem:[%s158 + $0x31] sm:$0xff]
      %v196 = vld [vmem:[%s158 + $0x41] sm:$0xff]
      %v197 = vld [vmem:[%s158 + $0x51] sm:$0xff]
      %v198 = vld [vmem:[%s158 + $0x61] sm:$0xff]
      %v199 = vld [vmem:[%s158 + $0x71] sm:$0xff]
      %v200 = vmax.f32 %v184, %v192
      %v201 = vmax.f32 %v185, %v193
      %v202 = vmax.f32 %v186, %v194
      %v203 = vmax.f32 %v187, %v195
      %v204 = vmax.f32 %v188, %v196
      %v205 = vmax.f32 %v189, %v197
      %v206 = vmax.f32 %v190, %v198
      %v207 = vmax.f32 %v191, %v199
      %s208 = scalar_lea.vmem %s111, 16
      %v209 = vld [vmem:[%s208] sm:$0xff]
      %v210 = vld [vmem:[%s208 + $0x10] sm:$0xff]
      %v211 = vld [vmem:[%s208 + $0x20] sm:$0xff]
      %v212 = vld [vmem:[%s208 + $0x30] sm:$0xff]
      %v213 = vld [vmem:[%s208 + $0x40] sm:$0xff]
      %v214 = vld [vmem:[%s208 + $0x50] sm:$0xff]
      %v215 = vld [vmem:[%s208 + $0x60] sm:$0xff]
      %v216 = vld [vmem:[%s208 + $0x70] sm:$0xff]
      %v217 = vmax.f32 %v200, %v209
      %v218 = vmax.f32 %v201, %v210
      %v219 = vmax.f32 %v202, %v211
      %v220 = vmax.f32 %v203, %v212
      %v221 = vmax.f32 %v204, %v213
      %v222 = vmax.f32 %v205, %v214
      %v223 = vmax.f32 %v206, %v215
      %v224 = vmax.f32 %v207, %v216
      %s225 = scalar_lea.vmem %s111, 160
      %v226 = vld [vmem:[%s225] sm:$0xff]
      %v227 = vld [vmem:[%s225 + $0x10] sm:$0xff]
      %v228 = vld [vmem:[%s225 + $0x20] sm:$0xff]
      %v229 = vld [vmem:[%s225 + $0x30] sm:$0xff]
      %v230 = vld [vmem:[%s225 + $0x40] sm:$0xff]
      %v231 = vld [vmem:[%s225 + $0x50] sm:$0xff]
      %v232 = vld [vmem:[%s225 + $0x60] sm:$0xff]
      %v233 = vld [vmem:[%s225 + $0x70] sm:$0xff]
      %v234 = vmax.f32 %v217, %v226
      %v235 = vmax.f32 %v218, %v227
      %v236 = vmax.f32 %v219, %v228
      %v237 = vmax.f32 %v220, %v229
      %v238 = vmax.f32 %v221, %v230
      %v239 = vmax.f32 %v222, %v231
      %v240 = vmax.f32 %v223, %v232
      %v241 = vmax.f32 %v224, %v233
      %v242 = vld [vmem:[%s208 + $0x1] sm:$0xff]
      %v243 = vld [vmem:[%s208 + $0x11] sm:$0xff]
      %v244 = vld [vmem:[%s208 + $0x21] sm:$0xff]
      %v245 = vld [vmem:[%s208 + $0x31] sm:$0xff]
      %v246 = vld [vmem:[%s208 + $0x41] sm:$0xff]
      %v247 = vld [vmem:[%s208 + $0x51] sm:$0xff]
      %v248 = vld [vmem:[%s208 + $0x61] sm:$0xff]
      %v249 = vld [vmem:[%s208 + $0x71] sm:$0xff]
      %v250 = vmax.f32 %v234, %v242
      %v251 = vmax.f32 %v235, %v243
      %v252 = vmax.f32 %v236, %v244
      %v253 = vmax.f32 %v237, %v245
      %v254 = vmax.f32 %v238, %v246
      %v255 = vmax.f32 %v239, %v247
      %v256 = vmax.f32 %v240, %v248
      %v257 = vmax.f32 %v241, %v249
      %vm258 = vcmask 31744
      %259 = vst.msk [vmem:[%s116] sm:$0xff] %vm258, %v250
      %260 = vst.msk [vmem:[%s116 + $0x8] sm:$0xff] %vm258, %v251
      %261 = vst.msk [vmem:[%s116 + $0x10] sm:$0xff] %vm258, %v252
      %262 = vst.msk [vmem:[%s116 + $0x18] sm:$0xff] %vm258, %v253
      %263 = vst.msk [vmem:[%s116 + $0x20] sm:$0xff] %vm258, %v254
      %264 = vst.msk [vmem:[%s116 + $0x28] sm:$0xff] %vm258, %v255
      %265 = vst.msk [vmem:[%s116 + $0x30] sm:$0xff] %vm258, %v256
      %266 = vst.msk [vmem:[%s116 + $0x38] sm:$0xff] %vm258, %v257
      %p267 = scmp.lt.s32.totalorder %s12, 1
      %s268 = scalar_select %p267, %s12, 1
      %s269 = smul.addr %s268, 8
      %s270 = smul.addr %s269, 8
      %s271 = scalar_lea.vmem %s1, %s270
      // Predicated region
      $region25: #{inception_b_forward.7} parent=23 // pred_check
        %p272 = pneg %p56
      $region26: #{inception_b_forward.7} parent=23 // pred_check_branch
        %274 = sbr.rel (%p272) target = $region28
      $region27: #{inception_b_forward.7} parent=23 // pred_region
        _
      $region28: #{inception_b_forward.7} parent=23 // pred_fallthru
        _
    $region24: #{inception_b_forward.7} parent=5 // pred_fallthru
      _
    %p275 = scmp.le.s32.totalorder 2, %s7
    // Predicated region
    $region29: #{inception_b_forward.7} parent=5 // pred_check
      %p276 = pneg %p275
    $region30: #{inception_b_forward.7} parent=5 // pred_check_branch
      %278 = sbr.rel (%p276) target = $region32
    $region31: #{inception_b_forward.7} parent=5 // pred_region
      %s279 = ssub.s32 %s7, 2
      // Predicated region
      $region33: #{inception_b_forward.7} parent=31 // pred_check
        %p280 = pneg %p62
      $region34: #{inception_b_forward.7} parent=31 // pred_check_branch
        %282 = sbr.rel (%p280) target = $region36
      $region35: #{inception_b_forward.7} parent=31 // pred_region
        %p283 = scmp.lt.s32.totalorder %s13, 1
        %s284 = scalar_select %p283, %s13, 1
        %s285 = smul.addr %s284, 8
        %s286 = smul.addr %s285, 8
        %s287 = scalar_lea.vmem %s1, %s286
      $region36: #{inception_b_forward.7} parent=31 // pred_fallthru
        _
    $region32: #{inception_b_forward.7} parent=5 // pred_fallthru
      _
  $region6: #{inception_b_forward.7} parent=0 // loop_footer
    %s11 = sadd.s32 1, %s7
  $region7: #{inception_b_forward.7} parent=0 // loop_footer_branch
    %6 = sbr.rel target = $region3
  $region8: #{inception_b_forward.7} parent=0 // loop_exit
    _

// kernel: inception_b_forward.5
$region0: #{inception_b_forward.5}
  #allocation0 [shape = 'u32[]', space=smem, size = 0x4, offset = 0x4, fixed_abs, tag = 'smem constant byte address 0x4 - core index']
  #allocation1 [shape = 'u32[144,128]{1,0:T(1,128)}', space=vmem, size = 0x12000, scoped, tag = 'internal scratch']
  #allocation2 [shape = 'bf16[18,18,64]{2,1,0:T(8,128)(2,1)}', space=vmem, size = 0x1b000, scoped, tag = 'scratch operand']
  %s0 = inlined_call_operand.vmem [shape: bf16[2,16,16,4], index: 0, kind: input, shape index: {}]
  %s1 = inlined_call_operand.vmem [shape: bf16[4,64], index: 1, kind: input, shape index: {}]
  %s2 = inlined_call_operand.vmem [shape: f32[1,64], index: 2, kind: input, shape index: {}]
  %s3 = inlined_call_operand.vmem [shape: f32[1,64], index: 3, kind: input, shape index: {}]
  %s4 = inlined_call_operand.vmem [shape: bf16[9,64,128], index: 4, kind: input, shape index: {}]
  %s5 = inlined_call_operand.vmem [shape: f32[1,128], index: 5, kind: input, shape index: {}]
  %s6 = inlined_call_operand.vmem [shape: f32[1,128], index: 6, kind: input, shape index: {}]
  %s7 = inlined_call_operand.vmem [shape: bf16[2,16,16,128], index: 7, kind: output, shape index: {}]
  %s8 = sld [smem:[#allocation0]]
  $region61: #{inception_b_forward.5} parent=0
    _
  %s10 = ssub.s32 1, %s8
  %s11 = scalar_select 0, %s10, %s8
  loop: start=0, step=1, limit=4
  $region2: #{inception_b_forward.5} parent=0 // loop_pre_header
    _
  $region3: #{inception_b_forward.5} parent=0 // loop_header
    %s13 = sphi 0, %s17
    %p14 = scmp.ge.s32.totalorder %s13, 4
    %s23 = sphi 0, %s25
    %s26 = sphi 0, %s23
    %s27 = sphi 0, %s26
    %s43 = sphi 0, %s27
    %s47 = sphi 0, %s47
    %s49 = sphi 0, %s47
    %s50 = sphi 0, %s49
    %s64 = sphi 0, %s50
    %s68 = sphi 0, %s68
    %s70 = sphi 0, %s68
    %s71 = sphi 0, %s70
    %s85 = sphi 0, %s71
    %s89 = sphi 0, %s89
    %s91 = sphi 0, %s89
    %s92 = sphi 0, %s91
    %s106 = sphi 0, %s92
    %s110 = sphi 0, %s110
    %s112 = sphi 0, %s110
    %s113 = sphi 0, %s112
    %s127 = sphi 0, %s113
    %s131 = sphi 0, %s131
    %s133 = sphi 0, %s131
    %s134 = sphi 0, %s133
    %s148 = sphi 0, %s134
    %s152 = sphi 0, %s152
    %s154 = sphi 0, %s152
    %s155 = sphi 0, %s154
    %s169 = sphi 0, %s155
    %s175 = sphi 0, %s177
    %s178 = sphi 0, %s175
    %s179 = sphi 0, %s178
    %s195 = sphi 0, %s179
  $region4: #{inception_b_forward.5} parent=0 // loop_header_branch
    %16 = sbr.rel (%p14) target = $region8
  $region5: #{inception_b_forward.5} parent=0 // loop_body
    %s18 = ssub.s32 %s13, 1
    %s19 = ssub.s32 %s13, 2
    %s20 = sadd.s32 %s13, 1
    %s21 = ssub.s32 %s13, %s20
    %p22 = scmp.eq.s32.totalorder %s21, 0
    %s24 = sadd.s32 %s23, 1
    %s25 = scalar_select %p22, %s23, %s24
    %p28 = pneg %p22
    %p29 = scmp.eq.s32.totalorder %s13, 1
    %p30 = por %p28, %p29
    %p31 = scmp.ne.s32.totalorder %s23, %s26
    %p32 = scmp.eq.s32.totalorder %s13, 0
    %p33 = por %p31, %p32
    %p34 = scmp.ne.s32.totalorder %s23, %s26
    %p35 = scmp.eq.s32.totalorder %s18, 1
    %p36 = por %p34, %p35
    %p37 = scmp.ne.s32.totalorder %s26, %s27
    %p38 = scmp.eq.s32.totalorder %s18, 0
    %p39 = por %p37, %p38
    %p40 = scmp.ne.s32.totalorder %s26, %s27
    %p41 = scmp.eq.s32.totalorder %s19, 1
    %p42 = por %p40, %p41
    %p44 = scmp.ne.s32.totalorder %s27, %s43
    %p45 = scmp.eq.s32.totalorder %s19, 0
    %p46 = por %p44, %p45
    %s48 = sadd.s32 %s47, 1
    %p51 = scmp.eq.s32.totalorder %s13, 1
    %p52 = scmp.ne.s32.totalorder %s47, %s49
    %p53 = scmp.eq.s32.totalorder %s13, 0
    %p54 = por %p52, %p53
    %p55 = scmp.ne.s32.totalorder %s47, %s49
    %p56 = scmp.eq.s32.totalorder %s18, 1
    %p57 = por %p55, %p56
    %p58 = scmp.ne.s32.totalorder %s49, %s50
    %p59 = scmp.eq.s32.totalorder %s18, 0
    %p60 = por %p58, %p59
    %p61 = scmp.ne.s32.totalorder %s49, %s50
    %p62 = scmp.eq.s32.totalorder %s19, 1
    %p63 = por %p61, %p62
    %p65 = scmp.ne.s32.totalorder %s50, %s64
    %p66 = scmp.eq.s32.totalorder %s19, 0
    %p67 = por %p65, %p66
    %s69 = sadd.s32 %s68, 1
    %p72 = scmp.eq.s32.totalorder %s13, 1
    %p73 = scmp.ne.s32.totalorder %s68, %s70
    %p74 = scmp.eq.s32.totalorder %s13, 0
    %p75 = por %p73, %p74
    %p76 = scmp.ne.s32.totalorder %s68, %s70
    %p77 = scmp.eq.s32.totalorder %s18, 1
    %p78 = por %p76, %p77
    %p79 = scmp.ne.s32.totalorder %s70, %s71
    %p80 = scmp.eq.s32.totalorder %s18, 0
    %p81 = por %p79, %p80
    %p82 = scmp.ne.s32.totalorder %s70, %s71
    %p83 = scmp.eq.s32.totalorder %s19, 1
    %p84 = por %p82, %p83
    %p86 = scmp.ne.s32.totalorder %s71, %s85
    %p87 = scmp.eq.s32.totalorder %s19, 0
    %p88 = por %p86, %p87
    %s90 = sadd.s32 %s89, 1
    %p93 = scmp.eq.s32.totalorder %s13, 1
    %p94 = scmp.ne.s32.totalorder %s89, %s91
    %p95 = scmp.eq.s32.totalorder %s13, 0
    %p96 = por %p94, %p95
    %p97 = scmp.ne.s32.totalorder %s89, %s91
    %p98 = scmp.eq.s32.totalorder %s18, 1
    %p99 = por %p97, %p98
    %p100 = scmp.ne.s32.totalorder %s91, %s92
    %p101 = scmp.eq.s32.totalorder %s18, 0
    %p102 = por %p100, %p101
    %p103 = scmp.ne.s32.totalorder %s91, %s92
    %p104 = scmp.eq.s32.totalorder %s19, 1
    %p105 = por %p103, %p104
    %p107 = scmp.ne.s32.totalorder %s92, %s106
    %p108 = scmp.eq.s32.totalorder %s19, 0
    %p109 = por %p107, %p108
    %s111 = sadd.s32 %s110, 1
    %p114 = scmp.eq.s32.totalorder %s13, 1
    %p115 = scmp.ne.s32.totalorder %s110, %s112
    %p116 = scmp.eq.s32.totalorder %s13, 0
    %p117 = por %p115, %p116
    %p118 = scmp.ne.s32.totalorder %s110, %s112
    %p119 = scmp.eq.s32.totalorder %s18, 1
    %p120 = por %p118, %p119
    %p121 = scmp.ne.s32.totalorder %s112, %s113
    %p122 = scmp.eq.s32.totalorder %s18, 0
    %p123 = por %p121, %p122
    %p124 = scmp.ne.s32.totalorder %s112, %s113
    %p125 = scmp.eq.s32.totalorder %s19, 1
    %p126 = por %p124, %p125
    %p128 = scmp.ne.s32.totalorder %s113, %s127
    %p129 = scmp.eq.s32.totalorder %s19, 0
    %p130 = por %p128, %p129
    %s132 = sadd.s32 %s131, 1
    %p135 = scmp.eq.s32.totalorder %s13, 1
    %p136 = scmp.ne.s32.totalorder %s131, %s133
    %p137 = scmp.eq.s32.totalorder %s13, 0
    %p138 = por %p136, %p137
    %p139 = scmp.ne.s32.totalorder %s131, %s133
    %p140 = scmp.eq.s32.totalorder %s18, 1
    %p141 = por %p139, %p140
    %p142 = scmp.ne.s32.totalorder %s133, %s134
    %p143 = scmp.eq.s32.totalorder %s18, 0
    %p144 = por %p142, %p143
    %p145 = scmp.ne.s32.totalorder %s133, %s134
    %p146 = scmp.eq.s32.totalorder %s19, 1
    %p147 = por %p145, %p146
    %p149 = scmp.ne.s32.totalorder %s134, %s148
    %p150 = scmp.eq.s32.totalorder %s19, 0
    %p151 = por %p149, %p150
    %s153 = sadd.s32 %s152, 1
    %p156 = scmp.eq.s32.totalorder %s13, 1
    %p157 = scmp.ne.s32.totalorder %s152, %s154
    %p158 = scmp.eq.s32.totalorder %s13, 0
    %p159 = por %p157, %p158
    %p160 = scmp.ne.s32.totalorder %s152, %s154
    %p161 = scmp.eq.s32.totalorder %s18, 1
    %p162 = por %p160, %p161
    %p163 = scmp.ne.s32.totalorder %s154, %s155
    %p164 = scmp.eq.s32.totalorder %s18, 0
    %p165 = por %p163, %p164
    %p166 = scmp.ne.s32.totalorder %s154, %s155
    %p167 = scmp.eq.s32.totalorder %s19, 1
    %p168 = por %p166, %p167
    %p170 = scmp.ne.s32.totalorder %s155, %s169
    %p171 = scmp.eq.s32.totalorder %s19, 0
    %p172 = por %p170, %p171
    %s173 = ssub.s32 %s13, %s20
    %p174 = scmp.eq.s32.totalorder %s173, 0
    %s176 = sadd.s32 %s175, 1
    %s177 = scalar_select %p174, %s175, %s176
    %p180 = pneg %p174
    %p181 = scmp.eq.s32.totalorder %s13, 1
    %p182 = por %p180, %p181
    %p183 = scmp.ne.s32.totalorder %s175, %s178
    %p184 = scmp.eq.s32.totalorder %s13, 0
    %p185 = por %p183, %p184
    %p186 = scmp.ne.s32.totalorder %s175, %s178
    %p187 = scmp.eq.s32.totalorder %s18, 1
    %p188 = por %p186, %p187
    %p189 = scmp.ne.s32.totalorder %s178, %s179
    %p190 = scmp.eq.s32.totalorder %s18, 0
    %p191 = por %p189, %p190
    %p192 = scmp.ne.s32.totalorder %s178, %s179
    %p193 = scmp.eq.s32.totalorder %s19, 1
    %p194 = por %p192, %p193
    %p196 = scmp.ne.s32.totalorder %s179, %s195
    %p197 = scmp.eq.s32.totalorder %s19, 0
    %p198 = por %p196, %p197
    %p199 = scmp.le.s32.totalorder 1, %s13
    %p200 = scmp.lt.s32.totalorder %s13, 3
    %p201 = pnand %p199, %p200
    %p202 = pneg %p201
    // Predicated region
    $region9: #{inception_b_forward.5} parent=5 // pred_check
      _
    $region10: #{inception_b_forward.5} parent=5 // pred_check_branch
      %204 = sbr.rel (%p201) target = $region12
    $region11: #{inception_b_forward.5} parent=5 // pred_region
      %s205 = ssub.s32 %s13, 1
      // Predicated region
      $region13: #{inception_b_forward.5} parent=11 // pred_check
        %p206 = pneg %p60
      $region14: #{inception_b_forward.5} parent=11 // pred_check_branch
        %208 = sbr.rel (%p206) target = $region16
      $region15: #{inception_b_forward.5} parent=11 // pred_region
        _
      $region16: #{inception_b_forward.5} parent=11 // pred_fallthru
        _
      // Predicated region
      $region17: #{inception_b_forward.5} parent=11 // pred_check
        %p209 = pneg %p81
      $region18: #{inception_b_forward.5} parent=11 // pred_check_branch
        %211 = sbr.rel (%p209) target = $region20
      $region19: #{inception_b_forward.5} parent=11 // pred_region
        _
      $region20: #{inception_b_forward.5} parent=11 // pred_fallthru
        _
      // Predicated region
      $region21: #{inception_b_forward.5} parent=11 // pred_check
        %p212 = pneg %p102
      $region22: #{inception_b_forward.5} parent=11 // pred_check_branch
        %214 = sbr.rel (%p212) target = $region24
      $region23: #{inception_b_forward.5} parent=11 // pred_region
        _
      $region24: #{inception_b_forward.5} parent=11 // pred_fallthru
        _
      // Predicated region
      $region25: #{inception_b_forward.5} parent=11 // pred_check
        %p215 = pneg %p123
      $region26: #{inception_b_forward.5} parent=11 // pred_check_branch
        %217 = sbr.rel (%p215) target = $region28
      $region27: #{inception_b_forward.5} parent=11 // pred_region
        _
      $region28: #{inception_b_forward.5} parent=11 // pred_fallthru
        _
      // Predicated region
      $region29: #{inception_b_forward.5} parent=11 // pred_check
        %p218 = pneg %p144
      $region30: #{inception_b_forward.5} parent=11 // pred_check_branch
        %220 = sbr.rel (%p218) target = $region32
      $region31: #{inception_b_forward.5} parent=11 // pred_region
        _
      $region32: #{inception_b_forward.5} parent=11 // pred_fallthru
        _
      // Predicated region
      $region33: #{inception_b_forward.5} parent=11 // pred_check
        %p221 = pneg %p165
      $region34: #{inception_b_forward.5} parent=11 // pred_check_branch
        %223 = sbr.rel (%p221) target = $region36
      $region35: #{inception_b_forward.5} parent=11 // pred_region
        _
      $region36: #{inception_b_forward.5} parent=11 // pred_fallthru
        _
    $region12: #{inception_b_forward.5} parent=5 // pred_fallthru
      _
    %p224 = scmp.lt.s32.totalorder %s13, 2
    // Predicated region
    $region37: #{inception_b_forward.5} parent=5 // pred_check
      %p225 = pneg %p224
    $region38: #{inception_b_forward.5} parent=5 // pred_check_branch
      %227 = sbr.rel (%p225) target = $region40
    $region39: #{inception_b_forward.5} parent=5 // pred_region
      // Predicated region
      $region41: #{inception_b_forward.5} parent=39 // pred_check
        %p228 = pneg %p33
      $region42: #{inception_b_forward.5} parent=39 // pred_check_branch
        %230 = sbr.rel (%p228) target = $region44
      $region43: #{inception_b_forward.5} parent=39 // pred_region
        %p231 = scmp.lt.s32.totalorder %s13, 1
        %s232 = scalar_select %p231, %s13, 1
        %s233 = smul.addr %s232, 32
        %s234 = smul.addr %s233, 4
        %s235 = scalar_lea.vmem %s0, %s234
      $region44: #{inception_b_forward.5} parent=39 // pred_fallthru
        _
    $region40: #{inception_b_forward.5} parent=5 // pred_fallthru
      _
    %p236 = scmp.le.s32.totalorder 1, %s13
    %p237 = scmp.lt.s32.totalorder %s13, 3
    %p238 = pnand %p236, %p237
    %p239 = pneg %p238
    // Predicated region
    $region45: #{inception_b_forward.5} parent=5 // pred_check
      _
    $region46: #{inception_b_forward.5} parent=5 // pred_check_branch
      %241 = sbr.rel (%p238) target = $region48
    $region47: #{inception_b_forward.5} parent=5 // pred_region
      %s242 = ssub.s32 %s13, 1
      %p243 = scmp.lt.s32.totalorder %s18, 1
      %s244 = scalar_select %p243, %s18, 1
      %s245 = smul.addr %s244, 32
      %s246 = smul.addr %s245, 4
      %s247 = scalar_lea.vmem %s0, %s246
      %p248 = pneg %p39
      %p249 = pneg %p36
      %p250 = pneg %p60
      %p251 = pneg %p57
      %p252 = pneg %p81
      %p253 = pneg %p78
      %p254 = pneg %p102
      %p255 = pneg %p99
      %p256 = pneg %p123
      %p257 = pneg %p120
      %p258 = pneg %p144
      %p259 = pneg %p141
      %p260 = pneg %p165
      %p261 = pneg %p162
      %p262 = pneg %p191
      %p263 = pneg %p188
      %p264 = scmp.lt.s32.totalorder %s18, 1
      %s265 = scalar_select %p264, %s18, 1
      %s266 = smul.addr %s265, 32
      %s267 = smul.addr %s266, 4
      %s268 = scalar_lea.vmem %s7, %s267
      %p269 = scmp.lt.s32.totalorder %s18, 1
      %s270 = scalar_select %p269, %s18, 1
      %s271 = smul.addr %s270, 32
      %s272 = smul.addr %s271, 4
      %s273 = scalar_lea.vmem %s0, %s272
      %p274 = scmp.lt.s32.totalorder %s18, 1
      %s275 = scalar_select %p274, %s18, 1
      %s276 = smul.addr %s275, 32
      %s277 = smul.addr %s276, 4
      %s278 = scalar_lea.vmem %s7, %s277
      %v280 = vld [vmem:[%s273] sm:$0xf]
      %v281 = vld [vmem:[%s273 + $0x4] sm:$0xf]
      %v282 = vld [vmem:[%s273 + $0x8] sm:$0xf]
      %v283 = vld [vmem:[%s273 + $0xc] sm:$0xf]
      %v284 = vld [vmem:[%s273 + $0x10] sm:$0xf]
      %v285 = vld [vmem:[%s273 + $0x14] sm:$0xf]
      %v286 = vld [vmem:[%s273 + $0x18] sm:$0xf]
      %v287 = vld [vmem:[%s273 + $0x1c] sm:$0xf]
      %v288 = vld [vmem:[%s273 + $0x20] sm:$0xf]
      %v289 = vld [vmem:[%s273 + $0x24] sm:$0xf]
      %v290 = vld [vmem:[%s273 + $0x28] sm:$0xf]
      %v291 = vld [vmem:[%s273 + $0x2c] sm:$0xf]
      %v292 = vld [vmem:[%s273 + $0x30] sm:$0xf]
      %v293 = vld [vmem:[%s273 + $0x34] sm:$0xf]
      %v294 = vld [vmem:[%s273 + $0x38] sm:$0xf]
      %v295 = vld [vmem:[%s273 + $0x3c] sm:$0xf]
      %v296 = vld [vmem:[%s273 + $0x40] sm:$0xf]
      %v297 = vld [vmem:[%s273 + $0x44] sm:$0xf]
      %v298 = vld [vmem:[%s273 + $0x48] sm:$0xf]
      %v299 = vld [vmem:[%s273 + $0x4c] sm:$0xf]
      %v300 = vld [vmem:[%s273 + $0x50] sm:$0xf]
      %v301 = vld [vmem:[%s273 + $0x54] sm:$0xf]
      %v302 = vld [vmem:[%s273 + $0x58] sm:$0xf]
      %v303 = vld [vmem:[%s273 + $0x5c] sm:$0xf]
      %v304 = vld [vmem:[%s273 + $0x60] sm:$0xf]
      %v305 = vld [vmem:[%s273 + $0x64] sm:$0xf]
      %v306 = vld [vmem:[%s273 + $0x68] sm:$0xf]
      %v307 = vld [vmem:[%s273 + $0x6c] sm:$0xf]
      %v308 = vld [vmem:[%s273 + $0x70] sm:$0xf]
      %v309 = vld [vmem:[%s273 + $0x74] sm:$0xf]
      %v310 = vld [vmem:[%s273 + $0x78] sm:$0xf]
      %v311 = vld [vmem:[%s273 + $0x7c] sm:$0xf]
      %v312 = vld [vmem:[%s1] sm:$0x3]
      %v345 = vunpack.c.l.b16 %v280
      %v346 = vunpack.c.l.b16 %v281
      %v347 = vunpack.c.l.b16 %v282
      %v348 = vunpack.c.l.b16 %v283
      %v349 = vunpack.c.l.b16 %v284
      %v350 = vunpack.c.l.b16 %v285
      %v351 = vunpack.c.l.b16 %v286
      %v352 = vunpack.c.l.b16 %v287
      %v353 = vunpack.c.l.b16 %v288
      %v354 = vunpack.c.l.b16 %v289
      %v355 = vunpack.c.l.b16 %v290
      %v356 = vunpack.c.l.b16 %v291
      %v357 = vunpack.c.l.b16 %v292
      %v358 = vunpack.c.l.b16 %v293
      %v359 = vunpack.c.l.b16 %v294
      %v360 = vunpack.c.l.b16 %v295
      %v361 = vunpack.c.l.b16 %v296
      %v362 = vunpack.c.l.b16 %v297
      %v363 = vunpack.c.l.b16 %v298
      %v364 = vunpack.c.l.b16 %v299
      %v365 = vunpack.c.l.b16 %v300
      %v366 = vunpack.c.l.b16 %v301
      %v367 = vunpack.c.l.b16 %v302
      %v368 = vunpack.c.l.b16 %v303
      %v369 = vunpack.c.l.b16 %v304
      %v370 = vunpack.c.l.b16 %v305
      %v371 = vunpack.c.l.b16 %v306
      %v372 = vunpack.c.l.b16 %v307
      %v373 = vunpack.c.l.b16 %v308
      %v374 = vunpack.c.l.b16 %v309
      %v375 = vunpack.c.l.b16 %v310
      %v376 = vunpack.c.l.b16 %v311
      %v377 = vpack.c.b16 %v346, %v345
      %v378 = vpack.c.b16 %v348, %v347
      %v379 = vpack.c.b16 %v350, %v349
      %v380 = vpack.c.b16 %v352, %v351
      %v381 = vpack.c.b16 %v354, %v353
      %v382 = vpack.c.b16 %v356, %v355
      %v383 = vpack.c.b16 %v358, %v357
      %v384 = vpack.c.b16 %v360, %v359
      %v385 = vpack.c.b16 %v362, %v361
      %v386 = vpack.c.b16 %v364, %v363
      %v387 = vpack.c.b16 %v366, %v365
      %v388 = vpack.c.b16 %v368, %v367
      %v389 = vpack.c.b16 %v370, %v369
      %v390 = vpack.c.b16 %v372, %v371
      %v391 = vpack.c.b16 %v374, %v373
      %v392 = vpack.c.b16 %v376, %v375
      %vm393 = vcmask 31744
      %v395 = vsel %vm393, %v377, 0
      %v398 = vsel %vm393, %v378, 0
      %v401 = vsel %vm393, %v379, 0
      %v404 = vsel %vm393, %v380, 0
      %v407 = vsel %vm393, %v381, 0
      %v410 = vsel %vm393, %v382, 0
      %v413 = vsel %vm393, %v383, 0
      %v416 = vsel %vm393, %v384, 0
      %v419 = vsel %vm393, %v385, 0
      %v422 = vsel %vm393, %v386, 0
      %v425 = vsel %vm393, %v387, 0
      %v428 = vsel %vm393, %v388, 0
      %v431 = vsel %vm393, %v389, 0
      %v434 = vsel %vm393, %v390, 0
      %v437 = vsel %vm393, %v391, 0
      %v440 = vsel %vm393, %v392, 0
      %vm442 = vcmask 1041408
      %v444 = vsel %vm442, %v312, 0
      %446 = vmatprep.subr.bf16.mxu0 0
      %447 = vmatpush1.bf16.msra.mxu0 %v444
      %448 = vmatprep.subr.bf16.mxu0 0
      %449 = vmatpush1.bf16.msra.mxu0 0
      %450 = vmatprep.subr.bf16.mxu0 0
      %451 = vmatpush1.bf16.msra.mxu0 0
      %452 = vmatprep.subr.bf16.mxu0 0
      %453 = vmatpush1.bf16.msra.mxu0 0
      %454 = vmatprep.subr.bf16.mxu0 0
      %455 = vmatpush1.bf16.msra.mxu0 0
      %456 = vmatprep.subr.bf16.mxu0 0
      %457 = vmatpush1.bf16.msra.mxu0 0
      %458 = vmatprep.subr.bf16.mxu0 0
      %459 = vmatpush1.bf16.msra.mxu0 0
      %460 = vmatprep.subr.bf16.mxu0 0
      %461 = vmatpush1.bf16.msra.mxu0 0
      %462 = vmatprep.subr.bf16.mxu0 0
      %463 = vmatpush1.bf16.msra.mxu0 0
      %464 = vmatprep.subr.bf16.mxu0 0
      %465 = vmatpush1.bf16.msra.mxu0 0
      %466 = vmatprep.subr.bf16.mxu0 0
      %467 = vmatpush1.bf16.msra.mxu0 0
      %468 = vmatprep.subr.bf16.mxu0 0
      %469 = vmatpush1.bf16.msra.mxu0 0
      %470 = vmatprep.subr.bf16.mxu0 0
      %471 = vmatpush1.bf16.msra.mxu0 0
      %472 = vmatprep.subr.bf16.mxu0 0
      %473 = vmatpush1.bf16.msra.mxu0 0
      %474 = vmatprep.subr.bf16.mxu0 0
      %475 = vmatpush1.bf16.msra.mxu0 0
      %476 = vmatprep.subr.bf16.mxu0 0
      %477 = vmatpush1.bf16.msra.mxu0 0
      %478 = vmatprep.mubr.bf16.mxu0 0
      %479 = vmatmul.mubr.bf16.gmra.mrb[0].mxu0 %v395
      %v480 = vpop.f32.mrb[0].mxu0
      %v481 = vadd.f32 0.0, %v480
      %v482 = vpop.f32.mrb[0].mxu0
      %v483 = vpop.f32.mrb[0].mxu0
      %v484 = vadd.f32 0.0, %v483
      %v485 = vpop.f32.mrb[0].mxu0
      %486 = vmatprep.mubr.bf16.mxu0 0
      %487 = vmatmul.mubr.bf16.gmra.mrb[0].mxu0 %v398
      %v488 = vpop.f32.mrb[0].mxu0
      %v489 = vadd.f32 0.0, %v488
      %v490 = vpop.f32.mrb[0].mxu0
      %v491 = vpop.f32.mrb[0].mxu0
      %v492 = vadd.f32 0.0, %v491
      %v493 = vpop.f32.mrb[0].mxu0
      %494 = vmatprep.mubr.bf16.mxu0 0
      %495 = vmatmul.mubr.bf16.gmra.mrb[0].mxu0 %v401
      %v496 = vpop.f32.mrb[0].mxu0
      %v497 = vadd.f32 0.0, %v496
      %v498 = vpop.f32.mrb[0].mxu0
      %v499 = vpop.f32.mrb[0].mxu0
      %v500 = vadd.f32 0.0, %v499
      %v501 = vpop.f32.mrb[0].mxu0
      %502 = vmatprep.mubr.bf16.mxu0 0
      %503 = vmatmul.mubr.bf16.gmra.mrb[0].mxu0 %v404
      %v504 = vpop.f32.mrb[0].mxu0
      %v505 = vadd.f32 0.0, %v504
      %v506 = vpop.f32.mrb[0].mxu0
      %v507 = vpop.f32.mrb[0].mxu0
      %v508 = vadd.f32 0.0, %v507
      %v509 = vpop.f32.mrb[0].mxu0
      %510 = vmatprep.mubr.bf16.mxu0 0
      %511 = vmatmul.mubr.bf16.gmra.mrb[0].mxu0 %v407
      %v512 = vpop.f32.mrb[0].mxu0
      %v513 = vadd.f32 0.0, %v512
      %v514 = vpop.f32.mrb[0].mxu0
      %v515 = vpop.f32.mrb[0].mxu0
      %v516 = vadd.f32 0.0, %v515
      %v517 = vpop.f32.mrb[0].mxu0
      %518 = vmatprep.mubr.bf16.mxu0 0
      %519 = vmatmul.mubr.bf16.gmra.mrb[0].mxu0 %v410
      %v520 = vpop.f32.mrb[0].mxu0
      %v521 = vadd.f32 0.0, %v520
      %v522 = vpop.f32.mrb[0].mxu0
      %v523 = vpop.f32.mrb[0].mxu0
      %v524 = vadd.f32 0.0, %v523
      %v525 = vpop.f32.mrb[0].mxu0
      %526 = vmatprep.mubr.bf16.mxu0 0
      %527 = vmatmul.mubr.bf16.gmra.mrb[0].mxu0 %v413
      %v528 = vpop.f32.mrb[0].mxu0
      %v529 = vadd.f32 0.0, %v528
      %v530 = vpop.f32.mrb[0].mxu0
      %v531 = vpop.f32.mrb[0].mxu0
      %v532 = vadd.f32 0.0, %v531
      %v533 = vpop.f32.mrb[0].mxu0
      %534 = vmatprep.mubr.bf16.mxu0 0
      %535 = vmatmul.mubr.bf16.gmra.mrb[0].mxu0 %v416
      %v536 = vpop.f32.mrb[0].mxu0
      %v537 = vadd.f32 0.0, %v536
      %v538 = vpop.f32.mrb[0].mxu0
      %v539 = vpop.f32.mrb[0].mxu0
      %v540 = vadd.f32 0.0, %v539
      %v541 = vpop.f32.mrb[0].mxu0
      %542 = vmatprep.mubr.bf16.mxu0 0
      %543 = vmatmul.mubr.bf16.gmra.mrb[0].mxu0 %v419
      %v544 = vpop.f32.mrb[0].mxu0
      %v545 = vadd.f32 0.0, %v544
      %v546 = vpop.f32.mrb[0].mxu0
      %v547 = vpop.f32.mrb[0].mxu0
      %v548 = vadd.f32 0.0, %v547
      %v549 = vpop.f32.mrb[0].mxu0
      %550 = vmatprep.mubr.bf16.mxu0 0
      %551 = vmatmul.mubr.bf16.gmra.mrb[0].mxu0 %v422
      %v552 = vpop.f32.mrb[0].mxu0
      %v553 = vadd.f32 0.0, %v552
      %v554 = vpop.f32.mrb[0].mxu0
      %v555 = vpop.f32.mrb[0].mxu0
      %v556 = vadd.f32 0.0, %v555
      %v557 = vpop.f32.mrb[0].mxu0
      %558 = vmatprep.mubr.bf16.mxu0 0
      %559 = vmatmul.mubr.bf16.gmra.mrb[0].mxu0 %v425
      %v560 = vpop.f32.mrb[0].mxu0
      %v561 = vadd.f32 0.0, %v560
      %v562 = vpop.f32.mrb[0].mxu0
      %v563 = vpop.f32.mrb[0].mxu0
      %v564 = vadd.f32 0.0, %v563
      %v565 = vpop.f32.mrb[0].mxu0
      %566 = vmatprep.mubr.bf16.mxu0 0
      %567 = vmatmul.mubr.bf16.gmra.mrb[0].mxu0 %v428
      %v568 = vpop.f32.mrb[0].mxu0
      %v569 = vadd.f32 0.0, %v568
      %v570 = vpop.f32.mrb[0].mxu0
      %v571 = vpop.f32.mrb[0].mxu0
      %v572 = vadd.f32 0.0, %v571
      %v573 = vpop.f32.mrb[0].mxu0
      %574 = vmatprep.mubr.bf16.mxu0 0
      %575 = vmatmul.mubr.bf16.gmra.mrb[0].mxu0 %v431
      %v576 = vpop.f32.mrb[0].mxu0
      %v577 = vadd.f32 0.0, %v576
      %v578 = vpop.f32.mrb[0].mxu0
      %v579 = vpop.f32.mrb[0].mxu0
      %v580 = vadd.f32 0.0, %v579
      %v581 = vpop.f32.mrb[0].mxu0
      %582 = vmatprep.mubr.bf16.mxu0 0
      %583 = vmatmul.mubr.bf16.gmra.mrb[0].mxu0 %v434
      %v584 = vpop.f32.mrb[0].mxu0
      %v585 = vadd.f32 0.0, %v584
      %v586 = vpop.f32.mrb[0].mxu0
      %v587 = vpop.f32.mrb[0].mxu0
      %v588 = vadd.f32 0.0, %v587
      %v589 = vpop.f32.mrb[0].mxu0
      %590 = vmatprep.mubr.bf16.mxu0 0
      %591 = vmatmul.mubr.bf16.gmra.mrb[0].mxu0 %v437
      %v592 = vpop.f32.mrb[0].mxu0
      %v593 = vadd.f32 0.0, %v592
      %v594 = vpop.f32.mrb[0].mxu0
      %v595 = vpop.f32.mrb[0].mxu0
      %v596 = vadd.f32 0.0, %v595
      %v597 = vpop.f32.mrb[0].mxu0
      %598 = vmatprep.mubr.bf16.mxu0 0
      %599 = vmatmul.mubr.bf16.gmra.mrb[0].mxu0 %v440
      %v600 = vpop.f32.mrb[0].mxu0
      %v601 = vadd.f32 0.0, %v600
      %v602 = vpop.f32.mrb[0].mxu0
      %v603 = vpop.f32.mrb[0].mxu0
      %v604 = vadd.f32 0.0, %v603
      %v605 = vpop.f32.mrb[0].mxu0
      %606 = vdwg.mxu0
      %v607 = vld [vmem:[%s2] sm:$0x1]
      %v609 = vlaneseq
      %v610 = vshrl.u32 %v609, 7
      %v611 = vsub.s32 0, %v610
      %v612 = vrot.slane %v607, %v611
      %v614 = vmul.f32 %v481, %v612
      %v615 = vmul.f32 %v484, %v612
      %v616 = vmul.f32 %v489, %v612
      %v617 = vmul.f32 %v492, %v612
      %v618 = vmul.f32 %v497, %v612
      %v619 = vmul.f32 %v500, %v612
      %v620 = vmul.f32 %v505, %v612
      %v621 = vmul.f32 %v508, %v612
      %v622 = vmul.f32 %v513, %v612
      %v623 = vmul.f32 %v516, %v612
      %v624 = vmul.f32 %v521, %v612
      %v625 = vmul.f32 %v524, %v612
      %v626 = vmul.f32 %v529, %v612
      %v627 = vmul.f32 %v532, %v612
      %v628 = vmul.f32 %v537, %v612
      %v629 = vmul.f32 %v540, %v612
      %v630 = vmul.f32 %v545, %v612
      %v631 = vmul.f32 %v548, %v612
      %v632 = vmul.f32 %v553, %v612
      %v633 = vmul.f32 %v556, %v612
      %v634 = vmul.f32 %v561, %v612
      %v635 = vmul.f32 %v564, %v612
      %v636 = vmul.f32 %v569, %v612
      %v637 = vmul.f32 %v572, %v612
      %v638 = vmul.f32 %v577, %v612
      %v639 = vmul.f32 %v580, %v612
      %v640 = vmul.f32 %v585, %v612
      %v641 = vmul.f32 %v588, %v612
      %v642 = vmul.f32 %v593, %v612
      %v643 = vmul.f32 %v596, %v612
      %v644 = vmul.f32 %v601, %v612
      %v645 = vmul.f32 %v604, %v612
      %v646 = vld [vmem:[%s3] sm:$0x1]
      %v648 = vlaneseq
      %v649 = vshrl.u32 %v648, 7
      %v650 = vsub.s32 0, %v649
      %v651 = vrot.slane %v646, %v650
      %v653 = vadd.f32 %v614, %v651
      %v654 = vadd.f32 %v615, %v651
      %v655 = vadd.f32 %v616, %v651
      %v656 = vadd.f32 %v617, %v651
      %v657 = vadd.f32 %v618, %v651
      %v658 = vadd.f32 %v619, %v651
      %v659 = vadd.f32 %v620, %v651
      %v660 = vadd.f32 %v621, %v651
      %v661 = vadd.f32 %v622, %v651
      %v662 = vadd.f32 %v623, %v651
      %v663 = vadd.f32 %v624, %v651
      %v664 = vadd.f32 %v625, %v651
      %v665 = vadd.f32 %v626, %v651
      %v666 = vadd.f32 %v627, %v651
      %v667 = vadd.f32 %v628, %v651
      %v668 = vadd.f32 %v629, %v651
      %v669 = vadd.f32 %v630, %v651
      %v670 = vadd.f32 %v631, %v651
      %v671 = vadd.f32 %v632, %v651
      %v672 = vadd.f32 %v633, %v651
      %v673 = vadd.f32 %v634, %v651
      %v674 = vadd.f32 %v635, %v651
      %v675 = vadd.f32 %v636, %v651
      %v676 = vadd.f32 %v637, %v651
      %v677 = vadd.f32 %v638, %v651
      %v678 = vadd.f32 %v639, %v651
      %v679 = vadd.f32 %v640, %v651
      %v680 = vadd.f32 %v641, %v651
      %v681 = vadd.f32 %v642, %v651
      %v682 = vadd.f32 %v643, %v651
      %v683 = vadd.f32 %v644, %v651
      %v684 = vadd.f32 %v645, %v651
      %v685 = vmax.f32 %v653, 0.0
      %v686 = vmax.f32 %v654, 0.0
      %v687 = vmax.f32 %v655, 0.0
      %v688 = vmax.f32 %v656, 0.0
      %v689 = vmax.f32 %v657, 0.0
      %v690 = vmax.f32 %v658, 0.0
      %v691 = vmax.f32 %v659, 0.0
      %v692 = vmax.f32 %v660, 0.0
      %v693 = vmax.f32 %v661, 0.0
      %v694 = vmax.f32 %v662, 0.0
      %v695 = vmax.f32 %v663, 0.0
      %v696 = vmax.f32 %v664, 0.0
      %v697 = vmax.f32 %v665, 0.0
      %v698 = vmax.f32 %v666, 0.0
      %v699 = vmax.f32 %v667, 0.0
      %v700 = vmax.f32 %v668, 0.0
      %v701 = vmax.f32 %v669, 0.0
      %v702 = vmax.f32 %v670, 0.0
      %v703 = vmax.f32 %v671, 0.0
      %v704 = vmax.f32 %v672, 0.0
      %v705 = vmax.f32 %v673, 0.0
      %v706 = vmax.f32 %v674, 0.0
      %v707 = vmax.f32 %v675, 0.0
      %v708 = vmax.f32 %v676, 0.0
      %v709 = vmax.f32 %v677, 0.0
      %v710 = vmax.f32 %v678, 0.0
      %v711 = vmax.f32 %v679, 0.0
      %v712 = vmax.f32 %v680, 0.0
      %v713 = vmax.f32 %v681, 0.0
      %v714 = vmax.f32 %v682, 0.0
      %v715 = vmax.f32 %v683, 0.0
      %v716 = vmax.f32 %v684, 0.0
      %vm717 = vcmask 519168
      %718 = vst.msk [vmem:[#allocation2] sm:$0xf] %vm717, 0
      %719 = vst.msk [vmem:[#allocation2 + $0x4] sm:$0xf] %vm717, 0
      %vm720 = vcmask 516096
      %721 = vst.msk [vmem:[#allocation2 + $0x8] sm:$0x1] %vm720, 0
      %722 = vst.msk [vmem:[#allocation2 + $0xc] sm:$0xf] %vm717, 0
      %723 = vst.msk [vmem:[#allocation2 + $0x10] sm:$0xf] %vm717, 0
      %724 = vst.msk [vmem:[#allocation2 + $0x14] sm:$0x1] %vm720, 0
      %725 = vst.msk [vmem:[#allocation2 + $0x18] sm:$0xf] %vm717, 0
      %726 = vst.msk [vmem:[#allocation2 + $0x1c] sm:$0xf] %vm717, 0
      %727 = vst.msk [vmem:[#allocation2 + $0x20] sm:$0x1] %vm720, 0
      %728 = vst.msk [vmem:[#allocation2 + $0x24] sm:$0xf] %vm717, 0
      %729 = vst.msk [vmem:[#allocation2 + $0x28] sm:$0xf] %vm717, 0
      %730 = vst.msk [vmem:[#allocation2 + $0x2c] sm:$0x1] %vm720, 0
      %731 = vst.msk [vmem:[#allocation2 + $0x30] sm:$0xf] %vm717, 0
      %732 = vst.msk [vmem:[#allocation2 + $0x34] sm:$0xf] %vm717, 0
      %733 = vst.msk [vmem:[#allocation2 + $0x38] sm:$0x1] %vm720, 0
      %734 = vst.msk [vmem:[#allocation2 + $0x3c] sm:$0xf] %vm717, 0
      %735 = vst.msk [vmem:[#allocation2 + $0x40] sm:$0xf] %vm717, 0
      %736 = vst.msk [vmem:[#allocation2 + $0x44] sm:$0x1] %vm720, 0
      %737 = vst.msk [vmem:[#allocation2 + $0x48] sm:$0xf] %vm717, 0
      %738 = vst.msk [vmem:[#allocation2 + $0x4c] sm:$0xf] %vm717, 0
      %739 = vst.msk [vmem:[#allocation2 + $0x50] sm:$0x1] %vm720, 0
      %740 = vst.msk [vmem:[#allocation2 + $0x54] sm:$0xf] %vm717, 0
      %741 = vst.msk [vmem:[#allocation2 + $0x58] sm:$0xf] %vm717, 0
      %742 = vst.msk [vmem:[#allocation2 + $0x5c] sm:$0x1] %vm720, 0
      %743 = vst.msk [vmem:[#allocation2 + $0x60] sm:$0xf] %vm717, 0
      %744 = vst.msk [vmem:[#allocation2 + $0x64] sm:$0xf] %vm717, 0
      %745 = vst.msk [vmem:[#allocation2 + $0x68] sm:$0x1] %vm720, 0
      %746 = vst.msk [vmem:[#allocation2 + $0x6c] sm:$0xf] %vm717, 0
      %747 = vst.msk [vmem:[#allocation2 + $0x70] sm:$0xf] %vm717, 0
      %748 = vst.msk [vmem:[#allocation2 + $0x74] sm:$0x1] %vm720, 0
      %749 = vst.msk [vmem:[#allocation2 + $0x78] sm:$0xf] %vm717, 0
      %750 = vst.msk [vmem:[#allocation2 + $0x7c] sm:$0xf] %vm717, 0
      %751 = vst.msk [vmem:[#allocation2 + $0x80] sm:$0x1] %vm720, 0
      %752 = vst.msk [vmem:[#allocation2 + $0x84] sm:$0xf] %vm717, 0
      %753 = vst.msk [vmem:[#allocation2 + $0x88] sm:$0xf] %vm717, 0
      %754 = vst.msk [vmem:[#allocation2 + $0x8c] sm:$0x1] %vm720, 0
      %755 = vst.msk [vmem:[#allocation2 + $0x90] sm:$0xf] %vm717, 0
      %756 = vst.msk [vmem:[#allocation2 + $0x94] sm:$0xf] %vm717, 0
      %757 = vst.msk [vmem:[#allocation2 + $0x98] sm:$0x1] %vm720, 0
      %758 = vst.msk [vmem:[#allocation2 + $0x9c] sm:$0xf] %vm717, 0
      %759 = vst.msk [vmem:[#allocation2 + $0xa0] sm:$0xf] %vm717, 0
      %760 = vst.msk [vmem:[#allocation2 + $0xa4] sm:$0x1] %vm720, 0
      %761 = vst.msk [vmem:[#allocation2 + $0xa8] sm:$0xf] %vm717, 0
      %762 = vst.msk [vmem:[#allocation2 + $0xac] sm:$0xf] %vm717, 0
      %763 = vst.msk [vmem:[#allocation2 + $0xb0] sm:$0x1] %vm720, 0
      %764 = vst.msk [vmem:[#allocation2 + $0xb4] sm:$0xf] %vm717, 0
      %765 = vst.msk [vmem:[#allocation2 + $0xb8] sm:$0xf] %vm717, 0
      %766 = vst.msk [vmem:[#allocation2 + $0xbc] sm:$0x1] %vm720, 0
      %767 = vst.msk [vmem:[#allocation2 + $0xc0] sm:$0xf] %vm717, 0
      %768 = vst.msk [vmem:[#allocation2 + $0xc4] sm:$0xf] %vm717, 0
      %769 = vst.msk [vmem:[#allocation2 + $0xc8] sm:$0x1] %vm720, 0
      %770 = vst.msk [vmem:[#allocation2 + $0xcc] sm:$0xf] %vm717, 0
      %771 = vst.msk [vmem:[#allocation2 + $0xd0] sm:$0xf] %vm717, 0
      %772 = vst.msk [vmem:[#allocation2 + $0xd4] sm:$0x1] %vm720, 0
      %v773 = vpack.c.bf16 %v686, %v685
      %v774 = vpack.c.bf16 %v688, %v687
      %v775 = vpack.c.bf16 %v690, %v689
      %v776 = vpack.c.bf16 %v692, %v691
      %v777 = vpack.c.bf16 %v694, %v693
      %v778 = vpack.c.bf16 %v696, %v695
      %v779 = vpack.c.bf16 %v698, %v697
      %v780 = vpack.c.bf16 %v700, %v699
      %v781 = vpack.c.bf16 %v702, %v701
      %v782 = vpack.c.bf16 %v704, %v703
      %v783 = vpack.c.bf16 %v706, %v705
      %v784 = vpack.c.bf16 %v708, %v707
      %v785 = vpack.c.bf16 %v710, %v709
      %v786 = vpack.c.bf16 %v712, %v711
      %v787 = vpack.c.bf16 %v714, %v713
      %v788 = vpack.c.bf16 %v716, %v715
      %v805 = vunpack.c.l.b16 %v773
      %v806 = vunpack.c.h.b16 %v773
      %v807 = vunpack.c.l.b16 %v774
      %v808 = vunpack.c.h.b16 %v774
      %v809 = vunpack.c.l.b16 %v775
      %v810 = vunpack.c.h.b16 %v775
      %v811 = vunpack.c.l.b16 %v776
      %v812 = vunpack.c.h.b16 %v776
      %v813 = vunpack.c.l.b16 %v777
      %v814 = vunpack.c.h.b16 %v777
      %v815 = vunpack.c.l.b16 %v778
      %v816 = vunpack.c.h.b16 %v778
      %v817 = vunpack.c.l.b16 %v779
      %v818 = vunpack.c.h.b16 %v779
      %v819 = vunpack.c.l.b16 %v780
      %v820 = vunpack.c.h.b16 %v780
      %v821 = vunpack.c.l.b16 %v781
      %v822 = vunpack.c.h.b16 %v781
      %v823 = vunpack.c.l.b16 %v782
      %v824 = vunpack.c.h.b16 %v782
      %v825 = vunpack.c.l.b16 %v783
      %v826 = vunpack.c.h.b16 %v783
      %v827 = vunpack.c.l.b16 %v784
      %v828 = vunpack.c.h.b16 %v784
      %v829 = vunpack.c.l.b16 %v785
      %v830 = vunpack.c.h.b16 %v785
      %v831 = vunpack.c.l.b16 %v786
      %v832 = vunpack.c.h.b16 %v786
      %v833 = vunpack.c.l.b16 %v787
      %v834 = vunpack.c.h.b16 %v787
      %v835 = vunpack.c.l.b16 %v788
      %v836 = vunpack.c.h.b16 %v788
      %v837 = vpack.c.b16 %v805, %v805
      %v838 = vpack.c.b16 %v806, %v806
      %v839 = vpack.c.b16 %v807, %v807
      %v840 = vpack.c.b16 %v808, %v808
      %v841 = vpack.c.b16 %v809, %v809
      %v842 = vpack.c.b16 %v810, %v810
      %v843 = vpack.c.b16 %v811, %v811
      %v844 = vpack.c.b16 %v812, %v812
      %v845 = vpack.c.b16 %v813, %v813
      %v846 = vpack.c.b16 %v814, %v814
      %v847 = vpack.c.b16 %v815, %v815
      %v848 = vpack.c.b16 %v816, %v816
      %v849 = vpack.c.b16 %v817, %v817
      %v850 = vpack.c.b16 %v818, %v818
      %v851 = vpack.c.b16 %v819, %v819
      %v852 = vpack.c.b16 %v820, %v820
      %v853 = vpack.c.b16 %v821, %v821
      %v854 = vpack.c.b16 %v822, %v822
      %v855 = vpack.c.b16 %v823, %v823
      %v856 = vpack.c.b16 %v824, %v824
      %v857 = vpack.c.b16 %v825, %v825
      %v858 = vpack.c.b16 %v826, %v826
      %v859 = vpack.c.b16 %v827, %v827
      %v860 = vpack.c.b16 %v828, %v828
      %v861 = vpack.c.b16 %v829, %v829
      %v862 = vpack.c.b16 %v830, %v830
      %v863 = vpack.c.b16 %v831, %v831
      %v864 = vpack.c.b16 %v832, %v832
      %v865 = vpack.c.b16 %v833, %v833
      %v866 = vpack.c.b16 %v834, %v834
      %v867 = vpack.c.b16 %v835, %v835
      %v868 = vpack.c.b16 %v836, %v836
      %vm869 = vsmask.f32 256
      %vm870 = vsmask.f32 4368
      %vm871 = vmor %vm869, %vm870
      %v873 = vshrl.u32 %v837, 16
      %v875 = vrot.slane %v873, 7
      %v876 = vshll.u32 %v837, 16
      %v878 = vor.u32 %v875, %v876
      %v879 = vrot.slane %v875, 4
      %v881 = vshrl.u32 %v838, 16
      %v883 = vrot.slane %v881, 7
      %v884 = vshll.u32 %v838, 16
      %v886 = vor.u32 %v883, %v884
      %v887 = vsel %vm871, %v879, %v886
      %v888 = vrot.slane %v883, 4
      %v890 = vshrl.u32 %v839, 16
      %v892 = vrot.slane %v890, 7
      %v893 = vshll.u32 %v839, 16
      %v895 = vor.u32 %v892, %v893
      %v896 = vrot.slane %v892, 4
      %v898 = vshrl.u32 %v840, 16
      %v900 = vrot.slane %v898, 7
      %v901 = vshll.u32 %v840, 16
      %v903 = vor.u32 %v900, %v901
      %v904 = vsel %vm871, %v896, %v903
      %v905 = vrot.slane %v900, 4
      %v907 = vshrl.u32 %v841, 16
      %v909 = vrot.slane %v907, 7
      %v910 = vshll.u32 %v841, 16
      %v912 = vor.u32 %v909, %v910
      %v913 = vrot.slane %v909, 4
      %v915 = vshrl.u32 %v842, 16
      %v917 = vrot.slane %v915, 7
      %v918 = vshll.u32 %v842, 16
      %v920 = vor.u32 %v917, %v918
      %v921 = vsel %vm871, %v913, %v920
      %v922 = vrot.slane %v917, 4
      %v924 = vshrl.u32 %v843, 16
      %v926 = vrot.slane %v924, 7
      %v927 = vshll.u32 %v843, 16
      %v929 = vor.u32 %v926, %v927
      %v930 = vrot.slane %v926, 4
      %v932 = vshrl.u32 %v844, 16
      %v934 = vrot.slane %v932, 7
      %v935 = vshll.u32 %v844, 16
      %v937 = vor.u32 %v934, %v935
      %v938 = vsel %vm871, %v930, %v937
      %v939 = vrot.slane %v934, 4
      %v941 = vshrl.u32 %v845, 16
      %v943 = vrot.slane %v941, 7
      %v944 = vshll.u32 %v845, 16
      %v946 = vor.u32 %v943, %v944
      %v947 = vrot.slane %v943, 4
      %v949 = vshrl.u32 %v846, 16
      %v951 = vrot.slane %v949, 7
      %v952 = vshll.u32 %v846, 16
      %v954 = vor.u32 %v951, %v952
      %v955 = vsel %vm871, %v947, %v954
      %v956 = vrot.slane %v951, 4
      %v958 = vshrl.u32 %v847, 16
      %v960 = vrot.slane %v958, 7
      %v961 = vshll.u32 %v847, 16
      %v963 = vor.u32 %v960, %v961
      %v964 = vrot.slane %v960, 4
      %v966 = vshrl.u32 %v848, 16
      %v968 = vrot.slane %v966, 7
      %v969 = vshll.u32 %v848, 16
      %v971 = vor.u32 %v968, %v969
      %v972 = vsel %vm871, %v964, %v971
      %v973 = vrot.slane %v968, 4
      %v975 = vshrl.u32 %v849, 16
      %v977 = vrot.slane %v975, 7
      %v978 = vshll.u32 %v849, 16
      %v980 = vor.u32 %v977, %v978
      %v981 = vrot.slane %v977, 4
      %v983 = vshrl.u32 %v850, 16
      %v985 = vrot.slane %v983, 7
      %v986 = vshll.u32 %v850, 16
      %v988 = vor.u32 %v985, %v986
      %v989 = vsel %vm871, %v981, %v988
      %v990 = vrot.slane %v985, 4
      %v992 = vshrl.u32 %v851, 16
      %v994 = vrot.slane %v992, 7
      %v995 = vshll.u32 %v851, 16
      %v997 = vor.u32 %v994, %v995
      %v998 = vrot.slane %v994, 4
      %v1000 = vshrl.u32 %v852, 16
      %v1002 = vrot.slane %v1000, 7
      %v1003 = vshll.u32 %v852, 16
      %v1005 = vor.u32 %v1002, %v1003
      %v1006 = vsel %vm871, %v998, %v1005
      %v1007 = vrot.slane %v1002, 4
      %v1009 = vshrl.u32 %v853, 16
      %v1011 = vrot.slane %v1009, 7
      %v1012 = vshll.u32 %v853, 16
      %v1014 = vor.u32 %v1011, %v1012
      %v1015 = vrot.slane %v1011, 4
      %v1017 = vshrl.u32 %v854, 16
      %v1019 = vrot.slane %v1017, 7
      %v1020 = vshll.u32 %v854, 16
      %v1022 = vor.u32 %v1019, %v1020
      %v1023 = vsel %vm871, %v1015, %v1022
      %v1024 = vrot.slane %v1019, 4
      %v1026 = vshrl.u32 %v855, 16
      %v1028 = vrot.slane %v1026, 7
      %v1029 = vshll.u32 %v855, 16
      %v1031 = vor.u32 %v1028, %v1029
      %v1032 = vrot.slane %v1028, 4
      %v1034 = vshrl.u32 %v856, 16
      %v1036 = vrot.slane %v1034, 7
      %v1037 = vshll.u32 %v856, 16
      %v1039 = vor.u32 %v1036, %v1037
      %v1040 = vsel %vm871, %v1032, %v1039
      %v1041 = vrot.slane %v1036, 4
      %v1043 = vshrl.u32 %v857, 16
      %v1045 = vrot.slane %v1043, 7
      %v1046 = vshll.u32 %v857, 16
      %v1048 = vor.u32 %v1045, %v1046
      %v1049 = vrot.slane %v1045, 4
      %v1051 = vshrl.u32 %v858, 16
      %v1053 = vrot.slane %v1051, 7
      %v1054 = vshll.u32 %v858, 16
      %v1056 = vor.u32 %v1053, %v1054
      %v1057 = vsel %vm871, %v1049, %v1056
      %v1058 = vrot.slane %v1053, 4
      %v1060 = vshrl.u32 %v859, 16
      %v1062 = vrot.slane %v1060, 7
      %v1063 = vshll.u32 %v859, 16
      %v1065 = vor.u32 %v1062, %v1063
      %v1066 = vrot.slane %v1062, 4
      %v1068 = vshrl.u32 %v860, 16
      %v1070 = vrot.slane %v1068, 7
      %v1071 = vshll.u32 %v860, 16
      %v1073 = vor.u32 %v1070, %v1071
      %v1074 = vsel %vm871, %v1066, %v1073
      %v1075 = vrot.slane %v1070, 4
      %v1077 = vshrl.u32 %v861, 16
      %v1079 = vrot.slane %v1077, 7
      %v1080 = vshll.u32 %v861, 16
      %v1082 = vor.u32 %v1079, %v1080
      %v1083 = vrot.slane %v1079, 4
      %v1085 = vshrl.u32 %v862, 16
      %v1087 = vrot.slane %v1085, 7
      %v1088 = vshll.u32 %v862, 16
      %v1090 = vor.u32 %v1087, %v1088
      %v1091 = vsel %vm871, %v1083, %v1090
      %v1092 = vrot.slane %v1087, 4
      %v1094 = vshrl.u32 %v863, 16
      %v1096 = vrot.slane %v1094, 7
      %v1097 = vshll.u32 %v863, 16
      %v1099 = vor.u32 %v1096, %v1097
      %v1100 = vrot.slane %v1096, 4
      %v1102 = vshrl.u32 %v864, 16
      %v1104 = vrot.slane %v1102, 7
      %v1105 = vshll.u32 %v864, 16
      %v1107 = vor.u32 %v1104, %v1105
      %v1108 = vsel %vm871, %v1100, %v1107
      %v1109 = vrot.slane %v1104, 4
      %v1111 = vshrl.u32 %v865, 16
      %v1113 = vrot.slane %v1111, 7
      %v1114 = vshll.u32 %v865, 16
      %v1116 = vor.u32 %v1113, %v1114
      %v1117 = vrot.slane %v1113, 4
      %v1119 = vshrl.u32 %v866, 16
      %v1121 = vrot.slane %v1119, 7
      %v1122 = vshll.u32 %v866, 16
      %v1124 = vor.u32 %v1121, %v1122
      %v1125 = vsel %vm871, %v1117, %v1124
      %v1126 = vrot.slane %v1121, 4
      %v1128 = vshrl.u32 %v867, 16
      %v1130 = vrot.slane %v1128, 7
      %v1131 = vshll.u32 %v867, 16
      %v1133 = vor.u32 %v1130, %v1131
      %v1134 = vrot.slane %v1130, 4
      %v1136 = vshrl.u32 %v868, 16
      %v1138 = vrot.slane %v1136, 7
      %v1139 = vshll.u32 %v868, 16
      %v1141 = vor.u32 %v1138, %v1139
      %v1142 = vsel %vm871, %v1134, %v1141
      %v1143 = vrot.slane %v1138, 4
      %s1192 = scalar_lea.vmem [#allocation2], 12
      %vm1193 = vcmask 519168
      %vm1194 = vsmask.f32 7938
      %vm1195 = vmand %vm1193, %vm1194
      %v1196 = vld [vmem:[%s1192] sm:$0xf]
      %v1197 = vsel %vm1195, %v878, %v1196
      %1198 = vst [vmem:[%s1192] sm:$0xf] %v1197
      %1199 = vst.msk [vmem:[%s1192 + $0x4] sm:$0xf] %vm717, %v887
      %vm1200 = vcmask 516096
      %vm1201 = vmand %vm1200, %vm869
      %v1202 = vld [vmem:[%s1192 + $0x8] sm:$0x1]
      %v1203 = vsel %vm1201, %v888, %v1202
      %1204 = vst [vmem:[%s1192 + $0x8] sm:$0x1] %v1203
      %v1205 = vld [vmem:[%s1192 + $0xc] sm:$0xf]
      %v1206 = vsel %vm1195, %v895, %v1205
      %1207 = vst [vmem:[%s1192 + $0xc] sm:$0xf] %v1206
      %1208 = vst.msk [vmem:[%s1192 + $0x10] sm:$0xf] %vm717, %v904
      %v1209 = vld [vmem:[%s1192 + $0x14] sm:$0x1]
      %v1210 = vsel %vm1201, %v905, %v1209
      %1211 = vst [vmem:[%s1192 + $0x14] sm:$0x1] %v1210
      %v1212 = vld [vmem:[%s1192 + $0x18] sm:$0xf]
      %v1213 = vsel %vm1195, %v912, %v1212
      %1214 = vst [vmem:[%s1192 + $0x18] sm:$0xf] %v1213
      %1215 = vst.msk [vmem:[%s1192 + $0x1c] sm:$0xf] %vm717, %v921
      %v1216 = vld [vmem:[%s1192 + $0x20] sm:$0x1]
      %v1217 = vsel %vm1201, %v922, %v1216
      %1218 = vst [vmem:[%s1192 + $0x20] sm:$0x1] %v1217
      %v1219 = vld [vmem:[%s1192 + $0x24] sm:$0xf]
      %v1220 = vsel %vm1195, %v929, %v1219
      %1221 = vst [vmem:[%s1192 + $0x24] sm:$0xf] %v1220
      %1222 = vst.msk [vmem:[%s1192 + $0x28] sm:$0xf] %vm717, %v938
      %v1223 = vld [vmem:[%s1192 + $0x2c] sm:$0x1]
      %v1224 = vsel %vm1201, %v939, %v1223
      %1225 = vst [vmem:[%s1192 + $0x2c] sm:$0x1] %v1224
      %v1226 = vld [vmem:[%s1192 + $0x30] sm:$0xf]
      %v1227 = vsel %vm1195, %v946, %v1226
      %1228 = vst [vmem:[%s1192 + $0x30] sm:$0xf] %v1227
      %1229 = vst.msk [vmem:[%s1192 + $0x34] sm:$0xf] %vm717, %v955
      %v1230 = vld [vmem:[%s1192 + $0x38] sm:$0x1]
      %v1231 = vsel %vm1201, %v956, %v1230
      %1232 = vst [vmem:[%s1192 + $0x38] sm:$0x1] %v1231
      %v1233 = vld [vmem:[%s1192 + $0x3c] sm:$0xf]
      %v1234 = vsel %vm1195, %v963, %v1233
      %1235 = vst [vmem:[%s1192 + $0x3c] sm:$0xf] %v1234
      %1236 = vst.msk [vmem:[%s1192 + $0x40] sm:$0xf] %vm717, %v972
      %v1237 = vld [vmem:[%s1192 + $0x44] sm:$0x1]
      %v1238 = vsel %vm1201, %v973, %v1237
      %1239 = vst [vmem:[%s1192 + $0x44] sm:$0x1] %v1238
      %v1240 = vld [vmem:[%s1192 + $0x48] sm:$0xf]
      %v1241 = vsel %vm1195, %v980, %v1240
      %1242 = vst [vmem:[%s1192 + $0x48] sm:$0xf] %v1241
      %1243 = vst.msk [vmem:[%s1192 + $0x4c] sm:$0xf] %vm717, %v989
      %v1244 = vld [vmem:[%s1192 + $0x50] sm:$0x1]
      %v1245 = vsel %vm1201, %v990, %v1244
      %1246 = vst [vmem:[%s1192 + $0x50] sm:$0x1] %v1245
      %v1247 = vld [vmem:[%s1192 + $0x54] sm:$0xf]
      %v1248 = vsel %vm1195, %v997, %v1247
      %1249 = vst [vmem:[%s1192 + $0x54] sm:$0xf] %v1248
      %1250 = vst.msk [vmem:[%s1192 + $0x58] sm:$0xf] %vm717, %v1006
      %v1251 = vld [vmem:[%s1192 + $0x5c] sm:$0x1]
      %v1252 = vsel %vm1201, %v1007, %v1251
      %1253 = vst [vmem:[%s1192 + $0x5c] sm:$0x1] %v1252
      %v1254 = vld [vmem:[%s1192 + $0x60] sm:$0xf]
      %v1255 = vsel %vm1195, %v1014, %v1254
      %1256 = vst [vmem:[%s1192 + $0x60] sm:$0xf] %v1255
      %1257 = vst.msk [vmem:[%s1192 + $0x64] sm:$0xf] %vm717, %v1023
      %v1258 = vld [vmem:[%s1192 + $0x68] sm:$0x1]
      %v1259 = vsel %vm1201, %v1024, %v1258
      %1260 = vst [vmem:[%s1192 + $0x68] sm:$0x1] %v1259
      %v1261 = vld [vmem:[%s1192 + $0x6c] sm:$0xf]
      %v1262 = vsel %vm1195, %v1031, %v1261
      %1263 = vst [vmem:[%s1192 + $0x6c] sm:$0xf] %v1262
      %1264 = vst.msk [vmem:[%s1192 + $0x70] sm:$0xf] %vm717, %v1040
      %v1265 = vld [vmem:[%s1192 + $0x74] sm:$0x1]
      %v1266 = vsel %vm1201, %v1041, %v1265
      %1267 = vst [vmem:[%s1192 + $0x74] sm:$0x1] %v1266
      %v1268 = vld [vmem:[%s1192 + $0x78] sm:$0xf]
      %v1269 = vsel %vm1195, %v1048, %v1268
      %1270 = vst [vmem:[%s1192 + $0x78] sm:$0xf] %v1269
      %1271 = vst.msk [vmem:[%s1192 + $0x7c] sm:$0xf] %vm717, %v1057
      %v1272 = vld [vmem:[%s1192 + $0x80] sm:$0x1]
      %v1273 = vsel %vm1201, %v1058, %v1272
      %1274 = vst [vmem:[%s1192 + $0x80] sm:$0x1] %v1273
      %v1275 = vld [vmem:[%s1192 + $0x84] sm:$0xf]
      %v1276 = vsel %vm1195, %v1065, %v1275
      %1277 = vst [vmem:[%s1192 + $0x84] sm:$0xf] %v1276
      %1278 = vst.msk [vmem:[%s1192 + $0x88] sm:$0xf] %vm717, %v1074
      %v1279 = vld [vmem:[%s1192 + $0x8c] sm:$0x1]
      %v1280 = vsel %vm1201, %v1075, %v1279
      %1281 = vst [vmem:[%s1192 + $0x8c] sm:$0x1] %v1280
      %v1282 = vld [vmem:[%s1192 + $0x90] sm:$0xf]
      %v1283 = vsel %vm1195, %v1082, %v1282
      %1284 = vst [vmem:[%s1192 + $0x90] sm:$0xf] %v1283
      %1285 = vst.msk [vmem:[%s1192 + $0x94] sm:$0xf] %vm717, %v1091
      %v1286 = vld [vmem:[%s1192 + $0x98] sm:$0x1]
      %v1287 = vsel %vm1201, %v1092, %v1286
      %1288 = vst [vmem:[%s1192 + $0x98] sm:$0x1] %v1287
      %v1289 = vld [vmem:[%s1192 + $0x9c] sm:$0xf]
      %v1290 = vsel %vm1195, %v1099, %v1289
      %1291 = vst [vmem:[%s1192 + $0x9c] sm:$0xf] %v1290
      %1292 = vst.msk [vmem:[%s1192 + $0xa0] sm:$0xf] %vm717, %v1108
      %v1293 = vld [vmem:[%s1192 + $0xa4] sm:$0x1]
      %v1294 = vsel %vm1201, %v1109, %v1293
      %1295 = vst [vmem:[%s1192 + $0xa4] sm:$0x1] %v1294
      %v1296 = vld [vmem:[%s1192 + $0xa8] sm:$0xf]
      %v1297 = vsel %vm1195, %v1116, %v1296
      %1298 = vst [vmem:[%s1192 + $0xa8] sm:$0xf] %v1297
      %1299 = vst.msk [vmem:[%s1192 + $0xac] sm:$0xf] %vm717, %v1125
      %v1300 = vld [vmem:[%s1192 + $0xb0] sm:$0x1]
      %v1301 = vsel %vm1201, %v1126, %v1300
      %1302 = vst [vmem:[%s1192 + $0xb0] sm:$0x1] %v1301
      %v1303 = vld [vmem:[%s1192 + $0xb4] sm:$0xf]
      %v1304 = vsel %vm1195, %v1133, %v1303
      %1305 = vst [vmem:[%s1192 + $0xb4] sm:$0xf] %v1304
      %1306 = vst.msk [vmem:[%s1192 + $0xb8] sm:$0xf] %vm717, %v1142
      %v1307 = vld [vmem:[%s1192 + $0xbc] sm:$0x1]
      %v1308 = vsel %vm1201, %v1143, %v1307
      %1309 = vst [vmem:[%s1192 + $0xbc] sm:$0x1] %v1308
      %v1310 = vld [vmem:[#allocation2] sm:$0xf]
      %v1311 = vld [vmem:[#allocation2 + $0x4] sm:$0xf]
      %v1312 = vld [vmem:[#allocation2 + $0xc] sm:$0xf]
      %v1313 = vld [vmem:[#allocation2 + $0x10] sm:$0xf]
      %v1314 = vld [vmem:[#allocation2 + $0x18] sm:$0xf]
      %v1315 = vld [vmem:[#allocation2 + $0x1c] sm:$0xf]
      %v1316 = vld [vmem:[#allocation2 + $0x24] sm:$0xf]
      %v1317 = vld [vmem:[#allocation2 + $0x28] sm:$0xf]
      %v1318 = vld [vmem:[#allocation2 + $0x30] sm:$0xf]
      %v1319 = vld [vmem:[#allocation2 + $0x34] sm:$0xf]
      %v1320 = vld [vmem:[#allocation2 + $0x3c] sm:$0xf]
      %v1321 = vld [vmem:[#allocation2 + $0x40] sm:$0xf]
      %v1322 = vld [vmem:[#allocation2 + $0x48] sm:$0xf]
      %v1323 = vld [vmem:[#allocation2 + $0x4c] sm:$0xf]
      %v1324 = vld [vmem:[#allocation2 + $0x54] sm:$0xf]
      %v1325 = vld [vmem:[#allocation2 + $0x58] sm:$0xf]
      %v1326 = vld [vmem:[#allocation2 + $0x60] sm:$0xf]
      %v1327 = vld [vmem:[#allocation2 + $0x64] sm:$0xf]
      %v1328 = vld [vmem:[#allocation2 + $0x6c] sm:$0xf]
      %v1329 = vld [vmem:[#allocation2 + $0x70] sm:$0xf]
      %v1330 = vld [vmem:[#allocation2 + $0x78] sm:$0xf]
      %v1331 = vld [vmem:[#allocation2 + $0x7c] sm:$0xf]
      %v1332 = vld [vmem:[#allocation2 + $0x84] sm:$0xf]
      %v1333 = vld [vmem:[#allocation2 + $0x88] sm:$0xf]
      %v1334 = vld [vmem:[#allocation2 + $0x90] sm:$0xf]
      %v1335 = vld [vmem:[#allocation2 + $0x94] sm:$0xf]
      %v1336 = vld [vmem:[#allocation2 + $0x9c] sm:$0xf]
      %v1337 = vld [vmem:[#allocation2 + $0xa0] sm:$0xf]
      %v1338 = vld [vmem:[#allocation2 + $0xa8] sm:$0xf]
      %v1339 = vld [vmem:[#allocation2 + $0xac] sm:$0xf]
      %v1340 = vld [vmem:[#allocation2 + $0xb4] sm:$0xf]
      %v1341 = vld [vmem:[#allocation2 + $0xb8] sm:$0xf]
      %v1342 = vld [vmem:[%s4] sm:$0xf]
      %v1343 = vld [vmem:[%s4 + $0x4] sm:$0xf]
      %v1344 = vld [vmem:[%s4 + $0x8] sm:$0xf]
      %v1345 = vld [vmem:[%s4 + $0xc] sm:$0xf]
      %v1346 = vld [vmem:[%s4 + $0x10] sm:$0xf]
      %v1347 = vld [vmem:[%s4 + $0x14] sm:$0xf]
      %v1348 = vld [vmem:[%s4 + $0x18] sm:$0xf]
      %v1349 = vld [vmem:[%s4 + $0x1c] sm:$0xf]
      %v1350 = vld [vmem:[#allocation2 + $0x8] sm:$0x1]
      %v1351 = vld [vmem:[#allocation2 + $0x14] sm:$0x1]
      %v1352 = vld [vmem:[#allocation2 + $0x20] sm:$0x1]
      %v1353 = vld [vmem:[#allocation2 + $0x2c] sm:$0x1]
      %v1354 = vld [vmem:[#allocation2 + $0x38] sm:$0x1]
      %v1355 = vld [vmem:[#allocation2 + $0x44] sm:$0x1]
      %v1356 = vld [vmem:[#allocation2 + $0x50] sm:$0x1]
      %v1357 = vld [vmem:[#allocation2 + $0x5c] sm:$0x1]
      %v1358 = vld [vmem:[#allocation2 + $0x68] sm:$0x1]
      %v1359 = vld [vmem:[#allocation2 + $0x74] sm:$0x1]
      %v1360 = vld [vmem:[#allocation2 + $0x80] sm:$0x1]
      %v1361 = vld [vmem:[#allocation2 + $0x8c] sm:$0x1]
      %v1362 = vld [vmem:[#allocation2 + $0x98] sm:$0x1]
      %v1363 = vld [vmem:[#allocation2 + $0xa4] sm:$0x1]
      %v1364 = vld [vmem:[#allocation2 + $0xb0] sm:$0x1]
      %v1365 = vld [vmem:[#allocation2 + $0xbc] sm:$0x1]
      %vm1366 = vsmask.f32 3328
      %vm1367 = vsmask.f32 7440
      %vm1368 = vmor %vm1366, %vm1367
      %v1370 = vshrl.u32 %v1310, 16
      %v1372 = vrot.slane %v1370, 4
      %v1373 = vshll.u32 %v1310, 16
      %v1375 = vrot.slane %v1373, 5
      %v1376 = vor.u32 %v1372, %v1375
      %v1377 = vrot.slane %v1376, 4
      %v1379 = vshll.u32 %v1311, 16
      %v1381 = vrot.slane %v1379, 5
      %v1382 = vsel %vm1368, %v1377, %v1381
      %v1383 = vshrl.u32 %v1311, 16
      %v1385 = vrot.slane %v1383, 4
      %v1386 = vor.u32 %v1385, %v1381
      %v1387 = vrot.slane %v1386, 4
      %v1389 = vshll.u32 %v1350, 16
      %v1391 = vrot.slane %v1389, 5
      %v1392 = vsel %vm1368, %v1387, %v1391
      %v1394 = vshrl.u32 %v1312, 16
      %v1396 = vrot.slane %v1394, 4
      %v1397 = vshll.u32 %v1312, 16
      %v1399 = vrot.slane %v1397, 5
      %v1400 = vor.u32 %v1396, %v1399
      %v1401 = vrot.slane %v1400, 4
      %v1403 = vshll.u32 %v1313, 16
      %v1405 = vrot.slane %v1403, 5
      %v1406 = vsel %vm1368, %v1401, %v1405
      %v1407 = vshrl.u32 %v1313, 16
      %v1409 = vrot.slane %v1407, 4
      %v1410 = vor.u32 %v1409, %v1405
      %v1411 = vrot.slane %v1410, 4
      %v1413 = vshll.u32 %v1351, 16
      %v1415 = vrot.slane %v1413, 5
      %v1416 = vsel %vm1368, %v1411, %v1415
      %v1418 = vshrl.u32 %v1314, 16
      %v1420 = vrot.slane %v1418, 4
      %v1421 = vshll.u32 %v1314, 16
      %v1423 = vrot.slane %v1421, 5
      %v1424 = vor.u32 %v1420, %v1423
      %v1425 = vrot.slane %v1424, 4
      %v1427 = vshll.u32 %v1315, 16
      %v1429 = vrot.slane %v1427, 5
      %v1430 = vsel %vm1368, %v1425, %v1429
      %v1431 = vshrl.u32 %v1315, 16
      %v1433 = vrot.slane %v1431, 4
      %v1434 = vor.u32 %v1433, %v1429
      %v1435 = vrot.slane %v1434, 4
      %v1437 = vshll.u32 %v1352, 16
      %v1439 = vrot.slane %v1437, 5
      %v1440 = vsel %vm1368, %v1435, %v1439
      %v1442 = vshrl.u32 %v1316, 16
      %v1444 = vrot.slane %v1442, 4
      %v1445 = vshll.u32 %v1316, 16
      %v1447 = vrot.slane %v1445, 5
      %v1448 = vor.u32 %v1444, %v1447
      %v1449 = vrot.slane %v1448, 4
      %v1451 = vshll.u32 %v1317, 16
      %v1453 = vrot.slane %v1451, 5
      %v1454 = vsel %vm1368, %v1449, %v1453
      %v1455 = vshrl.u32 %v1317, 16
      %v1457 = vrot.slane %v1455, 4
      %v1458 = vor.u32 %v1457, %v1453
      %v1459 = vrot.slane %v1458, 4
      %v1461 = vshll.u32 %v1353, 16
      %v1463 = vrot.slane %v1461, 5
      %v1464 = vsel %vm1368, %v1459, %v1463
      %v1466 = vshrl.u32 %v1318, 16
      %v1468 = vrot.slane %v1466, 4
      %v1469 = vshll.u32 %v1318, 16
      %v1471 = vrot.slane %v1469, 5
      %v1472 = vor.u32 %v1468, %v1471
      %v1473 = vrot.slane %v1472, 4
      %v1475 = vshll.u32 %v1319, 16
      %v1477 = vrot.slane %v1475, 5
      %v1478 = vsel %vm1368, %v1473, %v1477
      %v1479 = vshrl.u32 %v1319, 16
      %v1481 = vrot.slane %v1479, 4
      %v1482 = vor.u32 %v1481, %v1477
      %v1483 = vrot.slane %v1482, 4
      %v1485 = vshll.u32 %v1354, 16
      %v1487 = vrot.slane %v1485, 5
      %v1488 = vsel %vm1368, %v1483, %v1487
      %v1490 = vshrl.u32 %v1320, 16
      %v1492 = vrot.slane %v1490, 4
      %v1493 = vshll.u32 %v1320, 16
      %v1495 = vrot.slane %v1493, 5
      %v1496 = vor.u32 %v1492, %v1495
      %v1497 = vrot.slane %v1496, 4
      %v1499 = vshll.u32 %v1321, 16
      %v1501 = vrot.slane %v1499, 5
      %v1502 = vsel %vm1368, %v1497, %v1501
      %v1503 = vshrl.u32 %v1321, 16
      %v1505 = vrot.slane %v1503, 4
      %v1506 = vor.u32 %v1505, %v1501
      %v1507 = vrot.slane %v1506, 4
      %v1509 = vshll.u32 %v1355, 16
      %v1511 = vrot.slane %v1509, 5
      %v1512 = vsel %vm1368, %v1507, %v1511
      %v1514 = vshrl.u32 %v1322, 16
      %v1516 = vrot.slane %v1514, 4
      %v1517 = vshll.u32 %v1322, 16
      %v1519 = vrot.slane %v1517, 5
      %v1520 = vor.u32 %v1516, %v1519
      %v1521 = vrot.slane %v1520, 4
      %v1523 = vshll.u32 %v1323, 16
      %v1525 = vrot.slane %v1523, 5
      %v1526 = vsel %vm1368, %v1521, %v1525
      %v1527 = vshrl.u32 %v1323, 16
      %v1529 = vrot.slane %v1527, 4
      %v1530 = vor.u32 %v1529, %v1525
      %v1531 = vrot.slane %v1530, 4
      %v1533 = vshll.u32 %v1356, 16
      %v1535 = vrot.slane %v1533, 5
      %v1536 = vsel %vm1368, %v1531, %v1535
      %v1538 = vshrl.u32 %v1324, 16
      %v1540 = vrot.slane %v1538, 4
      %v1541 = vshll.u32 %v1324, 16
      %v1543 = vrot.slane %v1541, 5
      %v1544 = vor.u32 %v1540, %v1543
      %v1545 = vrot.slane %v1544, 4
      %v1547 = vshll.u32 %v1325, 16
      %v1549 = vrot.slane %v1547, 5
      %v1550 = vsel %vm1368, %v1545, %v1549
      %v1551 = vshrl.u32 %v1325, 16
      %v1553 = vrot.slane %v1551, 4
      %v1554 = vor.u32 %v1553, %v1549
      %v1555 = vrot.slane %v1554, 4
      %v1557 = vshll.u32 %v1357, 16
      %v1559 = vrot.slane %v1557, 5
      %v1560 = vsel %vm1368, %v1555, %v1559
      %v1562 = vshrl.u32 %v1326, 16
      %v1564 = vrot.slane %v1562, 4
      %v1565 = vshll.u32 %v1326, 16
      %v1567 = vrot.slane %v1565, 5
      %v1568 = vor.u32 %v1564, %v1567
      %v1569 = vrot.slane %v1568, 4
      %v1571 = vshll.u32 %v1327, 16
      %v1573 = vrot.slane %v1571, 5
      %v1574 = vsel %vm1368, %v1569, %v1573
      %v1575 = vshrl.u32 %v1327, 16
      %v1577 = vrot.slane %v1575, 4
      %v1578 = vor.u32 %v1577, %v1573
      %v1579 = vrot.slane %v1578, 4
      %v1581 = vshll.u32 %v1358, 16
      %v1583 = vrot.slane %v1581, 5
      %v1584 = vsel %vm1368, %v1579, %v1583
      %v1586 = vshrl.u32 %v1328, 16
      %v1588 = vrot.slane %v1586, 4
      %v1589 = vshll.u32 %v1328, 16
      %v1591 = vrot.slane %v1589, 5
      %v1592 = vor.u32 %v1588, %v1591
      %v1593 = vrot.slane %v1592, 4
      %v1595 = vshll.u32 %v1329, 16
      %v1597 = vrot.slane %v1595, 5
      %v1598 = vsel %vm1368, %v1593, %v1597
      %v1599 = vshrl.u32 %v1329, 16
      %v1601 = vrot.slane %v1599, 4
      %v1602 = vor.u32 %v1601, %v1597
      %v1603 = vrot.slane %v1602, 4
      %v1605 = vshll.u32 %v1359, 16
      %v1607 = vrot.slane %v1605, 5
      %v1608 = vsel %vm1368, %v1603, %v1607
      %v1610 = vshrl.u32 %v1330, 16
      %v1612 = vrot.slane %v1610, 4
      %v1613 = vshll.u32 %v1330, 16
      %v1615 = vrot.slane %v1613, 5
      %v1616 = vor.u32 %v1612, %v1615
      %v1617 = vrot.slane %v1616, 4
      %v1619 = vshll.u32 %v1331, 16
      %v1621 = vrot.slane %v1619, 5
      %v1622 = vsel %vm1368, %v1617, %v1621
      %v1623 = vshrl.u32 %v1331, 16
      %v1625 = vrot.slane %v1623, 4
      %v1626 = vor.u32 %v1625, %v1621
      %v1627 = vrot.slane %v1626, 4
      %v1629 = vshll.u32 %v1360, 16
      %v1631 = vrot.slane %v1629, 5
      %v1632 = vsel %vm1368, %v1627, %v1631
      %v1634 = vshrl.u32 %v1332, 16
      %v1636 = vrot.slane %v1634, 4
      %v1637 = vshll.u32 %v1332, 16
      %v1639 = vrot.slane %v1637, 5
      %v1640 = vor.u32 %v1636, %v1639
      %v1641 = vrot.slane %v1640, 4
      %v1643 = vshll.u32 %v1333, 16
      %v1645 = vrot.slane %v1643, 5
      %v1646 = vsel %vm1368, %v1641, %v1645
      %v1647 = vshrl.u32 %v1333, 16
      %v1649 = vrot.slane %v1647, 4
      %v1650 = vor.u32 %v1649, %v1645
      %v1651 = vrot.slane %v1650, 4
      %v1653 = vshll.u32 %v1361, 16
      %v1655 = vrot.slane %v1653, 5
      %v1656 = vsel %vm1368, %v1651, %v1655
      %v1658 = vshrl.u32 %v1334, 16
      %v1660 = vrot.slane %v1658, 4
      %v1661 = vshll.u32 %v1334, 16
      %v1663 = vrot.slane %v1661, 5
      %v1664 = vor.u32 %v1660, %v1663
      %v1665 = vrot.slane %v1664, 4
      %v1667 = vshll.u32 %v1335, 16
      %v1669 = vrot.slane %v1667, 5
      %v1670 = vsel %vm1368, %v1665, %v1669
      %v1671 = vshrl.u32 %v1335, 16
      %v1673 = vrot.slane %v1671, 4
      %v1674 = vor.u32 %v1673, %v1669
      %v1675 = vrot.slane %v1674, 4
      %v1677 = vshll.u32 %v1362, 16
      %v1679 = vrot.slane %v1677, 5
      %v1680 = vsel %vm1368, %v1675, %v1679
      %v1682 = vshrl.u32 %v1336, 16
      %v1684 = vrot.slane %v1682, 4
      %v1685 = vshll.u32 %v1336, 16
      %v1687 = vrot.slane %v1685, 5
      %v1688 = vor.u32 %v1684, %v1687
      %v1689 = vrot.slane %v1688, 4
      %v1691 = vshll.u32 %v1337, 16
      %v1693 = vrot.slane %v1691, 5
      %v1694 = vsel %vm1368, %v1689, %v1693
      %v1695 = vshrl.u32 %v1337, 16
      %v1697 = vrot.slane %v1695, 4
      %v1698 = vor.u32 %v1697, %v1693
      %v1699 = vrot.slane %v1698, 4
      %v1701 = vshll.u32 %v1363, 16
      %v1703 = vrot.slane %v1701, 5
      %v1704 = vsel %vm1368, %v1699, %v1703
      %v1706 = vshrl.u32 %v1338, 16
      %v1708 = vrot.slane %v1706, 4
      %v1709 = vshll.u32 %v1338, 16
      %v1711 = vrot.slane %v1709, 5
      %v1712 = vor.u32 %v1708, %v1711
      %v1713 = vrot.slane %v1712, 4
      %v1715 = vshll.u32 %v1339, 16
      %v1717 = vrot.slane %v1715, 5
      %v1718 = vsel %vm1368, %v1713, %v1717
      %v1719 = vshrl.u32 %v1339, 16
      %v1721 = vrot.slane %v1719, 4
      %v1722 = vor.u32 %v1721, %v1717
      %v1723 = vrot.slane %v1722, 4
      %v1725 = vshll.u32 %v1364, 16
      %v1727 = vrot.slane %v1725, 5
      %v1728 = vsel %vm1368, %v1723, %v1727
      %v1730 = vshrl.u32 %v1340, 16
      %v1732 = vrot.slane %v1730, 4
      %v1733 = vshll.u32 %v1340, 16
      %v1735 = vrot.slane %v1733, 5
      %v1736 = vor.u32 %v1732, %v1735
      %v1737 = vrot.slane %v1736, 4
      %v1739 = vshll.u32 %v1341, 16
      %v1741 = vrot.slane %v1739, 5
      %v1742 = vsel %vm1368, %v1737, %v1741
      %v1743 = vshrl.u32 %v1341, 16
      %v1745 = vrot.slane %v1743, 4
      %v1746 = vor.u32 %v1745, %v1741
      %v1747 = vrot.slane %v1746, 4
      %v1749 = vshll.u32 %v1365, 16
      %v1751 = vrot.slane %v1749, 5
      %v1752 = vsel %vm1368, %v1747, %v1751
      %s1753 = scalar_lea.vmem %s4, 32
      %v1754 = vld [vmem:[%s1753] sm:$0xf]
      %v1755 = vld [vmem:[%s1753 + $0x4] sm:$0xf]
      %v1756 = vld [vmem:[%s1753 + $0x8] sm:$0xf]
      %v1757 = vld [vmem:[%s1753 + $0xc] sm:$0xf]
      %v1758 = vld [vmem:[%s1753 + $0x10] sm:$0xf]
      %v1759 = vld [vmem:[%s1753 + $0x14] sm:$0xf]
      %v1760 = vld [vmem:[%s1753 + $0x18] sm:$0xf]
      %v1761 = vld [vmem:[%s1753 + $0x1c] sm:$0xf]
      %v1762 = vunpack.c.l.b16 %v1382
      %v1763 = vunpack.c.l.b16 %v1392
      %v1764 = vunpack.c.l.b16 %v1406
      %v1765 = vunpack.c.l.b16 %v1416
      %v1766 = vunpack.c.l.b16 %v1430
      %v1767 = vunpack.c.l.b16 %v1440
      %v1768 = vunpack.c.l.b16 %v1454
      %v1769 = vunpack.c.l.b16 %v1464
      %v1770 = vunpack.c.l.b16 %v1478
      %v1771 = vunpack.c.l.b16 %v1488
      %v1772 = vunpack.c.l.b16 %v1502
      %v1773 = vunpack.c.l.b16 %v1512
      %v1774 = vunpack.c.l.b16 %v1526
      %v1775 = vunpack.c.l.b16 %v1536
      %v1776 = vunpack.c.l.b16 %v1550
      %v1777 = vunpack.c.l.b16 %v1560
      %v1778 = vunpack.c.l.b16 %v1574
      %v1779 = vunpack.c.l.b16 %v1584
      %v1780 = vunpack.c.l.b16 %v1598
      %v1781 = vunpack.c.l.b16 %v1608
      %v1782 = vunpack.c.l.b16 %v1622
      %v1783 = vunpack.c.l.b16 %v1632
      %v1784 = vunpack.c.l.b16 %v1646
      %v1785 = vunpack.c.l.b16 %v1656
      %v1786 = vunpack.c.l.b16 %v1670
      %v1787 = vunpack.c.l.b16 %v1680
      %v1788 = vunpack.c.l.b16 %v1694
      %v1789 = vunpack.c.l.b16 %v1704
      %v1790 = vunpack.c.l.b16 %v1718
      %v1791 = vunpack.c.l.b16 %v1728
      %v1792 = vunpack.c.l.b16 %v1742
      %v1793 = vunpack.c.l.b16 %v1752
      %v1794 = vpack.c.b16 %v1763, %v1762
      %v1795 = vpack.c.b16 %v1765, %v1764
      %v1796 = vpack.c.b16 %v1767, %v1766
      %v1797 = vpack.c.b16 %v1769, %v1768
      %v1798 = vpack.c.b16 %v1771, %v1770
      %v1799 = vpack.c.b16 %v1773, %v1772
      %v1800 = vpack.c.b16 %v1775, %v1774
      %v1801 = vpack.c.b16 %v1777, %v1776
      %v1802 = vpack.c.b16 %v1779, %v1778
      %v1803 = vpack.c.b16 %v1781, %v1780
      %v1804 = vpack.c.b16 %v1783, %v1782
      %v1805 = vpack.c.b16 %v1785, %v1784
      %v1806 = vpack.c.b16 %v1787, %v1786
      %v1807 = vpack.c.b16 %v1789, %v1788
      %v1808 = vpack.c.b16 %v1791, %v1790
      %v1809 = vpack.c.b16 %v1793, %v1792
      %v1818 = vunpack.c.l.b16 %v1754
      %v1819 = vunpack.c.l.b16 %v1755
      %v1820 = vunpack.c.l.b16 %v1756
      %v1821 = vunpack.c.l.b16 %v1757
      %v1822 = vunpack.c.l.b16 %v1758
      %v1823 = vunpack.c.l.b16 %v1759
      %v1824 = vunpack.c.l.b16 %v1760
      %v1825 = vunpack.c.l.b16 %v1761
      %v1826 = vpack.c.b16 %v1819, %v1818
      %v1827 = vpack.c.b16 %v1821, %v1820
      %v1828 = vpack.c.b16 %v1823, %v1822
      %v1829 = vpack.c.b16 %v1825, %v1824
      %vm1834 = vcmask 523264
      %v1836 = vsel %vm1834, %v1794, 0
      %v1839 = vsel %vm1834, %v1795, 0
      %v1842 = vsel %vm1834, %v1796, 0
      %v1845 = vsel %vm1834, %v1797, 0
      %v1848 = vsel %vm1834, %v1798, 0
      %v1851 = vsel %vm1834, %v1799, 0
      %v1854 = vsel %vm1834, %v1800, 0
      %v1857 = vsel %vm1834, %v1801, 0
      %v1860 = vsel %vm1834, %v1802, 0
      %v1863 = vsel %vm1834, %v1803, 0
      %v1866 = vsel %vm1834, %v1804, 0
      %v1869 = vsel %vm1834, %v1805, 0
      %v1872 = vsel %vm1834, %v1806, 0
      %v1875 = vsel %vm1834, %v1807, 0
      %v1878 = vsel %vm1834, %v1808, 0
      %v1881 = vsel %vm1834, %v1809, 0
      %1883 = vmatprep.subr.bf16.mxu0 0
      %1884 = vmatpush1.bf16.msra.mxu0 %v1826
      %1885 = vmatprep.subr.bf16.mxu0 0
      %1886 = vmatpush1.bf16.msra.mxu0 %v1827
      %1887 = vmatprep.subr.bf16.mxu0 0
      %1888 = vmatpush1.bf16.msra.mxu0 %v1828
      %1889 = vmatprep.subr.bf16.mxu0 0
      %1890 = vmatpush1.bf16.msra.mxu0 %v1829
      %1891 = vmatprep.subr.bf16.mxu0 0
      %1892 = vmatpush1.bf16.msra.mxu0 0
      %1893 = vmatprep.subr.bf16.mxu0 0
      %1894 = vmatpush1.bf16.msra.mxu0 0
      %1895 = vmatprep.subr.bf16.mxu0 0
      %1896 = vmatpush1.bf16.msra.mxu0 0
      %1897 = vmatprep.subr.bf16.mxu0 0
      %1898 = vmatpush1.bf16.msra.mxu0 0
      %1899 = vmatprep.subr.bf16.mxu0 0
      %1900 = vmatpush1.bf16.msra.mxu0 0
      %1901 = vmatprep.subr.bf16.mxu0 0
      %1902 = vmatpush1.bf16.msra.mxu0 0
      %1903 = vmatprep.subr.bf16.mxu0 0
      %1904 = vmatpush1.bf16.msra.mxu0 0
      %1905 = vmatprep.subr.bf16.mxu0 0
      %1906 = vmatpush1.bf16.msra.mxu0 0
      %1907 = vmatprep.subr.bf16.mxu0 0
      %1908 = vmatpush1.bf16.msra.mxu0 0
      %1909 = vmatprep.subr.bf16.mxu0 0
      %1910 = vmatpush1.bf16.msra.mxu0 0
      %1911 = vmatprep.subr.bf16.mxu0 0
      %1912 = vmatpush1.bf16.msra.mxu0 0
      %1913 = vmatprep.subr.bf16.mxu0 0
      %1914 = vmatpush1.bf16.msra.mxu0 0
      %1915 = vmatprep.mubr.bf16.mxu0 0
      %1916 = vmatmul.mubr.bf16.gmra.mrb[0].mxu0 %v1836
      %v1917 = vpop.f32.mrb[0].mxu0
      %v1918 = vadd.f32 0.0, %v1917
      %v1919 = vpop.f32.mrb[0].mxu0
      %v1920 = vpop.f32.mrb[0].mxu0
      %v1921 = vadd.f32 0.0, %v1920
      %v1922 = vpop.f32.mrb[0].mxu0
      %1923 = vmatprep.mubr.bf16.mxu0 0
      %1924 = vmatmul.mubr.bf16.gmra.mrb[0].mxu0 %v1839
      %v1925 = vpop.f32.mrb[0].mxu0
      %v1926 = vadd.f32 0.0, %v1925
      %v1927 = vpop.f32.mrb[0].mxu0
      %v1928 = vpop.f32.mrb[0].mxu0
      %v1929 = vadd.f32 0.0, %v1928
      %v1930 = vpop.f32.mrb[0].mxu0
      %1931 = vmatprep.mubr.bf16.mxu0 0
      %1932 = vmatmul.mubr.bf16.gmra.mrb[0].mxu0 %v1842
      %v1933 = vpop.f32.mrb[0].mxu0
      %v1934 = vadd.f32 0.0, %v1933
      %v1935 = vpop.f32.mrb[0].mxu0
      %v1936 = vpop.f32.mrb[0].mxu0
      %v1937 = vadd.f32 0.0, %v1936
      %v1938 = vpop.f32.mrb[0].mxu0
      %1939 = vmatprep.mubr.bf16.mxu0 0
      %1940 = vmatmul.mubr.bf16.gmra.mrb[0].mxu0 %v1845
      %v1941 = vpop.f32.mrb[0].mxu0
      %v1942 = vadd.f32 0.0, %v1941
      %v1943 = vpop.f32.mrb[0].mxu0
      %v1944 = vpop.f32.mrb[0].mxu0
      %v1945 = vadd.f32 0.0, %v1944
      %v1946 = vpop.f32.mrb[0].mxu0
      %1947 = vmatprep.mubr.bf16.mxu0 0
      %1948 = vmatmul.mubr.bf16.gmra.mrb[0].mxu0 %v1848
      %v1949 = vpop.f32.mrb[0].mxu0
      %v1950 = vadd.f32 0.0, %v1949
      %v1951 = vpop.f32.mrb[0].mxu0
      %v1952 = vpop.f32.mrb[0].mxu0
      %v1953 = vadd.f32 0.0, %v1952
      %v1954 = vpop.f32.mrb[0].mxu0
      %1955 = vmatprep.mubr.bf16.mxu0 0
      %1956 = vmatmul.mubr.bf16.gmra.mrb[0].mxu0 %v1851
      %v1957 = vpop.f32.mrb[0].mxu0
      %v1958 = vadd.f32 0.0, %v1957
      %v1959 = vpop.f32.mrb[0].mxu0
      %v1960 = vpop.f32.mrb[0].mxu0
      %v1961 = vadd.f32 0.0, %v1960
      %v1962 = vpop.f32.mrb[0].mxu0
      %1963 = vmatprep.mubr.bf16.mxu0 0
      %1964 = vmatmul.mubr.bf16.gmra.mrb[0].mxu0 %v1854
      %v1965 = vpop.f32.mrb[0].mxu0
      %v1966 = vadd.f32 0.0, %v1965
      %v1967 = vpop.f32.mrb[0].mxu0
      %v1968 = vpop.f32.mrb[0].mxu0
      %v1969 = vadd.f32 0.0, %v1968
      %v1970 = vpop.f32.mrb[0].mxu0
      %1971 = vmatprep.mubr.bf16.mxu0 0
      %1972 = vmatmul.mubr.bf16.gmra.mrb[0].mxu0 %v1857
      %v1973 = vpop.f32.mrb[0].mxu0
      %v1974 = vadd.f32 0.0, %v1973
      %v1975 = vpop.f32.mrb[0].mxu0
      %v1976 = vpop.f32.mrb[0].mxu0
      %v1977 = vadd.f32 0.0, %v1976
      %v1978 = vpop.f32.mrb[0].mxu0
      %1979 = vmatprep.mubr.bf16.mxu0 0
      %1980 = vmatmul.mubr.bf16.gmra.mrb[0].mxu0 %v1860
      %v1981 = vpop.f32.mrb[0].mxu0
      %v1982 = vadd.f32 0.0, %v1981
      %v1983 = vpop.f32.mrb[0].mxu0
      %v1984 = vpop.f32.mrb[0].mxu0
      %v1985 = vadd.f32 0.0, %v1984
      %v1986 = vpop.f32.mrb[0].mxu0
      %1987 = vmatprep.mubr.bf16.mxu0 0
      %1988 = vmatmul.mubr.bf16.gmra.mrb[0].mxu0 %v1863
      %v1989 = vpop.f32.mrb[0].mxu0
      %v1990 = vadd.f32 0.0, %v1989
      %v1991 = vpop.f32.mrb[0].mxu0
      %v1992 = vpop.f32.mrb[0].mxu0
      %v1993 = vadd.f32 0.0, %v1992
      %v1994 = vpop.f32.mrb[0].mxu0
      %1995 = vmatprep.mubr.bf16.mxu0 0
      %1996 = vmatmul.mubr.bf16.gmra.mrb[0].mxu0 %v1866
      %v1997 = vpop.f32.mrb[0].mxu0
      %v1998 = vadd.f32 0.0, %v1997
      %v1999 = vpop.f32.mrb[0].mxu0
      %v2000 = vpop.f32.mrb[0].mxu0
      %v2001 = vadd.f32 0.0, %v2000
      %v2002 = vpop.f32.mrb[0].mxu0
      %2003 = vmatprep.mubr.bf16.mxu0 0
      %2004 = vmatmul.mubr.bf16.gmra.mrb[0].mxu0 %v1869
      %v2005 = vpop.f32.mrb[0].mxu0
      %v2006 = vadd.f32 0.0, %v2005
      %v2007 = vpop.f32.mrb[0].mxu0
      %v2008 = vpop.f32.mrb[0].mxu0
      %v2009 = vadd.f32 0.0, %v2008
      %v2010 = vpop.f32.mrb[0].mxu0
      %2011 = vmatprep.mubr.bf16.mxu0 0
      %2012 = vmatmul.mubr.bf16.gmra.mrb[0].mxu0 %v1872
      %v2013 = vpop.f32.mrb[0].mxu0
      %v2014 = vadd.f32 0.0, %v2013
      %v2015 = vpop.f32.mrb[0].mxu0
      %v2016 = vpop.f32.mrb[0].mxu0
      %v2017 = vadd.f32 0.0, %v2016
      %v2018 = vpop.f32.mrb[0].mxu0
      %2019 = vmatprep.mubr.bf16.mxu0 0
      %2020 = vmatmul.mubr.bf16.gmra.mrb[0].mxu0 %v1875
      %v2021 = vpop.f32.mrb[0].mxu0
      %v2022 = vadd.f32 0.0, %v2021
      %v2023 = vpop.f32.mrb[0].mxu0
      %v2024 = vpop.f32.mrb[0].mxu0
      %v2025 = vadd.f32 0.0, %v2024
      %v2026 = vpop.f32.mrb[0].mxu0
      %2027 = vmatprep.mubr.bf16.mxu0 0
      %2028 = vmatmul.mubr.bf16.gmra.mrb[0].mxu0 %v1878
      %v2029 = vpop.f32.mrb[0].mxu0
      %v2030 = vadd.f32 0.0, %v2029
      %v2031 = vpop.f32.mrb[0].mxu0
      %v2032 = vpop.f32.mrb[0].mxu0
      %v2033 = vadd.f32 0.0, %v2032
      %v2034 = vpop.f32.mrb[0].mxu0
      %2035 = vmatprep.mubr.bf16.mxu0 0
      %2036 = vmatmul.mubr.bf16.gmra.mrb[0].mxu0 %v1881
      %v2037 = vpop.f32.mrb[0].mxu0
      %v2038 = vadd.f32 0.0, %v2037
      %v2039 = vpop.f32.mrb[0].mxu0
      %v2040 = vpop.f32.mrb[0].mxu0
      %v2041 = vadd.f32 0.0, %v2040
      %v2042 = vpop.f32.mrb[0].mxu0
      %2043 = vdwg.mxu0
      %v2076 = vunpack.c.l.b16 %v1310
      %v2077 = vunpack.c.l.b16 %v1311
      %v2078 = vunpack.c.l.b16 %v1312
      %v2079 = vunpack.c.l.b16 %v1313
      %v2080 = vunpack.c.l.b16 %v1314
      %v2081 = vunpack.c.l.b16 %v1315
      %v2082 = vunpack.c.l.b16 %v1316
      %v2083 = vunpack.c.l.b16 %v1317
      %v2084 = vunpack.c.l.b16 %v1318
      %v2085 = vunpack.c.l.b16 %v1319
      %v2086 = vunpack.c.l.b16 %v1320
      %v2087 = vunpack.c.l.b16 %v1321
      %v2088 = vunpack.c.l.b16 %v1322
      %v2089 = vunpack.c.l.b16 %v1323
      %v2090 = vunpack.c.l.b16 %v1324
      %v2091 = vunpack.c.l.b16 %v1325
      %v2092 = vunpack.c.l.b16 %v1326
      %v2093 = vunpack.c.l.b16 %v1327
      %v2094 = vunpack.c.l.b16 %v1328
      %v2095 = vunpack.c.l.b16 %v1329
      %v2096 = vunpack.c.l.b16 %v1330
      %v2097 = vunpack.c.l.b16 %v1331
      %v2098 = vunpack.c.l.b16 %v1332
      %v2099 = vunpack.c.l.b16 %v1333
      %v2100 = vunpack.c.l.b16 %v1334
      %v2101 = vunpack.c.l.b16 %v1335
      %v2102 = vunpack.c.l.b16 %v1336
      %v2103 = vunpack.c.l.b16 %v1337
      %v2104 = vunpack.c.l.b16 %v1338
      %v2105 = vunpack.c.l.b16 %v1339
      %v2106 = vunpack.c.l.b16 %v1340
      %v2107 = vunpack.c.l.b16 %v1341
      %v2108 = vpack.c.b16 %v2077, %v2076
      %v2109 = vpack.c.b16 %v2079, %v2078
      %v2110 = vpack.c.b16 %v2081, %v2080
      %v2111 = vpack.c.b16 %v2083, %v2082
      %v2112 = vpack.c.b16 %v2085, %v2084
      %v2113 = vpack.c.b16 %v2087, %v2086
      %v2114 = vpack.c.b16 %v2089, %v2088
      %v2115 = vpack.c.b16 %v2091, %v2090
      %v2116 = vpack.c.b16 %v2093, %v2092
      %v2117 = vpack.c.b16 %v2095, %v2094
      %v2118 = vpack.c.b16 %v2097, %v2096
      %v2119 = vpack.c.b16 %v2099, %v2098
      %v2120 = vpack.c.b16 %v2101, %v2100
      %v2121 = vpack.c.b16 %v2103, %v2102
      %v2122 = vpack.c.b16 %v2105, %v2104
      %v2123 = vpack.c.b16 %v2107, %v2106
      %v2132 = vunpack.c.l.b16 %v1342
      %v2133 = vunpack.c.l.b16 %v1343
      %v2134 = vunpack.c.l.b16 %v1344
      %v2135 = vunpack.c.l.b16 %v1345
      %v2136 = vunpack.c.l.b16 %v1346
      %v2137 = vunpack.c.l.b16 %v1347
      %v2138 = vunpack.c.l.b16 %v1348
      %v2139 = vunpack.c.l.b16 %v1349
      %v2140 = vpack.c.b16 %v2133, %v2132
      %v2141 = vpack.c.b16 %v2135, %v2134
      %v2142 = vpack.c.b16 %v2137, %v2136
      %v2143 = vpack.c.b16 %v2139, %v2138
      %v2149 = vsel %vm1834, %v2108, 0
      %v2152 = vsel %vm1834, %v2109, 0
      %v2155 = vsel %vm1834, %v2110, 0
      %v2158 = vsel %vm1834, %v2111, 0
      %v2161 = vsel %vm1834, %v2112, 0
      %v2164 = vsel %vm1834, %v2113, 0
      %v2167 = vsel %vm1834, %v2114, 0
      %v2170 = vsel %vm1834, %v2115, 0
      %v2173 = vsel %vm1834, %v2116, 0
      %v2176 = vsel %vm1834, %v2117, 0
      %v2179 = vsel %vm1834, %v2118, 0
      %v2182 = vsel %vm1834, %v2119, 0
      %v2185 = vsel %vm1834, %v2120, 0
      %v2188 = vsel %vm1834, %v2121, 0
      %v2191 = vsel %vm1834, %v2122, 0
      %v2194 = vsel %vm1834, %v2123, 0
      %2196 = vmatprep.subr.bf16.mxu0 0
      %2197 = vmatpush1.bf16.msra.mxu0 %v2140
      %2198 = vmatprep.subr.bf16.mxu0 0
      %2199 = vmatpush1.bf16.msra.mxu0 %v2141
      %2200 = vmatprep.subr.bf16.mxu0 0
      %2201 = vmatpush1.bf16.msra.mxu0 %v2142
      %2202 = vmatprep.subr.bf16.mxu0 0
      %2203 = vmatpush1.bf16.msra.mxu0 %v2143
      %2204 = vmatprep.subr.bf16.mxu0 0
      %2205 = vmatpush1.bf16.msra.mxu0 0
      %2206 = vmatprep.subr.bf16.mxu0 0
      %2207 = vmatpush1.bf16.msra.mxu0 0
      %2208 = vmatprep.subr.bf16.mxu0 0
      %2209 = vmatpush1.bf16.msra.mxu0 0
      %2210 = vmatprep.subr.bf16.mxu0 0
      %2211 = vmatpush1.bf16.msra.mxu0 0
      %2212 = vmatprep.subr.bf16.mxu0 0
      %2213 = vmatpush1.bf16.msra.mxu0 0
      %2214 = vmatprep.subr.bf16.mxu0 0
      %2215 = vmatpush1.bf16.msra.mxu0 0
      %2216 = vmatprep.subr.bf16.mxu0 0
      %2217 = vmatpush1.bf16.msra.mxu0 0
      %2218 = vmatprep.subr.bf16.mxu0 0
      %2219 = vmatpush1.bf16.msra.mxu0 0
      %2220 = vmatprep.subr.bf16.mxu0 0
      %2221 = vmatpush1.bf16.msra.mxu0 0
      %2222 = vmatprep.subr.bf16.mxu0 0
      %2223 = vmatpush1.bf16.msra.mxu0 0
      %2224 = vmatprep.subr.bf16.mxu0 0
      %2225 = vmatpush1.bf16.msra.mxu0 0
      %2226 = vmatprep.subr.bf16.mxu0 0
      %2227 = vmatpush1.bf16.msra.mxu0 0
      %2228 = vmatprep.mubr.bf16.mxu0 0
      %2229 = vmatmul.mubr.bf16.gmra.mrb[0].mxu0 %v2149
      %v2230 = vpop.f32.mrb[0].mxu0
      %v2231 = vadd.f32 %v1918, %v2230
      %v2232 = vpop.f32.mrb[0].mxu0
      %v2233 = vpop.f32.mrb[0].mxu0
      %v2234 = vadd.f32 %v1921, %v2233
      %v2235 = vpop.f32.mrb[0].mxu0
      %2236 = vmatprep.mubr.bf16.mxu0 0
      %2237 = vmatmul.mubr.bf16.gmra.mrb[0].mxu0 %v2152
      %v2238 = vpop.f32.mrb[0].mxu0
      %v2239 = vadd.f32 %v1926, %v2238
      %v2240 = vpop.f32.mrb[0].mxu0
      %v2241 = vpop.f32.mrb[0].mxu0
      %v2242 = vadd.f32 %v1929, %v2241
      %v2243 = vpop.f32.mrb[0].mxu0
      %2244 = vmatprep.mubr.bf16.mxu0 0
      %2245 = vmatmul.mubr.bf16.gmra.mrb[0].mxu0 %v2155
      %v2246 = vpop.f32.mrb[0].mxu0
      %v2247 = vadd.f32 %v1934, %v2246
      %v2248 = vpop.f32.mrb[0].mxu0
      %v2249 = vpop.f32.mrb[0].mxu0
      %v2250 = vadd.f32 %v1937, %v2249
      %v2251 = vpop.f32.mrb[0].mxu0
      %2252 = vmatprep.mubr.bf16.mxu0 0
      %2253 = vmatmul.mubr.bf16.gmra.mrb[0].mxu0 %v2158
      %v2254 = vpop.f32.mrb[0].mxu0
      %v2255 = vadd.f32 %v1942, %v2254
      %v2256 = vpop.f32.mrb[0].mxu0
      %v2257 = vpop.f32.mrb[0].mxu0
      %v2258 = vadd.f32 %v1945, %v2257
      %v2259 = vpop.f32.mrb[0].mxu0
      %2260 = vmatprep.mubr.bf16.mxu0 0
      %2261 = vmatmul.mubr.bf16.gmra.mrb[0].mxu0 %v2161
      %v2262 = vpop.f32.mrb[0].mxu0
      %v2263 = vadd.f32 %v1950, %v2262
      %v2264 = vpop.f32.mrb[0].mxu0
      %v2265 = vpop.f32.mrb[0].mxu0
      %v2266 = vadd.f32 %v1953, %v2265
      %v2267 = vpop.f32.mrb[0].mxu0
      %2268 = vmatprep.mubr.bf16.mxu0 0
      %2269 = vmatmul.mubr.bf16.gmra.mrb[0].mxu0 %v2164
      %v2270 = vpop.f32.mrb[0].mxu0
      %v2271 = vadd.f32 %v1958, %v2270
      %v2272 = vpop.f32.mrb[0].mxu0
      %v2273 = vpop.f32.mrb[0].mxu0
      %v2274 = vadd.f32 %v1961, %v2273
      %v2275 = vpop.f32.mrb[0].mxu0
      %2276 = vmatprep.mubr.bf16.mxu0 0
      %2277 = vmatmul.mubr.bf16.gmra.mrb[0].mxu0 %v2167
      %v2278 = vpop.f32.mrb[0].mxu0
      %v2279 = vadd.f32 %v1966, %v2278
      %v2280 = vpop.f32.mrb[0].mxu0
      %v2281 = vpop.f32.mrb[0].mxu0
      %v2282 = vadd.f32 %v1969, %v2281
      %v2283 = vpop.f32.mrb[0].mxu0
      %2284 = vmatprep.mubr.bf16.mxu0 0
      %2285 = vmatmul.mubr.bf16.gmra.mrb[0].mxu0 %v2170
      %v2286 = vpop.f32.mrb[0].mxu0
      %v2287 = vadd.f32 %v1974, %v2286
      %v2288 = vpop.f32.mrb[0].mxu0
      %v2289 = vpop.f32.mrb[0].mxu0
      %v2290 = vadd.f32 %v1977, %v2289
      %v2291 = vpop.f32.mrb[0].mxu0
      %2292 = vmatprep.mubr.bf16.mxu0 0
      %2293 = vmatmul.mubr.bf16.gmra.mrb[0].mxu0 %v2173
      %v2294 = vpop.f32.mrb[0].mxu0
      %v2295 = vadd.f32 %v1982, %v2294
      %v2296 = vpop.f32.mrb[0].mxu0
      %v2297 = vpop.f32.mrb[0].mxu0
      %v2298 = vadd.f32 %v1985, %v2297
      %v2299 = vpop.f32.mrb[0].mxu0
      %2300 = vmatprep.mubr.bf16.mxu0 0
      %2301 = vmatmul.mubr.bf16.gmra.mrb[0].mxu0 %v2176
      %v2302 = vpop.f32.mrb[0].mxu0
      %v2303 = vadd.f32 %v1990, %v2302
      %v2304 = vpop.f32.mrb[0].mxu0
      %v2305 = vpop.f32.mrb[0].mxu0
      %v2306 = vadd.f32 %v1993, %v2305
      %v2307 = vpop.f32.mrb[0].mxu0
      %2308 = vmatprep.mubr.bf16.mxu0 0
      %2309 = vmatmul.mubr.bf16.gmra.mrb[0].mxu0 %v2179
      %v2310 = vpop.f32.mrb[0].mxu0
      %v2311 = vadd.f32 %v1998, %v2310
      %v2312 = vpop.f32.mrb[0].mxu0
      %v2313 = vpop.f32.mrb[0].mxu0
      %v2314 = vadd.f32 %v2001, %v2313
      %v2315 = vpop.f32.mrb[0].mxu0
      %2316 = vmatprep.mubr.bf16.mxu0 0
      %2317 = vmatmul.mubr.bf16.gmra.mrb[0].mxu0 %v2182
      %v2318 = vpop.f32.mrb[0].mxu0
      %v2319 = vadd.f32 %v2006, %v2318
      %v2320 = vpop.f32.mrb[0].mxu0
      %v2321 = vpop.f32.mrb[0].mxu0
      %v2322 = vadd.f32 %v2009, %v2321
      %v2323 = vpop.f32.mrb[0].mxu0
      %2324 = vmatprep.mubr.bf16.mxu0 0
      %2325 = vmatmul.mubr.bf16.gmra.mrb[0].mxu0 %v2185
      %v2326 = vpop.f32.mrb[0].mxu0
      %v2327 = vadd.f32 %v2014, %v2326
      %v2328 = vpop.f32.mrb[0].mxu0
      %v2329 = vpop.f32.mrb[0].mxu0
      %v2330 = vadd.f32 %v2017, %v2329
      %v2331 = vpop.f32.mrb[0].mxu0
      %2332 = vmatprep.mubr.bf16.mxu0 0
      %2333 = vmatmul.mubr.bf16.gmra.mrb[0].mxu0 %v2188
      %v2334 = vpop.f32.mrb[0].mxu0
      %v2335 = vadd.f32 %v2022, %v2334
      %v2336 = vpop.f32.mrb[0].mxu0
      %v2337 = vpop.f32.mrb[0].mxu0
      %v2338 = vadd.f32 %v2025, %v2337
      %v2339 = vpop.f32.mrb[0].mxu0
      %2340 = vmatprep.mubr.bf16.mxu0 0
      %2341 = vmatmul.mubr.bf16.gmra.mrb[0].mxu0 %v2191
      %v2342 = vpop.f32.mrb[0].mxu0
      %v2343 = vadd.f32 %v2030, %v2342
      %v2344 = vpop.f32.mrb[0].mxu0
      %v2345 = vpop.f32.mrb[0].mxu0
      %v2346 = vadd.f32 %v2033, %v2345
      %v2347 = vpop.f32.mrb[0].mxu0
      %2348 = vmatprep.mubr.bf16.mxu0 0
      %2349 = vmatmul.mubr.bf16.gmra.mrb[0].mxu0 %v2194
      %v2350 = vpop.f32.mrb[0].mxu0
      %v2351 = vadd.f32 %v2038, %v2350
      %v2352 = vpop.f32.mrb[0].mxu0
      %v2353 = vpop.f32.mrb[0].mxu0
      %v2354 = vadd.f32 %v2041, %v2353
      %v2355 = vpop.f32.mrb[0].mxu0
      %2356 = vdwg.mxu0
      %v2357 = vld [vmem:[#allocation2] sm:$0xe]
      %v2358 = vld [vmem:[#allocation2 + $0xc] sm:$0xe]
      %v2359 = vld [vmem:[#allocation2 + $0x18] sm:$0xe]
      %v2360 = vld [vmem:[#allocation2 + $0x24] sm:$0xe]
      %v2361 = vld [vmem:[#allocation2 + $0x30] sm:$0xe]
      %v2362 = vld [vmem:[#allocation2 + $0x3c] sm:$0xe]
      %v2363 = vld [vmem:[#allocation2 + $0x48] sm:$0xe]
      %v2364 = vld [vmem:[#allocation2 + $0x54] sm:$0xe]
      %v2365 = vld [vmem:[#allocation2 + $0x60] sm:$0xe]
      %v2366 = vld [vmem:[#allocation2 + $0x6c] sm:$0xe]
      %v2367 = vld [vmem:[#allocation2 + $0x78] sm:$0xe]
      %v2368 = vld [vmem:[#allocation2 + $0x84] sm:$0xe]
      %v2369 = vld [vmem:[#allocation2 + $0x90] sm:$0xe]
      %v2370 = vld [vmem:[#allocation2 + $0x9c] sm:$0xe]
      %v2371 = vld [vmem:[#allocation2 + $0xa8] sm:$0xe]
      %v2372 = vld [vmem:[#allocation2 + $0xb4] sm:$0xe]
      %vm2405 = vcmask 1042432
      %vm2406 = vcmask 1046532
      %vm2407 = vmor %vm2405, %vm2406
      %v2408 = vrot.slane %v2357, 5
      %v2409 = vrot.slane %v2408, 4
      %v2410 = vrot.slane %v1311, 5
      %v2411 = vsel %vm2407, %v2409, %v2410
      %v2412 = vrot.slane %v2410, 4
      %v2413 = vrot.slane %v1350, 5
      %v2414 = vsel %vm2407, %v2412, %v2413
      %v2415 = vrot.slane %v2358, 5
      %v2416 = vrot.slane %v2415, 4
      %v2417 = vrot.slane %v1313, 5
      %v2418 = vsel %vm2407, %v2416, %v2417
      %v2419 = vrot.slane %v2417, 4
      %v2420 = vrot.slane %v1351, 5
      %v2421 = vsel %vm2407, %v2419, %v2420
      %v2422 = vrot.slane %v2359, 5
      %v2423 = vrot.slane %v2422, 4
      %v2424 = vrot.slane %v1315, 5
      %v2425 = vsel %vm2407, %v2423, %v2424
      %v2426 = vrot.slane %v2424, 4
      %v2427 = vrot.slane %v1352, 5
      %v2428 = vsel %vm2407, %v2426, %v2427
      %v2429 = vrot.slane %v2360, 5
      %v2430 = vrot.slane %v2429, 4
      %v2431 = vrot.slane %v1317, 5
      %v2432 = vsel %vm2407, %v2430, %v2431
      %v2433 = vrot.slane %v2431, 4
      %v2434 = vrot.slane %v1353, 5
      %v2435 = vsel %vm2407, %v2433, %v2434
      %v2436 = vrot.slane %v2361, 5
      %v2437 = vrot.slane %v2436, 4
      %v2438 = vrot.slane %v1319, 5
      %v2439 = vsel %vm2407, %v2437, %v2438
      %v2440 = vrot.slane %v2438, 4
      %v2441 = vrot.slane %v1354, 5
      %v2442 = vsel %vm2407, %v2440, %v2441
      %v2443 = vrot.slane %v2362, 5
      %v2444 = vrot.slane %v2443, 4
      %v2445 = vrot.slane %v1321, 5
      %v2446 = vsel %vm2407, %v2444, %v2445
      %v2447 = vrot.slane %v2445, 4
      %v2448 = vrot.slane %v1355, 5
      %v2449 = vsel %vm2407, %v2447, %v2448
      %v2450 = vrot.slane %v2363, 5
      %v2451 = vrot.slane %v2450, 4
      %v2452 = vrot.slane %v1323, 5
      %v2453 = vsel %vm2407, %v2451, %v2452
      %v2454 = vrot.slane %v2452, 4
      %v2455 = vrot.slane %v1356, 5
      %v2456 = vsel %vm2407, %v2454, %v2455
      %v2457 = vrot.slane %v2364, 5
      %v2458 = vrot.slane %v2457, 4
      %v2459 = vrot.slane %v1325, 5
      %v2460 = vsel %vm2407, %v2458, %v2459
      %v2461 = vrot.slane %v2459, 4
      %v2462 = vrot.slane %v1357, 5
      %v2463 = vsel %vm2407, %v2461, %v2462
      %v2464 = vrot.slane %v2365, 5
      %v2465 = vrot.slane %v2464, 4
      %v2466 = vrot.slane %v1327, 5
      %v2467 = vsel %vm2407, %v2465, %v2466
      %v2468 = vrot.slane %v2466, 4
      %v2469 = vrot.slane %v1358, 5
      %v2470 = vsel %vm2407, %v2468, %v2469
      %v2471 = vrot.slane %v2366, 5
      %v2472 = vrot.slane %v2471, 4
      %v2473 = vrot.slane %v1329, 5
      %v2474 = vsel %vm2407, %v2472, %v2473
      %v2475 = vrot.slane %v2473, 4
      %v2476 = vrot.slane %v1359, 5
      %v2477 = vsel %vm2407, %v2475, %v2476
      %v2478 = vrot.slane %v2367, 5
      %v2479 = vrot.slane %v2478, 4
      %v2480 = vrot.slane %v1331, 5
      %v2481 = vsel %vm2407, %v2479, %v2480
      %v2482 = vrot.slane %v2480, 4
      %v2483 = vrot.slane %v1360, 5
      %v2484 = vsel %vm2407, %v2482, %v2483
      %v2485 = vrot.slane %v2368, 5
      %v2486 = vrot.slane %v2485, 4
      %v2487 = vrot.slane %v1333, 5
      %v2488 = vsel %vm2407, %v2486, %v2487
      %v2489 = vrot.slane %v2487, 4
      %v2490 = vrot.slane %v1361, 5
      %v2491 = vsel %vm2407, %v2489, %v2490
      %v2492 = vrot.slane %v2369, 5
      %v2493 = vrot.slane %v2492, 4
      %v2494 = vrot.slane %v1335, 5
      %v2495 = vsel %vm2407, %v2493, %v2494
      %v2496 = vrot.slane %v2494, 4
      %v2497 = vrot.slane %v1362, 5
      %v2498 = vsel %vm2407, %v2496, %v2497
      %v2499 = vrot.slane %v2370, 5
      %v2500 = vrot.slane %v2499, 4
      %v2501 = vrot.slane %v1337, 5
      %v2502 = vsel %vm2407, %v2500, %v2501
      %v2503 = vrot.slane %v2501, 4
      %v2504 = vrot.slane %v1363, 5
      %v2505 = vsel %vm2407, %v2503, %v2504
      %v2506 = vrot.slane %v2371, 5
      %v2507 = vrot.slane %v2506, 4
      %v2508 = vrot.slane %v1339, 5
      %v2509 = vsel %vm2407, %v2507, %v2508
      %v2510 = vrot.slane %v2508, 4
      %v2511 = vrot.slane %v1364, 5
      %v2512 = vsel %vm2407, %v2510, %v2511
      %v2513 = vrot.slane %v2372, 5
      %v2514 = vrot.slane %v2513, 4
      %v2515 = vrot.slane %v1341, 5
      %v2516 = vsel %vm2407, %v2514, %v2515
      %v2517 = vrot.slane %v2515, 4
      %v2518 = vrot.slane %v1365, 5
      %v2519 = vsel %vm2407, %v2517, %v2518
      %s2520 = scalar_lea.vmem %s4, 64
      %v2521 = vld [vmem:[%s2520] sm:$0xf]
      %v2522 = vld [vmem:[%s2520 + $0x4] sm:$0xf]
      %v2523 = vld [vmem:[%s2520 + $0x8] sm:$0xf]
      %v2524 = vld [vmem:[%s2520 + $0xc] sm:$0xf]
      %v2525 = vld [vmem:[%s2520 + $0x10] sm:$0xf]
      %v2526 = vld [vmem:[%s2520 + $0x14] sm:$0xf]
      %v2527 = vld [vmem:[%s2520 + $0x18] sm:$0xf]
      %v2528 = vld [vmem:[%s2520 + $0x1c] sm:$0xf]
      %v2529 = vunpack.c.l.b16 %v2411
      %v2530 = vunpack.c.l.b16 %v2414
      %v2531 = vunpack.c.l.b16 %v2418
      %v2532 = vunpack.c.l.b16 %v2421
      %v2533 = vunpack.c.l.b16 %v2425
      %v2534 = vunpack.c.l.b16 %v2428
      %v2535 = vunpack.c.l.b16 %v2432
      %v2536 = vunpack.c.l.b16 %v2435
      %v2537 = vunpack.c.l.b16 %v2439
      %v2538 = vunpack.c.l.b16 %v2442
      %v2539 = vunpack.c.l.b16 %v2446
      %v2540 = vunpack.c.l.b16 %v2449
      %v2541 = vunpack.c.l.b16 %v2453
      %v2542 = vunpack.c.l.b16 %v2456
      %v2543 = vunpack.c.l.b16 %v2460
      %v2544 = vunpack.c.l.b16 %v2463
      %v2545 = vunpack.c.l.b16 %v2467
      %v2546 = vunpack.c.l.b16 %v2470
      %v2547 = vunpack.c.l.b16 %v2474
      %v2548 = vunpack.c.l.b16 %v2477
      %v2549 = vunpack.c.l.b16 %v2481
      %v2550 = vunpack.c.l.b16 %v2484
      %v2551 = vunpack.c.l.b16 %v2488
      %v2552 = vunpack.c.l.b16 %v2491
      %v2553 = vunpack.c.l.b16 %v2495
      %v2554 = vunpack.c.l.b16 %v2498
      %v2555 = vunpack.c.l.b16 %v2502
      %v2556 = vunpack.c.l.b16 %v2505
      %v2557 = vunpack.c.l.b16 %v2509
      %v2558 = vunpack.c.l.b16 %v2512
      %v2559 = vunpack.c.l.b16 %v2516
      %v2560 = vunpack.c.l.b16 %v2519
      %v2561 = vpack.c.b16 %v2530, %v2529
      %v2562 = vpack.c.b16 %v2532, %v2531
      %v2563 = vpack.c.b16 %v2534, %v2533
      %v2564 = vpack.c.b16 %v2536, %v2535
      %v2565 = vpack.c.b16 %v2538, %v2537
      %v2566 = vpack.c.b16 %v2540, %v2539
      %v2567 = vpack.c.b16 %v2542, %v2541
      %v2568 = vpack.c.b16 %v2544, %v2543
      %v2569 = vpack.c.b16 %v2546, %v2545
      %v2570 = vpack.c.b16 %v2548, %v2547
      %v2571 = vpack.c.b16 %v2550, %v2549
      %v2572 = vpack.c.b16 %v2552, %v2551
      %v2573 = vpack.c.b16 %v2554, %v2553
      %v2574 = vpack.c.b16 %v2556, %v2555
      %v2575 = vpack.c.b16 %v2558, %v2557
      %v2576 = vpack.c.b16 %v2560, %v2559
      %v2585 = vunpack.c.l.b16 %v2521
      %v2586 = vunpack.c.l.b16 %v2522
      %v2587 = vunpack.c.l.b16 %v2523
      %v2588 = vunpack.c.l.b16 %v2524
      %v2589 = vunpack.c.l.b16 %v2525
      %v2590 = vunpack.c.l.b16 %v2526
      %v2591 = vunpack.c.l.b16 %v2527
      %v2592 = vunpack.c.l.b16 %v2528
      %v2593 = vpack.c.b16 %v2586, %v2585
      %v2594 = vpack.c.b16 %v2588, %v2587
      %v2595 = vpack.c.b16 %v2590, %v2589
      %v2596 = vpack.c.b16 %v2592, %v2591
      %v2602 = vsel %vm1834, %v2561, 0
      %v2605 = vsel %vm1834, %v2562, 0
      %v2608 = vsel %vm1834, %v2563, 0
      %v2611 = vsel %vm1834, %v2564, 0
      %v2614 = vsel %vm1834, %v2565, 0
      %v2617 = vsel %vm1834, %v2566, 0
      %v2620 = vsel %vm1834, %v2567, 0
      %v2623 = vsel %vm1834, %v2568, 0
      %v2626 = vsel %vm1834, %v2569, 0
      %v2629 = vsel %vm1834, %v2570, 0
      %v2632 = vsel %vm1834, %v2571, 0
      %v2635 = vsel %vm1834, %v2572, 0
      %v2638 = vsel %vm1834, %v2573, 0
      %v2641 = vsel %vm1834, %v2574, 0
      %v2644 = vsel %vm1834, %v2575, 0
      %v2647 = vsel %vm1834, %v2576, 0
      %2649 = vmatprep.subr.bf16.mxu0 0
      %2650 = vmatpush1.bf16.msra.mxu0 %v2593
      %2651 = vmatprep.subr.bf16.mxu0 0
      %2652 = vmatpush1.bf16.msra.mxu0 %v2594
      %2653 = vmatprep.subr.bf16.mxu0 0
      %2654 = vmatpush1.bf16.msra.mxu0 %v2595
      %2655 = vmatprep.subr.bf16.mxu0 0
      %2656 = vmatpush1.bf16.msra.mxu0 %v2596
      %2657 = vmatprep.subr.bf16.mxu0 0
      %2658 = vmatpush1.bf16.msra.mxu0 0
      %2659 = vmatprep.subr.bf16.mxu0 0
      %2660 = vmatpush1.bf16.msra.mxu0 0
      %2661 = vmatprep.subr.bf16.mxu0 0
      %2662 = vmatpush1.bf16.msra.mxu0 0
      %2663 = vmatprep.subr.bf16.mxu0 0
      %2664 = vmatpush1.bf16.msra.mxu0 0
      %2665 = vmatprep.subr.bf16.mxu0 0
      %2666 = vmatpush1.bf16.msra.mxu0 0
      %2667 = vmatprep.subr.bf16.mxu0 0
      %2668 = vmatpush1.bf16.msra.mxu0 0
      %2669 = vmatprep.subr.bf16.mxu0 0
      %2670 = vmatpush1.bf16.msra.mxu0 0
      %2671 = vmatprep.subr.bf16.mxu0 0
      %2672 = vmatpush1.bf16.msra.mxu0 0
      %2673 = vmatprep.subr.bf16.mxu0 0
      %2674 = vmatpush1.bf16.msra.mxu0 0
      %2675 = vmatprep.subr.bf16.mxu0 0
      %2676 = vmatpush1.bf16.msra.mxu0 0
      %2677 = vmatprep.subr.bf16.mxu0 0
      %2678 = vmatpush1.bf16.msra.mxu0 0
      %2679 = vmatprep.subr.bf16.mxu0 0
      %2680 = vmatpush1.bf16.msra.mxu0 0
      %2681 = vmatprep.mubr.bf16.mxu0 0
      %2682 = vmatmul.mubr.bf16.gmra.mrb[0].mxu0 %v2602
      %v2683 = vpop.f32.mrb[0].mxu0
      %v2684 = vadd.f32 0.0, %v2683
      %v2685 = vpop.f32.mrb[0].mxu0
      %v2686 = vpop.f32.mrb[0].mxu0
      %v2687 = vadd.f32 0.0, %v2686
      %v2688 = vpop.f32.mrb[0].mxu0
      %2689 = vmatprep.mubr.bf16.mxu0 0
      %2690 = vmatmul.mubr.bf16.gmra.mrb[0].mxu0 %v2605
      %v2691 = vpop.f32.mrb[0].mxu0
      %v2692 = vadd.f32 0.0, %v2691
      %v2693 = vpop.f32.mrb[0].mxu0
      %v2694 = vpop.f32.mrb[0].mxu0
      %v2695 = vadd.f32 0.0, %v2694
      %v2696 = vpop.f32.mrb[0].mxu0
      %2697 = vmatprep.mubr.bf16.mxu0 0
      %2698 = vmatmul.mubr.bf16.gmra.mrb[0].mxu0 %v2608
      %v2699 = vpop.f32.mrb[0].mxu0
      %v2700 = vadd.f32 0.0, %v2699
      %v2701 = vpop.f32.mrb[0].mxu0
      %v2702 = vpop.f32.mrb[0].mxu0
      %v2703 = vadd.f32 0.0, %v2702
      %v2704 = vpop.f32.mrb[0].mxu0
      %2705 = vmatprep.mubr.bf16.mxu0 0
      %2706 = vmatmul.mubr.bf16.gmra.mrb[0].mxu0 %v2611
      %v2707 = vpop.f32.mrb[0].mxu0
      %v2708 = vadd.f32 0.0, %v2707
      %v2709 = vpop.f32.mrb[0].mxu0
      %v2710 = vpop.f32.mrb[0].mxu0
      %v2711 = vadd.f32 0.0, %v2710
      %v2712 = vpop.f32.mrb[0].mxu0
      %2713 = vmatprep.mubr.bf16.mxu0 0
      %2714 = vmatmul.mubr.bf16.gmra.mrb[0].mxu0 %v2614
      %v2715 = vpop.f32.mrb[0].mxu0
      %v2716 = vadd.f32 0.0, %v2715
      %v2717 = vpop.f32.mrb[0].mxu0
      %v2718 = vpop.f32.mrb[0].mxu0
      %v2719 = vadd.f32 0.0, %v2718
      %v2720 = vpop.f32.mrb[0].mxu0
      %2721 = vmatprep.mubr.bf16.mxu0 0
      %2722 = vmatmul.mubr.bf16.gmra.mrb[0].mxu0 %v2617
      %v2723 = vpop.f32.mrb[0].mxu0
      %v2724 = vadd.f32 0.0, %v2723
      %v2725 = vpop.f32.mrb[0].mxu0
      %v2726 = vpop.f32.mrb[0].mxu0
      %v2727 = vadd.f32 0.0, %v2726
      %v2728 = vpop.f32.mrb[0].mxu0
      %2729 = vmatprep.mubr.bf16.mxu0 0
      %2730 = vmatmul.mubr.bf16.gmra.mrb[0].mxu0 %v2620
      %v2731 = vpop.f32.mrb[0].mxu0
      %v2732 = vadd.f32 0.0, %v2731
      %v2733 = vpop.f32.mrb[0].mxu0
      %v2734 = vpop.f32.mrb[0].mxu0
      %v2735 = vadd.f32 0.0, %v2734
      %v2736 = vpop.f32.mrb[0].mxu0
      %2737 = vmatprep.mubr.bf16.mxu0 0
      %2738 = vmatmul.mubr.bf16.gmra.mrb[0].mxu0 %v2623
      %v2739 = vpop.f32.mrb[0].mxu0
      %v2740 = vadd.f32 0.0, %v2739
      %v2741 = vpop.f32.mrb[0].mxu0
      %v2742 = vpop.f32.mrb[0].mxu0
      %v2743 = vadd.f32 0.0, %v2742
      %v2744 = vpop.f32.mrb[0].mxu0
      %2745 = vmatprep.mubr.bf16.mxu0 0
      %2746 = vmatmul.mubr.bf16.gmra.mrb[0].mxu0 %v2626
      %v2747 = vpop.f32.mrb[0].mxu0
      %v2748 = vadd.f32 0.0, %v2747
      %v2749 = vpop.f32.mrb[0].mxu0
      %v2750 = vpop.f32.mrb[0].mxu0
      %v2751 = vadd.f32 0.0, %v2750
      %v2752 = vpop.f32.mrb[0].mxu0
      %2753 = vmatprep.mubr.bf16.mxu0 0
      %2754 = vmatmul.mubr.bf16.gmra.mrb[0].mxu0 %v2629
      %v2755 = vpop.f32.mrb[0].mxu0
      %v2756 = vadd.f32 0.0, %v2755
      %v2757 = vpop.f32.mrb[0].mxu0
      %v2758 = vpop.f32.mrb[0].mxu0
      %v2759 = vadd.f32 0.0, %v2758
      %v2760 = vpop.f32.mrb[0].mxu0
      %2761 = vmatprep.mubr.bf16.mxu0 0
      %2762 = vmatmul.mubr.bf16.gmra.mrb[0].mxu0 %v2632
      %v2763 = vpop.f32.mrb[0].mxu0
      %v2764 = vadd.f32 0.0, %v2763
      %v2765 = vpop.f32.mrb[0].mxu0
      %v2766 = vpop.f32.mrb[0].mxu0
      %v2767 = vadd.f32 0.0, %v2766
      %v2768 = vpop.f32.mrb[0].mxu0
      %2769 = vmatprep.mubr.bf16.mxu0 0
      %2770 = vmatmul.mubr.bf16.gmra.mrb[0].mxu0 %v2635
      %v2771 = vpop.f32.mrb[0].mxu0
      %v2772 = vadd.f32 0.0, %v2771
      %v2773 = vpop.f32.mrb[0].mxu0
      %v2774 = vpop.f32.mrb[0].mxu0
      %v2775 = vadd.f32 0.0, %v2774
      %v2776 = vpop.f32.mrb[0].mxu0
      %2777 = vmatprep.mubr.bf16.mxu0 0
      %2778 = vmatmul.mubr.bf16.gmra.mrb[0].mxu0 %v2638
      %v2779 = vpop.f32.mrb[0].mxu0
      %v2780 = vadd.f32 0.0, %v2779
      %v2781 = vpop.f32.mrb[0].mxu0
      %v2782 = vpop.f32.mrb[0].mxu0
      %v2783 = vadd.f32 0.0, %v2782
      %v2784 = vpop.f32.mrb[0].mxu0
      %2785 = vmatprep.mubr.bf16.mxu0 0
      %2786 = vmatmul.mubr.bf16.gmra.mrb[0].mxu0 %v2641
      %v2787 = vpop.f32.mrb[0].mxu0
      %v2788 = vadd.f32 0.0, %v2787
      %v2789 = vpop.f32.mrb[0].mxu0
      %v2790 = vpop.f32.mrb[0].mxu0
      %v2791 = vadd.f32 0.0, %v2790
      %v2792 = vpop.f32.mrb[0].mxu0
      %2793 = vmatprep.mubr.bf16.mxu0 0
      %2794 = vmatmul.mubr.bf16.gmra.mrb[0].mxu0 %v2644
      %v2795 = vpop.f32.mrb[0].mxu0
      %v2796 = vadd.f32 0.0, %v2795
      %v2797 = vpop.f32.mrb[0].mxu0
      %v2798 = vpop.f32.mrb[0].mxu0
      %v2799 = vadd.f32 0.0, %v2798
      %v2800 = vpop.f32.mrb[0].mxu0
      %2801 = vmatprep.mubr.bf16.mxu0 0
      %2802 = vmatmul.mubr.bf16.gmra.mrb[0].mxu0 %v2647
      %v2803 = vpop.f32.mrb[0].mxu0
      %v2804 = vadd.f32 0.0, %v2803
      %v2805 = vpop.f32.mrb[0].mxu0
      %v2806 = vpop.f32.mrb[0].mxu0
      %v2807 = vadd.f32 0.0, %v2806
      %v2808 = vpop.f32.mrb[0].mxu0
      %2809 = vdwg.mxu0
      %v2810 = vadd.f32 %v2231, %v2684
      %v2811 = vadd.f32 %v2234, %v2687
      %v2812 = vadd.f32 %v2239, %v2692
      %v2813 = vadd.f32 %v2242, %v2695
      %v2814 = vadd.f32 %v2247, %v2700
      %v2815 = vadd.f32 %v2250, %v2703
      %v2816 = vadd.f32 %v2255, %v2708
      %v2817 = vadd.f32 %v2258, %v2711
      %v2818 = vadd.f32 %v2263, %v2716
      %v2819 = vadd.f32 %v2266, %v2719
      %v2820 = vadd.f32 %v2271, %v2724
      %v2821 = vadd.f32 %v2274, %v2727
      %v2822 = vadd.f32 %v2279, %v2732
      %v2823 = vadd.f32 %v2282, %v2735
      %v2824 = vadd.f32 %v2287, %v2740
      %v2825 = vadd.f32 %v2290, %v2743
      %v2826 = vadd.f32 %v2295, %v2748
      %v2827 = vadd.f32 %v2298, %v2751
      %v2828 = vadd.f32 %v2303, %v2756
      %v2829 = vadd.f32 %v2306, %v2759
      %v2830 = vadd.f32 %v2311, %v2764
      %v2831 = vadd.f32 %v2314, %v2767
      %v2832 = vadd.f32 %v2319, %v2772
      %v2833 = vadd.f32 %v2322, %v2775
      %v2834 = vadd.f32 %v2327, %v2780
      %v2835 = vadd.f32 %v2330, %v2783
      %v2836 = vadd.f32 %v2335, %v2788
      %v2837 = vadd.f32 %v2338, %v2791
      %v2838 = vadd.f32 %v2343, %v2796
      %v2839 = vadd.f32 %v2346, %v2799
      %v2840 = vadd.f32 %v2351, %v2804
      %v2841 = vadd.f32 %v2354, %v2807
      %v2842 = vld [vmem:[%s1192] sm:$0xf]
      %v2843 = vld [vmem:[%s1192 + $0x4] sm:$0xf]
      %v2844 = vld [vmem:[%s1192 + $0xc] sm:$0xf]
      %v2845 = vld [vmem:[%s1192 + $0x10] sm:$0xf]
      %v2846 = vld [vmem:[%s1192 + $0x18] sm:$0xf]
      %v2847 = vld [vmem:[%s1192 + $0x1c] sm:$0xf]
      %v2848 = vld [vmem:[%s1192 + $0x24] sm:$0xf]
      %v2849 = vld [vmem:[%s1192 + $0x28] sm:$0xf]
      %v2850 = vld [vmem:[%s1192 + $0x30] sm:$0xf]
      %v2851 = vld [vmem:[%s1192 + $0x34] sm:$0xf]
      %v2852 = vld [vmem:[%s1192 + $0x3c] sm:$0xf]
      %v2853 = vld [vmem:[%s1192 + $0x40] sm:$0xf]
      %v2854 = vld [vmem:[%s1192 + $0x48] sm:$0xf]
      %v2855 = vld [vmem:[%s1192 + $0x4c] sm:$0xf]
      %v2856 = vld [vmem:[%s1192 + $0x54] sm:$0xf]
      %v2857 = vld [vmem:[%s1192 + $0x58] sm:$0xf]
      %v2858 = vld [vmem:[%s1192 + $0x60] sm:$0xf]
      %v2859 = vld [vmem:[%s1192 + $0x64] sm:$0xf]
      %v2860 = vld [vmem:[%s1192 + $0x6c] sm:$0xf]
      %v2861 = vld [vmem:[%s1192 + $0x70] sm:$0xf]
      %v2862 = vld [vmem:[%s1192 + $0x78] sm:$0xf]
      %v2863 = vld [vmem:[%s1192 + $0x7c] sm:$0xf]
      %v2864 = vld [vmem:[%s1192 + $0x84] sm:$0xf]
      %v2865 = vld [vmem:[%s1192 + $0x88] sm:$0xf]
      %v2866 = vld [vmem:[%s1192 + $0x90] sm:$0xf]
      %v2867 = vld [vmem:[%s1192 + $0x94] sm:$0xf]
      %v2868 = vld [vmem:[%s1192 + $0x9c] sm:$0xf]
      %v2869 = vld [vmem:[%s1192 + $0xa0] sm:$0xf]
      %v2870 = vld [vmem:[%s1192 + $0xa8] sm:$0xf]
      %v2871 = vld [vmem:[%s1192 + $0xac] sm:$0xf]
      %v2872 = vld [vmem:[%s1192 + $0xb4] sm:$0xf]
      %v2873 = vld [vmem:[%s1192 + $0xb8] sm:$0xf]
      %s2874 = scalar_lea.vmem %s4, 96
      %v2875 = vld [vmem:[%s2874] sm:$0xf]
      %v2876 = vld [vmem:[%s2874 + $0x4] sm:$0xf]
      %v2877 = vld [vmem:[%s2874 + $0x8] sm:$0xf]
      %v2878 = vld [vmem:[%s2874 + $0xc] sm:$0xf]
      %v2879 = vld [vmem:[%s2874 + $0x10] sm:$0xf]
      %v2880 = vld [vmem:[%s2874 + $0x14] sm:$0xf]
      %v2881 = vld [vmem:[%s2874 + $0x18] sm:$0xf]
      %v2882 = vld [vmem:[%s2874 + $0x1c] sm:$0xf]
      %v2915 = vunpack.c.l.b16 %v2842
      %v2916 = vunpack.c.l.b16 %v2843
      %v2917 = vunpack.c.l.b16 %v2844
      %v2918 = vunpack.c.l.b16 %v2845
      %v2919 = vunpack.c.l.b16 %v2846
      %v2920 = vunpack.c.l.b16 %v2847
      %v2921 = vunpack.c.l.b16 %v2848
      %v2922 = vunpack.c.l.b16 %v2849
      %v2923 = vunpack.c.l.b16 %v2850
      %v2924 = vunpack.c.l.b16 %v2851
      %v2925 = vunpack.c.l.b16 %v2852
      %v2926 = vunpack.c.l.b16 %v2853
      %v2927 = vunpack.c.l.b16 %v2854
      %v2928 = vunpack.c.l.b16 %v2855
      %v2929 = vunpack.c.l.b16 %v2856
      %v2930 = vunpack.c.l.b16 %v2857
      %v2931 = vunpack.c.l.b16 %v2858
      %v2932 = vunpack.c.l.b16 %v2859
      %v2933 = vunpack.c.l.b16 %v2860
      %v2934 = vunpack.c.l.b16 %v2861
      %v2935 = vunpack.c.l.b16 %v2862
      %v2936 = vunpack.c.l.b16 %v2863
      %v2937 = vunpack.c.l.b16 %v2864
      %v2938 = vunpack.c.l.b16 %v2865
      %v2939 = vunpack.c.l.b16 %v2866
      %v2940 = vunpack.c.l.b16 %v2867
      %v2941 = vunpack.c.l.b16 %v2868
      %v2942 = vunpack.c.l.b16 %v2869
      %v2943 = vunpack.c.l.b16 %v2870
      %v2944 = vunpack.c.l.b16 %v2871
      %v2945 = vunpack.c.l.b16 %v2872
      %v2946 = vunpack.c.l.b16 %v2873
      %v2947 = vpack.c.b16 %v2916, %v2915
      %v2948 = vpack.c.b16 %v2918, %v2917
      %v2949 = vpack.c.b16 %v2920, %v2919
      %v2950 = vpack.c.b16 %v2922, %v2921
      %v2951 = vpack.c.b16 %v2924, %v2923
      %v2952 = vpack.c.b16 %v2926, %v2925
      %v2953 = vpack.c.b16 %v2928, %v2927
      %v2954 = vpack.c.b16 %v2930, %v2929
      %v2955 = vpack.c.b16 %v2932, %v2931
      %v2956 = vpack.c.b16 %v2934, %v2933
      %v2957 = vpack.c.b16 %v2936, %v2935
      %v2958 = vpack.c.b16 %v2938, %v2937
      %v2959 = vpack.c.b16 %v2940, %v2939
      %v2960 = vpack.c.b16 %v2942, %v2941
      %v2961 = vpack.c.b16 %v2944, %v2943
      %v2962 = vpack.c.b16 %v2946, %v2945
      %v2971 = vunpack.c.l.b16 %v2875
      %v2972 = vunpack.c.l.b16 %v2876
      %v2973 = vunpack.c.l.b16 %v2877
      %v2974 = vunpack.c.l.b16 %v2878
      %v2975 = vunpack.c.l.b16 %v2879
      %v2976 = vunpack.c.l.b16 %v2880
      %v2977 = vunpack.c.l.b16 %v2881
      %v2978 = vunpack.c.l.b16 %v2882
      %v2979 = vpack.c.b16 %v2972, %v2971
      %v2980 = vpack.c.b16 %v2974, %v2973
      %v2981 = vpack.c.b16 %v2976, %v2975
      %v2982 = vpack.c.b16 %v2978, %v2977
      %v2988 = vsel %vm1834, %v2947, 0
      %v2991 = vsel %vm1834, %v2948, 0
      %v2994 = vsel %vm1834, %v2949, 0
      %v2997 = vsel %vm1834, %v2950, 0
      %v3000 = vsel %vm1834, %v2951, 0
      %v3003 = vsel %vm1834, %v2952, 0
      %v3006 = vsel %vm1834, %v2953, 0
      %v3009 = vsel %vm1834, %v2954, 0
      %v3012 = vsel %vm1834, %v2955, 0
      %v3015 = vsel %vm1834, %v2956, 0
      %v3018 = vsel %vm1834, %v2957, 0
      %v3021 = vsel %vm1834, %v2958, 0
      %v3024 = vsel %vm1834, %v2959, 0
      %v3027 = vsel %vm1834, %v2960, 0
      %v3030 = vsel %vm1834, %v2961, 0
      %v3033 = vsel %vm1834, %v2962, 0
      %3035 = vmatprep.subr.bf16.mxu0 0
      %3036 = vmatpush1.bf16.msra.mxu0 %v2979
      %3037 = vmatprep.subr.bf16.mxu0 0
      %3038 = vmatpush1.bf16.msra.mxu0 %v2980
      %3039 = vmatprep.subr.bf16.mxu0 0
      %3040 = vmatpush1.bf16.msra.mxu0 %v2981
      %3041 = vmatprep.subr.bf16.mxu0 0
      %3042 = vmatpush1.bf16.msra.mxu0 %v2982
      %3043 = vmatprep.subr.bf16.mxu0 0
      %3044 = vmatpush1.bf16.msra.mxu0 0
      %3045 = vmatprep.subr.bf16.mxu0 0
      %3046 = vmatpush1.bf16.msra.mxu0 0
      %3047 = vmatprep.subr.bf16.mxu0 0
      %3048 = vmatpush1.bf16.msra.mxu0 0
      %3049 = vmatprep.subr.bf16.mxu0 0
      %3050 = vmatpush1.bf16.msra.mxu0 0
      %3051 = vmatprep.subr.bf16.mxu0 0
      %3052 = vmatpush1.bf16.msra.mxu0 0
      %3053 = vmatprep.subr.bf16.mxu0 0
      %3054 = vmatpush1.bf16.msra.mxu0 0
      %3055 = vmatprep.subr.bf16.mxu0 0
      %3056 = vmatpush1.bf16.msra.mxu0 0
      %3057 = vmatprep.subr.bf16.mxu0 0
      %3058 = vmatpush1.bf16.msra.mxu0 0
      %3059 = vmatprep.subr.bf16.mxu0 0
      %3060 = vmatpush1.bf16.msra.mxu0 0
      %3061 = vmatprep.subr.bf16.mxu0 0
      %3062 = vmatpush1.bf16.msra.mxu0 0
      %3063 = vmatprep.subr.bf16.mxu0 0
      %3064 = vmatpush1.bf16.msra.mxu0 0
      %3065 = vmatprep.subr.bf16.mxu0 0
      %3066 = vmatpush1.bf16.msra.mxu0 0
      %3067 = vmatprep.mubr.bf16.mxu0 0
      %3068 = vmatmul.mubr.bf16.gmra.mrb[0].mxu0 %v2988
      %v3069 = vpop.f32.mrb[0].mxu0
      %v3070 = vadd.f32 0.0, %v3069
      %v3071 = vpop.f32.mrb[0].mxu0
      %v3072 = vpop.f32.mrb[0].mxu0
      %v3073 = vadd.f32 0.0, %v3072
      %v3074 = vpop.f32.mrb[0].mxu0
      %3075 = vmatprep.mubr.bf16.mxu0 0
      %3076 = vmatmul.mubr.bf16.gmra.mrb[0].mxu0 %v2991
      %v3077 = vpop.f32.mrb[0].mxu0
      %v3078 = vadd.f32 0.0, %v3077
      %v3079 = vpop.f32.mrb[0].mxu0
      %v3080 = vpop.f32.mrb[0].mxu0
      %v3081 = vadd.f32 0.0, %v3080
      %v3082 = vpop.f32.mrb[0].mxu0
      %3083 = vmatprep.mubr.bf16.mxu0 0
      %3084 = vmatmul.mubr.bf16.gmra.mrb[0].mxu0 %v2994
      %v3085 = vpop.f32.mrb[0].mxu0
      %v3086 = vadd.f32 0.0, %v3085
      %v3087 = vpop.f32.mrb[0].mxu0
      %v3088 = vpop.f32.mrb[0].mxu0
      %v3089 = vadd.f32 0.0, %v3088
      %v3090 = vpop.f32.mrb[0].mxu0
      %3091 = vmatprep.mubr.bf16.mxu0 0
      %3092 = vmatmul.mubr.bf16.gmra.mrb[0].mxu0 %v2997
      %v3093 = vpop.f32.mrb[0].mxu0
      %v3094 = vadd.f32 0.0, %v3093
      %v3095 = vpop.f32.mrb[0].mxu0
      %v3096 = vpop.f32.mrb[0].mxu0
      %v3097 = vadd.f32 0.0, %v3096
      %v3098 = vpop.f32.mrb[0].mxu0
      %3099 = vmatprep.mubr.bf16.mxu0 0
      %3100 = vmatmul.mubr.bf16.gmra.mrb[0].mxu0 %v3000
      %v3101 = vpop.f32.mrb[0].mxu0
      %v3102 = vadd.f32 0.0, %v3101
      %v3103 = vpop.f32.mrb[0].mxu0
      %v3104 = vpop.f32.mrb[0].mxu0
      %v3105 = vadd.f32 0.0, %v3104
      %v3106 = vpop.f32.mrb[0].mxu0
      %3107 = vmatprep.mubr.bf16.mxu0 0
      %3108 = vmatmul.mubr.bf16.gmra.mrb[0].mxu0 %v3003
      %v3109 = vpop.f32.mrb[0].mxu0
      %v3110 = vadd.f32 0.0, %v3109
      %v3111 = vpop.f32.mrb[0].mxu0
      %v3112 = vpop.f32.mrb[0].mxu0
      %v3113 = vadd.f32 0.0, %v3112
      %v3114 = vpop.f32.mrb[0].mxu0
      %3115 = vmatprep.mubr.bf16.mxu0 0
      %3116 = vmatmul.mubr.bf16.gmra.mrb[0].mxu0 %v3006
      %v3117 = vpop.f32.mrb[0].mxu0
      %v3118 = vadd.f32 0.0, %v3117
      %v3119 = vpop.f32.mrb[0].mxu0
      %v3120 = vpop.f32.mrb[0].mxu0
      %v3121 = vadd.f32 0.0, %v3120
      %v3122 = vpop.f32.mrb[0].mxu0
      %3123 = vmatprep.mubr.bf16.mxu0 0
      %3124 = vmatmul.mubr.bf16.gmra.mrb[0].mxu0 %v3009
      %v3125 = vpop.f32.mrb[0].mxu0
      %v3126 = vadd.f32 0.0, %v3125
      %v3127 = vpop.f32.mrb[0].mxu0
      %v3128 = vpop.f32.mrb[0].mxu0
      %v3129 = vadd.f32 0.0, %v3128
      %v3130 = vpop.f32.mrb[0].mxu0
      %3131 = vmatprep.mubr.bf16.mxu0 0
      %3132 = vmatmul.mubr.bf16.gmra.mrb[0].mxu0 %v3012
      %v3133 = vpop.f32.mrb[0].mxu0
      %v3134 = vadd.f32 0.0, %v3133
      %v3135 = vpop.f32.mrb[0].mxu0
      %v3136 = vpop.f32.mrb[0].mxu0
      %v3137 = vadd.f32 0.0, %v3136
      %v3138 = vpop.f32.mrb[0].mxu0
      %3139 = vmatprep.mubr.bf16.mxu0 0
      %3140 = vmatmul.mubr.bf16.gmra.mrb[0].mxu0 %v3015
      %v3141 = vpop.f32.mrb[0].mxu0
      %v3142 = vadd.f32 0.0, %v3141
      %v3143 = vpop.f32.mrb[0].mxu0
      %v3144 = vpop.f32.mrb[0].mxu0
      %v3145 = vadd.f32 0.0, %v3144
      %v3146 = vpop.f32.mrb[0].mxu0
      %3147 = vmatprep.mubr.bf16.mxu0 0
      %3148 = vmatmul.mubr.bf16.gmra.mrb[0].mxu0 %v3018
      %v3149 = vpop.f32.mrb[0].mxu0
      %v3150 = vadd.f32 0.0, %v3149
      %v3151 = vpop.f32.mrb[0].mxu0
      %v3152 = vpop.f32.mrb[0].mxu0
      %v3153 = vadd.f32 0.0, %v3152
      %v3154 = vpop.f32.mrb[0].mxu0
      %3155 = vmatprep.mubr.bf16.mxu0 0
      %3156 = vmatmul.mubr.bf16.gmra.mrb[0].mxu0 %v3021
      %v3157 = vpop.f32.mrb[0].mxu0
      %v3158 = vadd.f32 0.0, %v3157
      %v3159 = vpop.f32.mrb[0].mxu0
      %v3160 = vpop.f32.mrb[0].mxu0
      %v3161 = vadd.f32 0.0, %v3160
      %v3162 = vpop.f32.mrb[0].mxu0
      %3163 = vmatprep.mubr.bf16.mxu0 0
      %3164 = vmatmul.mubr.bf16.gmra.mrb[0].mxu0 %v3024
      %v3165 = vpop.f32.mrb[0].mxu0
      %v3166 = vadd.f32 0.0, %v3165
      %v3167 = vpop.f32.mrb[0].mxu0
      %v3168 = vpop.f32.mrb[0].mxu0
      %v3169 = vadd.f32 0.0, %v3168
      %v3170 = vpop.f32.mrb[0].mxu0
      %3171 = vmatprep.mubr.bf16.mxu0 0
      %3172 = vmatmul.mubr.bf16.gmra.mrb[0].mxu0 %v3027
      %v3173 = vpop.f32.mrb[0].mxu0
      %v3174 = vadd.f32 0.0, %v3173
      %v3175 = vpop.f32.mrb[0].mxu0
      %v3176 = vpop.f32.mrb[0].mxu0
      %v3177 = vadd.f32 0.0, %v3176
      %v3178 = vpop.f32.mrb[0].mxu0
      %3179 = vmatprep.mubr.bf16.mxu0 0
      %3180 = vmatmul.mubr.bf16.gmra.mrb[0].mxu0 %v3030
      %v3181 = vpop.f32.mrb[0].mxu0
      %v3182 = vadd.f32 0.0, %v3181
      %v3183 = vpop.f32.mrb[0].mxu0
      %v3184 = vpop.f32.mrb[0].mxu0
      %v3185 = vadd.f32 0.0, %v3184
      %v3186 = vpop.f32.mrb[0].mxu0
      %3187 = vmatprep.mubr.bf16.mxu0 0
      %3188 = vmatmul.mubr.bf16.gmra.mrb[0].mxu0 %v3033
      %v3189 = vpop.f32.mrb[0].mxu0
      %v3190 = vadd.f32 0.0, %v3189
      %v3191 = vpop.f32.mrb[0].mxu0
      %v3192 = vpop.f32.mrb[0].mxu0
      %v3193 = vadd.f32 0.0, %v3192
      %v3194 = vpop.f32.mrb[0].mxu0
      %3195 = vdwg.mxu0
      %v3196 = vadd.f32 %v2810, %v3070
      %v3197 = vadd.f32 %v2811, %v3073
      %v3198 = vadd.f32 %v2812, %v3078
      %v3199 = vadd.f32 %v2813, %v3081
      %v3200 = vadd.f32 %v2814, %v3086
      %v3201 = vadd.f32 %v2815, %v3089
      %v3202 = vadd.f32 %v2816, %v3094
      %v3203 = vadd.f32 %v2817, %v3097
      %v3204 = vadd.f32 %v2818, %v3102
      %v3205 = vadd.f32 %v2819, %v3105
      %v3206 = vadd.f32 %v2820, %v3110
      %v3207 = vadd.f32 %v2821, %v3113
      %v3208 = vadd.f32 %v2822, %v3118
      %v3209 = vadd.f32 %v2823, %v3121
      %v3210 = vadd.f32 %v2824, %v3126
      %v3211 = vadd.f32 %v2825, %v3129
      %v3212 = vadd.f32 %v2826, %v3134
      %v3213 = vadd.f32 %v2827, %v3137
      %v3214 = vadd.f32 %v2828, %v3142
      %v3215 = vadd.f32 %v2829, %v3145
      %v3216 = vadd.f32 %v2830, %v3150
      %v3217 = vadd.f32 %v2831, %v3153
      %v3218 = vadd.f32 %v2832, %v3158
      %v3219 = vadd.f32 %v2833, %v3161
      %v3220 = vadd.f32 %v2834, %v3166
      %v3221 = vadd.f32 %v2835, %v3169
      %v3222 = vadd.f32 %v2836, %v3174
      %v3223 = vadd.f32 %v2837, %v3177
      %v3224 = vadd.f32 %v2838, %v3182
      %v3225 = vadd.f32 %v2839, %v3185
      %v3226 = vadd.f32 %v2840, %v3190
      %v3227 = vadd.f32 %v2841, %v3193
      %v3228 = vld [vmem:[%s1192] sm:$0xf]
      %v3229 = vld [vmem:[%s1192 + $0x4] sm:$0xf]
      %v3230 = vld [vmem:[%s1192 + $0x8] sm:$0x1]
      %v3231 = vld [vmem:[%s1192 + $0xc] sm:$0xf]
      %v3232 = vld [vmem:[%s1192 + $0x10] sm:$0xf]
      %v3233 = vld [vmem:[%s1192 + $0x14] sm:$0x1]
      %v3234 = vld [vmem:[%s1192 + $0x18] sm:$0xf]
      %v3235 = vld [vmem:[%s1192 + $0x1c] sm:$0xf]
      %v3236 = vld [vmem:[%s1192 + $0x20] sm:$0x1]
      %v3237 = vld [vmem:[%s1192 + $0x24] sm:$0xf]
      %v3238 = vld [vmem:[%s1192 + $0x28] sm:$0xf]
      %v3239 = vld [vmem:[%s1192 + $0x2c] sm:$0x1]
      %v3240 = vld [vmem:[%s1192 + $0x30] sm:$0xf]
      %v3241 = vld [vmem:[%s1192 + $0x34] sm:$0xf]
      %v3242 = vld [vmem:[%s1192 + $0x38] sm:$0x1]
      %v3243 = vld [vmem:[%s1192 + $0x3c] sm:$0xf]
      %v3244 = vld [vmem:[%s1192 + $0x40] sm:$0xf]
      %v3245 = vld [vmem:[%s1192 + $0x44] sm:$0x1]
      %v3246 = vld [vmem:[%s1192 + $0x48] sm:$0xf]
      %v3247 = vld [vmem:[%s1192 + $0x4c] sm:$0xf]
      %v3248 = vld [vmem:[%s1192 + $0x50] sm:$0x1]
      %v3249 = vld [vmem:[%s1192 + $0x54] sm:$0xf]
      %v3250 = vld [vmem:[%s1192 + $0x58] sm:$0xf]
      %v3251 = vld [vmem:[%s1192 + $0x5c] sm:$0x1]
      %v3252 = vld [vmem:[%s1192 + $0x60] sm:$0xf]
      %v3253 = vld [vmem:[%s1192 + $0x64] sm:$0xf]
      %v3254 = vld [vmem:[%s1192 + $0x68] sm:$0x1]
      %v3255 = vld [vmem:[%s1192 + $0x6c] sm:$0xf]
      %v3256 = vld [vmem:[%s1192 + $0x70] sm:$0xf]
      %v3257 = vld [vmem:[%s1192 + $0x74] sm:$0x1]
      %v3258 = vld [vmem:[%s1192 + $0x78] sm:$0xf]
      %v3259 = vld [vmem:[%s1192 + $0x7c] sm:$0xf]
      %v3260 = vld [vmem:[%s1192 + $0x80] sm:$0x1]
      %v3261 = vld [vmem:[%s1192 + $0x84] sm:$0xf]
      %v3262 = vld [vmem:[%s1192 + $0x88] sm:$0xf]
      %v3263 = vld [vmem:[%s1192 + $0x8c] sm:$0x1]
      %v3264 = vld [vmem:[%s1192 + $0x90] sm:$0xf]
      %v3265 = vld [vmem:[%s1192 + $0x94] sm:$0xf]
      %v3266 = vld [vmem:[%s1192 + $0x98] sm:$0x1]
      %v3267 = vld [vmem:[%s1192 + $0x9c] sm:$0xf]
      %v3268 = vld [vmem:[%s1192 + $0xa0] sm:$0xf]
      %v3269 = vld [vmem:[%s1192 + $0xa4] sm:$0x1]
      %v3270 = vld [vmem:[%s1192 + $0xa8] sm:$0xf]
      %v3271 = vld [vmem:[%s1192 + $0xac] sm:$0xf]
      %v3272 = vld [vmem:[%s1192 + $0xb0] sm:$0x1]
      %v3273 = vld [vmem:[%s1192 + $0xb4] sm:$0xf]
      %v3274 = vld [vmem:[%s1192 + $0xb8] sm:$0xf]
      %v3275 = vld [vmem:[%s1192 + $0xbc] sm:$0x1]
      %v3277 = vshrl.u32 %v3228, 16
      %v3279 = vrot.slane %v3277, 4
      %v3280 = vshll.u32 %v3228, 16
      %v3282 = vrot.slane %v3280, 5
      %v3283 = vor.u32 %v3279, %v3282
      %v3284 = vrot.slane %v3283, 4
      %v3286 = vshll.u32 %v3229, 16
      %v3288 = vrot.slane %v3286, 5
      %v3289 = vsel %vm1368, %v3284, %v3288
      %v3290 = vshrl.u32 %v3229, 16
      %v3292 = vrot.slane %v3290, 4
      %v3293 = vor.u32 %v3292, %v3288
      %v3294 = vrot.slane %v3293, 4
      %v3296 = vshll.u32 %v3230, 16
      %v3298 = vrot.slane %v3296, 5
      %v3299 = vsel %vm1368, %v3294, %v3298
      %v3301 = vshrl.u32 %v3231, 16
      %v3303 = vrot.slane %v3301, 4
      %v3304 = vshll.u32 %v3231, 16
      %v3306 = vrot.slane %v3304, 5
      %v3307 = vor.u32 %v3303, %v3306
      %v3308 = vrot.slane %v3307, 4
      %v3310 = vshll.u32 %v3232, 16
      %v3312 = vrot.slane %v3310, 5
      %v3313 = vsel %vm1368, %v3308, %v3312
      %v3314 = vshrl.u32 %v3232, 16
      %v3316 = vrot.slane %v3314, 4
      %v3317 = vor.u32 %v3316, %v3312
      %v3318 = vrot.slane %v3317, 4
      %v3320 = vshll.u32 %v3233, 16
      %v3322 = vrot.slane %v3320, 5
      %v3323 = vsel %vm1368, %v3318, %v3322
      %v3325 = vshrl.u32 %v3234, 16
      %v3327 = vrot.slane %v3325, 4
      %v3328 = vshll.u32 %v3234, 16
      %v3330 = vrot.slane %v3328, 5
      %v3331 = vor.u32 %v3327, %v3330
      %v3332 = vrot.slane %v3331, 4
      %v3334 = vshll.u32 %v3235, 16
      %v3336 = vrot.slane %v3334, 5
      %v3337 = vsel %vm1368, %v3332, %v3336
      %v3338 = vshrl.u32 %v3235, 16
      %v3340 = vrot.slane %v3338, 4
      %v3341 = vor.u32 %v3340, %v3336
      %v3342 = vrot.slane %v3341, 4
      %v3344 = vshll.u32 %v3236, 16
      %v3346 = vrot.slane %v3344, 5
      %v3347 = vsel %vm1368, %v3342, %v3346
      %v3349 = vshrl.u32 %v3237, 16
      %v3351 = vrot.slane %v3349, 4
      %v3352 = vshll.u32 %v3237, 16
      %v3354 = vrot.slane %v3352, 5
      %v3355 = vor.u32 %v3351, %v3354
      %v3356 = vrot.slane %v3355, 4
      %v3358 = vshll.u32 %v3238, 16
      %v3360 = vrot.slane %v3358, 5
      %v3361 = vsel %vm1368, %v3356, %v3360
      %v3362 = vshrl.u32 %v3238, 16
      %v3364 = vrot.slane %v3362, 4
      %v3365 = vor.u32 %v3364, %v3360
      %v3366 = vrot.slane %v3365, 4
      %v3368 = vshll.u32 %v3239, 16
      %v3370 = vrot.slane %v3368, 5
      %v3371 = vsel %vm1368, %v3366, %v3370
      %v3373 = vshrl.u32 %v3240, 16
      %v3375 = vrot.slane %v3373, 4
      %v3376 = vshll.u32 %v3240, 16
      %v3378 = vrot.slane %v3376, 5
      %v3379 = vor.u32 %v3375, %v3378
      %v3380 = vrot.slane %v3379, 4
      %v3382 = vshll.u32 %v3241, 16
      %v3384 = vrot.slane %v3382, 5
      %v3385 = vsel %vm1368, %v3380, %v3384
      %v3386 = vshrl.u32 %v3241, 16
      %v3388 = vrot.slane %v3386, 4
      %v3389 = vor.u32 %v3388, %v3384
      %v3390 = vrot.slane %v3389, 4
      %v3392 = vshll.u32 %v3242, 16
      %v3394 = vrot.slane %v3392, 5
      %v3395 = vsel %vm1368, %v3390, %v3394
      %v3397 = vshrl.u32 %v3243, 16
      %v3399 = vrot.slane %v3397, 4
      %v3400 = vshll.u32 %v3243, 16
      %v3402 = vrot.slane %v3400, 5
      %v3403 = vor.u32 %v3399, %v3402
      %v3404 = vrot.slane %v3403, 4
      %v3406 = vshll.u32 %v3244, 16
      %v3408 = vrot.slane %v3406, 5
      %v3409 = vsel %vm1368, %v3404, %v3408
      %v3410 = vshrl.u32 %v3244, 16
      %v3412 = vrot.slane %v3410, 4
      %v3413 = vor.u32 %v3412, %v3408
      %v3414 = vrot.slane %v3413, 4
      %v3416 = vshll.u32 %v3245, 16
      %v3418 = vrot.slane %v3416, 5
      %v3419 = vsel %vm1368, %v3414, %v3418
      %v3421 = vshrl.u32 %v3246, 16
      %v3423 = vrot.slane %v3421, 4
      %v3424 = vshll.u32 %v3246, 16
      %v3426 = vrot.slane %v3424, 5
      %v3427 = vor.u32 %v3423, %v3426
      %v3428 = vrot.slane %v3427, 4
      %v3430 = vshll.u32 %v3247, 16
      %v3432 = vrot.slane %v3430, 5
      %v3433 = vsel %vm1368, %v3428, %v3432
      %v3434 = vshrl.u32 %v3247, 16
      %v3436 = vrot.slane %v3434, 4
      %v3437 = vor.u32 %v3436, %v3432
      %v3438 = vrot.slane %v3437, 4
      %v3440 = vshll.u32 %v3248, 16
      %v3442 = vrot.slane %v3440, 5
      %v3443 = vsel %vm1368, %v3438, %v3442
      %v3445 = vshrl.u32 %v3249, 16
      %v3447 = vrot.slane %v3445, 4
      %v3448 = vshll.u32 %v3249, 16
      %v3450 = vrot.slane %v3448, 5
      %v3451 = vor.u32 %v3447, %v3450
      %v3452 = vrot.slane %v3451, 4
      %v3454 = vshll.u32 %v3250, 16
      %v3456 = vrot.slane %v3454, 5
      %v3457 = vsel %vm1368, %v3452, %v3456
      %v3458 = vshrl.u32 %v3250, 16
      %v3460 = vrot.slane %v3458, 4
      %v3461 = vor.u32 %v3460, %v3456
      %v3462 = vrot.slane %v3461, 4
      %v3464 = vshll.u32 %v3251, 16
      %v3466 = vrot.slane %v3464, 5
      %v3467 = vsel %vm1368, %v3462, %v3466
      %v3469 = vshrl.u32 %v3252, 16
      %v3471 = vrot.slane %v3469, 4
      %v3472 = vshll.u32 %v3252, 16
      %v3474 = vrot.slane %v3472, 5
      %v3475 = vor.u32 %v3471, %v3474
      %v3476 = vrot.slane %v3475, 4
      %v3478 = vshll.u32 %v3253, 16
      %v3480 = vrot.slane %v3478, 5
      %v3481 = vsel %vm1368, %v3476, %v3480
      %v3482 = vshrl.u32 %v3253, 16
      %v3484 = vrot.slane %v3482, 4
      %v3485 = vor.u32 %v3484, %v3480
      %v3486 = vrot.slane %v3485, 4
      %v3488 = vshll.u32 %v3254, 16
      %v3490 = vrot.slane %v3488, 5
      %v3491 = vsel %vm1368, %v3486, %v3490
      %v3493 = vshrl.u32 %v3255, 16
      %v3495 = vrot.slane %v3493, 4
      %v3496 = vshll.u32 %v3255, 16
      %v3498 = vrot.slane %v3496, 5
      %v3499 = vor.u32 %v3495, %v3498
      %v3500 = vrot.slane %v3499, 4
      %v3502 = vshll.u32 %v3256, 16
      %v3504 = vrot.slane %v3502, 5
      %v3505 = vsel %vm1368, %v3500, %v3504
      %v3506 = vshrl.u32 %v3256, 16
      %v3508 = vrot.slane %v3506, 4
      %v3509 = vor.u32 %v3508, %v3504
      %v3510 = vrot.slane %v3509, 4
      %v3512 = vshll.u32 %v3257, 16
      %v3514 = vrot.slane %v3512, 5
      %v3515 = vsel %vm1368, %v3510, %v3514
      %v3517 = vshrl.u32 %v3258, 16
      %v3519 = vrot.slane %v3517, 4
      %v3520 = vshll.u32 %v3258, 16
      %v3522 = vrot.slane %v3520, 5
      %v3523 = vor.u32 %v3519, %v3522
      %v3524 = vrot.slane %v3523, 4
      %v3526 = vshll.u32 %v3259, 16
      %v3528 = vrot.slane %v3526, 5
      %v3529 = vsel %vm1368, %v3524, %v3528
      %v3530 = vshrl.u32 %v3259, 16
      %v3532 = vrot.slane %v3530, 4
      %v3533 = vor.u32 %v3532, %v3528
      %v3534 = vrot.slane %v3533, 4
      %v3536 = vshll.u32 %v3260, 16
      %v3538 = vrot.slane %v3536, 5
      %v3539 = vsel %vm1368, %v3534, %v3538
      %v3541 = vshrl.u32 %v3261, 16
      %v3543 = vrot.slane %v3541, 4
      %v3544 = vshll.u32 %v3261, 16
      %v3546 = vrot.slane %v3544, 5
      %v3547 = vor.u32 %v3543, %v3546
      %v3548 = vrot.slane %v3547, 4
      %v3550 = vshll.u32 %v3262, 16
      %v3552 = vrot.slane %v3550, 5
      %v3553 = vsel %vm1368, %v3548, %v3552
      %v3554 = vshrl.u32 %v3262, 16
      %v3556 = vrot.slane %v3554, 4
      %v3557 = vor.u32 %v3556, %v3552
      %v3558 = vrot.slane %v3557, 4
      %v3560 = vshll.u32 %v3263, 16
      %v3562 = vrot.slane %v3560, 5
      %v3563 = vsel %vm1368, %v3558, %v3562
      %v3565 = vshrl.u32 %v3264, 16
      %v3567 = vrot.slane %v3565, 4
      %v3568 = vshll.u32 %v3264, 16
      %v3570 = vrot.slane %v3568, 5
      %v3571 = vor.u32 %v3567, %v3570
      %v3572 = vrot.slane %v3571, 4
      %v3574 = vshll.u32 %v3265, 16
      %v3576 = vrot.slane %v3574, 5
      %v3577 = vsel %vm1368, %v3572, %v3576
      %v3578 = vshrl.u32 %v3265, 16
      %v3580 = vrot.slane %v3578, 4
      %v3581 = vor.u32 %v3580, %v3576
      %v3582 = vrot.slane %v3581, 4
      %v3584 = vshll.u32 %v3266, 16
      %v3586 = vrot.slane %v3584, 5
      %v3587 = vsel %vm1368, %v3582, %v3586
      %v3589 = vshrl.u32 %v3267, 16
      %v3591 = vrot.slane %v3589, 4
      %v3592 = vshll.u32 %v3267, 16
      %v3594 = vrot.slane %v3592, 5
      %v3595 = vor.u32 %v3591, %v3594
      %v3596 = vrot.slane %v3595, 4
      %v3598 = vshll.u32 %v3268, 16
      %v3600 = vrot.slane %v3598, 5
      %v3601 = vsel %vm1368, %v3596, %v3600
      %v3602 = vshrl.u32 %v3268, 16
      %v3604 = vrot.slane %v3602, 4
      %v3605 = vor.u32 %v3604, %v3600
      %v3606 = vrot.slane %v3605, 4
      %v3608 = vshll.u32 %v3269, 16
      %v3610 = vrot.slane %v3608, 5
      %v3611 = vsel %vm1368, %v3606, %v3610
      %v3613 = vshrl.u32 %v3270, 16
      %v3615 = vrot.slane %v3613, 4
      %v3616 = vshll.u32 %v3270, 16
      %v3618 = vrot.slane %v3616, 5
      %v3619 = vor.u32 %v3615, %v3618
      %v3620 = vrot.slane %v3619, 4
      %v3622 = vshll.u32 %v3271, 16
      %v3624 = vrot.slane %v3622, 5
      %v3625 = vsel %vm1368, %v3620, %v3624
      %v3626 = vshrl.u32 %v3271, 16
      %v3628 = vrot.slane %v3626, 4
      %v3629 = vor.u32 %v3628, %v3624
      %v3630 = vrot.slane %v3629, 4
      %v3632 = vshll.u32 %v3272, 16
      %v3634 = vrot.slane %v3632, 5
      %v3635 = vsel %vm1368, %v3630, %v3634
      %v3637 = vshrl.u32 %v3273, 16
      %v3639 = vrot.slane %v3637, 4
      %v3640 = vshll.u32 %v3273, 16
      %v3642 = vrot.slane %v3640, 5
      %v3643 = vor.u32 %v3639, %v3642
      %v3644 = vrot.slane %v3643, 4
      %v3646 = vshll.u32 %v3274, 16
      %v3648 = vrot.slane %v3646, 5
      %v3649 = vsel %vm1368, %v3644, %v3648
      %v3650 = vshrl.u32 %v3274, 16
      %v3652 = vrot.slane %v3650, 4
      %v3653 = vor.u32 %v3652, %v3648
      %v3654 = vrot.slane %v3653, 4
      %v3656 = vshll.u32 %v3275, 16
      %v3658 = vrot.slane %v3656, 5
      %v3659 = vsel %vm1368, %v3654, %v3658
      %s3660 = scalar_lea.vmem %s4, 128
      %v3661 = vld [vmem:[%s3660] sm:$0xf]
      %v3662 = vld [vmem:[%s3660 + $0x4] sm:$0xf]
      %v3663 = vld [vmem:[%s3660 + $0x8] sm:$0xf]
      %v3664 = vld [vmem:[%s3660 + $0xc] sm:$0xf]
      %v3665 = vld [vmem:[%s3660 + $0x10] sm:$0xf]
      %v3666 = vld [vmem:[%s3660 + $0x14] sm:$0xf]
      %v3667 = vld [vmem:[%s3660 + $0x18] sm:$0xf]
      %v3668 = vld [vmem:[%s3660 + $0x1c] sm:$0xf]
      %v3669 = vunpack.c.l.b16 %v3289
      %v3670 = vunpack.c.l.b16 %v3299
      %v3671 = vunpack.c.l.b16 %v3313
      %v3672 = vunpack.c.l.b16 %v3323
      %v3673 = vunpack.c.l.b16 %v3337
      %v3674 = vunpack.c.l.b16 %v3347
      %v3675 = vunpack.c.l.b16 %v3361
      %v3676 = vunpack.c.l.b16 %v3371
      %v3677 = vunpack.c.l.b16 %v3385
      %v3678 = vunpack.c.l.b16 %v3395
      %v3679 = vunpack.c.l.b16 %v3409
      %v3680 = vunpack.c.l.b16 %v3419
      %v3681 = vunpack.c.l.b16 %v3433
      %v3682 = vunpack.c.l.b16 %v3443
      %v3683 = vunpack.c.l.b16 %v3457
      %v3684 = vunpack.c.l.b16 %v3467
      %v3685 = vunpack.c.l.b16 %v3481
      %v3686 = vunpack.c.l.b16 %v3491
      %v3687 = vunpack.c.l.b16 %v3505
      %v3688 = vunpack.c.l.b16 %v3515
      %v3689 = vunpack.c.l.b16 %v3529
      %v3690 = vunpack.c.l.b16 %v3539
      %v3691 = vunpack.c.l.b16 %v3553
      %v3692 = vunpack.c.l.b16 %v3563
      %v3693 = vunpack.c.l.b16 %v3577
      %v3694 = vunpack.c.l.b16 %v3587
      %v3695 = vunpack.c.l.b16 %v3601
      %v3696 = vunpack.c.l.b16 %v3611
      %v3697 = vunpack.c.l.b16 %v3625
      %v3698 = vunpack.c.l.b16 %v3635
      %v3699 = vunpack.c.l.b16 %v3649
      %v3700 = vunpack.c.l.b16 %v3659
      %v3701 = vpack.c.b16 %v3670, %v3669
      %v3702 = vpack.c.b16 %v3672, %v3671
      %v3703 = vpack.c.b16 %v3674, %v3673
      %v3704 = vpack.c.b16 %v3676, %v3675
      %v3705 = vpack.c.b16 %v3678, %v3677
      %v3706 = vpack.c.b16 %v3680, %v3679
      %v3707 = vpack.c.b16 %v3682, %v3681
      %v3708 = vpack.c.b16 %v3684, %v3683
      %v3709 = vpack.c.b16 %v3686, %v3685
      %v3710 = vpack.c.b16 %v3688, %v3687
      %v3711 = vpack.c.b16 %v3690, %v3689
      %v3712 = vpack.c.b16 %v3692, %v3691
      %v3713 = vpack.c.b16 %v3694, %v3693
      %v3714 = vpack.c.b16 %v3696, %v3695
      %v3715 = vpack.c.b16 %v3698, %v3697
      %v3716 = vpack.c.b16 %v3700, %v3699
      %v3725 = vunpack.c.l.b16 %v3661
      %v3726 = vunpack.c.l.b16 %v3662
      %v3727 = vunpack.c.l.b16 %v3663
      %v3728 = vunpack.c.l.b16 %v3664
      %v3729 = vunpack.c.l.b16 %v3665
      %v3730 = vunpack.c.l.b16 %v3666
      %v3731 = vunpack.c.l.b16 %v3667
      %v3732 = vunpack.c.l.b16 %v3668
      %v3733 = vpack.c.b16 %v3726, %v3725
      %v3734 = vpack.c.b16 %v3728, %v3727
      %v3735 = vpack.c.b16 %v3730, %v3729
      %v3736 = vpack.c.b16 %v3732, %v3731
      %v3742 = vsel %vm1834, %v3701, 0
      %v3745 = vsel %vm1834, %v3702, 0
      %v3748 = vsel %vm1834, %v3703, 0
      %v3751 = vsel %vm1834, %v3704, 0
      %v3754 = vsel %vm1834, %v3705, 0
      %v3757 = vsel %vm1834, %v3706, 0
      %v3760 = vsel %vm1834, %v3707, 0
      %v3763 = vsel %vm1834, %v3708, 0
      %v3766 = vsel %vm1834, %v3709, 0
      %v3769 = vsel %vm1834, %v3710, 0
      %v3772 = vsel %vm1834, %v3711, 0
      %v3775 = vsel %vm1834, %v3712, 0
      %v3778 = vsel %vm1834, %v3713, 0
      %v3781 = vsel %vm1834, %v3714, 0
      %v3784 = vsel %vm1834, %v3715, 0
      %v3787 = vsel %vm1834, %v3716, 0
      %3789 = vmatprep.subr.bf16.mxu0 0
      %3790 = vmatpush1.bf16.msra.mxu0 %v3733
      %3791 = vmatprep.subr.bf16.mxu0 0
      %3792 = vmatpush1.bf16.msra.mxu0 %v3734
      %3793 = vmatprep.subr.bf16.mxu0 0
      %3794 = vmatpush1.bf16.msra.mxu0 %v3735
      %3795 = vmatprep.subr.bf16.mxu0 0
      %3796 = vmatpush1.bf16.msra.mxu0 %v3736
      %3797 = vmatprep.subr.bf16.mxu0 0
      %3798 = vmatpush1.bf16.msra.mxu0 0
      %3799 = vmatprep.subr.bf16.mxu0 0
      %3800 = vmatpush1.bf16.msra.mxu0 0
      %3801 = vmatprep.subr.bf16.mxu0 0
      %3802 = vmatpush1.bf16.msra.mxu0 0
      %3803 = vmatprep.subr.bf16.mxu0 0
      %3804 = vmatpush1.bf16.msra.mxu0 0
      %3805 = vmatprep.subr.bf16.mxu0 0
      %3806 = vmatpush1.bf16.msra.mxu0 0
      %3807 = vmatprep.subr.bf16.mxu0 0
      %3808 = vmatpush1.bf16.msra.mxu0 0
      %3809 = vmatprep.subr.bf16.mxu0 0
      %3810 = vmatpush1.bf16.msra.mxu0 0
      %3811 = vmatprep.subr.bf16.mxu0 0
      %3812 = vmatpush1.bf16.msra.mxu0 0
      %3813 = vmatprep.subr.bf16.mxu0 0
      %3814 = vmatpush1.bf16.msra.mxu0 0
      %3815 = vmatprep.subr.bf16.mxu0 0
      %3816 = vmatpush1.bf16.msra.mxu0 0
      %3817 = vmatprep.subr.bf16.mxu0 0
      %3818 = vmatpush1.bf16.msra.mxu0 0
      %3819 = vmatprep.subr.bf16.mxu0 0
      %3820 = vmatpush1.bf16.msra.mxu0 0
      %3821 = vmatprep.mubr.bf16.mxu0 0
      %3822 = vmatmul.mubr.bf16.gmra.mrb[0].mxu0 %v3742
      %v3823 = vpop.f32.mrb[0].mxu0
      %v3824 = vadd.f32 0.0, %v3823
      %v3825 = vpop.f32.mrb[0].mxu0
      %v3826 = vpop.f32.mrb[0].mxu0
      %v3827 = vadd.f32 0.0, %v3826
      %v3828 = vpop.f32.mrb[0].mxu0
      %3829 = vmatprep.mubr.bf16.mxu0 0
      %3830 = vmatmul.mubr.bf16.gmra.mrb[0].mxu0 %v3745
      %v3831 = vpop.f32.mrb[0].mxu0
      %v3832 = vadd.f32 0.0, %v3831
      %v3833 = vpop.f32.mrb[0].mxu0
      %v3834 = vpop.f32.mrb[0].mxu0
      %v3835 = vadd.f32 0.0, %v3834
      %v3836 = vpop.f32.mrb[0].mxu0
      %3837 = vmatprep.mubr.bf16.mxu0 0
      %3838 = vmatmul.mubr.bf16.gmra.mrb[0].mxu0 %v3748
      %v3839 = vpop.f32.mrb[0].mxu0
      %v3840 = vadd.f32 0.0, %v3839
      %v3841 = vpop.f32.mrb[0].mxu0
      %v3842 = vpop.f32.mrb[0].mxu0
      %v3843 = vadd.f32 0.0, %v3842
      %v3844 = vpop.f32.mrb[0].mxu0
      %3845 = vmatprep.mubr.bf16.mxu0 0
      %3846 = vmatmul.mubr.bf16.gmra.mrb[0].mxu0 %v3751
      %v3847 = vpop.f32.mrb[0].mxu0
      %v3848 = vadd.f32 0.0, %v3847
      %v3849 = vpop.f32.mrb[0].mxu0
      %v3850 = vpop.f32.mrb[0].mxu0
      %v3851 = vadd.f32 0.0, %v3850
      %v3852 = vpop.f32.mrb[0].mxu0
      %3853 = vmatprep.mubr.bf16.mxu0 0
      %3854 = vmatmul.mubr.bf16.gmra.mrb[0].mxu0 %v3754
      %v3855 = vpop.f32.mrb[0].mxu0
      %v3856 = vadd.f32 0.0, %v3855
      %v3857 = vpop.f32.mrb[0].mxu0
      %v3858 = vpop.f32.mrb[0].mxu0
      %v3859 = vadd.f32 0.0, %v3858
      %v3860 = vpop.f32.mrb[0].mxu0
      %3861 = vmatprep.mubr.bf16.mxu0 0
      %3862 = vmatmul.mubr.bf16.gmra.mrb[0].mxu0 %v3757
      %v3863 = vpop.f32.mrb[0].mxu0
      %v3864 = vadd.f32 0.0, %v3863
      %v3865 = vpop.f32.mrb[0].mxu0
      %v3866 = vpop.f32.mrb[0].mxu0
      %v3867 = vadd.f32 0.0, %v3866
      %v3868 = vpop.f32.mrb[0].mxu0
      %3869 = vmatprep.mubr.bf16.mxu0 0
      %3870 = vmatmul.mubr.bf16.gmra.mrb[0].mxu0 %v3760
      %v3871 = vpop.f32.mrb[0].mxu0
      %v3872 = vadd.f32 0.0, %v3871
      %v3873 = vpop.f32.mrb[0].mxu0
      %v3874 = vpop.f32.mrb[0].mxu0
      %v3875 = vadd.f32 0.0, %v3874
      %v3876 = vpop.f32.mrb[0].mxu0
      %3877 = vmatprep.mubr.bf16.mxu0 0
      %3878 = vmatmul.mubr.bf16.gmra.mrb[0].mxu0 %v3763
      %v3879 = vpop.f32.mrb[0].mxu0
      %v3880 = vadd.f32 0.0, %v3879
      %v3881 = vpop.f32.mrb[0].mxu0
      %v3882 = vpop.f32.mrb[0].mxu0
      %v3883 = vadd.f32 0.0, %v3882
      %v3884 = vpop.f32.mrb[0].mxu0
      %3885 = vmatprep.mubr.bf16.mxu0 0
      %3886 = vmatmul.mubr.bf16.gmra.mrb[0].mxu0 %v3766
      %v3887 = vpop.f32.mrb[0].mxu0
      %v3888 = vadd.f32 0.0, %v3887
      %v3889 = vpop.f32.mrb[0].mxu0
      %v3890 = vpop.f32.mrb[0].mxu0
      %v3891 = vadd.f32 0.0, %v3890
      %v3892 = vpop.f32.mrb[0].mxu0
      %3893 = vmatprep.mubr.bf16.mxu0 0
      %3894 = vmatmul.mubr.bf16.gmra.mrb[0].mxu0 %v3769
      %v3895 = vpop.f32.mrb[0].mxu0
      %v3896 = vadd.f32 0.0, %v3895
      %v3897 = vpop.f32.mrb[0].mxu0
      %v3898 = vpop.f32.mrb[0].mxu0
      %v3899 = vadd.f32 0.0, %v3898
      %v3900 = vpop.f32.mrb[0].mxu0
      %3901 = vmatprep.mubr.bf16.mxu0 0
      %3902 = vmatmul.mubr.bf16.gmra.mrb[0].mxu0 %v3772
      %v3903 = vpop.f32.mrb[0].mxu0
      %v3904 = vadd.f32 0.0, %v3903
      %v3905 = vpop.f32.mrb[0].mxu0
      %v3906 = vpop.f32.mrb[0].mxu0
      %v3907 = vadd.f32 0.0, %v3906
      %v3908 = vpop.f32.mrb[0].mxu0
      %3909 = vmatprep.mubr.bf16.mxu0 0
      %3910 = vmatmul.mubr.bf16.gmra.mrb[0].mxu0 %v3775
      %v3911 = vpop.f32.mrb[0].mxu0
      %v3912 = vadd.f32 0.0, %v3911
      %v3913 = vpop.f32.mrb[0].mxu0
      %v3914 = vpop.f32.mrb[0].mxu0
      %v3915 = vadd.f32 0.0, %v3914
      %v3916 = vpop.f32.mrb[0].mxu0
      %3917 = vmatprep.mubr.bf16.mxu0 0
      %3918 = vmatmul.mubr.bf16.gmra.mrb[0].mxu0 %v3778
      %v3919 = vpop.f32.mrb[0].mxu0
      %v3920 = vadd.f32 0.0, %v3919
      %v3921 = vpop.f32.mrb[0].mxu0
      %v3922 = vpop.f32.mrb[0].mxu0
      %v3923 = vadd.f32 0.0, %v3922
      %v3924 = vpop.f32.mrb[0].mxu0
      %3925 = vmatprep.mubr.bf16.mxu0 0
      %3926 = vmatmul.mubr.bf16.gmra.mrb[0].mxu0 %v3781
      %v3927 = vpop.f32.mrb[0].mxu0
      %v3928 = vadd.f32 0.0, %v3927
      %v3929 = vpop.f32.mrb[0].mxu0
      %v3930 = vpop.f32.mrb[0].mxu0
      %v3931 = vadd.f32 0.0, %v3930
      %v3932 = vpop.f32.mrb[0].mxu0
      %3933 = vmatprep.mubr.bf16.mxu0 0
      %3934 = vmatmul.mubr.bf16.gmra.mrb[0].mxu0 %v3784
      %v3935 = vpop.f32.mrb[0].mxu0
      %v3936 = vadd.f32 0.0, %v3935
      %v3937 = vpop.f32.mrb[0].mxu0
      %v3938 = vpop.f32.mrb[0].mxu0
      %v3939 = vadd.f32 0.0, %v3938
      %v3940 = vpop.f32.mrb[0].mxu0
      %3941 = vmatprep.mubr.bf16.mxu0 0
      %3942 = vmatmul.mubr.bf16.gmra.mrb[0].mxu0 %v3787
      %v3943 = vpop.f32.mrb[0].mxu0
      %v3944 = vadd.f32 0.0, %v3943
      %v3945 = vpop.f32.mrb[0].mxu0
      %v3946 = vpop.f32.mrb[0].mxu0
      %v3947 = vadd.f32 0.0, %v3946
      %v3948 = vpop.f32.mrb[0].mxu0
      %3949 = vdwg.mxu0
      %v3950 = vadd.f32 %v3196, %v3824
      %v3951 = vadd.f32 %v3197, %v3827
      %v3952 = vadd.f32 %v3198, %v3832
      %v3953 = vadd.f32 %v3199, %v3835
      %v3954 = vadd.f32 %v3200, %v3840
      %v3955 = vadd.f32 %v3201, %v3843
      %v3956 = vadd.f32 %v3202, %v3848
      %v3957 = vadd.f32 %v3203, %v3851
      %v3958 = vadd.f32 %v3204, %v3856
      %v3959 = vadd.f32 %v3205, %v3859
      %v3960 = vadd.f32 %v3206, %v3864
      %v3961 = vadd.f32 %v3207, %v3867
      %v3962 = vadd.f32 %v3208, %v3872
      %v3963 = vadd.f32 %v3209, %v3875
      %v3964 = vadd.f32 %v3210, %v3880
      %v3965 = vadd.f32 %v3211, %v3883
      %v3966 = vadd.f32 %v3212, %v3888
      %v3967 = vadd.f32 %v3213, %v3891
      %v3968 = vadd.f32 %v3214, %v3896
      %v3969 = vadd.f32 %v3215, %v3899
      %v3970 = vadd.f32 %v3216, %v3904
      %v3971 = vadd.f32 %v3217, %v3907
      %v3972 = vadd.f32 %v3218, %v3912
      %v3973 = vadd.f32 %v3219, %v3915
      %v3974 = vadd.f32 %v3220, %v3920
      %v3975 = vadd.f32 %v3221, %v3923
      %v3976 = vadd.f32 %v3222, %v3928
      %v3977 = vadd.f32 %v3223, %v3931
      %v3978 = vadd.f32 %v3224, %v3936
      %v3979 = vadd.f32 %v3225, %v3939
      %v3980 = vadd.f32 %v3226, %v3944
      %v3981 = vadd.f32 %v3227, %v3947
      %v3982 = vld [vmem:[%s1192] sm:$0xe]
      %v3983 = vld [vmem:[%s1192 + $0xc] sm:$0xe]
      %v3984 = vld [vmem:[%s1192 + $0x18] sm:$0xe]
      %v3985 = vld [vmem:[%s1192 + $0x24] sm:$0xe]
      %v3986 = vld [vmem:[%s1192 + $0x30] sm:$0xe]
      %v3987 = vld [vmem:[%s1192 + $0x3c] sm:$0xe]
      %v3988 = vld [vmem:[%s1192 + $0x48] sm:$0xe]
      %v3989 = vld [vmem:[%s1192 + $0x54] sm:$0xe]
      %v3990 = vld [vmem:[%s1192 + $0x60] sm:$0xe]
      %v3991 = vld [vmem:[%s1192 + $0x6c] sm:$0xe]
      %v3992 = vld [vmem:[%s1192 + $0x78] sm:$0xe]
      %v3993 = vld [vmem:[%s1192 + $0x84] sm:$0xe]
      %v3994 = vld [vmem:[%s1192 + $0x90] sm:$0xe]
      %v3995 = vld [vmem:[%s1192 + $0x9c] sm:$0xe]
      %v3996 = vld [vmem:[%s1192 + $0xa8] sm:$0xe]
      %v3997 = vld [vmem:[%s1192 + $0xb4] sm:$0xe]
      %v4046 = vrot.slane %v3982, 5
      %v4047 = vrot.slane %v4046, 4
      %v4048 = vrot.slane %v3229, 5
      %v4049 = vsel %vm2407, %v4047, %v4048
      %v4050 = vrot.slane %v4048, 4
      %v4051 = vrot.slane %v3230, 5
      %v4052 = vsel %vm2407, %v4050, %v4051
      %v4053 = vrot.slane %v3983, 5
      %v4054 = vrot.slane %v4053, 4
      %v4055 = vrot.slane %v3232, 5
      %v4056 = vsel %vm2407, %v4054, %v4055
      %v4057 = vrot.slane %v4055, 4
      %v4058 = vrot.slane %v3233, 5
      %v4059 = vsel %vm2407, %v4057, %v4058
      %v4060 = vrot.slane %v3984, 5
      %v4061 = vrot.slane %v4060, 4
      %v4062 = vrot.slane %v3235, 5
      %v4063 = vsel %vm2407, %v4061, %v4062
      %v4064 = vrot.slane %v4062, 4
      %v4065 = vrot.slane %v3236, 5
      %v4066 = vsel %vm2407, %v4064, %v4065
      %v4067 = vrot.slane %v3985, 5
      %v4068 = vrot.slane %v4067, 4
      %v4069 = vrot.slane %v3238, 5
      %v4070 = vsel %vm2407, %v4068, %v4069
      %v4071 = vrot.slane %v4069, 4
      %v4072 = vrot.slane %v3239, 5
      %v4073 = vsel %vm2407, %v4071, %v4072
      %v4074 = vrot.slane %v3986, 5
      %v4075 = vrot.slane %v4074, 4
      %v4076 = vrot.slane %v3241, 5
      %v4077 = vsel %vm2407, %v4075, %v4076
      %v4078 = vrot.slane %v4076, 4
      %v4079 = vrot.slane %v3242, 5
      %v4080 = vsel %vm2407, %v4078, %v4079
      %v4081 = vrot.slane %v3987, 5
      %v4082 = vrot.slane %v4081, 4
      %v4083 = vrot.slane %v3244, 5
      %v4084 = vsel %vm2407, %v4082, %v4083
      %v4085 = vrot.slane %v4083, 4
      %v4086 = vrot.slane %v3245, 5
      %v4087 = vsel %vm2407, %v4085, %v4086
      %v4088 = vrot.slane %v3988, 5
      %v4089 = vrot.slane %v4088, 4
      %v4090 = vrot.slane %v3247, 5
      %v4091 = vsel %vm2407, %v4089, %v4090
      %v4092 = vrot.slane %v4090, 4
      %v4093 = vrot.slane %v3248, 5
      %v4094 = vsel %vm2407, %v4092, %v4093
      %v4095 = vrot.slane %v3989, 5
      %v4096 = vrot.slane %v4095, 4
      %v4097 = vrot.slane %v3250, 5
      %v4098 = vsel %vm2407, %v4096, %v4097
      %v4099 = vrot.slane %v4097, 4
      %v4100 = vrot.slane %v3251, 5
      %v4101 = vsel %vm2407, %v4099, %v4100
      %v4102 = vrot.slane %v3990, 5
      %v4103 = vrot.slane %v4102, 4
      %v4104 = vrot.slane %v3253, 5
      %v4105 = vsel %vm2407, %v4103, %v4104
      %v4106 = vrot.slane %v4104, 4
      %v4107 = vrot.slane %v3254, 5
      %v4108 = vsel %vm2407, %v4106, %v4107
      %v4109 = vrot.slane %v3991, 5
      %v4110 = vrot.slane %v4109, 4
      %v4111 = vrot.slane %v3256, 5
      %v4112 = vsel %vm2407, %v4110, %v4111
      %v4113 = vrot.slane %v4111, 4
      %v4114 = vrot.slane %v3257, 5
      %v4115 = vsel %vm2407, %v4113, %v4114
      %v4116 = vrot.slane %v3992, 5
      %v4117 = vrot.slane %v4116, 4
      %v4118 = vrot.slane %v3259, 5
      %v4119 = vsel %vm2407, %v4117, %v4118
      %v4120 = vrot.slane %v4118, 4
      %v4121 = vrot.slane %v3260, 5
      %v4122 = vsel %vm2407, %v4120, %v4121
      %v4123 = vrot.slane %v3993, 5
      %v4124 = vrot.slane %v4123, 4
      %v4125 = vrot.slane %v3262, 5
      %v4126 = vsel %vm2407, %v4124, %v4125
      %v4127 = vrot.slane %v4125, 4
      %v4128 = vrot.slane %v3263, 5
      %v4129 = vsel %vm2407, %v4127, %v4128
      %v4130 = vrot.slane %v3994, 5
      %v4131 = vrot.slane %v4130, 4
      %v4132 = vrot.slane %v3265, 5
      %v4133 = vsel %vm2407, %v4131, %v4132
      %v4134 = vrot.slane %v4132, 4
      %v4135 = vrot.slane %v3266, 5
      %v4136 = vsel %vm2407, %v4134, %v4135
      %v4137 = vrot.slane %v3995, 5
      %v4138 = vrot.slane %v4137, 4
      %v4139 = vrot.slane %v3268, 5
      %v4140 = vsel %vm2407, %v4138, %v4139
      %v4141 = vrot.slane %v4139, 4
      %v4142 = vrot.slane %v3269, 5
      %v4143 = vsel %vm2407, %v4141, %v4142
      %v4144 = vrot.slane %v3996, 5
      %v4145 = vrot.slane %v4144, 4
      %v4146 = vrot.slane %v3271, 5
      %v4147 = vsel %vm2407, %v4145, %v4146
      %v4148 = vrot.slane %v4146, 4
      %v4149 = vrot.slane %v3272, 5
      %v4150 = vsel %vm2407, %v4148, %v4149
      %v4151 = vrot.slane %v3997, 5
      %v4152 = vrot.slane %v4151, 4
      %v4153 = vrot.slane %v3274, 5
      %v4154 = vsel %vm2407, %v4152, %v4153
      %v4155 = vrot.slane %v4153, 4
      %v4156 = vrot.slane %v3275, 5
      %v4157 = vsel %vm2407, %v4155, %v4156
      %s4158 = scalar_lea.vmem %s4, 160
      %v4159 = vld [vmem:[%s4158] sm:$0xf]
      %v4160 = vld [vmem:[%s4158 + $0x4] sm:$0xf]
      %v4161 = vld [vmem:[%s4158 + $0x8] sm:$0xf]
      %v4162 = vld [vmem:[%s4158 + $0xc] sm:$0xf]
      %v4163 = vld [vmem:[%s4158 + $0x10] sm:$0xf]
      %v4164 = vld [vmem:[%s4158 + $0x14] sm:$0xf]
      %v4165 = vld [vmem:[%s4158 + $0x18] sm:$0xf]
      %v4166 = vld [vmem:[%s4158 + $0x1c] sm:$0xf]
      %v4167 = vunpack.c.l.b16 %v4049
      %v4168 = vunpack.c.l.b16 %v4052
      %v4169 = vunpack.c.l.b16 %v4056
      %v4170 = vunpack.c.l.b16 %v4059
      %v4171 = vunpack.c.l.b16 %v4063
      %v4172 = vunpack.c.l.b16 %v4066
      %v4173 = vunpack.c.l.b16 %v4070
      %v4174 = vunpack.c.l.b16 %v4073
      %v4175 = vunpack.c.l.b16 %v4077
      %v4176 = vunpack.c.l.b16 %v4080
      %v4177 = vunpack.c.l.b16 %v4084
      %v4178 = vunpack.c.l.b16 %v4087
      %v4179 = vunpack.c.l.b16 %v4091
      %v4180 = vunpack.c.l.b16 %v4094
      %v4181 = vunpack.c.l.b16 %v4098
      %v4182 = vunpack.c.l.b16 %v4101
      %v4183 = vunpack.c.l.b16 %v4105
      %v4184 = vunpack.c.l.b16 %v4108
      %v4185 = vunpack.c.l.b16 %v4112
      %v4186 = vunpack.c.l.b16 %v4115
      %v4187 = vunpack.c.l.b16 %v4119
      %v4188 = vunpack.c.l.b16 %v4122
      %v4189 = vunpack.c.l.b16 %v4126
      %v4190 = vunpack.c.l.b16 %v4129
      %v4191 = vunpack.c.l.b16 %v4133
      %v4192 = vunpack.c.l.b16 %v4136
      %v4193 = vunpack.c.l.b16 %v4140
      %v4194 = vunpack.c.l.b16 %v4143
      %v4195 = vunpack.c.l.b16 %v4147
      %v4196 = vunpack.c.l.b16 %v4150
      %v4197 = vunpack.c.l.b16 %v4154
      %v4198 = vunpack.c.l.b16 %v4157
      %v4199 = vpack.c.b16 %v4168, %v4167
      %v4200 = vpack.c.b16 %v4170, %v4169
      %v4201 = vpack.c.b16 %v4172, %v4171
      %v4202 = vpack.c.b16 %v4174, %v4173
      %v4203 = vpack.c.b16 %v4176, %v4175
      %v4204 = vpack.c.b16 %v4178, %v4177
      %v4205 = vpack.c.b16 %v4180, %v4179
      %v4206 = vpack.c.b16 %v4182, %v4181
      %v4207 = vpack.c.b16 %v4184, %v4183
      %v4208 = vpack.c.b16 %v4186, %v4185
      %v4209 = vpack.c.b16 %v4188, %v4187
      %v4210 = vpack.c.b16 %v4190, %v4189
      %v4211 = vpack.c.b16 %v4192, %v4191
      %v4212 = vpack.c.b16 %v4194, %v4193
      %v4213 = vpack.c.b16 %v4196, %v4195
      %v4214 = vpack.c.b16 %v4198, %v4197
      %v4223 = vunpack.c.l.b16 %v4159
      %v4224 = vunpack.c.l.b16 %v4160
      %v4225 = vunpack.c.l.b16 %v4161
      %v4226 = vunpack.c.l.b16 %v4162
      %v4227 = vunpack.c.l.b16 %v4163
      %v4228 = vunpack.c.l.b16 %v4164
      %v4229 = vunpack.c.l.b16 %v4165
      %v4230 = vunpack.c.l.b16 %v4166
      %v4231 = vpack.c.b16 %v4224, %v4223
      %v4232 = vpack.c.b16 %v4226, %v4225
      %v4233 = vpack.c.b16 %v4228, %v4227
      %v4234 = vpack.c.b16 %v4230, %v4229
      %v4240 = vsel %vm1834, %v4199, 0
      %v4243 = vsel %vm1834, %v4200, 0
      %v4246 = vsel %vm1834, %v4201, 0
      %v4249 = vsel %vm1834, %v4202, 0
      %v4252 = vsel %vm1834, %v4203, 0
      %v4255 = vsel %vm1834, %v4204, 0
      %v4258 = vsel %vm1834, %v4205, 0
      %v4261 = vsel %vm1834, %v4206, 0
      %v4264 = vsel %vm1834, %v4207, 0
      %v4267 = vsel %vm1834, %v4208, 0
      %v4270 = vsel %vm1834, %v4209, 0
      %v4273 = vsel %vm1834, %v4210, 0
      %v4276 = vsel %vm1834, %v4211, 0
      %v4279 = vsel %vm1834, %v4212, 0
      %v4282 = vsel %vm1834, %v4213, 0
      %v4285 = vsel %vm1834, %v4214, 0
      %4287 = vmatprep.subr.bf16.mxu0 0
      %4288 = vmatpush1.bf16.msra.mxu0 %v4231
      %4289 = vmatprep.subr.bf16.mxu0 0
      %4290 = vmatpush1.bf16.msra.mxu0 %v4232
      %4291 = vmatprep.subr.bf16.mxu0 0
      %4292 = vmatpush1.bf16.msra.mxu0 %v4233
      %4293 = vmatprep.subr.bf16.mxu0 0
      %4294 = vmatpush1.bf16.msra.mxu0 %v4234
      %4295 = vmatprep.subr.bf16.mxu0 0
      %4296 = vmatpush1.bf16.msra.mxu0 0
      %4297 = vmatprep.subr.bf16.mxu0 0
      %4298 = vmatpush1.bf16.msra.mxu0 0
      %4299 = vmatprep.subr.bf16.mxu0 0
      %4300 = vmatpush1.bf16.msra.mxu0 0
      %4301 = vmatprep.subr.bf16.mxu0 0
      %4302 = vmatpush1.bf16.msra.mxu0 0
      %4303 = vmatprep.subr.bf16.mxu0 0
      %4304 = vmatpush1.bf16.msra.mxu0 0
      %4305 = vmatprep.subr.bf16.mxu0 0
      %4306 = vmatpush1.bf16.msra.mxu0 0
      %4307 = vmatprep.subr.bf16.mxu0 0
      %4308 = vmatpush1.bf16.msra.mxu0 0
      %4309 = vmatprep.subr.bf16.mxu0 0
      %4310 = vmatpush1.bf16.msra.mxu0 0
      %4311 = vmatprep.subr.bf16.mxu0 0
      %4312 = vmatpush1.bf16.msra.mxu0 0
      %4313 = vmatprep.subr.bf16.mxu0 0
      %4314 = vmatpush1.bf16.msra.mxu0 0
      %4315 = vmatprep.subr.bf16.mxu0 0
      %4316 = vmatpush1.bf16.msra.mxu0 0
      %4317 = vmatprep.subr.bf16.mxu0 0
      %4318 = vmatpush1.bf16.msra.mxu0 0
      %4319 = vmatprep.mubr.bf16.mxu0 0
      %4320 = vmatmul.mubr.bf16.gmra.mrb[0].mxu0 %v4240
      %v4321 = vpop.f32.mrb[0].mxu0
      %v4322 = vadd.f32 0.0, %v4321
      %v4323 = vpop.f32.mrb[0].mxu0
      %v4324 = vpop.f32.mrb[0].mxu0
      %v4325 = vadd.f32 0.0, %v4324
      %v4326 = vpop.f32.mrb[0].mxu0
      %4327 = vmatprep.mubr.bf16.mxu0 0
      %4328 = vmatmul.mubr.bf16.gmra.mrb[0].mxu0 %v4243
      %v4329 = vpop.f32.mrb[0].mxu0
      %v4330 = vadd.f32 0.0, %v4329
      %v4331 = vpop.f32.mrb[0].mxu0
      %v4332 = vpop.f32.mrb[0].mxu0
      %v4333 = vadd.f32 0.0, %v4332
      %v4334 = vpop.f32.mrb[0].mxu0
      %4335 = vmatprep.mubr.bf16.mxu0 0
      %4336 = vmatmul.mubr.bf16.gmra.mrb[0].mxu0 %v4246
      %v4337 = vpop.f32.mrb[0].mxu0
      %v4338 = vadd.f32 0.0, %v4337
      %v4339 = vpop.f32.mrb[0].mxu0
      %v4340 = vpop.f32.mrb[0].mxu0
      %v4341 = vadd.f32 0.0, %v4340
      %v4342 = vpop.f32.mrb[0].mxu0
      %4343 = vmatprep.mubr.bf16.mxu0 0
      %4344 = vmatmul.mubr.bf16.gmra.mrb[0].mxu0 %v4249
      %v4345 = vpop.f32.mrb[0].mxu0
      %v4346 = vadd.f32 0.0, %v4345
      %v4347 = vpop.f32.mrb[0].mxu0
      %v4348 = vpop.f32.mrb[0].mxu0
      %v4349 = vadd.f32 0.0, %v4348
      %v4350 = vpop.f32.mrb[0].mxu0
      %4351 = vmatprep.mubr.bf16.mxu0 0
      %4352 = vmatmul.mubr.bf16.gmra.mrb[0].mxu0 %v4252
      %v4353 = vpop.f32.mrb[0].mxu0
      %v4354 = vadd.f32 0.0, %v4353
      %v4355 = vpop.f32.mrb[0].mxu0
      %v4356 = vpop.f32.mrb[0].mxu0
      %v4357 = vadd.f32 0.0, %v4356
      %v4358 = vpop.f32.mrb[0].mxu0
      %4359 = vmatprep.mubr.bf16.mxu0 0
      %4360 = vmatmul.mubr.bf16.gmra.mrb[0].mxu0 %v4255
      %v4361 = vpop.f32.mrb[0].mxu0
      %v4362 = vadd.f32 0.0, %v4361
      %v4363 = vpop.f32.mrb[0].mxu0
      %v4364 = vpop.f32.mrb[0].mxu0
      %v4365 = vadd.f32 0.0, %v4364
      %v4366 = vpop.f32.mrb[0].mxu0
      %4367 = vmatprep.mubr.bf16.mxu0 0
      %4368 = vmatmul.mubr.bf16.gmra.mrb[0].mxu0 %v4258
      %v4369 = vpop.f32.mrb[0].mxu0
      %v4370 = vadd.f32 0.0, %v4369
      %v4371 = vpop.f32.mrb[0].mxu0
      %v4372 = vpop.f32.mrb[0].mxu0
      %v4373 = vadd.f32 0.0, %v4372
      %v4374 = vpop.f32.mrb[0].mxu0
      %4375 = vmatprep.mubr.bf16.mxu0 0
      %4376 = vmatmul.mubr.bf16.gmra.mrb[0].mxu0 %v4261
      %v4377 = vpop.f32.mrb[0].mxu0
      %v4378 = vadd.f32 0.0, %v4377
      %v4379 = vpop.f32.mrb[0].mxu0
      %v4380 = vpop.f32.mrb[0].mxu0
      %v4381 = vadd.f32 0.0, %v4380
      %v4382 = vpop.f32.mrb[0].mxu0
      %4383 = vmatprep.mubr.bf16.mxu0 0
      %4384 = vmatmul.mubr.bf16.gmra.mrb[0].mxu0 %v4264
      %v4385 = vpop.f32.mrb[0].mxu0
      %v4386 = vadd.f32 0.0, %v4385
      %v4387 = vpop.f32.mrb[0].mxu0
      %v4388 = vpop.f32.mrb[0].mxu0
      %v4389 = vadd.f32 0.0, %v4388
      %v4390 = vpop.f32.mrb[0].mxu0
      %4391 = vmatprep.mubr.bf16.mxu0 0
      %4392 = vmatmul.mubr.bf16.gmra.mrb[0].mxu0 %v4267
      %v4393 = vpop.f32.mrb[0].mxu0
      %v4394 = vadd.f32 0.0, %v4393
      %v4395 = vpop.f32.mrb[0].mxu0
      %v4396 = vpop.f32.mrb[0].mxu0
      %v4397 = vadd.f32 0.0, %v4396
      %v4398 = vpop.f32.mrb[0].mxu0
      %4399 = vmatprep.mubr.bf16.mxu0 0
      %4400 = vmatmul.mubr.bf16.gmra.mrb[0].mxu0 %v4270
      %v4401 = vpop.f32.mrb[0].mxu0
      %v4402 = vadd.f32 0.0, %v4401
      %v4403 = vpop.f32.mrb[0].mxu0
      %v4404 = vpop.f32.mrb[0].mxu0
      %v4405 = vadd.f32 0.0, %v4404
      %v4406 = vpop.f32.mrb[0].mxu0
      %4407 = vmatprep.mubr.bf16.mxu0 0
      %4408 = vmatmul.mubr.bf16.gmra.mrb[0].mxu0 %v4273
      %v4409 = vpop.f32.mrb[0].mxu0
      %v4410 = vadd.f32 0.0, %v4409
      %v4411 = vpop.f32.mrb[0].mxu0
      %v4412 = vpop.f32.mrb[0].mxu0
      %v4413 = vadd.f32 0.0, %v4412
      %v4414 = vpop.f32.mrb[0].mxu0
      %4415 = vmatprep.mubr.bf16.mxu0 0
      %4416 = vmatmul.mubr.bf16.gmra.mrb[0].mxu0 %v4276
      %v4417 = vpop.f32.mrb[0].mxu0
      %v4418 = vadd.f32 0.0, %v4417
      %v4419 = vpop.f32.mrb[0].mxu0
      %v4420 = vpop.f32.mrb[0].mxu0
      %v4421 = vadd.f32 0.0, %v4420
      %v4422 = vpop.f32.mrb[0].mxu0
      %4423 = vmatprep.mubr.bf16.mxu0 0
      %4424 = vmatmul.mubr.bf16.gmra.mrb[0].mxu0 %v4279
      %v4425 = vpop.f32.mrb[0].mxu0
      %v4426 = vadd.f32 0.0, %v4425
      %v4427 = vpop.f32.mrb[0].mxu0
      %v4428 = vpop.f32.mrb[0].mxu0
      %v4429 = vadd.f32 0.0, %v4428
      %v4430 = vpop.f32.mrb[0].mxu0
      %4431 = vmatprep.mubr.bf16.mxu0 0
      %4432 = vmatmul.mubr.bf16.gmra.mrb[0].mxu0 %v4282
      %v4433 = vpop.f32.mrb[0].mxu0
      %v4434 = vadd.f32 0.0, %v4433
      %v4435 = vpop.f32.mrb[0].mxu0
      %v4436 = vpop.f32.mrb[0].mxu0
      %v4437 = vadd.f32 0.0, %v4436
      %v4438 = vpop.f32.mrb[0].mxu0
      %4439 = vmatprep.mubr.bf16.mxu0 0
      %4440 = vmatmul.mubr.bf16.gmra.mrb[0].mxu0 %v4285
      %v4441 = vpop.f32.mrb[0].mxu0
      %v4442 = vadd.f32 0.0, %v4441
      %v4443 = vpop.f32.mrb[0].mxu0
      %v4444 = vpop.f32.mrb[0].mxu0
      %v4445 = vadd.f32 0.0, %v4444
      %v4446 = vpop.f32.mrb[0].mxu0
      %4447 = vdwg.mxu0
      %v4448 = vadd.f32 %v3950, %v4322
      %v4449 = vadd.f32 %v3951, %v4325
      %v4450 = vadd.f32 %v3952, %v4330
      %v4451 = vadd.f32 %v3953, %v4333
      %v4452 = vadd.f32 %v3954, %v4338
      %v4453 = vadd.f32 %v3955, %v4341
      %v4454 = vadd.f32 %v3956, %v4346
      %v4455 = vadd.f32 %v3957, %v4349
      %v4456 = vadd.f32 %v3958, %v4354
      %v4457 = vadd.f32 %v3959, %v4357
      %v4458 = vadd.f32 %v3960, %v4362
      %v4459 = vadd.f32 %v3961, %v4365
      %v4460 = vadd.f32 %v3962, %v4370
      %v4461 = vadd.f32 %v3963, %v4373
      %v4462 = vadd.f32 %v3964, %v4378
      %v4463 = vadd.f32 %v3965, %v4381
      %v4464 = vadd.f32 %v3966, %v4386
      %v4465 = vadd.f32 %v3967, %v4389
      %v4466 = vadd.f32 %v3968, %v4394
      %v4467 = vadd.f32 %v3969, %v4397
      %v4468 = vadd.f32 %v3970, %v4402
      %v4469 = vadd.f32 %v3971, %v4405
      %v4470 = vadd.f32 %v3972, %v4410
      %v4471 = vadd.f32 %v3973, %v4413
      %v4472 = vadd.f32 %v3974, %v4418
      %v4473 = vadd.f32 %v3975, %v4421
      %v4474 = vadd.f32 %v3976, %v4426
      %v4475 = vadd.f32 %v3977, %v4429
      %v4476 = vadd.f32 %v3978, %v4434
      %v4477 = vadd.f32 %v3979, %v4437
      %v4478 = vadd.f32 %v3980, %v4442
      %v4479 = vadd.f32 %v3981, %v4445
      %s4480 = scalar_lea.vmem [#allocation2], 24
      %v4481 = vld [vmem:[%s4480] sm:$0xf]
      %v4482 = vld [vmem:[%s4480 + $0x4] sm:$0xf]
      %v4483 = vld [vmem:[%s4480 + $0xc] sm:$0xf]
      %v4484 = vld [vmem:[%s4480 + $0x10] sm:$0xf]
      %v4485 = vld [vmem:[%s4480 + $0x18] sm:$0xf]
      %v4486 = vld [vmem:[%s4480 + $0x1c] sm:$0xf]
      %v4487 = vld [vmem:[%s4480 + $0x24] sm:$0xf]
      %v4488 = vld [vmem:[%s4480 + $0x28] sm:$0xf]
      %v4489 = vld [vmem:[%s4480 + $0x30] sm:$0xf]
      %v4490 = vld [vmem:[%s4480 + $0x34] sm:$0xf]
      %v4491 = vld [vmem:[%s4480 + $0x3c] sm:$0xf]
      %v4492 = vld [vmem:[%s4480 + $0x40] sm:$0xf]
      %v4493 = vld [vmem:[%s4480 + $0x48] sm:$0xf]
      %v4494 = vld [vmem:[%s4480 + $0x4c] sm:$0xf]
      %v4495 = vld [vmem:[%s4480 + $0x54] sm:$0xf]
      %v4496 = vld [vmem:[%s4480 + $0x58] sm:$0xf]
      %v4497 = vld [vmem:[%s4480 + $0x60] sm:$0xf]
      %v4498 = vld [vmem:[%s4480 + $0x64] sm:$0xf]
      %v4499 = vld [vmem:[%s4480 + $0x6c] sm:$0xf]
      %v4500 = vld [vmem:[%s4480 + $0x70] sm:$0xf]
      %v4501 = vld [vmem:[%s4480 + $0x78] sm:$0xf]
      %v4502 = vld [vmem:[%s4480 + $0x7c] sm:$0xf]
      %v4503 = vld [vmem:[%s4480 + $0x84] sm:$0xf]
      %v4504 = vld [vmem:[%s4480 + $0x88] sm:$0xf]
      %v4505 = vld [vmem:[%s4480 + $0x90] sm:$0xf]
      %v4506 = vld [vmem:[%s4480 + $0x94] sm:$0xf]
      %v4507 = vld [vmem:[%s4480 + $0x9c] sm:$0xf]
      %v4508 = vld [vmem:[%s4480 + $0xa0] sm:$0xf]
      %v4509 = vld [vmem:[%s4480 + $0xa8] sm:$0xf]
      %v4510 = vld [vmem:[%s4480 + $0xac] sm:$0xf]
      %v4511 = vld [vmem:[%s4480 + $0xb4] sm:$0xf]
      %v4512 = vld [vmem:[%s4480 + $0xb8] sm:$0xf]
      %s4513 = scalar_lea.vmem %s4, 192
      %v4514 = vld [vmem:[%s4513] sm:$0xf]
      %v4515 = vld [vmem:[%s4513 + $0x4] sm:$0xf]
      %v4516 = vld [vmem:[%s4513 + $0x8] sm:$0xf]
      %v4517 = vld [vmem:[%s4513 + $0xc] sm:$0xf]
      %v4518 = vld [vmem:[%s4513 + $0x10] sm:$0xf]
      %v4519 = vld [vmem:[%s4513 + $0x14] sm:$0xf]
      %v4520 = vld [vmem:[%s4513 + $0x18] sm:$0xf]
      %v4521 = vld [vmem:[%s4513 + $0x1c] sm:$0xf]
      %v4554 = vunpack.c.l.b16 %v4481
      %v4555 = vunpack.c.l.b16 %v4482
      %v4556 = vunpack.c.l.b16 %v4483
      %v4557 = vunpack.c.l.b16 %v4484
      %v4558 = vunpack.c.l.b16 %v4485
      %v4559 = vunpack.c.l.b16 %v4486
      %v4560 = vunpack.c.l.b16 %v4487
      %v4561 = vunpack.c.l.b16 %v4488
      %v4562 = vunpack.c.l.b16 %v4489
      %v4563 = vunpack.c.l.b16 %v4490
      %v4564 = vunpack.c.l.b16 %v4491
      %v4565 = vunpack.c.l.b16 %v4492
      %v4566 = vunpack.c.l.b16 %v4493
      %v4567 = vunpack.c.l.b16 %v4494
      %v4568 = vunpack.c.l.b16 %v4495
      %v4569 = vunpack.c.l.b16 %v4496
      %v4570 = vunpack.c.l.b16 %v4497
      %v4571 = vunpack.c.l.b16 %v4498
      %v4572 = vunpack.c.l.b16 %v4499
      %v4573 = vunpack.c.l.b16 %v4500
      %v4574 = vunpack.c.l.b16 %v4501
      %v4575 = vunpack.c.l.b16 %v4502
      %v4576 = vunpack.c.l.b16 %v4503
      %v4577 = vunpack.c.l.b16 %v4504
      %v4578 = vunpack.c.l.b16 %v4505
      %v4579 = vunpack.c.l.b16 %v4506
      %v4580 = vunpack.c.l.b16 %v4507
      %v4581 = vunpack.c.l.b16 %v4508
      %v4582 = vunpack.c.l.b16 %v4509
      %v4583 = vunpack.c.l.b16 %v4510
      %v4584 = vunpack.c.l.b16 %v4511
      %v4585 = vunpack.c.l.b16 %v4512
      %v4586 = vpack.c.b16 %v4555, %v4554
      %v4587 = vpack.c.b16 %v4557, %v4556
      %v4588 = vpack.c.b16 %v4559, %v4558
      %v4589 = vpack.c.b16 %v4561, %v4560
      %v4590 = vpack.c.b16 %v4563, %v4562
      %v4591 = vpack.c.b16 %v4565, %v4564
      %v4592 = vpack.c.b16 %v4567, %v4566
      %v4593 = vpack.c.b16 %v4569, %v4568
      %v4594 = vpack.c.b16 %v4571, %v4570
      %v4595 = vpack.c.b16 %v4573, %v4572
      %v4596 = vpack.c.b16 %v4575, %v4574
      %v4597 = vpack.c.b16 %v4577, %v4576
      %v4598 = vpack.c.b16 %v4579, %v4578
      %v4599 = vpack.c.b16 %v4581, %v4580
      %v4600 = vpack.c.b16 %v4583, %v4582
      %v4601 = vpack.c.b16 %v4585, %v4584
      %v4610 = vunpack.c.l.b16 %v4514
      %v4611 = vunpack.c.l.b16 %v4515
      %v4612 = vunpack.c.l.b16 %v4516
      %v4613 = vunpack.c.l.b16 %v4517
      %v4614 = vunpack.c.l.b16 %v4518
      %v4615 = vunpack.c.l.b16 %v4519
      %v4616 = vunpack.c.l.b16 %v4520
      %v4617 = vunpack.c.l.b16 %v4521
      %v4618 = vpack.c.b16 %v4611, %v4610
      %v4619 = vpack.c.b16 %v4613, %v4612
      %v4620 = vpack.c.b16 %v4615, %v4614
      %v4621 = vpack.c.b16 %v4617, %v4616
      %v4627 = vsel %vm1834, %v4586, 0
      %v4630 = vsel %vm1834, %v4587, 0
      %v4633 = vsel %vm1834, %v4588, 0
      %v4636 = vsel %vm1834, %v4589, 0
      %v4639 = vsel %vm1834, %v4590, 0
      %v4642 = vsel %vm1834, %v4591, 0
      %v4645 = vsel %vm1834, %v4592, 0
      %v4648 = vsel %vm1834, %v4593, 0
      %v4651 = vsel %vm1834, %v4594, 0
      %v4654 = vsel %vm1834, %v4595, 0
      %v4657 = vsel %vm1834, %v4596, 0
      %v4660 = vsel %vm1834, %v4597, 0
      %v4663 = vsel %vm1834, %v4598, 0
      %v4666 = vsel %vm1834, %v4599, 0
      %v4669 = vsel %vm1834, %v4600, 0
      %v4672 = vsel %vm1834, %v4601, 0
      %4674 = vmatprep.subr.bf16.mxu0 0
      %4675 = vmatpush1.bf16.msra.mxu0 %v4618
      %4676 = vmatprep.subr.bf16.mxu0 0
      %4677 = vmatpush1.bf16.msra.mxu0 %v4619
      %4678 = vmatprep.subr.bf16.mxu0 0
      %4679 = vmatpush1.bf16.msra.mxu0 %v4620
      %4680 = vmatprep.subr.bf16.mxu0 0
      %4681 = vmatpush1.bf16.msra.mxu0 %v4621
      %4682 = vmatprep.subr.bf16.mxu0 0
      %4683 = vmatpush1.bf16.msra.mxu0 0
      %4684 = vmatprep.subr.bf16.mxu0 0
      %4685 = vmatpush1.bf16.msra.mxu0 0
      %4686 = vmatprep.subr.bf16.mxu0 0
      %4687 = vmatpush1.bf16.msra.mxu0 0
      %4688 = vmatprep.subr.bf16.mxu0 0
      %4689 = vmatpush1.bf16.msra.mxu0 0
      %4690 = vmatprep.subr.bf16.mxu0 0
      %4691 = vmatpush1.bf16.msra.mxu0 0
      %4692 = vmatprep.subr.bf16.mxu0 0
      %4693 = vmatpush1.bf16.msra.mxu0 0
      %4694 = vmatprep.subr.bf16.mxu0 0
      %4695 = vmatpush1.bf16.msra.mxu0 0
      %4696 = vmatprep.subr.bf16.mxu0 0
      %4697 = vmatpush1.bf16.msra.mxu0 0
      %4698 = vmatprep.subr.bf16.mxu0 0
      %4699 = vmatpush1.bf16.msra.mxu0 0
      %4700 = vmatprep.subr.bf16.mxu0 0
      %4701 = vmatpush1.bf16.msra.mxu0 0
      %4702 = vmatprep.subr.bf16.mxu0 0
      %4703 = vmatpush1.bf16.msra.mxu0 0
      %4704 = vmatprep.subr.bf16.mxu0 0
      %4705 = vmatpush1.bf16.msra.mxu0 0
      %4706 = vmatprep.mubr.bf16.mxu0 0
      %4707 = vmatmul.mubr.bf16.gmra.mrb[0].mxu0 %v4627
      %v4708 = vpop.f32.mrb[0].mxu0
      %v4709 = vadd.f32 0.0, %v4708
      %v4710 = vpop.f32.mrb[0].mxu0
      %v4711 = vpop.f32.mrb[0].mxu0
      %v4712 = vadd.f32 0.0, %v4711
      %v4713 = vpop.f32.mrb[0].mxu0
      %4714 = vmatprep.mubr.bf16.mxu0 0
      %4715 = vmatmul.mubr.bf16.gmra.mrb[0].mxu0 %v4630
      %v4716 = vpop.f32.mrb[0].mxu0
      %v4717 = vadd.f32 0.0, %v4716
      %v4718 = vpop.f32.mrb[0].mxu0
      %v4719 = vpop.f32.mrb[0].mxu0
      %v4720 = vadd.f32 0.0, %v4719
      %v4721 = vpop.f32.mrb[0].mxu0
      %4722 = vmatprep.mubr.bf16.mxu0 0
      %4723 = vmatmul.mubr.bf16.gmra.mrb[0].mxu0 %v4633
      %v4724 = vpop.f32.mrb[0].mxu0
      %v4725 = vadd.f32 0.0, %v4724
      %v4726 = vpop.f32.mrb[0].mxu0
      %v4727 = vpop.f32.mrb[0].mxu0
      %v4728 = vadd.f32 0.0, %v4727
      %v4729 = vpop.f32.mrb[0].mxu0
      %4730 = vmatprep.mubr.bf16.mxu0 0
      %4731 = vmatmul.mubr.bf16.gmra.mrb[0].mxu0 %v4636
      %v4732 = vpop.f32.mrb[0].mxu0
      %v4733 = vadd.f32 0.0, %v4732
      %v4734 = vpop.f32.mrb[0].mxu0
      %v4735 = vpop.f32.mrb[0].mxu0
      %v4736 = vadd.f32 0.0, %v4735
      %v4737 = vpop.f32.mrb[0].mxu0
      %4738 = vmatprep.mubr.bf16.mxu0 0
      %4739 = vmatmul.mubr.bf16.gmra.mrb[0].mxu0 %v4639
      %v4740 = vpop.f32.mrb[0].mxu0
      %v4741 = vadd.f32 0.0, %v4740
      %v4742 = vpop.f32.mrb[0].mxu0
      %v4743 = vpop.f32.mrb[0].mxu0
      %v4744 = vadd.f32 0.0, %v4743
      %v4745 = vpop.f32.mrb[0].mxu0
      %4746 = vmatprep.mubr.bf16.mxu0 0
      %4747 = vmatmul.mubr.bf16.gmra.mrb[0].mxu0 %v4642
      %v4748 = vpop.f32.mrb[0].mxu0
      %v4749 = vadd.f32 0.0, %v4748
      %v4750 = vpop.f32.mrb[0].mxu0
      %v4751 = vpop.f32.mrb[0].mxu0
      %v4752 = vadd.f32 0.0, %v4751
      %v4753 = vpop.f32.mrb[0].mxu0
      %4754 = vmatprep.mubr.bf16.mxu0 0
      %4755 = vmatmul.mubr.bf16.gmra.mrb[0].mxu0 %v4645
      %v4756 = vpop.f32.mrb[0].mxu0
      %v4757 = vadd.f32 0.0, %v4756
      %v4758 = vpop.f32.mrb[0].mxu0
      %v4759 = vpop.f32.mrb[0].mxu0
      %v4760 = vadd.f32 0.0, %v4759
      %v4761 = vpop.f32.mrb[0].mxu0
      %4762 = vmatprep.mubr.bf16.mxu0 0
      %4763 = vmatmul.mubr.bf16.gmra.mrb[0].mxu0 %v4648
      %v4764 = vpop.f32.mrb[0].mxu0
      %v4765 = vadd.f32 0.0, %v4764
      %v4766 = vpop.f32.mrb[0].mxu0
      %v4767 = vpop.f32.mrb[0].mxu0
      %v4768 = vadd.f32 0.0, %v4767
      %v4769 = vpop.f32.mrb[0].mxu0
      %4770 = vmatprep.mubr.bf16.mxu0 0
      %4771 = vmatmul.mubr.bf16.gmra.mrb[0].mxu0 %v4651
      %v4772 = vpop.f32.mrb[0].mxu0
      %v4773 = vadd.f32 0.0, %v4772
      %v4774 = vpop.f32.mrb[0].mxu0
      %v4775 = vpop.f32.mrb[0].mxu0
      %v4776 = vadd.f32 0.0, %v4775
      %v4777 = vpop.f32.mrb[0].mxu0
      %4778 = vmatprep.mubr.bf16.mxu0 0
      %4779 = vmatmul.mubr.bf16.gmra.mrb[0].mxu0 %v4654
      %v4780 = vpop.f32.mrb[0].mxu0
      %v4781 = vadd.f32 0.0, %v4780
      %v4782 = vpop.f32.mrb[0].mxu0
      %v4783 = vpop.f32.mrb[0].mxu0
      %v4784 = vadd.f32 0.0, %v4783
      %v4785 = vpop.f32.mrb[0].mxu0
      %4786 = vmatprep.mubr.bf16.mxu0 0
      %4787 = vmatmul.mubr.bf16.gmra.mrb[0].mxu0 %v4657
      %v4788 = vpop.f32.mrb[0].mxu0
      %v4789 = vadd.f32 0.0, %v4788
      %v4790 = vpop.f32.mrb[0].mxu0
      %v4791 = vpop.f32.mrb[0].mxu0
      %v4792 = vadd.f32 0.0, %v4791
      %v4793 = vpop.f32.mrb[0].mxu0
      %4794 = vmatprep.mubr.bf16.mxu0 0
      %4795 = vmatmul.mubr.bf16.gmra.mrb[0].mxu0 %v4660
      %v4796 = vpop.f32.mrb[0].mxu0
      %v4797 = vadd.f32 0.0, %v4796
      %v4798 = vpop.f32.mrb[0].mxu0
      %v4799 = vpop.f32.mrb[0].mxu0
      %v4800 = vadd.f32 0.0, %v4799
      %v4801 = vpop.f32.mrb[0].mxu0
      %4802 = vmatprep.mubr.bf16.mxu0 0
      %4803 = vmatmul.mubr.bf16.gmra.mrb[0].mxu0 %v4663
      %v4804 = vpop.f32.mrb[0].mxu0
      %v4805 = vadd.f32 0.0, %v4804
      %v4806 = vpop.f32.mrb[0].mxu0
      %v4807 = vpop.f32.mrb[0].mxu0
      %v4808 = vadd.f32 0.0, %v4807
      %v4809 = vpop.f32.mrb[0].mxu0
      %4810 = vmatprep.mubr.bf16.mxu0 0
      %4811 = vmatmul.mubr.bf16.gmra.mrb[0].mxu0 %v4666
      %v4812 = vpop.f32.mrb[0].mxu0
      %v4813 = vadd.f32 0.0, %v4812
      %v4814 = vpop.f32.mrb[0].mxu0
      %v4815 = vpop.f32.mrb[0].mxu0
      %v4816 = vadd.f32 0.0, %v4815
      %v4817 = vpop.f32.mrb[0].mxu0
      %4818 = vmatprep.mubr.bf16.mxu0 0
      %4819 = vmatmul.mubr.bf16.gmra.mrb[0].mxu0 %v4669
      %v4820 = vpop.f32.mrb[0].mxu0
      %v4821 = vadd.f32 0.0, %v4820
      %v4822 = vpop.f32.mrb[0].mxu0
      %v4823 = vpop.f32.mrb[0].mxu0
      %v4824 = vadd.f32 0.0, %v4823
      %v4825 = vpop.f32.mrb[0].mxu0
      %4826 = vmatprep.mubr.bf16.mxu0 0
      %4827 = vmatmul.mubr.bf16.gmra.mrb[0].mxu0 %v4672
      %v4828 = vpop.f32.mrb[0].mxu0
      %v4829 = vadd.f32 0.0, %v4828
      %v4830 = vpop.f32.mrb[0].mxu0
      %v4831 = vpop.f32.mrb[0].mxu0
      %v4832 = vadd.f32 0.0, %v4831
      %v4833 = vpop.f32.mrb[0].mxu0
      %4834 = vdwg.mxu0
      %v4835 = vadd.f32 %v4448, %v4709
      %v4836 = vadd.f32 %v4449, %v4712
      %v4837 = vadd.f32 %v4450, %v4717
      %v4838 = vadd.f32 %v4451, %v4720
      %v4839 = vadd.f32 %v4452, %v4725
      %v4840 = vadd.f32 %v4453, %v4728
      %v4841 = vadd.f32 %v4454, %v4733
      %v4842 = vadd.f32 %v4455, %v4736
      %v4843 = vadd.f32 %v4456, %v4741
      %v4844 = vadd.f32 %v4457, %v4744
      %v4845 = vadd.f32 %v4458, %v4749
      %v4846 = vadd.f32 %v4459, %v4752
      %v4847 = vadd.f32 %v4460, %v4757
      %v4848 = vadd.f32 %v4461, %v4760
      %v4849 = vadd.f32 %v4462, %v4765
      %v4850 = vadd.f32 %v4463, %v4768
      %v4851 = vadd.f32 %v4464, %v4773
      %v4852 = vadd.f32 %v4465, %v4776
      %v4853 = vadd.f32 %v4466, %v4781
      %v4854 = vadd.f32 %v4467, %v4784
      %v4855 = vadd.f32 %v4468, %v4789
      %v4856 = vadd.f32 %v4469, %v4792
      %v4857 = vadd.f32 %v4470, %v4797
      %v4858 = vadd.f32 %v4471, %v4800
      %v4859 = vadd.f32 %v4472, %v4805
      %v4860 = vadd.f32 %v4473, %v4808
      %v4861 = vadd.f32 %v4474, %v4813
      %v4862 = vadd.f32 %v4475, %v4816
      %v4863 = vadd.f32 %v4476, %v4821
      %v4864 = vadd.f32 %v4477, %v4824
      %v4865 = vadd.f32 %v4478, %v4829
      %v4866 = vadd.f32 %v4479, %v4832
      %v4867 = vld [vmem:[%s4480] sm:$0xf]
      %v4868 = vld [vmem:[%s4480 + $0x4] sm:$0xf]
      %v4869 = vld [vmem:[%s4480 + $0x8] sm:$0x1]
      %v4870 = vld [vmem:[%s4480 + $0xc] sm:$0xf]
      %v4871 = vld [vmem:[%s4480 + $0x10] sm:$0xf]
      %v4872 = vld [vmem:[%s4480 + $0x14] sm:$0x1]
      %v4873 = vld [vmem:[%s4480 + $0x18] sm:$0xf]
      %v4874 = vld [vmem:[%s4480 + $0x1c] sm:$0xf]
      %v4875 = vld [vmem:[%s4480 + $0x20] sm:$0x1]
      %v4876 = vld [vmem:[%s4480 + $0x24] sm:$0xf]
      %v4877 = vld [vmem:[%s4480 + $0x28] sm:$0xf]
      %v4878 = vld [vmem:[%s4480 + $0x2c] sm:$0x1]
      %v4879 = vld [vmem:[%s4480 + $0x30] sm:$0xf]
      %v4880 = vld [vmem:[%s4480 + $0x34] sm:$0xf]
      %v4881 = vld [vmem:[%s4480 + $0x38] sm:$0x1]
      %v4882 = vld [vmem:[%s4480 + $0x3c] sm:$0xf]
      %v4883 = vld [vmem:[%s4480 + $0x40] sm:$0xf]
      %v4884 = vld [vmem:[%s4480 + $0x44] sm:$0x1]
      %v4885 = vld [vmem:[%s4480 + $0x48] sm:$0xf]
      %v4886 = vld [vmem:[%s4480 + $0x4c] sm:$0xf]
      %v4887 = vld [vmem:[%s4480 + $0x50] sm:$0x1]
      %v4888 = vld [vmem:[%s4480 + $0x54] sm:$0xf]
      %v4889 = vld [vmem:[%s4480 + $0x58] sm:$0xf]
      %v4890 = vld [vmem:[%s4480 + $0x5c] sm:$0x1]
      %v4891 = vld [vmem:[%s4480 + $0x60] sm:$0xf]
      %v4892 = vld [vmem:[%s4480 + $0x64] sm:$0xf]
      %v4893 = vld [vmem:[%s4480 + $0x68] sm:$0x1]
      %v4894 = vld [vmem:[%s4480 + $0x6c] sm:$0xf]
      %v4895 = vld [vmem:[%s4480 + $0x70] sm:$0xf]
      %v4896 = vld [vmem:[%s4480 + $0x74] sm:$0x1]
      %v4897 = vld [vmem:[%s4480 + $0x78] sm:$0xf]
      %v4898 = vld [vmem:[%s4480 + $0x7c] sm:$0xf]
      %v4899 = vld [vmem:[%s4480 + $0x80] sm:$0x1]
      %v4900 = vld [vmem:[%s4480 + $0x84] sm:$0xf]
      %v4901 = vld [vmem:[%s4480 + $0x88] sm:$0xf]
      %v4902 = vld [vmem:[%s4480 + $0x8c] sm:$0x1]
      %v4903 = vld [vmem:[%s4480 + $0x90] sm:$0xf]
      %v4904 = vld [vmem:[%s4480 + $0x94] sm:$0xf]
      %v4905 = vld [vmem:[%s4480 + $0x98] sm:$0x1]
      %v4906 = vld [vmem:[%s4480 + $0x9c] sm:$0xf]
      %v4907 = vld [vmem:[%s4480 + $0xa0] sm:$0xf]
      %v4908 = vld [vmem:[%s4480 + $0xa4] sm:$0x1]
      %v4909 = vld [vmem:[%s4480 + $0xa8] sm:$0xf]
      %v4910 = vld [vmem:[%s4480 + $0xac] sm:$0xf]
      %v4911 = vld [vmem:[%s4480 + $0xb0] sm:$0x1]
      %v4912 = vld [vmem:[%s4480 + $0xb4] sm:$0xf]
      %v4913 = vld [vmem:[%s4480 + $0xb8] sm:$0xf]
      %v4914 = vld [vmem:[%s4480 + $0xbc] sm:$0x1]
      %v4916 = vshrl.u32 %v4867, 16
      %v4918 = vrot.slane %v4916, 4
      %v4919 = vshll.u32 %v4867, 16
      %v4921 = vrot.slane %v4919, 5
      %v4922 = vor.u32 %v4918, %v4921
      %v4923 = vrot.slane %v4922, 4
      %v4925 = vshll.u32 %v4868, 16
      %v4927 = vrot.slane %v4925, 5
      %v4928 = vsel %vm1368, %v4923, %v4927
      %v4929 = vshrl.u32 %v4868, 16
      %v4931 = vrot.slane %v4929, 4
      %v4932 = vor.u32 %v4931, %v4927
      %v4933 = vrot.slane %v4932, 4
      %v4935 = vshll.u32 %v4869, 16
      %v4937 = vrot.slane %v4935, 5
      %v4938 = vsel %vm1368, %v4933, %v4937
      %v4940 = vshrl.u32 %v4870, 16
      %v4942 = vrot.slane %v4940, 4
      %v4943 = vshll.u32 %v4870, 16
      %v4945 = vrot.slane %v4943, 5
      %v4946 = vor.u32 %v4942, %v4945
      %v4947 = vrot.slane %v4946, 4
      %v4949 = vshll.u32 %v4871, 16
      %v4951 = vrot.slane %v4949, 5
      %v4952 = vsel %vm1368, %v4947, %v4951
      %v4953 = vshrl.u32 %v4871, 16
      %v4955 = vrot.slane %v4953, 4
      %v4956 = vor.u32 %v4955, %v4951
      %v4957 = vrot.slane %v4956, 4
      %v4959 = vshll.u32 %v4872, 16
      %v4961 = vrot.slane %v4959, 5
      %v4962 = vsel %vm1368, %v4957, %v4961
      %v4964 = vshrl.u32 %v4873, 16
      %v4966 = vrot.slane %v4964, 4
      %v4967 = vshll.u32 %v4873, 16
      %v4969 = vrot.slane %v4967, 5
      %v4970 = vor.u32 %v4966, %v4969
      %v4971 = vrot.slane %v4970, 4
      %v4973 = vshll.u32 %v4874, 16
      %v4975 = vrot.slane %v4973, 5
      %v4976 = vsel %vm1368, %v4971, %v4975
      %v4977 = vshrl.u32 %v4874, 16
      %v4979 = vrot.slane %v4977, 4
      %v4980 = vor.u32 %v4979, %v4975
      %v4981 = vrot.slane %v4980, 4
      %v4983 = vshll.u32 %v4875, 16
      %v4985 = vrot.slane %v4983, 5
      %v4986 = vsel %vm1368, %v4981, %v4985
      %v4988 = vshrl.u32 %v4876, 16
      %v4990 = vrot.slane %v4988, 4
      %v4991 = vshll.u32 %v4876, 16
      %v4993 = vrot.slane %v4991, 5
      %v4994 = vor.u32 %v4990, %v4993
      %v4995 = vrot.slane %v4994, 4
      %v4997 = vshll.u32 %v4877, 16
      %v4999 = vrot.slane %v4997, 5
      %v5000 = vsel %vm1368, %v4995, %v4999
      %v5001 = vshrl.u32 %v4877, 16
      %v5003 = vrot.slane %v5001, 4
      %v5004 = vor.u32 %v5003, %v4999
      %v5005 = vrot.slane %v5004, 4
      %v5007 = vshll.u32 %v4878, 16
      %v5009 = vrot.slane %v5007, 5
      %v5010 = vsel %vm1368, %v5005, %v5009
      %v5012 = vshrl.u32 %v4879, 16
      %v5014 = vrot.slane %v5012, 4
      %v5015 = vshll.u32 %v4879, 16
      %v5017 = vrot.slane %v5015, 5
      %v5018 = vor.u32 %v5014, %v5017
      %v5019 = vrot.slane %v5018, 4
      %v5021 = vshll.u32 %v4880, 16
      %v5023 = vrot.slane %v5021, 5
      %v5024 = vsel %vm1368, %v5019, %v5023
      %v5025 = vshrl.u32 %v4880, 16
      %v5027 = vrot.slane %v5025, 4
      %v5028 = vor.u32 %v5027, %v5023
      %v5029 = vrot.slane %v5028, 4
      %v5031 = vshll.u32 %v4881, 16
      %v5033 = vrot.slane %v5031, 5
      %v5034 = vsel %vm1368, %v5029, %v5033
      %v5036 = vshrl.u32 %v4882, 16
      %v5038 = vrot.slane %v5036, 4
      %v5039 = vshll.u32 %v4882, 16
      %v5041 = vrot.slane %v5039, 5
      %v5042 = vor.u32 %v5038, %v5041
      %v5043 = vrot.slane %v5042, 4
      %v5045 = vshll.u32 %v4883, 16
      %v5047 = vrot.slane %v5045, 5
      %v5048 = vsel %vm1368, %v5043, %v5047
      %v5049 = vshrl.u32 %v4883, 16
      %v5051 = vrot.slane %v5049, 4
      %v5052 = vor.u32 %v5051, %v5047
      %v5053 = vrot.slane %v5052, 4
      %v5055 = vshll.u32 %v4884, 16
      %v5057 = vrot.slane %v5055, 5
      %v5058 = vsel %vm1368, %v5053, %v5057
      %v5060 = vshrl.u32 %v4885, 16
      %v5062 = vrot.slane %v5060, 4
      %v5063 = vshll.u32 %v4885, 16
      %v5065 = vrot.slane %v5063, 5
      %v5066 = vor.u32 %v5062, %v5065
      %v5067 = vrot.slane %v5066, 4
      %v5069 = vshll.u32 %v4886, 16
      %v5071 = vrot.slane %v5069, 5
      %v5072 = vsel %vm1368, %v5067, %v5071
      %v5073 = vshrl.u32 %v4886, 16
      %v5075 = vrot.slane %v5073, 4
      %v5076 = vor.u32 %v5075, %v5071
      %v5077 = vrot.slane %v5076, 4
      %v5079 = vshll.u32 %v4887, 16
      %v5081 = vrot.slane %v5079, 5
      %v5082 = vsel %vm1368, %v5077, %v5081
      %v5084 = vshrl.u32 %v4888, 16
      %v5086 = vrot.slane %v5084, 4
      %v5087 = vshll.u32 %v4888, 16
      %v5089 = vrot.slane %v5087, 5
      %v5090 = vor.u32 %v5086, %v5089
      %v5091 = vrot.slane %v5090, 4
      %v5093 = vshll.u32 %v4889, 16
      %v5095 = vrot.slane %v5093, 5
      %v5096 = vsel %vm1368, %v5091, %v5095
      %v5097 = vshrl.u32 %v4889, 16
      %v5099 = vrot.slane %v5097, 4
      %v5100 = vor.u32 %v5099, %v5095
      %v5101 = vrot.slane %v5100, 4
      %v5103 = vshll.u32 %v4890, 16
      %v5105 = vrot.slane %v5103, 5
      %v5106 = vsel %vm1368, %v5101, %v5105
      %v5108 = vshrl.u32 %v4891, 16
      %v5110 = vrot.slane %v5108, 4
      %v5111 = vshll.u32 %v4891, 16
      %v5113 = vrot.slane %v5111, 5
      %v5114 = vor.u32 %v5110, %v5113
      %v5115 = vrot.slane %v5114, 4
      %v5117 = vshll.u32 %v4892, 16
      %v5119 = vrot.slane %v5117, 5
      %v5120 = vsel %vm1368, %v5115, %v5119
      %v5121 = vshrl.u32 %v4892, 16
      %v5123 = vrot.slane %v5121, 4
      %v5124 = vor.u32 %v5123, %v5119
      %v5125 = vrot.slane %v5124, 4
      %v5127 = vshll.u32 %v4893, 16
      %v5129 = vrot.slane %v5127, 5
      %v5130 = vsel %vm1368, %v5125, %v5129
      %v5132 = vshrl.u32 %v4894, 16
      %v5134 = vrot.slane %v5132, 4
      %v5135 = vshll.u32 %v4894, 16
      %v5137 = vrot.slane %v5135, 5
      %v5138 = vor.u32 %v5134, %v5137
      %v5139 = vrot.slane %v5138, 4
      %v5141 = vshll.u32 %v4895, 16
      %v5143 = vrot.slane %v5141, 5
      %v5144 = vsel %vm1368, %v5139, %v5143
      %v5145 = vshrl.u32 %v4895, 16
      %v5147 = vrot.slane %v5145, 4
      %v5148 = vor.u32 %v5147, %v5143
      %v5149 = vrot.slane %v5148, 4
      %v5151 = vshll.u32 %v4896, 16
      %v5153 = vrot.slane %v5151, 5
      %v5154 = vsel %vm1368, %v5149, %v5153
      %v5156 = vshrl.u32 %v4897, 16
      %v5158 = vrot.slane %v5156, 4
      %v5159 = vshll.u32 %v4897, 16
      %v5161 = vrot.slane %v5159, 5
      %v5162 = vor.u32 %v5158, %v5161
      %v5163 = vrot.slane %v5162, 4
      %v5165 = vshll.u32 %v4898, 16
      %v5167 = vrot.slane %v5165, 5
      %v5168 = vsel %vm1368, %v5163, %v5167
      %v5169 = vshrl.u32 %v4898, 16
      %v5171 = vrot.slane %v5169, 4
      %v5172 = vor.u32 %v5171, %v5167
      %v5173 = vrot.slane %v5172, 4
      %v5175 = vshll.u32 %v4899, 16
      %v5177 = vrot.slane %v5175, 5
      %v5178 = vsel %vm1368, %v5173, %v5177
      %v5180 = vshrl.u32 %v4900, 16
      %v5182 = vrot.slane %v5180, 4
      %v5183 = vshll.u32 %v4900, 16
      %v5185 = vrot.slane %v5183, 5
      %v5186 = vor.u32 %v5182, %v5185
      %v5187 = vrot.slane %v5186, 4
      %v5189 = vshll.u32 %v4901, 16
      %v5191 = vrot.slane %v5189, 5
      %v5192 = vsel %vm1368, %v5187, %v5191
      %v5193 = vshrl.u32 %v4901, 16
      %v5195 = vrot.slane %v5193, 4
      %v5196 = vor.u32 %v5195, %v5191
      %v5197 = vrot.slane %v5196, 4
      %v5199 = vshll.u32 %v4902, 16
      %v5201 = vrot.slane %v5199, 5
      %v5202 = vsel %vm1368, %v5197, %v5201
      %v5204 = vshrl.u32 %v4903, 16
      %v5206 = vrot.slane %v5204, 4
      %v5207 = vshll.u32 %v4903, 16
      %v5209 = vrot.slane %v5207, 5
      %v5210 = vor.u32 %v5206, %v5209
      %v5211 = vrot.slane %v5210, 4
      %v5213 = vshll.u32 %v4904, 16
      %v5215 = vrot.slane %v5213, 5
      %v5216 = vsel %vm1368, %v5211, %v5215
      %v5217 = vshrl.u32 %v4904, 16
      %v5219 = vrot.slane %v5217, 4
      %v5220 = vor.u32 %v5219, %v5215
      %v5221 = vrot.slane %v5220, 4
      %v5223 = vshll.u32 %v4905, 16
      %v5225 = vrot.slane %v5223, 5
      %v5226 = vsel %vm1368, %v5221, %v5225
      %v5228 = vshrl.u32 %v4906, 16
      %v5230 = vrot.slane %v5228, 4
      %v5231 = vshll.u32 %v4906, 16
      %v5233 = vrot.slane %v5231, 5
      %v5234 = vor.u32 %v5230, %v5233
      %v5235 = vrot.slane %v5234, 4
      %v5237 = vshll.u32 %v4907, 16
      %v5239 = vrot.slane %v5237, 5
      %v5240 = vsel %vm1368, %v5235, %v5239
      %v5241 = vshrl.u32 %v4907, 16
      %v5243 = vrot.slane %v5241, 4
      %v5244 = vor.u32 %v5243, %v5239
      %v5245 = vrot.slane %v5244, 4
      %v5247 = vshll.u32 %v4908, 16
      %v5249 = vrot.slane %v5247, 5
      %v5250 = vsel %vm1368, %v5245, %v5249
      %v5252 = vshrl.u32 %v4909, 16
      %v5254 = vrot.slane %v5252, 4
      %v5255 = vshll.u32 %v4909, 16
      %v5257 = vrot.slane %v5255, 5
      %v5258 = vor.u32 %v5254, %v5257
      %v5259 = vrot.slane %v5258, 4
      %v5261 = vshll.u32 %v4910, 16
      %v5263 = vrot.slane %v5261, 5
      %v5264 = vsel %vm1368, %v5259, %v5263
      %v5265 = vshrl.u32 %v4910, 16
      %v5267 = vrot.slane %v5265, 4
      %v5268 = vor.u32 %v5267, %v5263
      %v5269 = vrot.slane %v5268, 4
      %v5271 = vshll.u32 %v4911, 16
      %v5273 = vrot.slane %v5271, 5
      %v5274 = vsel %vm1368, %v5269, %v5273
      %v5276 = vshrl.u32 %v4912, 16
      %v5278 = vrot.slane %v5276, 4
      %v5279 = vshll.u32 %v4912, 16
      %v5281 = vrot.slane %v5279, 5
      %v5282 = vor.u32 %v5278, %v5281
      %v5283 = vrot.slane %v5282, 4
      %v5285 = vshll.u32 %v4913, 16
      %v5287 = vrot.slane %v5285, 5
      %v5288 = vsel %vm1368, %v5283, %v5287
      %v5289 = vshrl.u32 %v4913, 16
      %v5291 = vrot.slane %v5289, 4
      %v5292 = vor.u32 %v5291, %v5287
      %v5293 = vrot.slane %v5292, 4
      %v5295 = vshll.u32 %v4914, 16
      %v5297 = vrot.slane %v5295, 5
      %v5298 = vsel %vm1368, %v5293, %v5297
      %s5299 = scalar_lea.vmem %s4, 224
      %v5300 = vld [vmem:[%s5299] sm:$0xf]
      %v5301 = vld [vmem:[%s5299 + $0x4] sm:$0xf]
      %v5302 = vld [vmem:[%s5299 + $0x8] sm:$0xf]
      %v5303 = vld [vmem:[%s5299 + $0xc] sm:$0xf]
      %v5304 = vld [vmem:[%s5299 + $0x10] sm:$0xf]
      %v5305 = vld [vmem:[%s5299 + $0x14] sm:$0xf]
      %v5306 = vld [vmem:[%s5299 + $0x18] sm:$0xf]
      %v5307 = vld [vmem:[%s5299 + $0x1c] sm:$0xf]
      %v5308 = vunpack.c.l.b16 %v4928
      %v5309 = vunpack.c.l.b16 %v4938
      %v5310 = vunpack.c.l.b16 %v4952
      %v5311 = vunpack.c.l.b16 %v4962
      %v5312 = vunpack.c.l.b16 %v4976
      %v5313 = vunpack.c.l.b16 %v4986
      %v5314 = vunpack.c.l.b16 %v5000
      %v5315 = vunpack.c.l.b16 %v5010
      %v5316 = vunpack.c.l.b16 %v5024
      %v5317 = vunpack.c.l.b16 %v5034
      %v5318 = vunpack.c.l.b16 %v5048
      %v5319 = vunpack.c.l.b16 %v5058
      %v5320 = vunpack.c.l.b16 %v5072
      %v5321 = vunpack.c.l.b16 %v5082
      %v5322 = vunpack.c.l.b16 %v5096
      %v5323 = vunpack.c.l.b16 %v5106
      %v5324 = vunpack.c.l.b16 %v5120
      %v5325 = vunpack.c.l.b16 %v5130
      %v5326 = vunpack.c.l.b16 %v5144
      %v5327 = vunpack.c.l.b16 %v5154
      %v5328 = vunpack.c.l.b16 %v5168
      %v5329 = vunpack.c.l.b16 %v5178
      %v5330 = vunpack.c.l.b16 %v5192
      %v5331 = vunpack.c.l.b16 %v5202
      %v5332 = vunpack.c.l.b16 %v5216
      %v5333 = vunpack.c.l.b16 %v5226
      %v5334 = vunpack.c.l.b16 %v5240
      %v5335 = vunpack.c.l.b16 %v5250
      %v5336 = vunpack.c.l.b16 %v5264
      %v5337 = vunpack.c.l.b16 %v5274
      %v5338 = vunpack.c.l.b16 %v5288
      %v5339 = vunpack.c.l.b16 %v5298
      %v5340 = vpack.c.b16 %v5309, %v5308
      %v5341 = vpack.c.b16 %v5311, %v5310
      %v5342 = vpack.c.b16 %v5313, %v5312
      %v5343 = vpack.c.b16 %v5315, %v5314
      %v5344 = vpack.c.b16 %v5317, %v5316
      %v5345 = vpack.c.b16 %v5319, %v5318
      %v5346 = vpack.c.b16 %v5321, %v5320
      %v5347 = vpack.c.b16 %v5323, %v5322
      %v5348 = vpack.c.b16 %v5325, %v5324
      %v5349 = vpack.c.b16 %v5327, %v5326
      %v5350 = vpack.c.b16 %v5329, %v5328
      %v5351 = vpack.c.b16 %v5331, %v5330
      %v5352 = vpack.c.b16 %v5333, %v5332
      %v5353 = vpack.c.b16 %v5335, %v5334
      %v5354 = vpack.c.b16 %v5337, %v5336
      %v5355 = vpack.c.b16 %v5339, %v5338
      %v5364 = vunpack.c.l.b16 %v5300
      %v5365 = vunpack.c.l.b16 %v5301
      %v5366 = vunpack.c.l.b16 %v5302
      %v5367 = vunpack.c.l.b16 %v5303
      %v5368 = vunpack.c.l.b16 %v5304
      %v5369 = vunpack.c.l.b16 %v5305
      %v5370 = vunpack.c.l.b16 %v5306
      %v5371 = vunpack.c.l.b16 %v5307
      %v5372 = vpack.c.b16 %v5365, %v5364
      %v5373 = vpack.c.b16 %v5367, %v5366
      %v5374 = vpack.c.b16 %v5369, %v5368
      %v5375 = vpack.c.b16 %v5371, %v5370
      %v5381 = vsel %vm1834, %v5340, 0
      %v5384 = vsel %vm1834, %v5341, 0
      %v5387 = vsel %vm1834, %v5342, 0
      %v5390 = vsel %vm1834, %v5343, 0
      %v5393 = vsel %vm1834, %v5344, 0
      %v5396 = vsel %vm1834, %v5345, 0
      %v5399 = vsel %vm1834, %v5346, 0
      %v5402 = vsel %vm1834, %v5347, 0
      %v5405 = vsel %vm1834, %v5348, 0
      %v5408 = vsel %vm1834, %v5349, 0
      %v5411 = vsel %vm1834, %v5350, 0
      %v5414 = vsel %vm1834, %v5351, 0
      %v5417 = vsel %vm1834, %v5352, 0
      %v5420 = vsel %vm1834, %v5353, 0
      %v5423 = vsel %vm1834, %v5354, 0
      %v5426 = vsel %vm1834, %v5355, 0
      %5428 = vmatprep.subr.bf16.mxu0 0
      %5429 = vmatpush1.bf16.msra.mxu0 %v5372
      %5430 = vmatprep.subr.bf16.mxu0 0
      %5431 = vmatpush1.bf16.msra.mxu0 %v5373
      %5432 = vmatprep.subr.bf16.mxu0 0
      %5433 = vmatpush1.bf16.msra.mxu0 %v5374
      %5434 = vmatprep.subr.bf16.mxu0 0
      %5435 = vmatpush1.bf16.msra.mxu0 %v5375
      %5436 = vmatprep.subr.bf16.mxu0 0
      %5437 = vmatpush1.bf16.msra.mxu0 0
      %5438 = vmatprep.subr.bf16.mxu0 0
      %5439 = vmatpush1.bf16.msra.mxu0 0
      %5440 = vmatprep.subr.bf16.mxu0 0
      %5441 = vmatpush1.bf16.msra.mxu0 0
      %5442 = vmatprep.subr.bf16.mxu0 0
      %5443 = vmatpush1.bf16.msra.mxu0 0
      %5444 = vmatprep.subr.bf16.mxu0 0
      %5445 = vmatpush1.bf16.msra.mxu0 0
      %5446 = vmatprep.subr.bf16.mxu0 0
      %5447 = vmatpush1.bf16.msra.mxu0 0
      %5448 = vmatprep.subr.bf16.mxu0 0
      %5449 = vmatpush1.bf16.msra.mxu0 0
      %5450 = vmatprep.subr.bf16.mxu0 0
      %5451 = vmatpush1.bf16.msra.mxu0 0
      %5452 = vmatprep.subr.bf16.mxu0 0
      %5453 = vmatpush1.bf16.msra.mxu0 0
      %5454 = vmatprep.subr.bf16.mxu0 0
      %5455 = vmatpush1.bf16.msra.mxu0 0
      %5456 = vmatprep.subr.bf16.mxu0 0
      %5457 = vmatpush1.bf16.msra.mxu0 0
      %5458 = vmatprep.subr.bf16.mxu0 0
      %5459 = vmatpush1.bf16.msra.mxu0 0
      %5460 = vmatprep.mubr.bf16.mxu0 0
      %5461 = vmatmul.mubr.bf16.gmra.mrb[0].mxu0 %v5381
      %v5462 = vpop.f32.mrb[0].mxu0
      %v5463 = vadd.f32 0.0, %v5462
      %v5464 = vpop.f32.mrb[0].mxu0
      %v5465 = vpop.f32.mrb[0].mxu0
      %v5466 = vadd.f32 0.0, %v5465
      %v5467 = vpop.f32.mrb[0].mxu0
      %5468 = vmatprep.mubr.bf16.mxu0 0
      %5469 = vmatmul.mubr.bf16.gmra.mrb[0].mxu0 %v5384
      %v5470 = vpop.f32.mrb[0].mxu0
      %v5471 = vadd.f32 0.0, %v5470
      %v5472 = vpop.f32.mrb[0].mxu0
      %v5473 = vpop.f32.mrb[0].mxu0
      %v5474 = vadd.f32 0.0, %v5473
      %v5475 = vpop.f32.mrb[0].mxu0
      %5476 = vmatprep.mubr.bf16.mxu0 0
      %5477 = vmatmul.mubr.bf16.gmra.mrb[0].mxu0 %v5387
      %v5478 = vpop.f32.mrb[0].mxu0
      %v5479 = vadd.f32 0.0, %v5478
      %v5480 = vpop.f32.mrb[0].mxu0
      %v5481 = vpop.f32.mrb[0].mxu0
      %v5482 = vadd.f32 0.0, %v5481
      %v5483 = vpop.f32.mrb[0].mxu0
      %5484 = vmatprep.mubr.bf16.mxu0 0
      %5485 = vmatmul.mubr.bf16.gmra.mrb[0].mxu0 %v5390
      %v5486 = vpop.f32.mrb[0].mxu0
      %v5487 = vadd.f32 0.0, %v5486
      %v5488 = vpop.f32.mrb[0].mxu0
      %v5489 = vpop.f32.mrb[0].mxu0
      %v5490 = vadd.f32 0.0, %v5489
      %v5491 = vpop.f32.mrb[0].mxu0
      %5492 = vmatprep.mubr.bf16.mxu0 0
      %5493 = vmatmul.mubr.bf16.gmra.mrb[0].mxu0 %v5393
      %v5494 = vpop.f32.mrb[0].mxu0
      %v5495 = vadd.f32 0.0, %v5494
      %v5496 = vpop.f32.mrb[0].mxu0
      %v5497 = vpop.f32.mrb[0].mxu0
      %v5498 = vadd.f32 0.0, %v5497
      %v5499 = vpop.f32.mrb[0].mxu0
      %5500 = vmatprep.mubr.bf16.mxu0 0
      %5501 = vmatmul.mubr.bf16.gmra.mrb[0].mxu0 %v5396
      %v5502 = vpop.f32.mrb[0].mxu0
      %v5503 = vadd.f32 0.0, %v5502
      %v5504 = vpop.f32.mrb[0].mxu0
      %v5505 = vpop.f32.mrb[0].mxu0
      %v5506 = vadd.f32 0.0, %v5505
      %v5507 = vpop.f32.mrb[0].mxu0
      %5508 = vmatprep.mubr.bf16.mxu0 0
      %5509 = vmatmul.mubr.bf16.gmra.mrb[0].mxu0 %v5399
      %v5510 = vpop.f32.mrb[0].mxu0
      %v5511 = vadd.f32 0.0, %v5510
      %v5512 = vpop.f32.mrb[0].mxu0
      %v5513 = vpop.f32.mrb[0].mxu0
      %v5514 = vadd.f32 0.0, %v5513
      %v5515 = vpop.f32.mrb[0].mxu0
      %5516 = vmatprep.mubr.bf16.mxu0 0
      %5517 = vmatmul.mubr.bf16.gmra.mrb[0].mxu0 %v5402
      %v5518 = vpop.f32.mrb[0].mxu0
      %v5519 = vadd.f32 0.0, %v5518
      %v5520 = vpop.f32.mrb[0].mxu0
      %v5521 = vpop.f32.mrb[0].mxu0
      %v5522 = vadd.f32 0.0, %v5521
      %v5523 = vpop.f32.mrb[0].mxu0
      %5524 = vmatprep.mubr.bf16.mxu0 0
      %5525 = vmatmul.mubr.bf16.gmra.mrb[0].mxu0 %v5405
      %v5526 = vpop.f32.mrb[0].mxu0
      %v5527 = vadd.f32 0.0, %v5526
      %v5528 = vpop.f32.mrb[0].mxu0
      %v5529 = vpop.f32.mrb[0].mxu0
      %v5530 = vadd.f32 0.0, %v5529
      %v5531 = vpop.f32.mrb[0].mxu0
      %5532 = vmatprep.mubr.bf16.mxu0 0
      %5533 = vmatmul.mubr.bf16.gmra.mrb[0].mxu0 %v5408
      %v5534 = vpop.f32.mrb[0].mxu0
      %v5535 = vadd.f32 0.0, %v5534
      %v5536 = vpop.f32.mrb[0].mxu0
      %v5537 = vpop.f32.mrb[0].mxu0
      %v5538 = vadd.f32 0.0, %v5537
      %v5539 = vpop.f32.mrb[0].mxu0
      %5540 = vmatprep.mubr.bf16.mxu0 0
      %5541 = vmatmul.mubr.bf16.gmra.mrb[0].mxu0 %v5411
      %v5542 = vpop.f32.mrb[0].mxu0
      %v5543 = vadd.f32 0.0, %v5542
      %v5544 = vpop.f32.mrb[0].mxu0
      %v5545 = vpop.f32.mrb[0].mxu0
      %v5546 = vadd.f32 0.0, %v5545
      %v5547 = vpop.f32.mrb[0].mxu0
      %5548 = vmatprep.mubr.bf16.mxu0 0
      %5549 = vmatmul.mubr.bf16.gmra.mrb[0].mxu0 %v5414
      %v5550 = vpop.f32.mrb[0].mxu0
      %v5551 = vadd.f32 0.0, %v5550
      %v5552 = vpop.f32.mrb[0].mxu0
      %v5553 = vpop.f32.mrb[0].mxu0
      %v5554 = vadd.f32 0.0, %v5553
      %v5555 = vpop.f32.mrb[0].mxu0
      %5556 = vmatprep.mubr.bf16.mxu0 0
      %5557 = vmatmul.mubr.bf16.gmra.mrb[0].mxu0 %v5417
      %v5558 = vpop.f32.mrb[0].mxu0
      %v5559 = vadd.f32 0.0, %v5558
      %v5560 = vpop.f32.mrb[0].mxu0
      %v5561 = vpop.f32.mrb[0].mxu0
      %v5562 = vadd.f32 0.0, %v5561
      %v5563 = vpop.f32.mrb[0].mxu0
      %5564 = vmatprep.mubr.bf16.mxu0 0
      %5565 = vmatmul.mubr.bf16.gmra.mrb[0].mxu0 %v5420
      %v5566 = vpop.f32.mrb[0].mxu0
      %v5567 = vadd.f32 0.0, %v5566
      %v5568 = vpop.f32.mrb[0].mxu0
      %v5569 = vpop.f32.mrb[0].mxu0
      %v5570 = vadd.f32 0.0, %v5569
      %v5571 = vpop.f32.mrb[0].mxu0
      %5572 = vmatprep.mubr.bf16.mxu0 0
      %5573 = vmatmul.mubr.bf16.gmra.mrb[0].mxu0 %v5423
      %v5574 = vpop.f32.mrb[0].mxu0
      %v5575 = vadd.f32 0.0, %v5574
      %v5576 = vpop.f32.mrb[0].mxu0
      %v5577 = vpop.f32.mrb[0].mxu0
      %v5578 = vadd.f32 0.0, %v5577
      %v5579 = vpop.f32.mrb[0].mxu0
      %5580 = vmatprep.mubr.bf16.mxu0 0
      %5581 = vmatmul.mubr.bf16.gmra.mrb[0].mxu0 %v5426
      %v5582 = vpop.f32.mrb[0].mxu0
      %v5583 = vadd.f32 0.0, %v5582
      %v5584 = vpop.f32.mrb[0].mxu0
      %v5585 = vpop.f32.mrb[0].mxu0
      %v5586 = vadd.f32 0.0, %v5585
      %v5587 = vpop.f32.mrb[0].mxu0
      %5588 = vdwg.mxu0
      %v5589 = vadd.f32 %v4835, %v5463
      %v5590 = vadd.f32 %v4836, %v5466
      %v5591 = vadd.f32 %v4837, %v5471
      %v5592 = vadd.f32 %v4838, %v5474
      %v5593 = vadd.f32 %v4839, %v5479
      %v5594 = vadd.f32 %v4840, %v5482
      %v5595 = vadd.f32 %v4841, %v5487
      %v5596 = vadd.f32 %v4842, %v5490
      %v5597 = vadd.f32 %v4843, %v5495
      %v5598 = vadd.f32 %v4844, %v5498
      %v5599 = vadd.f32 %v4845, %v5503
      %v5600 = vadd.f32 %v4846, %v5506
      %v5601 = vadd.f32 %v4847, %v5511
      %v5602 = vadd.f32 %v4848, %v5514
      %v5603 = vadd.f32 %v4849, %v5519
      %v5604 = vadd.f32 %v4850, %v5522
      %v5605 = vadd.f32 %v4851, %v5527
      %v5606 = vadd.f32 %v4852, %v5530
      %v5607 = vadd.f32 %v4853, %v5535
      %v5608 = vadd.f32 %v4854, %v5538
      %v5609 = vadd.f32 %v4855, %v5543
      %v5610 = vadd.f32 %v4856, %v5546
      %v5611 = vadd.f32 %v4857, %v5551
      %v5612 = vadd.f32 %v4858, %v5554
      %v5613 = vadd.f32 %v4859, %v5559
      %v5614 = vadd.f32 %v4860, %v5562
      %v5615 = vadd.f32 %v4861, %v5567
      %v5616 = vadd.f32 %v4862, %v5570
      %v5617 = vadd.f32 %v4863, %v5575
      %v5618 = vadd.f32 %v4864, %v5578
      %v5619 = vadd.f32 %v4865, %v5583
      %v5620 = vadd.f32 %v4866, %v5586
      %v5621 = vld [vmem:[%s4480] sm:$0xe]
      %v5622 = vld [vmem:[%s4480 + $0xc] sm:$0xe]
      %v5623 = vld [vmem:[%s4480 + $0x18] sm:$0xe]
      %v5624 = vld [vmem:[%s4480 + $0x24] sm:$0xe]
      %v5625 = vld [vmem:[%s4480 + $0x30] sm:$0xe]
      %v5626 = vld [vmem:[%s4480 + $0x3c] sm:$0xe]
      %v5627 = vld [vmem:[%s4480 + $0x48] sm:$0xe]
      %v5628 = vld [vmem:[%s4480 + $0x54] sm:$0xe]
      %v5629 = vld [vmem:[%s4480 + $0x60] sm:$0xe]
      %v5630 = vld [vmem:[%s4480 + $0x6c] sm:$0xe]
      %v5631 = vld [vmem:[%s4480 + $0x78] sm:$0xe]
      %v5632 = vld [vmem:[%s4480 + $0x84] sm:$0xe]
      %v5633 = vld [vmem:[%s4480 + $0x90] sm:$0xe]
      %v5634 = vld [vmem:[%s4480 + $0x9c] sm:$0xe]
      %v5635 = vld [vmem:[%s4480 + $0xa8] sm:$0xe]
      %v5636 = vld [vmem:[%s4480 + $0xb4] sm:$0xe]
      %v5685 = vrot.slane %v5621, 5
      %v5686 = vrot.slane %v5685, 4
      %v5687 = vrot.slane %v4868, 5
      %v5688 = vsel %vm2407, %v5686, %v5687
      %v5689 = vrot.slane %v5687, 4
      %v5690 = vrot.slane %v4869, 5
      %v5691 = vsel %vm2407, %v5689, %v5690
      %v5692 = vrot.slane %v5622, 5
      %v5693 = vrot.slane %v5692, 4
      %v5694 = vrot.slane %v4871, 5
      %v5695 = vsel %vm2407, %v5693, %v5694
      %v5696 = vrot.slane %v5694, 4
      %v5697 = vrot.slane %v4872, 5
      %v5698 = vsel %vm2407, %v5696, %v5697
      %v5699 = vrot.slane %v5623, 5
      %v5700 = vrot.slane %v5699, 4
      %v5701 = vrot.slane %v4874, 5
      %v5702 = vsel %vm2407, %v5700, %v5701
      %v5703 = vrot.slane %v5701, 4
      %v5704 = vrot.slane %v4875, 5
      %v5705 = vsel %vm2407, %v5703, %v5704
      %v5706 = vrot.slane %v5624, 5
      %v5707 = vrot.slane %v5706, 4
      %v5708 = vrot.slane %v4877, 5
      %v5709 = vsel %vm2407, %v5707, %v5708
      %v5710 = vrot.slane %v5708, 4
      %v5711 = vrot.slane %v4878, 5
      %v5712 = vsel %vm2407, %v5710, %v5711
      %v5713 = vrot.slane %v5625, 5
      %v5714 = vrot.slane %v5713, 4
      %v5715 = vrot.slane %v4880, 5
      %v5716 = vsel %vm2407, %v5714, %v5715
      %v5717 = vrot.slane %v5715, 4
      %v5718 = vrot.slane %v4881, 5
      %v5719 = vsel %vm2407, %v5717, %v5718
      %v5720 = vrot.slane %v5626, 5
      %v5721 = vrot.slane %v5720, 4
      %v5722 = vrot.slane %v4883, 5
      %v5723 = vsel %vm2407, %v5721, %v5722
      %v5724 = vrot.slane %v5722, 4
      %v5725 = vrot.slane %v4884, 5
      %v5726 = vsel %vm2407, %v5724, %v5725
      %v5727 = vrot.slane %v5627, 5
      %v5728 = vrot.slane %v5727, 4
      %v5729 = vrot.slane %v4886, 5
      %v5730 = vsel %vm2407, %v5728, %v5729
      %v5731 = vrot.slane %v5729, 4
      %v5732 = vrot.slane %v4887, 5
      %v5733 = vsel %vm2407, %v5731, %v5732
      %v5734 = vrot.slane %v5628, 5
      %v5735 = vrot.slane %v5734, 4
      %v5736 = vrot.slane %v4889, 5
      %v5737 = vsel %vm2407, %v5735, %v5736
      %v5738 = vrot.slane %v5736, 4
      %v5739 = vrot.slane %v4890, 5
      %v5740 = vsel %vm2407, %v5738, %v5739
      %v5741 = vrot.slane %v5629, 5
      %v5742 = vrot.slane %v5741, 4
      %v5743 = vrot.slane %v4892, 5
      %v5744 = vsel %vm2407, %v5742, %v5743
      %v5745 = vrot.slane %v5743, 4
      %v5746 = vrot.slane %v4893, 5
      %v5747 = vsel %vm2407, %v5745, %v5746
      %v5748 = vrot.slane %v5630, 5
      %v5749 = vrot.slane %v5748, 4
      %v5750 = vrot.slane %v4895, 5
      %v5751 = vsel %vm2407, %v5749, %v5750
      %v5752 = vrot.slane %v5750, 4
      %v5753 = vrot.slane %v4896, 5
      %v5754 = vsel %vm2407, %v5752, %v5753
      %v5755 = vrot.slane %v5631, 5
      %v5756 = vrot.slane %v5755, 4
      %v5757 = vrot.slane %v4898, 5
      %v5758 = vsel %vm2407, %v5756, %v5757
      %v5759 = vrot.slane %v5757, 4
      %v5760 = vrot.slane %v4899, 5
      %v5761 = vsel %vm2407, %v5759, %v5760
      %v5762 = vrot.slane %v5632, 5
      %v5763 = vrot.slane %v5762, 4
      %v5764 = vrot.slane %v4901, 5
      %v5765 = vsel %vm2407, %v5763, %v5764
      %v5766 = vrot.slane %v5764, 4
      %v5767 = vrot.slane %v4902, 5
      %v5768 = vsel %vm2407, %v5766, %v5767
      %v5769 = vrot.slane %v5633, 5
      %v5770 = vrot.slane %v5769, 4
      %v5771 = vrot.slane %v4904, 5
      %v5772 = vsel %vm2407, %v5770, %v5771
      %v5773 = vrot.slane %v5771, 4
      %v5774 = vrot.slane %v4905, 5
      %v5775 = vsel %vm2407, %v5773, %v5774
      %v5776 = vrot.slane %v5634, 5
      %v5777 = vrot.slane %v5776, 4
      %v5778 = vrot.slane %v4907, 5
      %v5779 = vsel %vm2407, %v5777, %v5778
      %v5780 = vrot.slane %v5778, 4
      %v5781 = vrot.slane %v4908, 5
      %v5782 = vsel %vm2407, %v5780, %v5781
      %v5783 = vrot.slane %v5635, 5
      %v5784 = vrot.slane %v5783, 4
      %v5785 = vrot.slane %v4910, 5
      %v5786 = vsel %vm2407, %v5784, %v5785
      %v5787 = vrot.slane %v5785, 4
      %v5788 = vrot.slane %v4911, 5
      %v5789 = vsel %vm2407, %v5787, %v5788
      %v5790 = vrot.slane %v5636, 5
      %v5791 = vrot.slane %v5790, 4
      %v5792 = vrot.slane %v4913, 5
      %v5793 = vsel %vm2407, %v5791, %v5792
      %v5794 = vrot.slane %v5792, 4
      %v5795 = vrot.slane %v4914, 5
      %v5796 = vsel %vm2407, %v5794, %v5795
      %s5797 = scalar_lea.vmem %s4, 256
      %v5798 = vld [vmem:[%s5797] sm:$0xf]
      %v5799 = vld [vmem:[%s5797 + $0x4] sm:$0xf]
      %v5800 = vld [vmem:[%s5797 + $0x8] sm:$0xf]
      %v5801 = vld [vmem:[%s5797 + $0xc] sm:$0xf]
      %v5802 = vld [vmem:[%s5797 + $0x10] sm:$0xf]
      %v5803 = vld [vmem:[%s5797 + $0x14] sm:$0xf]
      %v5804 = vld [vmem:[%s5797 + $0x18] sm:$0xf]
      %v5805 = vld [vmem:[%s5797 + $0x1c] sm:$0xf]
      %v5806 = vunpack.c.l.b16 %v5688
      %v5807 = vunpack.c.l.b16 %v5691
      %v5808 = vunpack.c.l.b16 %v5695
      %v5809 = vunpack.c.l.b16 %v5698
      %v5810 = vunpack.c.l.b16 %v5702
      %v5811 = vunpack.c.l.b16 %v5705
      %v5812 = vunpack.c.l.b16 %v5709
      %v5813 = vunpack.c.l.b16 %v5712
      %v5814 = vunpack.c.l.b16 %v5716
      %v5815 = vunpack.c.l.b16 %v5719
      %v5816 = vunpack.c.l.b16 %v5723
      %v5817 = vunpack.c.l.b16 %v5726
      %v5818 = vunpack.c.l.b16 %v5730
      %v5819 = vunpack.c.l.b16 %v5733
      %v5820 = vunpack.c.l.b16 %v5737
      %v5821 = vunpack.c.l.b16 %v5740
      %v5822 = vunpack.c.l.b16 %v5744
      %v5823 = vunpack.c.l.b16 %v5747
      %v5824 = vunpack.c.l.b16 %v5751
      %v5825 = vunpack.c.l.b16 %v5754
      %v5826 = vunpack.c.l.b16 %v5758
      %v5827 = vunpack.c.l.b16 %v5761
      %v5828 = vunpack.c.l.b16 %v5765
      %v5829 = vunpack.c.l.b16 %v5768
      %v5830 = vunpack.c.l.b16 %v5772
      %v5831 = vunpack.c.l.b16 %v5775
      %v5832 = vunpack.c.l.b16 %v5779
      %v5833 = vunpack.c.l.b16 %v5782
      %v5834 = vunpack.c.l.b16 %v5786
      %v5835 = vunpack.c.l.b16 %v5789
      %v5836 = vunpack.c.l.b16 %v5793
      %v5837 = vunpack.c.l.b16 %v5796
      %v5838 = vpack.c.b16 %v5807, %v5806
      %v5839 = vpack.c.b16 %v5809, %v5808
      %v5840 = vpack.c.b16 %v5811, %v5810
      %v5841 = vpack.c.b16 %v5813, %v5812
      %v5842 = vpack.c.b16 %v5815, %v5814
      %v5843 = vpack.c.b16 %v5817, %v5816
      %v5844 = vpack.c.b16 %v5819, %v5818
      %v5845 = vpack.c.b16 %v5821, %v5820
      %v5846 = vpack.c.b16 %v5823, %v5822
      %v5847 = vpack.c.b16 %v5825, %v5824
      %v5848 = vpack.c.b16 %v5827, %v5826
      %v5849 = vpack.c.b16 %v5829, %v5828
      %v5850 = vpack.c.b16 %v5831, %v5830
      %v5851 = vpack.c.b16 %v5833, %v5832
      %v5852 = vpack.c.b16 %v5835, %v5834
      %v5853 = vpack.c.b16 %v5837, %v5836
      %v5862 = vunpack.c.l.b16 %v5798
      %v5863 = vunpack.c.l.b16 %v5799
      %v5864 = vunpack.c.l.b16 %v5800
      %v5865 = vunpack.c.l.b16 %v5801
      %v5866 = vunpack.c.l.b16 %v5802
      %v5867 = vunpack.c.l.b16 %v5803
      %v5868 = vunpack.c.l.b16 %v5804
      %v5869 = vunpack.c.l.b16 %v5805
      %v5870 = vpack.c.b16 %v5863, %v5862
      %v5871 = vpack.c.b16 %v5865, %v5864
      %v5872 = vpack.c.b16 %v5867, %v5866
      %v5873 = vpack.c.b16 %v5869, %v5868
      %v5879 = vsel %vm1834, %v5838, 0
      %v5882 = vsel %vm1834, %v5839, 0
      %v5885 = vsel %vm1834, %v5840, 0
      %v5888 = vsel %vm1834, %v5841, 0
      %v5891 = vsel %vm1834, %v5842, 0
      %v5894 = vsel %vm1834, %v5843, 0
      %v5897 = vsel %vm1834, %v5844, 0
      %v5900 = vsel %vm1834, %v5845, 0
      %v5903 = vsel %vm1834, %v5846, 0
      %v5906 = vsel %vm1834, %v5847, 0
      %v5909 = vsel %vm1834, %v5848, 0
      %v5912 = vsel %vm1834, %v5849, 0
      %v5915 = vsel %vm1834, %v5850, 0
      %v5918 = vsel %vm1834, %v5851, 0
      %v5921 = vsel %vm1834, %v5852, 0
      %v5924 = vsel %vm1834, %v5853, 0
      %5926 = vmatprep.subr.bf16.mxu0 0
      %5927 = vmatpush1.bf16.msra.mxu0 %v5870
      %5928 = vmatprep.subr.bf16.mxu0 0
      %5929 = vmatpush1.bf16.msra.mxu0 %v5871
      %5930 = vmatprep.subr.bf16.mxu0 0
      %5931 = vmatpush1.bf16.msra.mxu0 %v5872
      %5932 = vmatprep.subr.bf16.mxu0 0
      %5933 = vmatpush1.bf16.msra.mxu0 %v5873
      %5934 = vmatprep.subr.bf16.mxu0 0
      %5935 = vmatpush1.bf16.msra.mxu0 0
      %5936 = vmatprep.subr.bf16.mxu0 0
      %5937 = vmatpush1.bf16.msra.mxu0 0
      %5938 = vmatprep.subr.bf16.mxu0 0
      %5939 = vmatpush1.bf16.msra.mxu0 0
      %5940 = vmatprep.subr.bf16.mxu0 0
      %5941 = vmatpush1.bf16.msra.mxu0 0
      %5942 = vmatprep.subr.bf16.mxu0 0
      %5943 = vmatpush1.bf16.msra.mxu0 0
      %5944 = vmatprep.subr.bf16.mxu0 0
      %5945 = vmatpush1.bf16.msra.mxu0 0
      %5946 = vmatprep.subr.bf16.mxu0 0
      %5947 = vmatpush1.bf16.msra.mxu0 0
      %5948 = vmatprep.subr.bf16.mxu0 0
      %5949 = vmatpush1.bf16.msra.mxu0 0
      %5950 = vmatprep.subr.bf16.mxu0 0
      %5951 = vmatpush1.bf16.msra.mxu0 0
      %5952 = vmatprep.subr.bf16.mxu0 0
      %5953 = vmatpush1.bf16.msra.mxu0 0
      %5954 = vmatprep.subr.bf16.mxu0 0
      %5955 = vmatpush1.bf16.msra.mxu0 0
      %5956 = vmatprep.subr.bf16.mxu0 0
      %5957 = vmatpush1.bf16.msra.mxu0 0
      %5958 = vmatprep.mubr.bf16.mxu0 0
      %5959 = vmatmul.mubr.bf16.gmra.mrb[0].mxu0 %v5879
      %v5960 = vpop.f32.mrb[0].mxu0
      %v5961 = vadd.f32 0.0, %v5960
      %v5962 = vpop.f32.mrb[0].mxu0
      %v5963 = vpop.f32.mrb[0].mxu0
      %v5964 = vadd.f32 0.0, %v5963
      %v5965 = vpop.f32.mrb[0].mxu0
      %5966 = vmatprep.mubr.bf16.mxu0 0
      %5967 = vmatmul.mubr.bf16.gmra.mrb[0].mxu0 %v5882
      %v5968 = vpop.f32.mrb[0].mxu0
      %v5969 = vadd.f32 0.0, %v5968
      %v5970 = vpop.f32.mrb[0].mxu0
      %v5971 = vpop.f32.mrb[0].mxu0
      %v5972 = vadd.f32 0.0, %v5971
      %v5973 = vpop.f32.mrb[0].mxu0
      %5974 = vmatprep.mubr.bf16.mxu0 0
      %5975 = vmatmul.mubr.bf16.gmra.mrb[0].mxu0 %v5885
      %v5976 = vpop.f32.mrb[0].mxu0
      %v5977 = vadd.f32 0.0, %v5976
      %v5978 = vpop.f32.mrb[0].mxu0
      %v5979 = vpop.f32.mrb[0].mxu0
      %v5980 = vadd.f32 0.0, %v5979
      %v5981 = vpop.f32.mrb[0].mxu0
      %5982 = vmatprep.mubr.bf16.mxu0 0
      %5983 = vmatmul.mubr.bf16.gmra.mrb[0].mxu0 %v5888
      %v5984 = vpop.f32.mrb[0].mxu0
      %v5985 = vadd.f32 0.0, %v5984
      %v5986 = vpop.f32.mrb[0].mxu0
      %v5987 = vpop.f32.mrb[0].mxu0
      %v5988 = vadd.f32 0.0, %v5987
      %v5989 = vpop.f32.mrb[0].mxu0
      %5990 = vmatprep.mubr.bf16.mxu0 0
      %5991 = vmatmul.mubr.bf16.gmra.mrb[0].mxu0 %v5891
      %v5992 = vpop.f32.mrb[0].mxu0
      %v5993 = vadd.f32 0.0, %v5992
      %v5994 = vpop.f32.mrb[0].mxu0
      %v5995 = vpop.f32.mrb[0].mxu0
      %v5996 = vadd.f32 0.0, %v5995
      %v5997 = vpop.f32.mrb[0].mxu0
      %5998 = vmatprep.mubr.bf16.mxu0 0
      %5999 = vmatmul.mubr.bf16.gmra.mrb[0].mxu0 %v5894
      %v6000 = vpop.f32.mrb[0].mxu0
      %v6001 = vadd.f32 0.0, %v6000
      %v6002 = vpop.f32.mrb[0].mxu0
      %v6003 = vpop.f32.mrb[0].mxu0
      %v6004 = vadd.f32 0.0, %v6003
      %v6005 = vpop.f32.mrb[0].mxu0
      %6006 = vmatprep.mubr.bf16.mxu0 0
      %6007 = vmatmul.mubr.bf16.gmra.mrb[0].mxu0 %v5897
      %v6008 = vpop.f32.mrb[0].mxu0
      %v6009 = vadd.f32 0.0, %v6008
      %v6010 = vpop.f32.mrb[0].mxu0
      %v6011 = vpop.f32.mrb[0].mxu0
      %v6012 = vadd.f32 0.0, %v6011
      %v6013 = vpop.f32.mrb[0].mxu0
      %6014 = vmatprep.mubr.bf16.mxu0 0
      %6015 = vmatmul.mubr.bf16.gmra.mrb[0].mxu0 %v5900
      %v6016 = vpop.f32.mrb[0].mxu0
      %v6017 = vadd.f32 0.0, %v6016
      %v6018 = vpop.f32.mrb[0].mxu0
      %v6019 = vpop.f32.mrb[0].mxu0
      %v6020 = vadd.f32 0.0, %v6019
      %v6021 = vpop.f32.mrb[0].mxu0
      %6022 = vmatprep.mubr.bf16.mxu0 0
      %6023 = vmatmul.mubr.bf16.gmra.mrb[0].mxu0 %v5903
      %v6024 = vpop.f32.mrb[0].mxu0
      %v6025 = vadd.f32 0.0, %v6024
      %v6026 = vpop.f32.mrb[0].mxu0
      %v6027 = vpop.f32.mrb[0].mxu0
      %v6028 = vadd.f32 0.0, %v6027
      %v6029 = vpop.f32.mrb[0].mxu0
      %6030 = vmatprep.mubr.bf16.mxu0 0
      %6031 = vmatmul.mubr.bf16.gmra.mrb[0].mxu0 %v5906
      %v6032 = vpop.f32.mrb[0].mxu0
      %v6033 = vadd.f32 0.0, %v6032
      %v6034 = vpop.f32.mrb[0].mxu0
      %v6035 = vpop.f32.mrb[0].mxu0
      %v6036 = vadd.f32 0.0, %v6035
      %v6037 = vpop.f32.mrb[0].mxu0
      %6038 = vmatprep.mubr.bf16.mxu0 0
      %6039 = vmatmul.mubr.bf16.gmra.mrb[0].mxu0 %v5909
      %v6040 = vpop.f32.mrb[0].mxu0
      %v6041 = vadd.f32 0.0, %v6040
      %v6042 = vpop.f32.mrb[0].mxu0
      %v6043 = vpop.f32.mrb[0].mxu0
      %v6044 = vadd.f32 0.0, %v6043
      %v6045 = vpop.f32.mrb[0].mxu0
      %6046 = vmatprep.mubr.bf16.mxu0 0
      %6047 = vmatmul.mubr.bf16.gmra.mrb[0].mxu0 %v5912
      %v6048 = vpop.f32.mrb[0].mxu0
      %v6049 = vadd.f32 0.0, %v6048
      %v6050 = vpop.f32.mrb[0].mxu0
      %v6051 = vpop.f32.mrb[0].mxu0
      %v6052 = vadd.f32 0.0, %v6051
      %v6053 = vpop.f32.mrb[0].mxu0
      %6054 = vmatprep.mubr.bf16.mxu0 0
      %6055 = vmatmul.mubr.bf16.gmra.mrb[0].mxu0 %v5915
      %v6056 = vpop.f32.mrb[0].mxu0
      %v6057 = vadd.f32 0.0, %v6056
      %v6058 = vpop.f32.mrb[0].mxu0
      %v6059 = vpop.f32.mrb[0].mxu0
      %v6060 = vadd.f32 0.0, %v6059
      %v6061 = vpop.f32.mrb[0].mxu0
      %6062 = vmatprep.mubr.bf16.mxu0 0
      %6063 = vmatmul.mubr.bf16.gmra.mrb[0].mxu0 %v5918
      %v6064 = vpop.f32.mrb[0].mxu0
      %v6065 = vadd.f32 0.0, %v6064
      %v6066 = vpop.f32.mrb[0].mxu0
      %v6067 = vpop.f32.mrb[0].mxu0
      %v6068 = vadd.f32 0.0, %v6067
      %v6069 = vpop.f32.mrb[0].mxu0
      %6070 = vmatprep.mubr.bf16.mxu0 0
      %6071 = vmatmul.mubr.bf16.gmra.mrb[0].mxu0 %v5921
      %v6072 = vpop.f32.mrb[0].mxu0
      %v6073 = vadd.f32 0.0, %v6072
      %v6074 = vpop.f32.mrb[0].mxu0
      %v6075 = vpop.f32.mrb[0].mxu0
      %v6076 = vadd.f32 0.0, %v6075
      %v6077 = vpop.f32.mrb[0].mxu0
      %6078 = vmatprep.mubr.bf16.mxu0 0
      %6079 = vmatmul.mubr.bf16.gmra.mrb[0].mxu0 %v5924
      %v6080 = vpop.f32.mrb[0].mxu0
      %v6081 = vadd.f32 0.0, %v6080
      %v6082 = vpop.f32.mrb[0].mxu0
      %v6083 = vpop.f32.mrb[0].mxu0
      %v6084 = vadd.f32 0.0, %v6083
      %v6085 = vpop.f32.mrb[0].mxu0
      %6086 = vdwg.mxu0
      %v6087 = vadd.f32 %v5589, %v5961
      %v6088 = vadd.f32 %v5590, %v5964
      %v6089 = vadd.f32 %v5591, %v5969
      %v6090 = vadd.f32 %v5592, %v5972
      %v6091 = vadd.f32 %v5593, %v5977
      %v6092 = vadd.f32 %v5594, %v5980
      %v6093 = vadd.f32 %v5595, %v5985
      %v6094 = vadd.f32 %v5596, %v5988
      %v6095 = vadd.f32 %v5597, %v5993
      %v6096 = vadd.f32 %v5598, %v5996
      %v6097 = vadd.f32 %v5599, %v6001
      %v6098 = vadd.f32 %v5600, %v6004
      %v6099 = vadd.f32 %v5601, %v6009
      %v6100 = vadd.f32 %v5602, %v6012
      %v6101 = vadd.f32 %v5603, %v6017
      %v6102 = vadd.f32 %v5604, %v6020
      %v6103 = vadd.f32 %v5605, %v6025
      %v6104 = vadd.f32 %v5606, %v6028
      %v6105 = vadd.f32 %v5607, %v6033
      %v6106 = vadd.f32 %v5608, %v6036
      %v6107 = vadd.f32 %v5609, %v6041
      %v6108 = vadd.f32 %v5610, %v6044
      %v6109 = vadd.f32 %v5611, %v6049
      %v6110 = vadd.f32 %v5612, %v6052
      %v6111 = vadd.f32 %v5613, %v6057
      %v6112 = vadd.f32 %v5614, %v6060
      %v6113 = vadd.f32 %v5615, %v6065
      %v6114 = vadd.f32 %v5616, %v6068
      %v6115 = vadd.f32 %v5617, %v6073
      %v6116 = vadd.f32 %v5618, %v6076
      %v6117 = vadd.f32 %v5619, %v6081
      %v6118 = vadd.f32 %v5620, %v6084
      %v6119 = vld [vmem:[%s5] sm:$0x1]
      %v6121 = vlaneseq
      %v6122 = vshrl.u32 %v6121, 7
      %v6123 = vsub.s32 0, %v6122
      %v6124 = vrot.slane %v6119, %v6123
      %v6126 = vmul.f32 %v6087, %v6124
      %v6127 = vmul.f32 %v6088, %v6124
      %v6128 = vmul.f32 %v6089, %v6124
      %v6129 = vmul.f32 %v6090, %v6124
      %v6130 = vmul.f32 %v6091, %v6124
      %v6131 = vmul.f32 %v6092, %v6124
      %v6132 = vmul.f32 %v6093, %v6124
      %v6133 = vmul.f32 %v6094, %v6124
      %v6134 = vmul.f32 %v6095, %v6124
      %v6135 = vmul.f32 %v6096, %v6124
      %v6136 = vmul.f32 %v6097, %v6124
      %v6137 = vmul.f32 %v6098, %v6124
      %v6138 = vmul.f32 %v6099, %v6124
      %v6139 = vmul.f32 %v6100, %v6124
      %v6140 = vmul.f32 %v6101, %v6124
      %v6141 = vmul.f32 %v6102, %v6124
      %v6142 = vmul.f32 %v6103, %v6124
      %v6143 = vmul.f32 %v6104, %v6124
      %v6144 = vmul.f32 %v6105, %v6124
      %v6145 = vmul.f32 %v6106, %v6124
      %v6146 = vmul.f32 %v6107, %v6124
      %v6147 = vmul.f32 %v6108, %v6124
      %v6148 = vmul.f32 %v6109, %v6124
      %v6149 = vmul.f32 %v6110, %v6124
      %v6150 = vmul.f32 %v6111, %v6124
      %v6151 = vmul.f32 %v6112, %v6124
      %v6152 = vmul.f32 %v6113, %v6124
      %v6153 = vmul.f32 %v6114, %v6124
      %v6154 = vmul.f32 %v6115, %v6124
      %v6155 = vmul.f32 %v6116, %v6124
      %v6156 = vmul.f32 %v6117, %v6124
      %v6157 = vmul.f32 %v6118, %v6124
      %v6158 = vld [vmem:[%s6] sm:$0x1]
      %v6160 = vlaneseq
      %v6161 = vshrl.u32 %v6160, 7
      %v6162 = vsub.s32 0, %v6161
      %v6163 = vrot.slane %v6158, %v6162
      %v6165 = vadd.f32 %v6126, %v6163
      %v6166 = vadd.f32 %v6127, %v6163
      %v6167 = vadd.f32 %v6128, %v6163
      %v6168 = vadd.f32 %v6129, %v6163
      %v6169 = vadd.f32 %v6130, %v6163
      %v6170 = vadd.f32 %v6131, %v6163
      %v6171 = vadd.f32 %v6132, %v6163
      %v6172 = vadd.f32 %v6133, %v6163
      %v6173 = vadd.f32 %v6134, %v6163
      %v6174 = vadd.f32 %v6135, %v6163
      %v6175 = vadd.f32 %v6136, %v6163
      %v6176 = vadd.f32 %v6137, %v6163
      %v6177 = vadd.f32 %v6138, %v6163
      %v6178 = vadd.f32 %v6139, %v6163
      %v6179 = vadd.f32 %v6140, %v6163
      %v6180 = vadd.f32 %v6141, %v6163
      %v6181 = vadd.f32 %v6142, %v6163
      %v6182 = vadd.f32 %v6143, %v6163
      %v6183 = vadd.f32 %v6144, %v6163
      %v6184 = vadd.f32 %v6145, %v6163
      %v6185 = vadd.f32 %v6146, %v6163
      %v6186 = vadd.f32 %v6147, %v6163
      %v6187 = vadd.f32 %v6148, %v6163
      %v6188 = vadd.f32 %v6149, %v6163
      %v6189 = vadd.f32 %v6150, %v6163
      %v6190 = vadd.f32 %v6151, %v6163
      %v6191 = vadd.f32 %v6152, %v6163
      %v6192 = vadd.f32 %v6153, %v6163
      %v6193 = vadd.f32 %v6154, %v6163
      %v6194 = vadd.f32 %v6155, %v6163
      %v6195 = vadd.f32 %v6156, %v6163
      %v6196 = vadd.f32 %v6157, %v6163
      %v6197 = vmax.f32 %v6165, 0.0
      %v6198 = vmax.f32 %v6166, 0.0
      %v6199 = vmax.f32 %v6167, 0.0
      %v6200 = vmax.f32 %v6168, 0.0
      %v6201 = vmax.f32 %v6169, 0.0
      %v6202 = vmax.f32 %v6170, 0.0
      %v6203 = vmax.f32 %v6171, 0.0
      %v6204 = vmax.f32 %v6172, 0.0
      %v6205 = vmax.f32 %v6173, 0.0
      %v6206 = vmax.f32 %v6174, 0.0
      %v6207 = vmax.f32 %v6175, 0.0
      %v6208 = vmax.f32 %v6176, 0.0
      %v6209 = vmax.f32 %v6177, 0.0
      %v6210 = vmax.f32 %v6178, 0.0
      %v6211 = vmax.f32 %v6179, 0.0
      %v6212 = vmax.f32 %v6180, 0.0
      %v6213 = vmax.f32 %v6181, 0.0
      %v6214 = vmax.f32 %v6182, 0.0
      %v6215 = vmax.f32 %v6183, 0.0
      %v6216 = vmax.f32 %v6184, 0.0
      %v6217 = vmax.f32 %v6185, 0.0
      %v6218 = vmax.f32 %v6186, 0.0
      %v6219 = vmax.f32 %v6187, 0.0
      %v6220 = vmax.f32 %v6188, 0.0
      %v6221 = vmax.f32 %v6189, 0.0
      %v6222 = vmax.f32 %v6190, 0.0
      %v6223 = vmax.f32 %v6191, 0.0
      %v6224 = vmax.f32 %v6192, 0.0
      %v6225 = vmax.f32 %v6193, 0.0
      %v6226 = vmax.f32 %v6194, 0.0
      %v6227 = vmax.f32 %v6195, 0.0
      %v6228 = vmax.f32 %v6196, 0.0
      %v6229 = vpack.c.bf16 %v6198, %v6197
      %v6230 = vpack.c.bf16 %v6200, %v6199
      %v6231 = vpack.c.bf16 %v6202, %v6201
      %v6232 = vpack.c.bf16 %v6204, %v6203
      %v6233 = vpack.c.bf16 %v6206, %v6205
      %v6234 = vpack.c.bf16 %v6208, %v6207
      %v6235 = vpack.c.bf16 %v6210, %v6209
      %v6236 = vpack.c.bf16 %v6212, %v6211
      %v6237 = vpack.c.bf16 %v6214, %v6213
      %v6238 = vpack.c.bf16 %v6216, %v6215
      %v6239 = vpack.c.bf16 %v6218, %v6217
      %v6240 = vpack.c.bf16 %v6220, %v6219
      %v6241 = vpack.c.bf16 %v6222, %v6221
      %v6242 = vpack.c.bf16 %v6224, %v6223
      %v6243 = vpack.c.bf16 %v6226, %v6225
      %v6244 = vpack.c.bf16 %v6228, %v6227
      %v6261 = vunpack.c.l.b16 %v6229
      %v6262 = vunpack.c.h.b16 %v6229
      %v6263 = vunpack.c.l.b16 %v6230
      %v6264 = vunpack.c.h.b16 %v6230
      %v6265 = vunpack.c.l.b16 %v6231
      %v6266 = vunpack.c.h.b16 %v6231
      %v6267 = vunpack.c.l.b16 %v6232
      %v6268 = vunpack.c.h.b16 %v6232
      %v6269 = vunpack.c.l.b16 %v6233
      %v6270 = vunpack.c.h.b16 %v6233
      %v6271 = vunpack.c.l.b16 %v6234
      %v6272 = vunpack.c.h.b16 %v6234
      %v6273 = vunpack.c.l.b16 %v6235
      %v6274 = vunpack.c.h.b16 %v6235
      %v6275 = vunpack.c.l.b16 %v6236
      %v6276 = vunpack.c.h.b16 %v6236
      %v6277 = vunpack.c.l.b16 %v6237
      %v6278 = vunpack.c.h.b16 %v6237
      %v6279 = vunpack.c.l.b16 %v6238
      %v6280 = vunpack.c.h.b16 %v6238
      %v6281 = vunpack.c.l.b16 %v6239
      %v6282 = vunpack.c.h.b16 %v6239
      %v6283 = vunpack.c.l.b16 %v6240
      %v6284 = vunpack.c.h.b16 %v6240
      %v6285 = vunpack.c.l.b16 %v6241
      %v6286 = vunpack.c.h.b16 %v6241
      %v6287 = vunpack.c.l.b16 %v6242
      %v6288 = vunpack.c.h.b16 %v6242
      %v6289 = vunpack.c.l.b16 %v6243
      %v6290 = vunpack.c.h.b16 %v6243
      %v6291 = vunpack.c.l.b16 %v6244
      %v6292 = vunpack.c.h.b16 %v6244
      %v6293 = vpack.c.b16 %v6261, %v6261
      %v6294 = vpack.c.b16 %v6262, %v6262
      %v6295 = vpack.c.b16 %v6263, %v6263
      %v6296 = vpack.c.b16 %v6264, %v6264
      %v6297 = vpack.c.b16 %v6265, %v6265
      %v6298 = vpack.c.b16 %v6266, %v6266
      %v6299 = vpack.c.b16 %v6267, %v6267
      %v6300 = vpack.c.b16 %v6268, %v6268
      %v6301 = vpack.c.b16 %v6269, %v6269
      %v6302 = vpack.c.b16 %v6270, %v6270
      %v6303 = vpack.c.b16 %v6271, %v6271
      %v6304 = vpack.c.b16 %v6272, %v6272
      %v6305 = vpack.c.b16 %v6273, %v6273
      %v6306 = vpack.c.b16 %v6274, %v6274
      %v6307 = vpack.c.b16 %v6275, %v6275
      %v6308 = vpack.c.b16 %v6276, %v6276
      %v6309 = vpack.c.b16 %v6277, %v6277
      %v6310 = vpack.c.b16 %v6278, %v6278
      %v6311 = vpack.c.b16 %v6279, %v6279
      %v6312 = vpack.c.b16 %v6280, %v6280
      %v6313 = vpack.c.b16 %v6281, %v6281
      %v6314 = vpack.c.b16 %v6282, %v6282
      %v6315 = vpack.c.b16 %v6283, %v6283
      %v6316 = vpack.c.b16 %v6284, %v6284
      %v6317 = vpack.c.b16 %v6285, %v6285
      %v6318 = vpack.c.b16 %v6286, %v6286
      %v6319 = vpack.c.b16 %v6287, %v6287
      %v6320 = vpack.c.b16 %v6288, %v6288
      %v6321 = vpack.c.b16 %v6289, %v6289
      %v6322 = vpack.c.b16 %v6290, %v6290
      %v6323 = vpack.c.b16 %v6291, %v6291
      %v6324 = vpack.c.b16 %v6292, %v6292
      %6357 = vst [vmem:[%s278] sm:$0xf] %v6293
      %6358 = vst [vmem:[%s278 + $0x4] sm:$0xf] %v6294
      %6359 = vst [vmem:[%s278 + $0x8] sm:$0xf] %v6295
      %6360 = vst [vmem:[%s278 + $0xc] sm:$0xf] %v6296
      %6361 = vst [vmem:[%s278 + $0x10] sm:$0xf] %v6297
      %6362 = vst [vmem:[%s278 + $0x14] sm:$0xf] %v6298
      %6363 = vst [vmem:[%s278 + $0x18] sm:$0xf] %v6299
      %6364 = vst [vmem:[%s278 + $0x1c] sm:$0xf] %v6300
      %6365 = vst [vmem:[%s278 + $0x20] sm:$0xf] %v6301
      %6366 = vst [vmem:[%s278 + $0x24] sm:$0xf] %v6302
      %6367 = vst [vmem:[%s278 + $0x28] sm:$0xf] %v6303
      %6368 = vst [vmem:[%s278 + $0x2c] sm:$0xf] %v6304
      %6369 = vst [vmem:[%s278 + $0x30] sm:$0xf] %v6305
      %6370 = vst [vmem:[%s278 + $0x34] sm:$0xf] %v6306
      %6371 = vst [vmem:[%s278 + $0x38] sm:$0xf] %v6307
      %6372 = vst [vmem:[%s278 + $0x3c] sm:$0xf] %v6308
      %6373 = vst [vmem:[%s278 + $0x40] sm:$0xf] %v6309
      %6374 = vst [vmem:[%s278 + $0x44] sm:$0xf] %v6310
      %6375 = vst [vmem:[%s278 + $0x48] sm:$0xf] %v6311
      %6376 = vst [vmem:[%s278 + $0x4c] sm:$0xf] %v6312
      %6377 = vst [vmem:[%s278 + $0x50] sm:$0xf] %v6313
      %6378 = vst [vmem:[%s278 + $0x54] sm:$0xf] %v6314
      %6379 = vst [vmem:[%s278 + $0x58] sm:$0xf] %v6315
      %6380 = vst [vmem:[%s278 + $0x5c] sm:$0xf] %v6316
      %6381 = vst [vmem:[%s278 + $0x60] sm:$0xf] %v6317
      %6382 = vst [vmem:[%s278 + $0x64] sm:$0xf] %v6318
      %6383 = vst [vmem:[%s278 + $0x68] sm:$0xf] %v6319
      %6384 = vst [vmem:[%s278 + $0x6c] sm:$0xf] %v6320
      %6385 = vst [vmem:[%s278 + $0x70] sm:$0xf] %v6321
      %6386 = vst [vmem:[%s278 + $0x74] sm:$0xf] %v6322
      %6387 = vst [vmem:[%s278 + $0x78] sm:$0xf] %v6323
      %6388 = vst [vmem:[%s278 + $0x7c] sm:$0xf] %v6324
      %p6389 = scmp.lt.s32.totalorder %s18, 1
      %s6390 = scalar_select %p6389, %s18, 1
      %s6391 = smul.addr %s6390, 32
      %s6392 = smul.addr %s6391, 4
      %s6393 = scalar_lea.vmem %s7, %s6392
      // Predicated region
      $region49: #{inception_b_forward.5} parent=47 // pred_check
        %p6394 = pneg %p188
      $region50: #{inception_b_forward.5} parent=47 // pred_check_branch
        %6396 = sbr.rel (%p6394) target = $region52
      $region51: #{inception_b_forward.5} parent=47 // pred_region
        _
      $region52: #{inception_b_forward.5} parent=47 // pred_fallthru
        _
    $region48: #{inception_b_forward.5} parent=5 // pred_fallthru
      _
    %p6397 = scmp.le.s32.totalorder 2, %s13
    // Predicated region
    $region53: #{inception_b_forward.5} parent=5 // pred_check
      %p6398 = pneg %p6397
    $region54: #{inception_b_forward.5} parent=5 // pred_check_branch
      %6400 = sbr.rel (%p6398) target = $region56
    $region55: #{inception_b_forward.5} parent=5 // pred_region
      %s6401 = ssub.s32 %s13, 2
      // Predicated region
      $region57: #{inception_b_forward.5} parent=55 // pred_check
        %p6402 = pneg %p194
      $region58: #{inception_b_forward.5} parent=55 // pred_check_branch
        %6404 = sbr.rel (%p6402) target = $region60
      $region59: #{inception_b_forward.5} parent=55 // pred_region
        %p6405 = scmp.lt.s32.totalorder %s19, 1
        %s6406 = scalar_select %p6405, %s19, 1
        %s6407 = smul.addr %s6406, 32
        %s6408 = smul.addr %s6407, 4
        %s6409 = scalar_lea.vmem %s7, %s6408
      $region60: #{inception_b_forward.5} parent=55 // pred_fallthru
        _
    $region56: #{inception_b_forward.5} parent=5 // pred_fallthru
      _
  $region6: #{inception_b_forward.5} parent=0 // loop_footer
    %s17 = sadd.s32 1, %s13
  $region7: #{inception_b_forward.5} parent=0 // loop_footer_branch
    %12 = sbr.rel target = $region3
  $region8: #{inception_b_forward.5} parent=0 // loop_exit
    _

// kernel: inception_b_forward.6
$region0: #{inception_b_forward.6}
  #allocation0 [shape = 'u32[]', space=smem, size = 0x4, offset = 0x4, fixed_abs, tag = 'smem constant byte address 0x4 - core index']
  #allocation1 [shape = 'u32[144,128]{1,0:T(1,128)}', space=vmem, size = 0x12000, scoped, tag = 'internal scratch']
  %s0 = inlined_call_operand.vmem [shape: bf16[2,4,9,9,128], index: 0, kind: input, shape index: {}]
  %s1 = inlined_call_operand.vmem [shape: bf16[9,128,128], index: 1, kind: input, shape index: {}]
  %s2 = inlined_call_operand.vmem [shape: f32[1,128], index: 2, kind: input, shape index: {}]
  %s3 = inlined_call_operand.vmem [shape: f32[1,128], index: 3, kind: input, shape index: {}]
  %s4 = inlined_call_operand.vmem [shape: f32[2,8,8,128], index: 4, kind: output, shape index: {}]
  %s5 = sld [smem:[#allocation0]]
  $region49: #{inception_b_forward.6} parent=0
    _
  %s7 = ssub.s32 1, %s5
  %s8 = scalar_select 0, %s7, %s5
  loop: start=0, step=1, limit=4
  $region2: #{inception_b_forward.6} parent=0 // loop_pre_header
    _
  $region3: #{inception_b_forward.6} parent=0 // loop_header
    %s10 = sphi 0, %s14
    %p11 = scmp.ge.s32.totalorder %s10, 4
    %s20 = sphi 0, %s22
    %s23 = sphi 0, %s20
    %s24 = sphi 0, %s23
    %s40 = sphi 0, %s24
    %s44 = sphi 0, %s44
    %s46 = sphi 0, %s44
    %s47 = sphi 0, %s46
    %s61 = sphi 0, %s47
    %s65 = sphi 0, %s65
    %s67 = sphi 0, %s65
    %s68 = sphi 0, %s67
    %s82 = sphi 0, %s68
    %s86 = sphi 0, %s86
    %s88 = sphi 0, %s86
    %s89 = sphi 0, %s88
    %s103 = sphi 0, %s89
    %s109 = sphi 0, %s111
    %s112 = sphi 0, %s109
    %s113 = sphi 0, %s112
    %s129 = sphi 0, %s113
  $region4: #{inception_b_forward.6} parent=0 // loop_header_branch
    %13 = sbr.rel (%p11) target = $region8
  $region5: #{inception_b_forward.6} parent=0 // loop_body
    %s15 = ssub.s32 %s10, 1
    %s16 = ssub.s32 %s10, 2
    %s17 = sadd.s32 %s10, 1
    %s18 = ssub.s32 %s10, %s17
    %p19 = scmp.eq.s32.totalorder %s18, 0
    %s21 = sadd.s32 %s20, 1
    %s22 = scalar_select %p19, %s20, %s21
    %p25 = pneg %p19
    %p26 = scmp.eq.s32.totalorder %s10, 1
    %p27 = por %p25, %p26
    %p28 = scmp.ne.s32.totalorder %s20, %s23
    %p29 = scmp.eq.s32.totalorder %s10, 0
    %p30 = por %p28, %p29
    %p31 = scmp.ne.s32.totalorder %s20, %s23
    %p32 = scmp.eq.s32.totalorder %s15, 1
    %p33 = por %p31, %p32
    %p34 = scmp.ne.s32.totalorder %s23, %s24
    %p35 = scmp.eq.s32.totalorder %s15, 0
    %p36 = por %p34, %p35
    %p37 = scmp.ne.s32.totalorder %s23, %s24
    %p38 = scmp.eq.s32.totalorder %s16, 1
    %p39 = por %p37, %p38
    %p41 = scmp.ne.s32.totalorder %s24, %s40
    %p42 = scmp.eq.s32.totalorder %s16, 0
    %p43 = por %p41, %p42
    %s45 = sadd.s32 %s44, 1
    %p48 = scmp.eq.s32.totalorder %s10, 1
    %p49 = scmp.ne.s32.totalorder %s44, %s46
    %p50 = scmp.eq.s32.totalorder %s10, 0
    %p51 = por %p49, %p50
    %p52 = scmp.ne.s32.totalorder %s44, %s46
    %p53 = scmp.eq.s32.totalorder %s15, 1
    %p54 = por %p52, %p53
    %p55 = scmp.ne.s32.totalorder %s46, %s47
    %p56 = scmp.eq.s32.totalorder %s15, 0
    %p57 = por %p55, %p56
    %p58 = scmp.ne.s32.totalorder %s46, %s47
    %p59 = scmp.eq.s32.totalorder %s16, 1
    %p60 = por %p58, %p59
    %p62 = scmp.ne.s32.totalorder %s47, %s61
    %p63 = scmp.eq.s32.totalorder %s16, 0
    %p64 = por %p62, %p63
    %s66 = sadd.s32 %s65, 1
    %p69 = scmp.eq.s32.totalorder %s10, 1
    %p70 = scmp.ne.s32.totalorder %s65, %s67
    %p71 = scmp.eq.s32.totalorder %s10, 0
    %p72 = por %p70, %p71
    %p73 = scmp.ne.s32.totalorder %s65, %s67
    %p74 = scmp.eq.s32.totalorder %s15, 1
    %p75 = por %p73, %p74
    %p76 = scmp.ne.s32.totalorder %s67, %s68
    %p77 = scmp.eq.s32.totalorder %s15, 0
    %p78 = por %p76, %p77
    %p79 = scmp.ne.s32.totalorder %s67, %s68
    %p80 = scmp.eq.s32.totalorder %s16, 1
    %p81 = por %p79, %p80
    %p83 = scmp.ne.s32.totalorder %s68, %s82
    %p84 = scmp.eq.s32.totalorder %s16, 0
    %p85 = por %p83, %p84
    %s87 = sadd.s32 %s86, 1
    %p90 = scmp.eq.s32.totalorder %s10, 1
    %p91 = scmp.ne.s32.totalorder %s86, %s88
    %p92 = scmp.eq.s32.totalorder %s10, 0
    %p93 = por %p91, %p92
    %p94 = scmp.ne.s32.totalorder %s86, %s88
    %p95 = scmp.eq.s32.totalorder %s15, 1
    %p96 = por %p94, %p95
    %p97 = scmp.ne.s32.totalorder %s88, %s89
    %p98 = scmp.eq.s32.totalorder %s15, 0
    %p99 = por %p97, %p98
    %p100 = scmp.ne.s32.totalorder %s88, %s89
    %p101 = scmp.eq.s32.totalorder %s16, 1
    %p102 = por %p100, %p101
    %p104 = scmp.ne.s32.totalorder %s89, %s103
    %p105 = scmp.eq.s32.totalorder %s16, 0
    %p106 = por %p104, %p105
    %s107 = ssub.s32 %s10, %s17
    %p108 = scmp.eq.s32.totalorder %s107, 0
    %s110 = sadd.s32 %s109, 1
    %s111 = scalar_select %p108, %s109, %s110
    %p114 = pneg %p108
    %p115 = scmp.eq.s32.totalorder %s10, 1
    %p116 = por %p114, %p115
    %p117 = scmp.ne.s32.totalorder %s109, %s112
    %p118 = scmp.eq.s32.totalorder %s10, 0
    %p119 = por %p117, %p118
    %p120 = scmp.ne.s32.totalorder %s109, %s112
    %p121 = scmp.eq.s32.totalorder %s15, 1
    %p122 = por %p120, %p121
    %p123 = scmp.ne.s32.totalorder %s112, %s113
    %p124 = scmp.eq.s32.totalorder %s15, 0
    %p125 = por %p123, %p124
    %p126 = scmp.ne.s32.totalorder %s112, %s113
    %p127 = scmp.eq.s32.totalorder %s16, 1
    %p128 = por %p126, %p127
    %p130 = scmp.ne.s32.totalorder %s113, %s129
    %p131 = scmp.eq.s32.totalorder %s16, 0
    %p132 = por %p130, %p131
    %p133 = scmp.le.s32.totalorder 1, %s10
    %p134 = scmp.lt.s32.totalorder %s10, 3
    %p135 = pnand %p133, %p134
    %p136 = pneg %p135
    // Predicated region
    $region9: #{inception_b_forward.6} parent=5 // pred_check
      _
    $region10: #{inception_b_forward.6} parent=5 // pred_check_branch
      %138 = sbr.rel (%p135) target = $region12
    $region11: #{inception_b_forward.6} parent=5 // pred_region
      %s139 = ssub.s32 %s10, 1
      // Predicated region
      $region13: #{inception_b_forward.6} parent=11 // pred_check
        %p140 = pneg %p57
      $region14: #{inception_b_forward.6} parent=11 // pred_check_branch
        %142 = sbr.rel (%p140) target = $region16
      $region15: #{inception_b_forward.6} parent=11 // pred_region
        _
      $region16: #{inception_b_forward.6} parent=11 // pred_fallthru
        _
      // Predicated region
      $region17: #{inception_b_forward.6} parent=11 // pred_check
        %p143 = pneg %p78
      $region18: #{inception_b_forward.6} parent=11 // pred_check_branch
        %145 = sbr.rel (%p143) target = $region20
      $region19: #{inception_b_forward.6} parent=11 // pred_region
        _
      $region20: #{inception_b_forward.6} parent=11 // pred_fallthru
        _
      // Predicated region
      $region21: #{inception_b_forward.6} parent=11 // pred_check
        %p146 = pneg %p99
      $region22: #{inception_b_forward.6} parent=11 // pred_check_branch
        %148 = sbr.rel (%p146) target = $region24
      $region23: #{inception_b_forward.6} parent=11 // pred_region
        _
      $region24: #{inception_b_forward.6} parent=11 // pred_fallthru
        _
    $region12: #{inception_b_forward.6} parent=5 // pred_fallthru
      _
    %p149 = scmp.lt.s32.totalorder %s10, 2
    // Predicated region
    $region25: #{inception_b_forward.6} parent=5 // pred_check
      %p150 = pneg %p149
    $region26: #{inception_b_forward.6} parent=5 // pred_check_branch
      %152 = sbr.rel (%p150) target = $region28
    $region27: #{inception_b_forward.6} parent=5 // pred_region
      // Predicated region
      $region29: #{inception_b_forward.6} parent=27 // pred_check
        %p153 = pneg %p30
      $region30: #{inception_b_forward.6} parent=27 // pred_check_branch
        %155 = sbr.rel (%p153) target = $region32
      $region31: #{inception_b_forward.6} parent=27 // pred_region
        %p156 = scmp.lt.s32.totalorder %s10, 1
        %s157 = scalar_select %p156, %s10, 1
        %s158 = smul.addr %s157, 72
        %s159 = smul.addr %s158, 4
        %s160 = scalar_lea.vmem %s0, %s159
      $region32: #{inception_b_forward.6} parent=27 // pred_fallthru
        _
    $region28: #{inception_b_forward.6} parent=5 // pred_fallthru
      _
    %p161 = scmp.le.s32.totalorder 1, %s10
    %p162 = scmp.lt.s32.totalorder %s10, 3
    %p163 = pnand %p161, %p162
    %p164 = pneg %p163
    // Predicated region
    $region33: #{inception_b_forward.6} parent=5 // pred_check
      _
    $region34: #{inception_b_forward.6} parent=5 // pred_check_branch
      %166 = sbr.rel (%p163) target = $region36
    $region35: #{inception_b_forward.6} parent=5 // pred_region
      %s167 = ssub.s32 %s10, 1
      %p168 = scmp.lt.s32.totalorder %s15, 1
      %s169 = scalar_select %p168, %s15, 1
      %s170 = smul.addr %s169, 72
      %s171 = smul.addr %s170, 4
      %s172 = scalar_lea.vmem %s0, %s171
      %p173 = pneg %p36
      %p174 = pneg %p33
      %p175 = pneg %p57
      %p176 = pneg %p54
      %p177 = pneg %p78
      %p178 = pneg %p75
      %p179 = pneg %p99
      %p180 = pneg %p96
      %p181 = pneg %p125
      %p182 = pneg %p122
      %p183 = scmp.lt.s32.totalorder %s15, 1
      %s184 = scalar_select %p183, %s15, 1
      %s185 = smul.addr %s184, 8
      %s186 = smul.addr %s185, 8
      %s187 = scalar_lea.vmem %s4, %s186
      %p188 = scmp.lt.s32.totalorder %s15, 1
      %s189 = scalar_select %p188, %s15, 1
      %s190 = smul.addr %s189, 72
      %s191 = smul.addr %s190, 4
      %s192 = scalar_lea.vmem %s0, %s191
      %p193 = scmp.lt.s32.totalorder %s15, 1
      %s194 = scalar_select %p193, %s15, 1
      %s195 = smul.addr %s194, 8
      %s196 = smul.addr %s195, 8
      %s197 = scalar_lea.vmem %s4, %s196
      %v199 = vld [vmem:[%s192] sm:$0xf]
      %v200 = vld [vmem:[%s192 + $0x8] sm:$0xf]
      %v201 = vld [vmem:[%s192 + $0x10] sm:$0xf]
      %v202 = vld [vmem:[%s192 + $0x18] sm:$0xf]
      %v203 = vld [vmem:[%s192 + $0x20] sm:$0xf]
      %v204 = vld [vmem:[%s192 + $0x28] sm:$0xf]
      %v205 = vld [vmem:[%s192 + $0x30] sm:$0xf]
      %v206 = vld [vmem:[%s192 + $0x38] sm:$0xf]
      %v207 = vld [vmem:[%s1] sm:$0xf]
      %v208 = vld [vmem:[%s1 + $0x4] sm:$0xf]
      %v209 = vld [vmem:[%s1 + $0x8] sm:$0xf]
      %v210 = vld [vmem:[%s1 + $0xc] sm:$0xf]
      %v211 = vld [vmem:[%s1 + $0x10] sm:$0xf]
      %v212 = vld [vmem:[%s1 + $0x14] sm:$0xf]
      %v213 = vld [vmem:[%s1 + $0x18] sm:$0xf]
      %v214 = vld [vmem:[%s1 + $0x1c] sm:$0xf]
      %v215 = vld [vmem:[%s1 + $0x20] sm:$0xf]
      %v216 = vld [vmem:[%s1 + $0x24] sm:$0xf]
      %v217 = vld [vmem:[%s1 + $0x28] sm:$0xf]
      %v218 = vld [vmem:[%s1 + $0x2c] sm:$0xf]
      %v219 = vld [vmem:[%s1 + $0x30] sm:$0xf]
      %v220 = vld [vmem:[%s1 + $0x34] sm:$0xf]
      %v221 = vld [vmem:[%s1 + $0x38] sm:$0xf]
      %v222 = vld [vmem:[%s1 + $0x3c] sm:$0xf]
      %s223 = scalar_lea.vmem %s192, 72
      %v224 = vld [vmem:[%s223] sm:$0xf]
      %v225 = vld [vmem:[%s223 + $0x8] sm:$0xf]
      %v226 = vld [vmem:[%s223 + $0x10] sm:$0xf]
      %v227 = vld [vmem:[%s223 + $0x18] sm:$0xf]
      %v228 = vld [vmem:[%s223 + $0x20] sm:$0xf]
      %v229 = vld [vmem:[%s223 + $0x28] sm:$0xf]
      %v230 = vld [vmem:[%s223 + $0x30] sm:$0xf]
      %v231 = vld [vmem:[%s223 + $0x38] sm:$0xf]
      %s232 = scalar_lea.vmem %s1, 64
      %v233 = vld [vmem:[%s232] sm:$0xf]
      %v234 = vld [vmem:[%s232 + $0x4] sm:$0xf]
      %v235 = vld [vmem:[%s232 + $0x8] sm:$0xf]
      %v236 = vld [vmem:[%s232 + $0xc] sm:$0xf]
      %v237 = vld [vmem:[%s232 + $0x10] sm:$0xf]
      %v238 = vld [vmem:[%s232 + $0x14] sm:$0xf]
      %v239 = vld [vmem:[%s232 + $0x18] sm:$0xf]
      %v240 = vld [vmem:[%s232 + $0x1c] sm:$0xf]
      %v241 = vld [vmem:[%s232 + $0x20] sm:$0xf]
      %v242 = vld [vmem:[%s232 + $0x24] sm:$0xf]
      %v243 = vld [vmem:[%s232 + $0x28] sm:$0xf]
      %v244 = vld [vmem:[%s232 + $0x2c] sm:$0xf]
      %v245 = vld [vmem:[%s232 + $0x30] sm:$0xf]
      %v246 = vld [vmem:[%s232 + $0x34] sm:$0xf]
      %v247 = vld [vmem:[%s232 + $0x38] sm:$0xf]
      %v248 = vld [vmem:[%s232 + $0x3c] sm:$0xf]
      %v257 = vunpack.c.l.b16 %v224
      %v258 = vunpack.c.l.b16 %v225
      %v259 = vunpack.c.l.b16 %v226
      %v260 = vunpack.c.l.b16 %v227
      %v261 = vunpack.c.l.b16 %v228
      %v262 = vunpack.c.l.b16 %v229
      %v263 = vunpack.c.l.b16 %v230
      %v264 = vunpack.c.l.b16 %v231
      %v265 = vpack.c.b16 %v258, %v257
      %v266 = vpack.c.b16 %v260, %v259
      %v267 = vpack.c.b16 %v262, %v261
      %v268 = vpack.c.b16 %v264, %v263
      %v289 = vunpack.c.l.b16 %v233
      %v290 = vunpack.c.l.b16 %v234
      %v291 = vunpack.c.l.b16 %v235
      %v292 = vunpack.c.l.b16 %v236
      %v293 = vunpack.c.l.b16 %v237
      %v294 = vunpack.c.l.b16 %v238
      %v295 = vunpack.c.l.b16 %v239
      %v296 = vunpack.c.l.b16 %v240
      %v297 = vunpack.c.l.b16 %v241
      %v298 = vunpack.c.l.b16 %v242
      %v299 = vunpack.c.l.b16 %v243
      %v300 = vunpack.c.l.b16 %v244
      %v301 = vunpack.c.l.b16 %v245
      %v302 = vunpack.c.l.b16 %v246
      %v303 = vunpack.c.l.b16 %v247
      %v304 = vunpack.c.l.b16 %v248
      %v305 = vpack.c.b16 %v290, %v289
      %v306 = vpack.c.b16 %v292, %v291
      %v307 = vpack.c.b16 %v294, %v293
      %v308 = vpack.c.b16 %v296, %v295
      %v309 = vpack.c.b16 %v298, %v297
      %v310 = vpack.c.b16 %v300, %v299
      %v311 = vpack.c.b16 %v302, %v301
      %v312 = vpack.c.b16 %v304, %v303
      %321 = vmatprep.subr.bf16.mxu0 0
      %322 = vmatpush1.bf16.msra.mxu0 %v305
      %323 = vmatprep.subr.bf16.mxu0 0
      %324 = vmatpush1.bf16.msra.mxu0 %v306
      %325 = vmatprep.subr.bf16.mxu0 0
      %326 = vmatpush1.bf16.msra.mxu0 %v307
      %327 = vmatprep.subr.bf16.mxu0 0
      %328 = vmatpush1.bf16.msra.mxu0 %v308
      %329 = vmatprep.subr.bf16.mxu0 0
      %330 = vmatpush1.bf16.msra.mxu0 %v309
      %331 = vmatprep.subr.bf16.mxu0 0
      %332 = vmatpush1.bf16.msra.mxu0 %v310
      %333 = vmatprep.subr.bf16.mxu0 0
      %334 = vmatpush1.bf16.msra.mxu0 %v311
      %335 = vmatprep.subr.bf16.mxu0 0
      %336 = vmatpush1.bf16.msra.mxu0 %v312
      %337 = vmatprep.subr.bf16.mxu0 0
      %338 = vmatpush1.bf16.msra.mxu0 0
      %339 = vmatprep.subr.bf16.mxu0 0
      %340 = vmatpush1.bf16.msra.mxu0 0
      %341 = vmatprep.subr.bf16.mxu0 0
      %342 = vmatpush1.bf16.msra.mxu0 0
      %343 = vmatprep.subr.bf16.mxu0 0
      %344 = vmatpush1.bf16.msra.mxu0 0
      %345 = vmatprep.subr.bf16.mxu0 0
      %346 = vmatpush1.bf16.msra.mxu0 0
      %347 = vmatprep.subr.bf16.mxu0 0
      %348 = vmatpush1.bf16.msra.mxu0 0
      %349 = vmatprep.subr.bf16.mxu0 0
      %350 = vmatpush1.bf16.msra.mxu0 0
      %351 = vmatprep.subr.bf16.mxu0 0
      %352 = vmatpush1.bf16.msra.mxu0 0
      %353 = vmatprep.mubr.bf16.mxu0 0
      %354 = vmatmul.mubr.bf16.gmra.mrb[0].mxu0 %v265
      %v355 = vpop.f32.mrb[0].mxu0
      %v356 = vadd.f32 0.0, %v355
      %v357 = vpop.f32.mrb[0].mxu0
      %v358 = vpop.f32.mrb[0].mxu0
      %v359 = vadd.f32 0.0, %v358
      %v360 = vpop.f32.mrb[0].mxu0
      %361 = vmatprep.mubr.bf16.mxu0 0
      %362 = vmatmul.mubr.bf16.gmra.mrb[0].mxu0 %v266
      %v363 = vpop.f32.mrb[0].mxu0
      %v364 = vadd.f32 0.0, %v363
      %v365 = vpop.f32.mrb[0].mxu0
      %v366 = vpop.f32.mrb[0].mxu0
      %v367 = vadd.f32 0.0, %v366
      %v368 = vpop.f32.mrb[0].mxu0
      %369 = vmatprep.mubr.bf16.mxu0 0
      %370 = vmatmul.mubr.bf16.gmra.mrb[0].mxu0 %v267
      %v371 = vpop.f32.mrb[0].mxu0
      %v372 = vadd.f32 0.0, %v371
      %v373 = vpop.f32.mrb[0].mxu0
      %v374 = vpop.f32.mrb[0].mxu0
      %v375 = vadd.f32 0.0, %v374
      %v376 = vpop.f32.mrb[0].mxu0
      %377 = vmatprep.mubr.bf16.mxu0 0
      %378 = vmatmul.mubr.bf16.gmra.mrb[0].mxu0 %v268
      %v379 = vpop.f32.mrb[0].mxu0
      %v380 = vadd.f32 0.0, %v379
      %v381 = vpop.f32.mrb[0].mxu0
      %v382 = vpop.f32.mrb[0].mxu0
      %v383 = vadd.f32 0.0, %v382
      %v384 = vpop.f32.mrb[0].mxu0
      %385 = vdwg.mxu0
      %v394 = vunpack.c.l.b16 %v199
      %v395 = vunpack.c.l.b16 %v200
      %v396 = vunpack.c.l.b16 %v201
      %v397 = vunpack.c.l.b16 %v202
      %v398 = vunpack.c.l.b16 %v203
      %v399 = vunpack.c.l.b16 %v204
      %v400 = vunpack.c.l.b16 %v205
      %v401 = vunpack.c.l.b16 %v206
      %v402 = vpack.c.b16 %v395, %v394
      %v403 = vpack.c.b16 %v397, %v396
      %v404 = vpack.c.b16 %v399, %v398
      %v405 = vpack.c.b16 %v401, %v400
      %v426 = vunpack.c.l.b16 %v207
      %v427 = vunpack.c.l.b16 %v208
      %v428 = vunpack.c.l.b16 %v209
      %v429 = vunpack.c.l.b16 %v210
      %v430 = vunpack.c.l.b16 %v211
      %v431 = vunpack.c.l.b16 %v212
      %v432 = vunpack.c.l.b16 %v213
      %v433 = vunpack.c.l.b16 %v214
      %v434 = vunpack.c.l.b16 %v215
      %v435 = vunpack.c.l.b16 %v216
      %v436 = vunpack.c.l.b16 %v217
      %v437 = vunpack.c.l.b16 %v218
      %v438 = vunpack.c.l.b16 %v219
      %v439 = vunpack.c.l.b16 %v220
      %v440 = vunpack.c.l.b16 %v221
      %v441 = vunpack.c.l.b16 %v222
      %v442 = vpack.c.b16 %v427, %v426
      %v443 = vpack.c.b16 %v429, %v428
      %v444 = vpack.c.b16 %v431, %v430
      %v445 = vpack.c.b16 %v433, %v432
      %v446 = vpack.c.b16 %v435, %v434
      %v447 = vpack.c.b16 %v437, %v436
      %v448 = vpack.c.b16 %v439, %v438
      %v449 = vpack.c.b16 %v441, %v440
      %458 = vmatprep.subr.bf16.mxu0 0
      %459 = vmatpush1.bf16.msra.mxu0 %v442
      %460 = vmatprep.subr.bf16.mxu0 0
      %461 = vmatpush1.bf16.msra.mxu0 %v443
      %462 = vmatprep.subr.bf16.mxu0 0
      %463 = vmatpush1.bf16.msra.mxu0 %v444
      %464 = vmatprep.subr.bf16.mxu0 0
      %465 = vmatpush1.bf16.msra.mxu0 %v445
      %466 = vmatprep.subr.bf16.mxu0 0
      %467 = vmatpush1.bf16.msra.mxu0 %v446
      %468 = vmatprep.subr.bf16.mxu0 0
      %469 = vmatpush1.bf16.msra.mxu0 %v447
      %470 = vmatprep.subr.bf16.mxu0 0
      %471 = vmatpush1.bf16.msra.mxu0 %v448
      %472 = vmatprep.subr.bf16.mxu0 0
      %473 = vmatpush1.bf16.msra.mxu0 %v449
      %474 = vmatprep.subr.bf16.mxu0 0
      %475 = vmatpush1.bf16.msra.mxu0 0
      %476 = vmatprep.subr.bf16.mxu0 0
      %477 = vmatpush1.bf16.msra.mxu0 0
      %478 = vmatprep.subr.bf16.mxu0 0
      %479 = vmatpush1.bf16.msra.mxu0 0
      %480 = vmatprep.subr.bf16.mxu0 0
      %481 = vmatpush1.bf16.msra.mxu0 0
      %482 = vmatprep.subr.bf16.mxu0 0
      %483 = vmatpush1.bf16.msra.mxu0 0
      %484 = vmatprep.subr.bf16.mxu0 0
      %485 = vmatpush1.bf16.msra.mxu0 0
      %486 = vmatprep.subr.bf16.mxu0 0
      %487 = vmatpush1.bf16.msra.mxu0 0
      %488 = vmatprep.subr.bf16.mxu0 0
      %489 = vmatpush1.bf16.msra.mxu0 0
      %490 = vmatprep.mubr.bf16.mxu0 0
      %491 = vmatmul.mubr.bf16.gmra.mrb[0].mxu0 %v402
      %v492 = vpop.f32.mrb[0].mxu0
      %v493 = vadd.f32 %v356, %v492
      %v494 = vpop.f32.mrb[0].mxu0
      %v495 = vpop.f32.mrb[0].mxu0
      %v496 = vadd.f32 %v359, %v495
      %v497 = vpop.f32.mrb[0].mxu0
      %498 = vmatprep.mubr.bf16.mxu0 0
      %499 = vmatmul.mubr.bf16.gmra.mrb[0].mxu0 %v403
      %v500 = vpop.f32.mrb[0].mxu0
      %v501 = vadd.f32 %v364, %v500
      %v502 = vpop.f32.mrb[0].mxu0
      %v503 = vpop.f32.mrb[0].mxu0
      %v504 = vadd.f32 %v367, %v503
      %v505 = vpop.f32.mrb[0].mxu0
      %506 = vmatprep.mubr.bf16.mxu0 0
      %507 = vmatmul.mubr.bf16.gmra.mrb[0].mxu0 %v404
      %v508 = vpop.f32.mrb[0].mxu0
      %v509 = vadd.f32 %v372, %v508
      %v510 = vpop.f32.mrb[0].mxu0
      %v511 = vpop.f32.mrb[0].mxu0
      %v512 = vadd.f32 %v375, %v511
      %v513 = vpop.f32.mrb[0].mxu0
      %514 = vmatprep.mubr.bf16.mxu0 0
      %515 = vmatmul.mubr.bf16.gmra.mrb[0].mxu0 %v405
      %v516 = vpop.f32.mrb[0].mxu0
      %v517 = vadd.f32 %v380, %v516
      %v518 = vpop.f32.mrb[0].mxu0
      %v519 = vpop.f32.mrb[0].mxu0
      %v520 = vadd.f32 %v383, %v519
      %v521 = vpop.f32.mrb[0].mxu0
      %522 = vdwg.mxu0
      %v523 = vld [vmem:[%s192] sm:$0xf]
      %v524 = vld [vmem:[%s192 + $0x4] sm:$0x1]
      %v525 = vld [vmem:[%s192 + $0x8] sm:$0xf]
      %v526 = vld [vmem:[%s192 + $0xc] sm:$0x1]
      %v527 = vld [vmem:[%s192 + $0x10] sm:$0xf]
      %v528 = vld [vmem:[%s192 + $0x14] sm:$0x1]
      %v529 = vld [vmem:[%s192 + $0x18] sm:$0xf]
      %v530 = vld [vmem:[%s192 + $0x1c] sm:$0x1]
      %v531 = vld [vmem:[%s192 + $0x20] sm:$0xf]
      %v532 = vld [vmem:[%s192 + $0x24] sm:$0x1]
      %v533 = vld [vmem:[%s192 + $0x28] sm:$0xf]
      %v534 = vld [vmem:[%s192 + $0x2c] sm:$0x1]
      %v535 = vld [vmem:[%s192 + $0x30] sm:$0xf]
      %v536 = vld [vmem:[%s192 + $0x34] sm:$0x1]
      %v537 = vld [vmem:[%s192 + $0x38] sm:$0xf]
      %v538 = vld [vmem:[%s192 + $0x3c] sm:$0x1]
      %vm539 = vsmask.f32 3328
      %vm540 = vsmask.f32 7440
      %vm541 = vmor %vm539, %vm540
      %v543 = vshrl.u32 %v523, 16
      %v545 = vrot.slane %v543, 4
      %v546 = vshll.u32 %v523, 16
      %v548 = vrot.slane %v546, 5
      %v549 = vor.u32 %v545, %v548
      %v550 = vrot.slane %v549, 4
      %v552 = vshll.u32 %v524, 16
      %v554 = vrot.slane %v552, 5
      %v555 = vsel %vm541, %v550, %v554
      %v557 = vshrl.u32 %v525, 16
      %v559 = vrot.slane %v557, 4
      %v560 = vshll.u32 %v525, 16
      %v562 = vrot.slane %v560, 5
      %v563 = vor.u32 %v559, %v562
      %v564 = vrot.slane %v563, 4
      %v566 = vshll.u32 %v526, 16
      %v568 = vrot.slane %v566, 5
      %v569 = vsel %vm541, %v564, %v568
      %v571 = vshrl.u32 %v527, 16
      %v573 = vrot.slane %v571, 4
      %v574 = vshll.u32 %v527, 16
      %v576 = vrot.slane %v574, 5
      %v577 = vor.u32 %v573, %v576
      %v578 = vrot.slane %v577, 4
      %v580 = vshll.u32 %v528, 16
      %v582 = vrot.slane %v580, 5
      %v583 = vsel %vm541, %v578, %v582
      %v585 = vshrl.u32 %v529, 16
      %v587 = vrot.slane %v585, 4
      %v588 = vshll.u32 %v529, 16
      %v590 = vrot.slane %v588, 5
      %v591 = vor.u32 %v587, %v590
      %v592 = vrot.slane %v591, 4
      %v594 = vshll.u32 %v530, 16
      %v596 = vrot.slane %v594, 5
      %v597 = vsel %vm541, %v592, %v596
      %v599 = vshrl.u32 %v531, 16
      %v601 = vrot.slane %v599, 4
      %v602 = vshll.u32 %v531, 16
      %v604 = vrot.slane %v602, 5
      %v605 = vor.u32 %v601, %v604
      %v606 = vrot.slane %v605, 4
      %v608 = vshll.u32 %v532, 16
      %v610 = vrot.slane %v608, 5
      %v611 = vsel %vm541, %v606, %v610
      %v613 = vshrl.u32 %v533, 16
      %v615 = vrot.slane %v613, 4
      %v616 = vshll.u32 %v533, 16
      %v618 = vrot.slane %v616, 5
      %v619 = vor.u32 %v615, %v618
      %v620 = vrot.slane %v619, 4
      %v622 = vshll.u32 %v534, 16
      %v624 = vrot.slane %v622, 5
      %v625 = vsel %vm541, %v620, %v624
      %v627 = vshrl.u32 %v535, 16
      %v629 = vrot.slane %v627, 4
      %v630 = vshll.u32 %v535, 16
      %v632 = vrot.slane %v630, 5
      %v633 = vor.u32 %v629, %v632
      %v634 = vrot.slane %v633, 4
      %v636 = vshll.u32 %v536, 16
      %v638 = vrot.slane %v636, 5
      %v639 = vsel %vm541, %v634, %v638
      %v641 = vshrl.u32 %v537, 16
      %v643 = vrot.slane %v641, 4
      %v644 = vshll.u32 %v537, 16
      %v646 = vrot.slane %v644, 5
      %v647 = vor.u32 %v643, %v646
      %v648 = vrot.slane %v647, 4
      %v650 = vshll.u32 %v538, 16
      %v652 = vrot.slane %v650, 5
      %v653 = vsel %vm541, %v648, %v652
      %s654 = scalar_lea.vmem %s1, 128
      %v655 = vld [vmem:[%s654] sm:$0xf]
      %v656 = vld [vmem:[%s654 + $0x4] sm:$0xf]
      %v657 = vld [vmem:[%s654 + $0x8] sm:$0xf]
      %v658 = vld [vmem:[%s654 + $0xc] sm:$0xf]
      %v659 = vld [vmem:[%s654 + $0x10] sm:$0xf]
      %v660 = vld [vmem:[%s654 + $0x14] sm:$0xf]
      %v661 = vld [vmem:[%s654 + $0x18] sm:$0xf]
      %v662 = vld [vmem:[%s654 + $0x1c] sm:$0xf]
      %v663 = vld [vmem:[%s654 + $0x20] sm:$0xf]
      %v664 = vld [vmem:[%s654 + $0x24] sm:$0xf]
      %v665 = vld [vmem:[%s654 + $0x28] sm:$0xf]
      %v666 = vld [vmem:[%s654 + $0x2c] sm:$0xf]
      %v667 = vld [vmem:[%s654 + $0x30] sm:$0xf]
      %v668 = vld [vmem:[%s654 + $0x34] sm:$0xf]
      %v669 = vld [vmem:[%s654 + $0x38] sm:$0xf]
      %v670 = vld [vmem:[%s654 + $0x3c] sm:$0xf]
      %v671 = vunpack.c.l.b16 %v555
      %v672 = vunpack.c.l.b16 %v569
      %v673 = vunpack.c.l.b16 %v583
      %v674 = vunpack.c.l.b16 %v597
      %v675 = vunpack.c.l.b16 %v611
      %v676 = vunpack.c.l.b16 %v625
      %v677 = vunpack.c.l.b16 %v639
      %v678 = vunpack.c.l.b16 %v653
      %v679 = vpack.c.b16 %v672, %v671
      %v680 = vpack.c.b16 %v674, %v673
      %v681 = vpack.c.b16 %v676, %v675
      %v682 = vpack.c.b16 %v678, %v677
      %v703 = vunpack.c.l.b16 %v655
      %v704 = vunpack.c.l.b16 %v656
      %v705 = vunpack.c.l.b16 %v657
      %v706 = vunpack.c.l.b16 %v658
      %v707 = vunpack.c.l.b16 %v659
      %v708 = vunpack.c.l.b16 %v660
      %v709 = vunpack.c.l.b16 %v661
      %v710 = vunpack.c.l.b16 %v662
      %v711 = vunpack.c.l.b16 %v663
      %v712 = vunpack.c.l.b16 %v664
      %v713 = vunpack.c.l.b16 %v665
      %v714 = vunpack.c.l.b16 %v666
      %v715 = vunpack.c.l.b16 %v667
      %v716 = vunpack.c.l.b16 %v668
      %v717 = vunpack.c.l.b16 %v669
      %v718 = vunpack.c.l.b16 %v670
      %v719 = vpack.c.b16 %v704, %v703
      %v720 = vpack.c.b16 %v706, %v705
      %v721 = vpack.c.b16 %v708, %v707
      %v722 = vpack.c.b16 %v710, %v709
      %v723 = vpack.c.b16 %v712, %v711
      %v724 = vpack.c.b16 %v714, %v713
      %v725 = vpack.c.b16 %v716, %v715
      %v726 = vpack.c.b16 %v718, %v717
      %735 = vmatprep.subr.bf16.mxu0 0
      %736 = vmatpush1.bf16.msra.mxu0 %v719
      %737 = vmatprep.subr.bf16.mxu0 0
      %738 = vmatpush1.bf16.msra.mxu0 %v720
      %739 = vmatprep.subr.bf16.mxu0 0
      %740 = vmatpush1.bf16.msra.mxu0 %v721
      %741 = vmatprep.subr.bf16.mxu0 0
      %742 = vmatpush1.bf16.msra.mxu0 %v722
      %743 = vmatprep.subr.bf16.mxu0 0
      %744 = vmatpush1.bf16.msra.mxu0 %v723
      %745 = vmatprep.subr.bf16.mxu0 0
      %746 = vmatpush1.bf16.msra.mxu0 %v724
      %747 = vmatprep.subr.bf16.mxu0 0
      %748 = vmatpush1.bf16.msra.mxu0 %v725
      %749 = vmatprep.subr.bf16.mxu0 0
      %750 = vmatpush1.bf16.msra.mxu0 %v726
      %751 = vmatprep.subr.bf16.mxu0 0
      %752 = vmatpush1.bf16.msra.mxu0 0
      %753 = vmatprep.subr.bf16.mxu0 0
      %754 = vmatpush1.bf16.msra.mxu0 0
      %755 = vmatprep.subr.bf16.mxu0 0
      %756 = vmatpush1.bf16.msra.mxu0 0
      %757 = vmatprep.subr.bf16.mxu0 0
      %758 = vmatpush1.bf16.msra.mxu0 0
      %759 = vmatprep.subr.bf16.mxu0 0
      %760 = vmatpush1.bf16.msra.mxu0 0
      %761 = vmatprep.subr.bf16.mxu0 0
      %762 = vmatpush1.bf16.msra.mxu0 0
      %763 = vmatprep.subr.bf16.mxu0 0
      %764 = vmatpush1.bf16.msra.mxu0 0
      %765 = vmatprep.subr.bf16.mxu0 0
      %766 = vmatpush1.bf16.msra.mxu0 0
      %767 = vmatprep.mubr.bf16.mxu0 0
      %768 = vmatmul.mubr.bf16.gmra.mrb[0].mxu0 %v679
      %v769 = vpop.f32.mrb[0].mxu0
      %v770 = vadd.f32 0.0, %v769
      %v771 = vpop.f32.mrb[0].mxu0
      %v772 = vpop.f32.mrb[0].mxu0
      %v773 = vadd.f32 0.0, %v772
      %v774 = vpop.f32.mrb[0].mxu0
      %775 = vmatprep.mubr.bf16.mxu0 0
      %776 = vmatmul.mubr.bf16.gmra.mrb[0].mxu0 %v680
      %v777 = vpop.f32.mrb[0].mxu0
      %v778 = vadd.f32 0.0, %v777
      %v779 = vpop.f32.mrb[0].mxu0
      %v780 = vpop.f32.mrb[0].mxu0
      %v781 = vadd.f32 0.0, %v780
      %v782 = vpop.f32.mrb[0].mxu0
      %783 = vmatprep.mubr.bf16.mxu0 0
      %784 = vmatmul.mubr.bf16.gmra.mrb[0].mxu0 %v681
      %v785 = vpop.f32.mrb[0].mxu0
      %v786 = vadd.f32 0.0, %v785
      %v787 = vpop.f32.mrb[0].mxu0
      %v788 = vpop.f32.mrb[0].mxu0
      %v789 = vadd.f32 0.0, %v788
      %v790 = vpop.f32.mrb[0].mxu0
      %791 = vmatprep.mubr.bf16.mxu0 0
      %792 = vmatmul.mubr.bf16.gmra.mrb[0].mxu0 %v682
      %v793 = vpop.f32.mrb[0].mxu0
      %v794 = vadd.f32 0.0, %v793
      %v795 = vpop.f32.mrb[0].mxu0
      %v796 = vpop.f32.mrb[0].mxu0
      %v797 = vadd.f32 0.0, %v796
      %v798 = vpop.f32.mrb[0].mxu0
      %799 = vdwg.mxu0
      %v800 = vadd.f32 %v493, %v770
      %v801 = vadd.f32 %v496, %v773
      %v802 = vadd.f32 %v501, %v778
      %v803 = vadd.f32 %v504, %v781
      %v804 = vadd.f32 %v509, %v786
      %v805 = vadd.f32 %v512, %v789
      %v806 = vadd.f32 %v517, %v794
      %v807 = vadd.f32 %v520, %v797
      %s808 = scalar_lea.vmem %s192, 144
      %v809 = vld [vmem:[%s808] sm:$0xf]
      %v810 = vld [vmem:[%s808 + $0x8] sm:$0xf]
      %v811 = vld [vmem:[%s808 + $0x10] sm:$0xf]
      %v812 = vld [vmem:[%s808 + $0x18] sm:$0xf]
      %v813 = vld [vmem:[%s808 + $0x20] sm:$0xf]
      %v814 = vld [vmem:[%s808 + $0x28] sm:$0xf]
      %v815 = vld [vmem:[%s808 + $0x30] sm:$0xf]
      %v816 = vld [vmem:[%s808 + $0x38] sm:$0xf]
      %s817 = scalar_lea.vmem %s1, 192
      %v818 = vld [vmem:[%s817] sm:$0xf]
      %v819 = vld [vmem:[%s817 + $0x4] sm:$0xf]
      %v820 = vld [vmem:[%s817 + $0x8] sm:$0xf]
      %v821 = vld [vmem:[%s817 + $0xc] sm:$0xf]
      %v822 = vld [vmem:[%s817 + $0x10] sm:$0xf]
      %v823 = vld [vmem:[%s817 + $0x14] sm:$0xf]
      %v824 = vld [vmem:[%s817 + $0x18] sm:$0xf]
      %v825 = vld [vmem:[%s817 + $0x1c] sm:$0xf]
      %v826 = vld [vmem:[%s817 + $0x20] sm:$0xf]
      %v827 = vld [vmem:[%s817 + $0x24] sm:$0xf]
      %v828 = vld [vmem:[%s817 + $0x28] sm:$0xf]
      %v829 = vld [vmem:[%s817 + $0x2c] sm:$0xf]
      %v830 = vld [vmem:[%s817 + $0x30] sm:$0xf]
      %v831 = vld [vmem:[%s817 + $0x34] sm:$0xf]
      %v832 = vld [vmem:[%s817 + $0x38] sm:$0xf]
      %v833 = vld [vmem:[%s817 + $0x3c] sm:$0xf]
      %v842 = vunpack.c.l.b16 %v809
      %v843 = vunpack.c.l.b16 %v810
      %v844 = vunpack.c.l.b16 %v811
      %v845 = vunpack.c.l.b16 %v812
      %v846 = vunpack.c.l.b16 %v813
      %v847 = vunpack.c.l.b16 %v814
      %v848 = vunpack.c.l.b16 %v815
      %v849 = vunpack.c.l.b16 %v816
      %v850 = vpack.c.b16 %v843, %v842
      %v851 = vpack.c.b16 %v845, %v844
      %v852 = vpack.c.b16 %v847, %v846
      %v853 = vpack.c.b16 %v849, %v848
      %v874 = vunpack.c.l.b16 %v818
      %v875 = vunpack.c.l.b16 %v819
      %v876 = vunpack.c.l.b16 %v820
      %v877 = vunpack.c.l.b16 %v821
      %v878 = vunpack.c.l.b16 %v822
      %v879 = vunpack.c.l.b16 %v823
      %v880 = vunpack.c.l.b16 %v824
      %v881 = vunpack.c.l.b16 %v825
      %v882 = vunpack.c.l.b16 %v826
      %v883 = vunpack.c.l.b16 %v827
      %v884 = vunpack.c.l.b16 %v828
      %v885 = vunpack.c.l.b16 %v829
      %v886 = vunpack.c.l.b16 %v830
      %v887 = vunpack.c.l.b16 %v831
      %v888 = vunpack.c.l.b16 %v832
      %v889 = vunpack.c.l.b16 %v833
      %v890 = vpack.c.b16 %v875, %v874
      %v891 = vpack.c.b16 %v877, %v876
      %v892 = vpack.c.b16 %v879, %v878
      %v893 = vpack.c.b16 %v881, %v880
      %v894 = vpack.c.b16 %v883, %v882
      %v895 = vpack.c.b16 %v885, %v884
      %v896 = vpack.c.b16 %v887, %v886
      %v897 = vpack.c.b16 %v889, %v888
      %906 = vmatprep.subr.bf16.mxu0 0
      %907 = vmatpush1.bf16.msra.mxu0 %v890
      %908 = vmatprep.subr.bf16.mxu0 0
      %909 = vmatpush1.bf16.msra.mxu0 %v891
      %910 = vmatprep.subr.bf16.mxu0 0
      %911 = vmatpush1.bf16.msra.mxu0 %v892
      %912 = vmatprep.subr.bf16.mxu0 0
      %913 = vmatpush1.bf16.msra.mxu0 %v893
      %914 = vmatprep.subr.bf16.mxu0 0
      %915 = vmatpush1.bf16.msra.mxu0 %v894
      %916 = vmatprep.subr.bf16.mxu0 0
      %917 = vmatpush1.bf16.msra.mxu0 %v895
      %918 = vmatprep.subr.bf16.mxu0 0
      %919 = vmatpush1.bf16.msra.mxu0 %v896
      %920 = vmatprep.subr.bf16.mxu0 0
      %921 = vmatpush1.bf16.msra.mxu0 %v897
      %922 = vmatprep.subr.bf16.mxu0 0
      %923 = vmatpush1.bf16.msra.mxu0 0
      %924 = vmatprep.subr.bf16.mxu0 0
      %925 = vmatpush1.bf16.msra.mxu0 0
      %926 = vmatprep.subr.bf16.mxu0 0
      %927 = vmatpush1.bf16.msra.mxu0 0
      %928 = vmatprep.subr.bf16.mxu0 0
      %929 = vmatpush1.bf16.msra.mxu0 0
      %930 = vmatprep.subr.bf16.mxu0 0
      %931 = vmatpush1.bf16.msra.mxu0 0
      %932 = vmatprep.subr.bf16.mxu0 0
      %933 = vmatpush1.bf16.msra.mxu0 0
      %934 = vmatprep.subr.bf16.mxu0 0
      %935 = vmatpush1.bf16.msra.mxu0 0
      %936 = vmatprep.subr.bf16.mxu0 0
      %937 = vmatpush1.bf16.msra.mxu0 0
      %938 = vmatprep.mubr.bf16.mxu0 0
      %939 = vmatmul.mubr.bf16.gmra.mrb[0].mxu0 %v850
      %v940 = vpop.f32.mrb[0].mxu0
      %v941 = vadd.f32 0.0, %v940
      %v942 = vpop.f32.mrb[0].mxu0
      %v943 = vpop.f32.mrb[0].mxu0
      %v944 = vadd.f32 0.0, %v943
      %v945 = vpop.f32.mrb[0].mxu0
      %946 = vmatprep.mubr.bf16.mxu0 0
      %947 = vmatmul.mubr.bf16.gmra.mrb[0].mxu0 %v851
      %v948 = vpop.f32.mrb[0].mxu0
      %v949 = vadd.f32 0.0, %v948
      %v950 = vpop.f32.mrb[0].mxu0
      %v951 = vpop.f32.mrb[0].mxu0
      %v952 = vadd.f32 0.0, %v951
      %v953 = vpop.f32.mrb[0].mxu0
      %954 = vmatprep.mubr.bf16.mxu0 0
      %955 = vmatmul.mubr.bf16.gmra.mrb[0].mxu0 %v852
      %v956 = vpop.f32.mrb[0].mxu0
      %v957 = vadd.f32 0.0, %v956
      %v958 = vpop.f32.mrb[0].mxu0
      %v959 = vpop.f32.mrb[0].mxu0
      %v960 = vadd.f32 0.0, %v959
      %v961 = vpop.f32.mrb[0].mxu0
      %962 = vmatprep.mubr.bf16.mxu0 0
      %963 = vmatmul.mubr.bf16.gmra.mrb[0].mxu0 %v853
      %v964 = vpop.f32.mrb[0].mxu0
      %v965 = vadd.f32 0.0, %v964
      %v966 = vpop.f32.mrb[0].mxu0
      %v967 = vpop.f32.mrb[0].mxu0
      %v968 = vadd.f32 0.0, %v967
      %v969 = vpop.f32.mrb[0].mxu0
      %970 = vdwg.mxu0
      %v971 = vadd.f32 %v800, %v941
      %v972 = vadd.f32 %v801, %v944
      %v973 = vadd.f32 %v802, %v949
      %v974 = vadd.f32 %v803, %v952
      %v975 = vadd.f32 %v804, %v957
      %v976 = vadd.f32 %v805, %v960
      %v977 = vadd.f32 %v806, %v965
      %v978 = vadd.f32 %v807, %v968
      %s979 = scalar_lea.vmem %s192, 216
      %v980 = vld [vmem:[%s979] sm:$0xf]
      %v981 = vld [vmem:[%s979 + $0x8] sm:$0xf]
      %v982 = vld [vmem:[%s979 + $0x10] sm:$0xf]
      %v983 = vld [vmem:[%s979 + $0x18] sm:$0xf]
      %v984 = vld [vmem:[%s979 + $0x20] sm:$0xf]
      %v985 = vld [vmem:[%s979 + $0x28] sm:$0xf]
      %v986 = vld [vmem:[%s979 + $0x30] sm:$0xf]
      %v987 = vld [vmem:[%s979 + $0x38] sm:$0xf]
      %s988 = scalar_lea.vmem %s1, 256
      %v989 = vld [vmem:[%s988] sm:$0xf]
      %v990 = vld [vmem:[%s988 + $0x4] sm:$0xf]
      %v991 = vld [vmem:[%s988 + $0x8] sm:$0xf]
      %v992 = vld [vmem:[%s988 + $0xc] sm:$0xf]
      %v993 = vld [vmem:[%s988 + $0x10] sm:$0xf]
      %v994 = vld [vmem:[%s988 + $0x14] sm:$0xf]
      %v995 = vld [vmem:[%s988 + $0x18] sm:$0xf]
      %v996 = vld [vmem:[%s988 + $0x1c] sm:$0xf]
      %v997 = vld [vmem:[%s988 + $0x20] sm:$0xf]
      %v998 = vld [vmem:[%s988 + $0x24] sm:$0xf]
      %v999 = vld [vmem:[%s988 + $0x28] sm:$0xf]
      %v1000 = vld [vmem:[%s988 + $0x2c] sm:$0xf]
      %v1001 = vld [vmem:[%s988 + $0x30] sm:$0xf]
      %v1002 = vld [vmem:[%s988 + $0x34] sm:$0xf]
      %v1003 = vld [vmem:[%s988 + $0x38] sm:$0xf]
      %v1004 = vld [vmem:[%s988 + $0x3c] sm:$0xf]
      %v1013 = vunpack.c.l.b16 %v980
      %v1014 = vunpack.c.l.b16 %v981
      %v1015 = vunpack.c.l.b16 %v982
      %v1016 = vunpack.c.l.b16 %v983
      %v1017 = vunpack.c.l.b16 %v984
      %v1018 = vunpack.c.l.b16 %v985
      %v1019 = vunpack.c.l.b16 %v986
      %v1020 = vunpack.c.l.b16 %v987
      %v1021 = vpack.c.b16 %v1014, %v1013
      %v1022 = vpack.c.b16 %v1016, %v1015
      %v1023 = vpack.c.b16 %v1018, %v1017
      %v1024 = vpack.c.b16 %v1020, %v1019
      %v1045 = vunpack.c.l.b16 %v989
      %v1046 = vunpack.c.l.b16 %v990
      %v1047 = vunpack.c.l.b16 %v991
      %v1048 = vunpack.c.l.b16 %v992
      %v1049 = vunpack.c.l.b16 %v993
      %v1050 = vunpack.c.l.b16 %v994
      %v1051 = vunpack.c.l.b16 %v995
      %v1052 = vunpack.c.l.b16 %v996
      %v1053 = vunpack.c.l.b16 %v997
      %v1054 = vunpack.c.l.b16 %v998
      %v1055 = vunpack.c.l.b16 %v999
      %v1056 = vunpack.c.l.b16 %v1000
      %v1057 = vunpack.c.l.b16 %v1001
      %v1058 = vunpack.c.l.b16 %v1002
      %v1059 = vunpack.c.l.b16 %v1003
      %v1060 = vunpack.c.l.b16 %v1004
      %v1061 = vpack.c.b16 %v1046, %v1045
      %v1062 = vpack.c.b16 %v1048, %v1047
      %v1063 = vpack.c.b16 %v1050, %v1049
      %v1064 = vpack.c.b16 %v1052, %v1051
      %v1065 = vpack.c.b16 %v1054, %v1053
      %v1066 = vpack.c.b16 %v1056, %v1055
      %v1067 = vpack.c.b16 %v1058, %v1057
      %v1068 = vpack.c.b16 %v1060, %v1059
      %1077 = vmatprep.subr.bf16.mxu0 0
      %1078 = vmatpush1.bf16.msra.mxu0 %v1061
      %1079 = vmatprep.subr.bf16.mxu0 0
      %1080 = vmatpush1.bf16.msra.mxu0 %v1062
      %1081 = vmatprep.subr.bf16.mxu0 0
      %1082 = vmatpush1.bf16.msra.mxu0 %v1063
      %1083 = vmatprep.subr.bf16.mxu0 0
      %1084 = vmatpush1.bf16.msra.mxu0 %v1064
      %1085 = vmatprep.subr.bf16.mxu0 0
      %1086 = vmatpush1.bf16.msra.mxu0 %v1065
      %1087 = vmatprep.subr.bf16.mxu0 0
      %1088 = vmatpush1.bf16.msra.mxu0 %v1066
      %1089 = vmatprep.subr.bf16.mxu0 0
      %1090 = vmatpush1.bf16.msra.mxu0 %v1067
      %1091 = vmatprep.subr.bf16.mxu0 0
      %1092 = vmatpush1.bf16.msra.mxu0 %v1068
      %1093 = vmatprep.subr.bf16.mxu0 0
      %1094 = vmatpush1.bf16.msra.mxu0 0
      %1095 = vmatprep.subr.bf16.mxu0 0
      %1096 = vmatpush1.bf16.msra.mxu0 0
      %1097 = vmatprep.subr.bf16.mxu0 0
      %1098 = vmatpush1.bf16.msra.mxu0 0
      %1099 = vmatprep.subr.bf16.mxu0 0
      %1100 = vmatpush1.bf16.msra.mxu0 0
      %1101 = vmatprep.subr.bf16.mxu0 0
      %1102 = vmatpush1.bf16.msra.mxu0 0
      %1103 = vmatprep.subr.bf16.mxu0 0
      %1104 = vmatpush1.bf16.msra.mxu0 0
      %1105 = vmatprep.subr.bf16.mxu0 0
      %1106 = vmatpush1.bf16.msra.mxu0 0
      %1107 = vmatprep.subr.bf16.mxu0 0
      %1108 = vmatpush1.bf16.msra.mxu0 0
      %1109 = vmatprep.mubr.bf16.mxu0 0
      %1110 = vmatmul.mubr.bf16.gmra.mrb[0].mxu0 %v1021
      %v1111 = vpop.f32.mrb[0].mxu0
      %v1112 = vadd.f32 0.0, %v1111
      %v1113 = vpop.f32.mrb[0].mxu0
      %v1114 = vpop.f32.mrb[0].mxu0
      %v1115 = vadd.f32 0.0, %v1114
      %v1116 = vpop.f32.mrb[0].mxu0
      %1117 = vmatprep.mubr.bf16.mxu0 0
      %1118 = vmatmul.mubr.bf16.gmra.mrb[0].mxu0 %v1022
      %v1119 = vpop.f32.mrb[0].mxu0
      %v1120 = vadd.f32 0.0, %v1119
      %v1121 = vpop.f32.mrb[0].mxu0
      %v1122 = vpop.f32.mrb[0].mxu0
      %v1123 = vadd.f32 0.0, %v1122
      %v1124 = vpop.f32.mrb[0].mxu0
      %1125 = vmatprep.mubr.bf16.mxu0 0
      %1126 = vmatmul.mubr.bf16.gmra.mrb[0].mxu0 %v1023
      %v1127 = vpop.f32.mrb[0].mxu0
      %v1128 = vadd.f32 0.0, %v1127
      %v1129 = vpop.f32.mrb[0].mxu0
      %v1130 = vpop.f32.mrb[0].mxu0
      %v1131 = vadd.f32 0.0, %v1130
      %v1132 = vpop.f32.mrb[0].mxu0
      %1133 = vmatprep.mubr.bf16.mxu0 0
      %1134 = vmatmul.mubr.bf16.gmra.mrb[0].mxu0 %v1024
      %v1135 = vpop.f32.mrb[0].mxu0
      %v1136 = vadd.f32 0.0, %v1135
      %v1137 = vpop.f32.mrb[0].mxu0
      %v1138 = vpop.f32.mrb[0].mxu0
      %v1139 = vadd.f32 0.0, %v1138
      %v1140 = vpop.f32.mrb[0].mxu0
      %1141 = vdwg.mxu0
      %v1142 = vadd.f32 %v971, %v1112
      %v1143 = vadd.f32 %v972, %v1115
      %v1144 = vadd.f32 %v973, %v1120
      %v1145 = vadd.f32 %v974, %v1123
      %v1146 = vadd.f32 %v975, %v1128
      %v1147 = vadd.f32 %v976, %v1131
      %v1148 = vadd.f32 %v977, %v1136
      %v1149 = vadd.f32 %v978, %v1139
      %v1150 = vld [vmem:[%s808] sm:$0xf]
      %v1151 = vld [vmem:[%s808 + $0x4] sm:$0x1]
      %v1152 = vld [vmem:[%s808 + $0x8] sm:$0xf]
      %v1153 = vld [vmem:[%s808 + $0xc] sm:$0x1]
      %v1154 = vld [vmem:[%s808 + $0x10] sm:$0xf]
      %v1155 = vld [vmem:[%s808 + $0x14] sm:$0x1]
      %v1156 = vld [vmem:[%s808 + $0x18] sm:$0xf]
      %v1157 = vld [vmem:[%s808 + $0x1c] sm:$0x1]
      %v1158 = vld [vmem:[%s808 + $0x20] sm:$0xf]
      %v1159 = vld [vmem:[%s808 + $0x24] sm:$0x1]
      %v1160 = vld [vmem:[%s808 + $0x28] sm:$0xf]
      %v1161 = vld [vmem:[%s808 + $0x2c] sm:$0x1]
      %v1162 = vld [vmem:[%s808 + $0x30] sm:$0xf]
      %v1163 = vld [vmem:[%s808 + $0x34] sm:$0x1]
      %v1164 = vld [vmem:[%s808 + $0x38] sm:$0xf]
      %v1165 = vld [vmem:[%s808 + $0x3c] sm:$0x1]
      %v1167 = vshrl.u32 %v1150, 16
      %v1169 = vrot.slane %v1167, 4
      %v1170 = vshll.u32 %v1150, 16
      %v1172 = vrot.slane %v1170, 5
      %v1173 = vor.u32 %v1169, %v1172
      %v1174 = vrot.slane %v1173, 4
      %v1176 = vshll.u32 %v1151, 16
      %v1178 = vrot.slane %v1176, 5
      %v1179 = vsel %vm541, %v1174, %v1178
      %v1181 = vshrl.u32 %v1152, 16
      %v1183 = vrot.slane %v1181, 4
      %v1184 = vshll.u32 %v1152, 16
      %v1186 = vrot.slane %v1184, 5
      %v1187 = vor.u32 %v1183, %v1186
      %v1188 = vrot.slane %v1187, 4
      %v1190 = vshll.u32 %v1153, 16
      %v1192 = vrot.slane %v1190, 5
      %v1193 = vsel %vm541, %v1188, %v1192
      %v1195 = vshrl.u32 %v1154, 16
      %v1197 = vrot.slane %v1195, 4
      %v1198 = vshll.u32 %v1154, 16
      %v1200 = vrot.slane %v1198, 5
      %v1201 = vor.u32 %v1197, %v1200
      %v1202 = vrot.slane %v1201, 4
      %v1204 = vshll.u32 %v1155, 16
      %v1206 = vrot.slane %v1204, 5
      %v1207 = vsel %vm541, %v1202, %v1206
      %v1209 = vshrl.u32 %v1156, 16
      %v1211 = vrot.slane %v1209, 4
      %v1212 = vshll.u32 %v1156, 16
      %v1214 = vrot.slane %v1212, 5
      %v1215 = vor.u32 %v1211, %v1214
      %v1216 = vrot.slane %v1215, 4
      %v1218 = vshll.u32 %v1157, 16
      %v1220 = vrot.slane %v1218, 5
      %v1221 = vsel %vm541, %v1216, %v1220
      %v1223 = vshrl.u32 %v1158, 16
      %v1225 = vrot.slane %v1223, 4
      %v1226 = vshll.u32 %v1158, 16
      %v1228 = vrot.slane %v1226, 5
      %v1229 = vor.u32 %v1225, %v1228
      %v1230 = vrot.slane %v1229, 4
      %v1232 = vshll.u32 %v1159, 16
      %v1234 = vrot.slane %v1232, 5
      %v1235 = vsel %vm541, %v1230, %v1234
      %v1237 = vshrl.u32 %v1160, 16
      %v1239 = vrot.slane %v1237, 4
      %v1240 = vshll.u32 %v1160, 16
      %v1242 = vrot.slane %v1240, 5
      %v1243 = vor.u32 %v1239, %v1242
      %v1244 = vrot.slane %v1243, 4
      %v1246 = vshll.u32 %v1161, 16
      %v1248 = vrot.slane %v1246, 5
      %v1249 = vsel %vm541, %v1244, %v1248
      %v1251 = vshrl.u32 %v1162, 16
      %v1253 = vrot.slane %v1251, 4
      %v1254 = vshll.u32 %v1162, 16
      %v1256 = vrot.slane %v1254, 5
      %v1257 = vor.u32 %v1253, %v1256
      %v1258 = vrot.slane %v1257, 4
      %v1260 = vshll.u32 %v1163, 16
      %v1262 = vrot.slane %v1260, 5
      %v1263 = vsel %vm541, %v1258, %v1262
      %v1265 = vshrl.u32 %v1164, 16
      %v1267 = vrot.slane %v1265, 4
      %v1268 = vshll.u32 %v1164, 16
      %v1270 = vrot.slane %v1268, 5
      %v1271 = vor.u32 %v1267, %v1270
      %v1272 = vrot.slane %v1271, 4
      %v1274 = vshll.u32 %v1165, 16
      %v1276 = vrot.slane %v1274, 5
      %v1277 = vsel %vm541, %v1272, %v1276
      %s1278 = scalar_lea.vmem %s1, 320
      %v1279 = vld [vmem:[%s1278] sm:$0xf]
      %v1280 = vld [vmem:[%s1278 + $0x4] sm:$0xf]
      %v1281 = vld [vmem:[%s1278 + $0x8] sm:$0xf]
      %v1282 = vld [vmem:[%s1278 + $0xc] sm:$0xf]
      %v1283 = vld [vmem:[%s1278 + $0x10] sm:$0xf]
      %v1284 = vld [vmem:[%s1278 + $0x14] sm:$0xf]
      %v1285 = vld [vmem:[%s1278 + $0x18] sm:$0xf]
      %v1286 = vld [vmem:[%s1278 + $0x1c] sm:$0xf]
      %v1287 = vld [vmem:[%s1278 + $0x20] sm:$0xf]
      %v1288 = vld [vmem:[%s1278 + $0x24] sm:$0xf]
      %v1289 = vld [vmem:[%s1278 + $0x28] sm:$0xf]
      %v1290 = vld [vmem:[%s1278 + $0x2c] sm:$0xf]
      %v1291 = vld [vmem:[%s1278 + $0x30] sm:$0xf]
      %v1292 = vld [vmem:[%s1278 + $0x34] sm:$0xf]
      %v1293 = vld [vmem:[%s1278 + $0x38] sm:$0xf]
      %v1294 = vld [vmem:[%s1278 + $0x3c] sm:$0xf]
      %v1295 = vunpack.c.l.b16 %v1179
      %v1296 = vunpack.c.l.b16 %v1193
      %v1297 = vunpack.c.l.b16 %v1207
      %v1298 = vunpack.c.l.b16 %v1221
      %v1299 = vunpack.c.l.b16 %v1235
      %v1300 = vunpack.c.l.b16 %v1249
      %v1301 = vunpack.c.l.b16 %v1263
      %v1302 = vunpack.c.l.b16 %v1277
      %v1303 = vpack.c.b16 %v1296, %v1295
      %v1304 = vpack.c.b16 %v1298, %v1297
      %v1305 = vpack.c.b16 %v1300, %v1299
      %v1306 = vpack.c.b16 %v1302, %v1301
      %v1327 = vunpack.c.l.b16 %v1279
      %v1328 = vunpack.c.l.b16 %v1280
      %v1329 = vunpack.c.l.b16 %v1281
      %v1330 = vunpack.c.l.b16 %v1282
      %v1331 = vunpack.c.l.b16 %v1283
      %v1332 = vunpack.c.l.b16 %v1284
      %v1333 = vunpack.c.l.b16 %v1285
      %v1334 = vunpack.c.l.b16 %v1286
      %v1335 = vunpack.c.l.b16 %v1287
      %v1336 = vunpack.c.l.b16 %v1288
      %v1337 = vunpack.c.l.b16 %v1289
      %v1338 = vunpack.c.l.b16 %v1290
      %v1339 = vunpack.c.l.b16 %v1291
      %v1340 = vunpack.c.l.b16 %v1292
      %v1341 = vunpack.c.l.b16 %v1293
      %v1342 = vunpack.c.l.b16 %v1294
      %v1343 = vpack.c.b16 %v1328, %v1327
      %v1344 = vpack.c.b16 %v1330, %v1329
      %v1345 = vpack.c.b16 %v1332, %v1331
      %v1346 = vpack.c.b16 %v1334, %v1333
      %v1347 = vpack.c.b16 %v1336, %v1335
      %v1348 = vpack.c.b16 %v1338, %v1337
      %v1349 = vpack.c.b16 %v1340, %v1339
      %v1350 = vpack.c.b16 %v1342, %v1341
      %1359 = vmatprep.subr.bf16.mxu0 0
      %1360 = vmatpush1.bf16.msra.mxu0 %v1343
      %1361 = vmatprep.subr.bf16.mxu0 0
      %1362 = vmatpush1.bf16.msra.mxu0 %v1344
      %1363 = vmatprep.subr.bf16.mxu0 0
      %1364 = vmatpush1.bf16.msra.mxu0 %v1345
      %1365 = vmatprep.subr.bf16.mxu0 0
      %1366 = vmatpush1.bf16.msra.mxu0 %v1346
      %1367 = vmatprep.subr.bf16.mxu0 0
      %1368 = vmatpush1.bf16.msra.mxu0 %v1347
      %1369 = vmatprep.subr.bf16.mxu0 0
      %1370 = vmatpush1.bf16.msra.mxu0 %v1348
      %1371 = vmatprep.subr.bf16.mxu0 0
      %1372 = vmatpush1.bf16.msra.mxu0 %v1349
      %1373 = vmatprep.subr.bf16.mxu0 0
      %1374 = vmatpush1.bf16.msra.mxu0 %v1350
      %1375 = vmatprep.subr.bf16.mxu0 0
      %1376 = vmatpush1.bf16.msra.mxu0 0
      %1377 = vmatprep.subr.bf16.mxu0 0
      %1378 = vmatpush1.bf16.msra.mxu0 0
      %1379 = vmatprep.subr.bf16.mxu0 0
      %1380 = vmatpush1.bf16.msra.mxu0 0
      %1381 = vmatprep.subr.bf16.mxu0 0
      %1382 = vmatpush1.bf16.msra.mxu0 0
      %1383 = vmatprep.subr.bf16.mxu0 0
      %1384 = vmatpush1.bf16.msra.mxu0 0
      %1385 = vmatprep.subr.bf16.mxu0 0
      %1386 = vmatpush1.bf16.msra.mxu0 0
      %1387 = vmatprep.subr.bf16.mxu0 0
      %1388 = vmatpush1.bf16.msra.mxu0 0
      %1389 = vmatprep.subr.bf16.mxu0 0
      %1390 = vmatpush1.bf16.msra.mxu0 0
      %1391 = vmatprep.mubr.bf16.mxu0 0
      %1392 = vmatmul.mubr.bf16.gmra.mrb[0].mxu0 %v1303
      %v1393 = vpop.f32.mrb[0].mxu0
      %v1394 = vadd.f32 0.0, %v1393
      %v1395 = vpop.f32.mrb[0].mxu0
      %v1396 = vpop.f32.mrb[0].mxu0
      %v1397 = vadd.f32 0.0, %v1396
      %v1398 = vpop.f32.mrb[0].mxu0
      %1399 = vmatprep.mubr.bf16.mxu0 0
      %1400 = vmatmul.mubr.bf16.gmra.mrb[0].mxu0 %v1304
      %v1401 = vpop.f32.mrb[0].mxu0
      %v1402 = vadd.f32 0.0, %v1401
      %v1403 = vpop.f32.mrb[0].mxu0
      %v1404 = vpop.f32.mrb[0].mxu0
      %v1405 = vadd.f32 0.0, %v1404
      %v1406 = vpop.f32.mrb[0].mxu0
      %1407 = vmatprep.mubr.bf16.mxu0 0
      %1408 = vmatmul.mubr.bf16.gmra.mrb[0].mxu0 %v1305
      %v1409 = vpop.f32.mrb[0].mxu0
      %v1410 = vadd.f32 0.0, %v1409
      %v1411 = vpop.f32.mrb[0].mxu0
      %v1412 = vpop.f32.mrb[0].mxu0
      %v1413 = vadd.f32 0.0, %v1412
      %v1414 = vpop.f32.mrb[0].mxu0
      %1415 = vmatprep.mubr.bf16.mxu0 0
      %1416 = vmatmul.mubr.bf16.gmra.mrb[0].mxu0 %v1306
      %v1417 = vpop.f32.mrb[0].mxu0
      %v1418 = vadd.f32 0.0, %v1417
      %v1419 = vpop.f32.mrb[0].mxu0
      %v1420 = vpop.f32.mrb[0].mxu0
      %v1421 = vadd.f32 0.0, %v1420
      %v1422 = vpop.f32.mrb[0].mxu0
      %1423 = vdwg.mxu0
      %v1424 = vadd.f32 %v1142, %v1394
      %v1425 = vadd.f32 %v1143, %v1397
      %v1426 = vadd.f32 %v1144, %v1402
      %v1427 = vadd.f32 %v1145, %v1405
      %v1428 = vadd.f32 %v1146, %v1410
      %v1429 = vadd.f32 %v1147, %v1413
      %v1430 = vadd.f32 %v1148, %v1418
      %v1431 = vadd.f32 %v1149, %v1421
      %s1432 = scalar_lea.vmem %s192, 8
      %v1433 = vld [vmem:[%s1432] sm:$0xf]
      %v1434 = vld [vmem:[%s1432 + $0x8] sm:$0xf]
      %v1435 = vld [vmem:[%s1432 + $0x10] sm:$0xf]
      %v1436 = vld [vmem:[%s1432 + $0x18] sm:$0xf]
      %v1437 = vld [vmem:[%s1432 + $0x20] sm:$0xf]
      %v1438 = vld [vmem:[%s1432 + $0x28] sm:$0xf]
      %v1439 = vld [vmem:[%s1432 + $0x30] sm:$0xf]
      %v1440 = vld [vmem:[%s1432 + $0x38] sm:$0xf]
      %s1441 = scalar_lea.vmem %s1, 384
      %v1442 = vld [vmem:[%s1441] sm:$0xf]
      %v1443 = vld [vmem:[%s1441 + $0x4] sm:$0xf]
      %v1444 = vld [vmem:[%s1441 + $0x8] sm:$0xf]
      %v1445 = vld [vmem:[%s1441 + $0xc] sm:$0xf]
      %v1446 = vld [vmem:[%s1441 + $0x10] sm:$0xf]
      %v1447 = vld [vmem:[%s1441 + $0x14] sm:$0xf]
      %v1448 = vld [vmem:[%s1441 + $0x18] sm:$0xf]
      %v1449 = vld [vmem:[%s1441 + $0x1c] sm:$0xf]
      %v1450 = vld [vmem:[%s1441 + $0x20] sm:$0xf]
      %v1451 = vld [vmem:[%s1441 + $0x24] sm:$0xf]
      %v1452 = vld [vmem:[%s1441 + $0x28] sm:$0xf]
      %v1453 = vld [vmem:[%s1441 + $0x2c] sm:$0xf]
      %v1454 = vld [vmem:[%s1441 + $0x30] sm:$0xf]
      %v1455 = vld [vmem:[%s1441 + $0x34] sm:$0xf]
      %v1456 = vld [vmem:[%s1441 + $0x38] sm:$0xf]
      %v1457 = vld [vmem:[%s1441 + $0x3c] sm:$0xf]
      %v1466 = vunpack.c.l.b16 %v1433
      %v1467 = vunpack.c.l.b16 %v1434
      %v1468 = vunpack.c.l.b16 %v1435
      %v1469 = vunpack.c.l.b16 %v1436
      %v1470 = vunpack.c.l.b16 %v1437
      %v1471 = vunpack.c.l.b16 %v1438
      %v1472 = vunpack.c.l.b16 %v1439
      %v1473 = vunpack.c.l.b16 %v1440
      %v1474 = vpack.c.b16 %v1467, %v1466
      %v1475 = vpack.c.b16 %v1469, %v1468
      %v1476 = vpack.c.b16 %v1471, %v1470
      %v1477 = vpack.c.b16 %v1473, %v1472
      %v1498 = vunpack.c.l.b16 %v1442
      %v1499 = vunpack.c.l.b16 %v1443
      %v1500 = vunpack.c.l.b16 %v1444
      %v1501 = vunpack.c.l.b16 %v1445
      %v1502 = vunpack.c.l.b16 %v1446
      %v1503 = vunpack.c.l.b16 %v1447
      %v1504 = vunpack.c.l.b16 %v1448
      %v1505 = vunpack.c.l.b16 %v1449
      %v1506 = vunpack.c.l.b16 %v1450
      %v1507 = vunpack.c.l.b16 %v1451
      %v1508 = vunpack.c.l.b16 %v1452
      %v1509 = vunpack.c.l.b16 %v1453
      %v1510 = vunpack.c.l.b16 %v1454
      %v1511 = vunpack.c.l.b16 %v1455
      %v1512 = vunpack.c.l.b16 %v1456
      %v1513 = vunpack.c.l.b16 %v1457
      %v1514 = vpack.c.b16 %v1499, %v1498
      %v1515 = vpack.c.b16 %v1501, %v1500
      %v1516 = vpack.c.b16 %v1503, %v1502
      %v1517 = vpack.c.b16 %v1505, %v1504
      %v1518 = vpack.c.b16 %v1507, %v1506
      %v1519 = vpack.c.b16 %v1509, %v1508
      %v1520 = vpack.c.b16 %v1511, %v1510
      %v1521 = vpack.c.b16 %v1513, %v1512
      %1530 = vmatprep.subr.bf16.mxu0 0
      %1531 = vmatpush1.bf16.msra.mxu0 %v1514
      %1532 = vmatprep.subr.bf16.mxu0 0
      %1533 = vmatpush1.bf16.msra.mxu0 %v1515
      %1534 = vmatprep.subr.bf16.mxu0 0
      %1535 = vmatpush1.bf16.msra.mxu0 %v1516
      %1536 = vmatprep.subr.bf16.mxu0 0
      %1537 = vmatpush1.bf16.msra.mxu0 %v1517
      %1538 = vmatprep.subr.bf16.mxu0 0
      %1539 = vmatpush1.bf16.msra.mxu0 %v1518
      %1540 = vmatprep.subr.bf16.mxu0 0
      %1541 = vmatpush1.bf16.msra.mxu0 %v1519
      %1542 = vmatprep.subr.bf16.mxu0 0
      %1543 = vmatpush1.bf16.msra.mxu0 %v1520
      %1544 = vmatprep.subr.bf16.mxu0 0
      %1545 = vmatpush1.bf16.msra.mxu0 %v1521
      %1546 = vmatprep.subr.bf16.mxu0 0
      %1547 = vmatpush1.bf16.msra.mxu0 0
      %1548 = vmatprep.subr.bf16.mxu0 0
      %1549 = vmatpush1.bf16.msra.mxu0 0
      %1550 = vmatprep.subr.bf16.mxu0 0
      %1551 = vmatpush1.bf16.msra.mxu0 0
      %1552 = vmatprep.subr.bf16.mxu0 0
      %1553 = vmatpush1.bf16.msra.mxu0 0
      %1554 = vmatprep.subr.bf16.mxu0 0
      %1555 = vmatpush1.bf16.msra.mxu0 0
      %1556 = vmatprep.subr.bf16.mxu0 0
      %1557 = vmatpush1.bf16.msra.mxu0 0
      %1558 = vmatprep.subr.bf16.mxu0 0
      %1559 = vmatpush1.bf16.msra.mxu0 0
      %1560 = vmatprep.subr.bf16.mxu0 0
      %1561 = vmatpush1.bf16.msra.mxu0 0
      %1562 = vmatprep.mubr.bf16.mxu0 0
      %1563 = vmatmul.mubr.bf16.gmra.mrb[0].mxu0 %v1474
      %v1564 = vpop.f32.mrb[0].mxu0
      %v1565 = vadd.f32 0.0, %v1564
      %v1566 = vpop.f32.mrb[0].mxu0
      %v1567 = vpop.f32.mrb[0].mxu0
      %v1568 = vadd.f32 0.0, %v1567
      %v1569 = vpop.f32.mrb[0].mxu0
      %1570 = vmatprep.mubr.bf16.mxu0 0
      %1571 = vmatmul.mubr.bf16.gmra.mrb[0].mxu0 %v1475
      %v1572 = vpop.f32.mrb[0].mxu0
      %v1573 = vadd.f32 0.0, %v1572
      %v1574 = vpop.f32.mrb[0].mxu0
      %v1575 = vpop.f32.mrb[0].mxu0
      %v1576 = vadd.f32 0.0, %v1575
      %v1577 = vpop.f32.mrb[0].mxu0
      %1578 = vmatprep.mubr.bf16.mxu0 0
      %1579 = vmatmul.mubr.bf16.gmra.mrb[0].mxu0 %v1476
      %v1580 = vpop.f32.mrb[0].mxu0
      %v1581 = vadd.f32 0.0, %v1580
      %v1582 = vpop.f32.mrb[0].mxu0
      %v1583 = vpop.f32.mrb[0].mxu0
      %v1584 = vadd.f32 0.0, %v1583
      %v1585 = vpop.f32.mrb[0].mxu0
      %1586 = vmatprep.mubr.bf16.mxu0 0
      %1587 = vmatmul.mubr.bf16.gmra.mrb[0].mxu0 %v1477
      %v1588 = vpop.f32.mrb[0].mxu0
      %v1589 = vadd.f32 0.0, %v1588
      %v1590 = vpop.f32.mrb[0].mxu0
      %v1591 = vpop.f32.mrb[0].mxu0
      %v1592 = vadd.f32 0.0, %v1591
      %v1593 = vpop.f32.mrb[0].mxu0
      %1594 = vdwg.mxu0
      %v1595 = vadd.f32 %v1424, %v1565
      %v1596 = vadd.f32 %v1425, %v1568
      %v1597 = vadd.f32 %v1426, %v1573
      %v1598 = vadd.f32 %v1427, %v1576
      %v1599 = vadd.f32 %v1428, %v1581
      %v1600 = vadd.f32 %v1429, %v1584
      %v1601 = vadd.f32 %v1430, %v1589
      %v1602 = vadd.f32 %v1431, %v1592
      %s1603 = scalar_lea.vmem %s192, 80
      %v1604 = vld [vmem:[%s1603] sm:$0xf]
      %v1605 = vld [vmem:[%s1603 + $0x8] sm:$0xf]
      %v1606 = vld [vmem:[%s1603 + $0x10] sm:$0xf]
      %v1607 = vld [vmem:[%s1603 + $0x18] sm:$0xf]
      %v1608 = vld [vmem:[%s1603 + $0x20] sm:$0xf]
      %v1609 = vld [vmem:[%s1603 + $0x28] sm:$0xf]
      %v1610 = vld [vmem:[%s1603 + $0x30] sm:$0xf]
      %v1611 = vld [vmem:[%s1603 + $0x38] sm:$0xf]
      %s1612 = scalar_lea.vmem %s1, 448
      %v1613 = vld [vmem:[%s1612] sm:$0xf]
      %v1614 = vld [vmem:[%s1612 + $0x4] sm:$0xf]
      %v1615 = vld [vmem:[%s1612 + $0x8] sm:$0xf]
      %v1616 = vld [vmem:[%s1612 + $0xc] sm:$0xf]
      %v1617 = vld [vmem:[%s1612 + $0x10] sm:$0xf]
      %v1618 = vld [vmem:[%s1612 + $0x14] sm:$0xf]
      %v1619 = vld [vmem:[%s1612 + $0x18] sm:$0xf]
      %v1620 = vld [vmem:[%s1612 + $0x1c] sm:$0xf]
      %v1621 = vld [vmem:[%s1612 + $0x20] sm:$0xf]
      %v1622 = vld [vmem:[%s1612 + $0x24] sm:$0xf]
      %v1623 = vld [vmem:[%s1612 + $0x28] sm:$0xf]
      %v1624 = vld [vmem:[%s1612 + $0x2c] sm:$0xf]
      %v1625 = vld [vmem:[%s1612 + $0x30] sm:$0xf]
      %v1626 = vld [vmem:[%s1612 + $0x34] sm:$0xf]
      %v1627 = vld [vmem:[%s1612 + $0x38] sm:$0xf]
      %v1628 = vld [vmem:[%s1612 + $0x3c] sm:$0xf]
      %v1637 = vunpack.c.l.b16 %v1604
      %v1638 = vunpack.c.l.b16 %v1605
      %v1639 = vunpack.c.l.b16 %v1606
      %v1640 = vunpack.c.l.b16 %v1607
      %v1641 = vunpack.c.l.b16 %v1608
      %v1642 = vunpack.c.l.b16 %v1609
      %v1643 = vunpack.c.l.b16 %v1610
      %v1644 = vunpack.c.l.b16 %v1611
      %v1645 = vpack.c.b16 %v1638, %v1637
      %v1646 = vpack.c.b16 %v1640, %v1639
      %v1647 = vpack.c.b16 %v1642, %v1641
      %v1648 = vpack.c.b16 %v1644, %v1643
      %v1669 = vunpack.c.l.b16 %v1613
      %v1670 = vunpack.c.l.b16 %v1614
      %v1671 = vunpack.c.l.b16 %v1615
      %v1672 = vunpack.c.l.b16 %v1616
      %v1673 = vunpack.c.l.b16 %v1617
      %v1674 = vunpack.c.l.b16 %v1618
      %v1675 = vunpack.c.l.b16 %v1619
      %v1676 = vunpack.c.l.b16 %v1620
      %v1677 = vunpack.c.l.b16 %v1621
      %v1678 = vunpack.c.l.b16 %v1622
      %v1679 = vunpack.c.l.b16 %v1623
      %v1680 = vunpack.c.l.b16 %v1624
      %v1681 = vunpack.c.l.b16 %v1625
      %v1682 = vunpack.c.l.b16 %v1626
      %v1683 = vunpack.c.l.b16 %v1627
      %v1684 = vunpack.c.l.b16 %v1628
      %v1685 = vpack.c.b16 %v1670, %v1669
      %v1686 = vpack.c.b16 %v1672, %v1671
      %v1687 = vpack.c.b16 %v1674, %v1673
      %v1688 = vpack.c.b16 %v1676, %v1675
      %v1689 = vpack.c.b16 %v1678, %v1677
      %v1690 = vpack.c.b16 %v1680, %v1679
      %v1691 = vpack.c.b16 %v1682, %v1681
      %v1692 = vpack.c.b16 %v1684, %v1683
      %1701 = vmatprep.subr.bf16.mxu0 0
      %1702 = vmatpush1.bf16.msra.mxu0 %v1685
      %1703 = vmatprep.subr.bf16.mxu0 0
      %1704 = vmatpush1.bf16.msra.mxu0 %v1686
      %1705 = vmatprep.subr.bf16.mxu0 0
      %1706 = vmatpush1.bf16.msra.mxu0 %v1687
      %1707 = vmatprep.subr.bf16.mxu0 0
      %1708 = vmatpush1.bf16.msra.mxu0 %v1688
      %1709 = vmatprep.subr.bf16.mxu0 0
      %1710 = vmatpush1.bf16.msra.mxu0 %v1689
      %1711 = vmatprep.subr.bf16.mxu0 0
      %1712 = vmatpush1.bf16.msra.mxu0 %v1690
      %1713 = vmatprep.subr.bf16.mxu0 0
      %1714 = vmatpush1.bf16.msra.mxu0 %v1691
      %1715 = vmatprep.subr.bf16.mxu0 0
      %1716 = vmatpush1.bf16.msra.mxu0 %v1692
      %1717 = vmatprep.subr.bf16.mxu0 0
      %1718 = vmatpush1.bf16.msra.mxu0 0
      %1719 = vmatprep.subr.bf16.mxu0 0
      %1720 = vmatpush1.bf16.msra.mxu0 0
      %1721 = vmatprep.subr.bf16.mxu0 0
      %1722 = vmatpush1.bf16.msra.mxu0 0
      %1723 = vmatprep.subr.bf16.mxu0 0
      %1724 = vmatpush1.bf16.msra.mxu0 0
      %1725 = vmatprep.subr.bf16.mxu0 0
      %1726 = vmatpush1.bf16.msra.mxu0 0
      %1727 = vmatprep.subr.bf16.mxu0 0
      %1728 = vmatpush1.bf16.msra.mxu0 0
      %1729 = vmatprep.subr.bf16.mxu0 0
      %1730 = vmatpush1.bf16.msra.mxu0 0
      %1731 = vmatprep.subr.bf16.mxu0 0
      %1732 = vmatpush1.bf16.msra.mxu0 0
      %1733 = vmatprep.mubr.bf16.mxu0 0
      %1734 = vmatmul.mubr.bf16.gmra.mrb[0].mxu0 %v1645
      %v1735 = vpop.f32.mrb[0].mxu0
      %v1736 = vadd.f32 0.0, %v1735
      %v1737 = vpop.f32.mrb[0].mxu0
      %v1738 = vpop.f32.mrb[0].mxu0
      %v1739 = vadd.f32 0.0, %v1738
      %v1740 = vpop.f32.mrb[0].mxu0
      %1741 = vmatprep.mubr.bf16.mxu0 0
      %1742 = vmatmul.mubr.bf16.gmra.mrb[0].mxu0 %v1646
      %v1743 = vpop.f32.mrb[0].mxu0
      %v1744 = vadd.f32 0.0, %v1743
      %v1745 = vpop.f32.mrb[0].mxu0
      %v1746 = vpop.f32.mrb[0].mxu0
      %v1747 = vadd.f32 0.0, %v1746
      %v1748 = vpop.f32.mrb[0].mxu0
      %1749 = vmatprep.mubr.bf16.mxu0 0
      %1750 = vmatmul.mubr.bf16.gmra.mrb[0].mxu0 %v1647
      %v1751 = vpop.f32.mrb[0].mxu0
      %v1752 = vadd.f32 0.0, %v1751
      %v1753 = vpop.f32.mrb[0].mxu0
      %v1754 = vpop.f32.mrb[0].mxu0
      %v1755 = vadd.f32 0.0, %v1754
      %v1756 = vpop.f32.mrb[0].mxu0
      %1757 = vmatprep.mubr.bf16.mxu0 0
      %1758 = vmatmul.mubr.bf16.gmra.mrb[0].mxu0 %v1648
      %v1759 = vpop.f32.mrb[0].mxu0
      %v1760 = vadd.f32 0.0, %v1759
      %v1761 = vpop.f32.mrb[0].mxu0
      %v1762 = vpop.f32.mrb[0].mxu0
      %v1763 = vadd.f32 0.0, %v1762
      %v1764 = vpop.f32.mrb[0].mxu0
      %1765 = vdwg.mxu0
      %v1766 = vadd.f32 %v1595, %v1736
      %v1767 = vadd.f32 %v1596, %v1739
      %v1768 = vadd.f32 %v1597, %v1744
      %v1769 = vadd.f32 %v1598, %v1747
      %v1770 = vadd.f32 %v1599, %v1752
      %v1771 = vadd.f32 %v1600, %v1755
      %v1772 = vadd.f32 %v1601, %v1760
      %v1773 = vadd.f32 %v1602, %v1763
      %v1774 = vld [vmem:[%s1432] sm:$0xf]
      %v1775 = vld [vmem:[%s1432 + $0x4] sm:$0x1]
      %v1776 = vld [vmem:[%s1432 + $0x8] sm:$0xf]
      %v1777 = vld [vmem:[%s1432 + $0xc] sm:$0x1]
      %v1778 = vld [vmem:[%s1432 + $0x10] sm:$0xf]
      %v1779 = vld [vmem:[%s1432 + $0x14] sm:$0x1]
      %v1780 = vld [vmem:[%s1432 + $0x18] sm:$0xf]
      %v1781 = vld [vmem:[%s1432 + $0x1c] sm:$0x1]
      %v1782 = vld [vmem:[%s1432 + $0x20] sm:$0xf]
      %v1783 = vld [vmem:[%s1432 + $0x24] sm:$0x1]
      %v1784 = vld [vmem:[%s1432 + $0x28] sm:$0xf]
      %v1785 = vld [vmem:[%s1432 + $0x2c] sm:$0x1]
      %v1786 = vld [vmem:[%s1432 + $0x30] sm:$0xf]
      %v1787 = vld [vmem:[%s1432 + $0x34] sm:$0x1]
      %v1788 = vld [vmem:[%s1432 + $0x38] sm:$0xf]
      %v1789 = vld [vmem:[%s1432 + $0x3c] sm:$0x1]
      %v1791 = vshrl.u32 %v1774, 16
      %v1793 = vrot.slane %v1791, 4
      %v1794 = vshll.u32 %v1774, 16
      %v1796 = vrot.slane %v1794, 5
      %v1797 = vor.u32 %v1793, %v1796
      %v1798 = vrot.slane %v1797, 4
      %v1800 = vshll.u32 %v1775, 16
      %v1802 = vrot.slane %v1800, 5
      %v1803 = vsel %vm541, %v1798, %v1802
      %v1805 = vshrl.u32 %v1776, 16
      %v1807 = vrot.slane %v1805, 4
      %v1808 = vshll.u32 %v1776, 16
      %v1810 = vrot.slane %v1808, 5
      %v1811 = vor.u32 %v1807, %v1810
      %v1812 = vrot.slane %v1811, 4
      %v1814 = vshll.u32 %v1777, 16
      %v1816 = vrot.slane %v1814, 5
      %v1817 = vsel %vm541, %v1812, %v1816
      %v1819 = vshrl.u32 %v1778, 16
      %v1821 = vrot.slane %v1819, 4
      %v1822 = vshll.u32 %v1778, 16
      %v1824 = vrot.slane %v1822, 5
      %v1825 = vor.u32 %v1821, %v1824
      %v1826 = vrot.slane %v1825, 4
      %v1828 = vshll.u32 %v1779, 16
      %v1830 = vrot.slane %v1828, 5
      %v1831 = vsel %vm541, %v1826, %v1830
      %v1833 = vshrl.u32 %v1780, 16
      %v1835 = vrot.slane %v1833, 4
      %v1836 = vshll.u32 %v1780, 16
      %v1838 = vrot.slane %v1836, 5
      %v1839 = vor.u32 %v1835, %v1838
      %v1840 = vrot.slane %v1839, 4
      %v1842 = vshll.u32 %v1781, 16
      %v1844 = vrot.slane %v1842, 5
      %v1845 = vsel %vm541, %v1840, %v1844
      %v1847 = vshrl.u32 %v1782, 16
      %v1849 = vrot.slane %v1847, 4
      %v1850 = vshll.u32 %v1782, 16
      %v1852 = vrot.slane %v1850, 5
      %v1853 = vor.u32 %v1849, %v1852
      %v1854 = vrot.slane %v1853, 4
      %v1856 = vshll.u32 %v1783, 16
      %v1858 = vrot.slane %v1856, 5
      %v1859 = vsel %vm541, %v1854, %v1858
      %v1861 = vshrl.u32 %v1784, 16
      %v1863 = vrot.slane %v1861, 4
      %v1864 = vshll.u32 %v1784, 16
      %v1866 = vrot.slane %v1864, 5
      %v1867 = vor.u32 %v1863, %v1866
      %v1868 = vrot.slane %v1867, 4
      %v1870 = vshll.u32 %v1785, 16
      %v1872 = vrot.slane %v1870, 5
      %v1873 = vsel %vm541, %v1868, %v1872
      %v1875 = vshrl.u32 %v1786, 16
      %v1877 = vrot.slane %v1875, 4
      %v1878 = vshll.u32 %v1786, 16
      %v1880 = vrot.slane %v1878, 5
      %v1881 = vor.u32 %v1877, %v1880
      %v1882 = vrot.slane %v1881, 4
      %v1884 = vshll.u32 %v1787, 16
      %v1886 = vrot.slane %v1884, 5
      %v1887 = vsel %vm541, %v1882, %v1886
      %v1889 = vshrl.u32 %v1788, 16
      %v1891 = vrot.slane %v1889, 4
      %v1892 = vshll.u32 %v1788, 16
      %v1894 = vrot.slane %v1892, 5
      %v1895 = vor.u32 %v1891, %v1894
      %v1896 = vrot.slane %v1895, 4
      %v1898 = vshll.u32 %v1789, 16
      %v1900 = vrot.slane %v1898, 5
      %v1901 = vsel %vm541, %v1896, %v1900
      %s1902 = scalar_lea.vmem %s1, 512
      %v1903 = vld [vmem:[%s1902] sm:$0xf]
      %v1904 = vld [vmem:[%s1902 + $0x4] sm:$0xf]
      %v1905 = vld [vmem:[%s1902 + $0x8] sm:$0xf]
      %v1906 = vld [vmem:[%s1902 + $0xc] sm:$0xf]
      %v1907 = vld [vmem:[%s1902 + $0x10] sm:$0xf]
      %v1908 = vld [vmem:[%s1902 + $0x14] sm:$0xf]
      %v1909 = vld [vmem:[%s1902 + $0x18] sm:$0xf]
      %v1910 = vld [vmem:[%s1902 + $0x1c] sm:$0xf]
      %v1911 = vld [vmem:[%s1902 + $0x20] sm:$0xf]
      %v1912 = vld [vmem:[%s1902 + $0x24] sm:$0xf]
      %v1913 = vld [vmem:[%s1902 + $0x28] sm:$0xf]
      %v1914 = vld [vmem:[%s1902 + $0x2c] sm:$0xf]
      %v1915 = vld [vmem:[%s1902 + $0x30] sm:$0xf]
      %v1916 = vld [vmem:[%s1902 + $0x34] sm:$0xf]
      %v1917 = vld [vmem:[%s1902 + $0x38] sm:$0xf]
      %v1918 = vld [vmem:[%s1902 + $0x3c] sm:$0xf]
      %v1919 = vunpack.c.l.b16 %v1803
      %v1920 = vunpack.c.l.b16 %v1817
      %v1921 = vunpack.c.l.b16 %v1831
      %v1922 = vunpack.c.l.b16 %v1845
      %v1923 = vunpack.c.l.b16 %v1859
      %v1924 = vunpack.c.l.b16 %v1873
      %v1925 = vunpack.c.l.b16 %v1887
      %v1926 = vunpack.c.l.b16 %v1901
      %v1927 = vpack.c.b16 %v1920, %v1919
      %v1928 = vpack.c.b16 %v1922, %v1921
      %v1929 = vpack.c.b16 %v1924, %v1923
      %v1930 = vpack.c.b16 %v1926, %v1925
      %v1951 = vunpack.c.l.b16 %v1903
      %v1952 = vunpack.c.l.b16 %v1904
      %v1953 = vunpack.c.l.b16 %v1905
      %v1954 = vunpack.c.l.b16 %v1906
      %v1955 = vunpack.c.l.b16 %v1907
      %v1956 = vunpack.c.l.b16 %v1908
      %v1957 = vunpack.c.l.b16 %v1909
      %v1958 = vunpack.c.l.b16 %v1910
      %v1959 = vunpack.c.l.b16 %v1911
      %v1960 = vunpack.c.l.b16 %v1912
      %v1961 = vunpack.c.l.b16 %v1913
      %v1962 = vunpack.c.l.b16 %v1914
      %v1963 = vunpack.c.l.b16 %v1915
      %v1964 = vunpack.c.l.b16 %v1916
      %v1965 = vunpack.c.l.b16 %v1917
      %v1966 = vunpack.c.l.b16 %v1918
      %v1967 = vpack.c.b16 %v1952, %v1951
      %v1968 = vpack.c.b16 %v1954, %v1953
      %v1969 = vpack.c.b16 %v1956, %v1955
      %v1970 = vpack.c.b16 %v1958, %v1957
      %v1971 = vpack.c.b16 %v1960, %v1959
      %v1972 = vpack.c.b16 %v1962, %v1961
      %v1973 = vpack.c.b16 %v1964, %v1963
      %v1974 = vpack.c.b16 %v1966, %v1965
      %1983 = vmatprep.subr.bf16.mxu0 0
      %1984 = vmatpush1.bf16.msra.mxu0 %v1967
      %1985 = vmatprep.subr.bf16.mxu0 0
      %1986 = vmatpush1.bf16.msra.mxu0 %v1968
      %1987 = vmatprep.subr.bf16.mxu0 0
      %1988 = vmatpush1.bf16.msra.mxu0 %v1969
      %1989 = vmatprep.subr.bf16.mxu0 0
      %1990 = vmatpush1.bf16.msra.mxu0 %v1970
      %1991 = vmatprep.subr.bf16.mxu0 0
      %1992 = vmatpush1.bf16.msra.mxu0 %v1971
      %1993 = vmatprep.subr.bf16.mxu0 0
      %1994 = vmatpush1.bf16.msra.mxu0 %v1972
      %1995 = vmatprep.subr.bf16.mxu0 0
      %1996 = vmatpush1.bf16.msra.mxu0 %v1973
      %1997 = vmatprep.subr.bf16.mxu0 0
      %1998 = vmatpush1.bf16.msra.mxu0 %v1974
      %1999 = vmatprep.subr.bf16.mxu0 0
      %2000 = vmatpush1.bf16.msra.mxu0 0
      %2001 = vmatprep.subr.bf16.mxu0 0
      %2002 = vmatpush1.bf16.msra.mxu0 0
      %2003 = vmatprep.subr.bf16.mxu0 0
      %2004 = vmatpush1.bf16.msra.mxu0 0
      %2005 = vmatprep.subr.bf16.mxu0 0
      %2006 = vmatpush1.bf16.msra.mxu0 0
      %2007 = vmatprep.subr.bf16.mxu0 0
      %2008 = vmatpush1.bf16.msra.mxu0 0
      %2009 = vmatprep.subr.bf16.mxu0 0
      %2010 = vmatpush1.bf16.msra.mxu0 0
      %2011 = vmatprep.subr.bf16.mxu0 0
      %2012 = vmatpush1.bf16.msra.mxu0 0
      %2013 = vmatprep.subr.bf16.mxu0 0
      %2014 = vmatpush1.bf16.msra.mxu0 0
      %2015 = vmatprep.mubr.bf16.mxu0 0
      %2016 = vmatmul.mubr.bf16.gmra.mrb[0].mxu0 %v1927
      %v2017 = vpop.f32.mrb[0].mxu0
      %v2018 = vadd.f32 0.0, %v2017
      %v2019 = vpop.f32.mrb[0].mxu0
      %v2020 = vpop.f32.mrb[0].mxu0
      %v2021 = vadd.f32 0.0, %v2020
      %v2022 = vpop.f32.mrb[0].mxu0
      %2023 = vmatprep.mubr.bf16.mxu0 0
      %2024 = vmatmul.mubr.bf16.gmra.mrb[0].mxu0 %v1928
      %v2025 = vpop.f32.mrb[0].mxu0
      %v2026 = vadd.f32 0.0, %v2025
      %v2027 = vpop.f32.mrb[0].mxu0
      %v2028 = vpop.f32.mrb[0].mxu0
      %v2029 = vadd.f32 0.0, %v2028
      %v2030 = vpop.f32.mrb[0].mxu0
      %2031 = vmatprep.mubr.bf16.mxu0 0
      %2032 = vmatmul.mubr.bf16.gmra.mrb[0].mxu0 %v1929
      %v2033 = vpop.f32.mrb[0].mxu0
      %v2034 = vadd.f32 0.0, %v2033
      %v2035 = vpop.f32.mrb[0].mxu0
      %v2036 = vpop.f32.mrb[0].mxu0
      %v2037 = vadd.f32 0.0, %v2036
      %v2038 = vpop.f32.mrb[0].mxu0
      %2039 = vmatprep.mubr.bf16.mxu0 0
      %2040 = vmatmul.mubr.bf16.gmra.mrb[0].mxu0 %v1930
      %v2041 = vpop.f32.mrb[0].mxu0
      %v2042 = vadd.f32 0.0, %v2041
      %v2043 = vpop.f32.mrb[0].mxu0
      %v2044 = vpop.f32.mrb[0].mxu0
      %v2045 = vadd.f32 0.0, %v2044
      %v2046 = vpop.f32.mrb[0].mxu0
      %2047 = vdwg.mxu0
      %v2048 = vadd.f32 %v1766, %v2018
      %v2049 = vadd.f32 %v1767, %v2021
      %v2050 = vadd.f32 %v1768, %v2026
      %v2051 = vadd.f32 %v1769, %v2029
      %v2052 = vadd.f32 %v1770, %v2034
      %v2053 = vadd.f32 %v1771, %v2037
      %v2054 = vadd.f32 %v1772, %v2042
      %v2055 = vadd.f32 %v1773, %v2045
      %v2056 = vld [vmem:[%s2] sm:$0x1]
      %v2058 = vlaneseq
      %v2059 = vshrl.u32 %v2058, 7
      %v2060 = vsub.s32 0, %v2059
      %v2061 = vrot.slane %v2056, %v2060
      %v2063 = vmul.f32 %v2048, %v2061
      %v2064 = vmul.f32 %v2049, %v2061
      %v2065 = vmul.f32 %v2050, %v2061
      %v2066 = vmul.f32 %v2051, %v2061
      %v2067 = vmul.f32 %v2052, %v2061
      %v2068 = vmul.f32 %v2053, %v2061
      %v2069 = vmul.f32 %v2054, %v2061
      %v2070 = vmul.f32 %v2055, %v2061
      %v2071 = vld [vmem:[%s3] sm:$0x1]
      %v2073 = vlaneseq
      %v2074 = vshrl.u32 %v2073, 7
      %v2075 = vsub.s32 0, %v2074
      %v2076 = vrot.slane %v2071, %v2075
      %v2078 = vadd.f32 %v2063, %v2076
      %v2079 = vadd.f32 %v2064, %v2076
      %v2080 = vadd.f32 %v2065, %v2076
      %v2081 = vadd.f32 %v2066, %v2076
      %v2082 = vadd.f32 %v2067, %v2076
      %v2083 = vadd.f32 %v2068, %v2076
      %v2084 = vadd.f32 %v2069, %v2076
      %v2085 = vadd.f32 %v2070, %v2076
      %v2086 = vmax.f32 %v2078, 0.0
      %v2087 = vmax.f32 %v2079, 0.0
      %v2088 = vmax.f32 %v2080, 0.0
      %v2089 = vmax.f32 %v2081, 0.0
      %v2090 = vmax.f32 %v2082, 0.0
      %v2091 = vmax.f32 %v2083, 0.0
      %v2092 = vmax.f32 %v2084, 0.0
      %v2093 = vmax.f32 %v2085, 0.0
      %2094 = vst [vmem:[%s197] sm:$0xff] %v2086
      %2095 = vst [vmem:[%s197 + $0x8] sm:$0xff] %v2087
      %2096 = vst [vmem:[%s197 + $0x10] sm:$0xff] %v2088
      %2097 = vst [vmem:[%s197 + $0x18] sm:$0xff] %v2089
      %2098 = vst [vmem:[%s197 + $0x20] sm:$0xff] %v2090
      %2099 = vst [vmem:[%s197 + $0x28] sm:$0xff] %v2091
      %2100 = vst [vmem:[%s197 + $0x30] sm:$0xff] %v2092
      %2101 = vst [vmem:[%s197 + $0x38] sm:$0xff] %v2093
      %p2102 = scmp.lt.s32.totalorder %s15, 1
      %s2103 = scalar_select %p2102, %s15, 1
      %s2104 = smul.addr %s2103, 8
      %s2105 = smul.addr %s2104, 8
      %s2106 = scalar_lea.vmem %s4, %s2105
      // Predicated region
      $region37: #{inception_b_forward.6} parent=35 // pred_check
        %p2107 = pneg %p122
      $region38: #{inception_b_forward.6} parent=35 // pred_check_branch
        %2109 = sbr.rel (%p2107) target = $region40
      $region39: #{inception_b_forward.6} parent=35 // pred_region
        _
      $region40: #{inception_b_forward.6} parent=35 // pred_fallthru
        _
    $region36: #{inception_b_forward.6} parent=5 // pred_fallthru
      _
    %p2110 = scmp.le.s32.totalorder 2, %s10
    // Predicated region
    $region41: #{inception_b_forward.6} parent=5 // pred_check
      %p2111 = pneg %p2110
    $region42: #{inception_b_forward.6} parent=5 // pred_check_branch
      %2113 = sbr.rel (%p2111) target = $region44
    $region43: #{inception_b_forward.6} parent=5 // pred_region
      %s2114 = ssub.s32 %s10, 2
      // Predicated region
      $region45: #{inception_b_forward.6} parent=43 // pred_check
        %p2115 = pneg %p128
      $region46: #{inception_b_forward.6} parent=43 // pred_check_branch
        %2117 = sbr.rel (%p2115) target = $region48
      $region47: #{inception_b_forward.6} parent=43 // pred_region
        %p2118 = scmp.lt.s32.totalorder %s16, 1
        %s2119 = scalar_select %p2118, %s16, 1
        %s2120 = smul.addr %s2119, 8
        %s2121 = smul.addr %s2120, 8
        %s2122 = scalar_lea.vmem %s4, %s2121
      $region48: #{inception_b_forward.6} parent=43 // pred_fallthru
        _
    $region44: #{inception_b_forward.6} parent=5 // pred_fallthru
      _
  $region6: #{inception_b_forward.6} parent=0 // loop_footer
    %s14 = sadd.s32 1, %s10
  $region7: #{inception_b_forward.6} parent=0 // loop_footer_branch
    %9 = sbr.rel target = $region3
  $region8: #{inception_b_forward.6} parent=0 // loop_exit
    _

// kernel: inception_b_forward.4
$region0: #{inception_b_forward.4}
  #allocation0 [shape = 'u32[]', space=smem, size = 0x4, offset = 0x4, fixed_abs, tag = 'smem constant byte address 0x4 - core index']
  #allocation1 [shape = 'u32[144,128]{1,0:T(1,128)}', space=vmem, size = 0x12000, scoped, tag = 'internal scratch']
  %s0 = inlined_call_operand.vmem [shape: bf16[2,4,9,9,4], index: 0, kind: input, shape index: {}]
  %s1 = inlined_call_operand.vmem [shape: bf16[9,4,384], index: 1, kind: input, shape index: {}]
  %s2 = inlined_call_operand.vmem [shape: f32[1,384], index: 2, kind: input, shape index: {}]
  %s3 = inlined_call_operand.vmem [shape: f32[1,384], index: 3, kind: input, shape index: {}]
  %s4 = inlined_call_operand.vmem [shape: f32[2,8,8,384], index: 4, kind: output, shape index: {}]
  %s5 = sld [smem:[#allocation0]]
  $region49: #{inception_b_forward.4} parent=0
    _
  %s7 = ssub.s32 1, %s5
  %s8 = scalar_select 0, %s7, %s5
  loop: start=0, step=1, limit=4
  $region2: #{inception_b_forward.4} parent=0 // loop_pre_header
    _
  $region3: #{inception_b_forward.4} parent=0 // loop_header
    %s10 = sphi 0, %s14
    %p11 = scmp.ge.s32.totalorder %s10, 4
    %s20 = sphi 0, %s22
    %s23 = sphi 0, %s20
    %s24 = sphi 0, %s23
    %s40 = sphi 0, %s24
    %s44 = sphi 0, %s44
    %s46 = sphi 0, %s44
    %s47 = sphi 0, %s46
    %s61 = sphi 0, %s47
    %s65 = sphi 0, %s65
    %s67 = sphi 0, %s65
    %s68 = sphi 0, %s67
    %s82 = sphi 0, %s68
    %s86 = sphi 0, %s86
    %s88 = sphi 0, %s86
    %s89 = sphi 0, %s88
    %s103 = sphi 0, %s89
    %s109 = sphi 0, %s111
    %s112 = sphi 0, %s109
    %s113 = sphi 0, %s112
    %s129 = sphi 0, %s113
  $region4: #{inception_b_forward.4} parent=0 // loop_header_branch
    %13 = sbr.rel (%p11) target = $region8
  $region5: #{inception_b_forward.4} parent=0 // loop_body
    %s15 = ssub.s32 %s10, 1
    %s16 = ssub.s32 %s10, 2
    %s17 = sadd.s32 %s10, 1
    %s18 = ssub.s32 %s10, %s17
    %p19 = scmp.eq.s32.totalorder %s18, 0
    %s21 = sadd.s32 %s20, 1
    %s22 = scalar_select %p19, %s20, %s21
    %p25 = pneg %p19
    %p26 = scmp.eq.s32.totalorder %s10, 1
    %p27 = por %p25, %p26
    %p28 = scmp.ne.s32.totalorder %s20, %s23
    %p29 = scmp.eq.s32.totalorder %s10, 0
    %p30 = por %p28, %p29
    %p31 = scmp.ne.s32.totalorder %s20, %s23
    %p32 = scmp.eq.s32.totalorder %s15, 1
    %p33 = por %p31, %p32
    %p34 = scmp.ne.s32.totalorder %s23, %s24
    %p35 = scmp.eq.s32.totalorder %s15, 0
    %p36 = por %p34, %p35
    %p37 = scmp.ne.s32.totalorder %s23, %s24
    %p38 = scmp.eq.s32.totalorder %s16, 1
    %p39 = por %p37, %p38
    %p41 = scmp.ne.s32.totalorder %s24, %s40
    %p42 = scmp.eq.s32.totalorder %s16, 0
    %p43 = por %p41, %p42
    %s45 = sadd.s32 %s44, 1
    %p48 = scmp.eq.s32.totalorder %s10, 1
    %p49 = scmp.ne.s32.totalorder %s44, %s46
    %p50 = scmp.eq.s32.totalorder %s10, 0
    %p51 = por %p49, %p50
    %p52 = scmp.ne.s32.totalorder %s44, %s46
    %p53 = scmp.eq.s32.totalorder %s15, 1
    %p54 = por %p52, %p53
    %p55 = scmp.ne.s32.totalorder %s46, %s47
    %p56 = scmp.eq.s32.totalorder %s15, 0
    %p57 = por %p55, %p56
    %p58 = scmp.ne.s32.totalorder %s46, %s47
    %p59 = scmp.eq.s32.totalorder %s16, 1
    %p60 = por %p58, %p59
    %p62 = scmp.ne.s32.totalorder %s47, %s61
    %p63 = scmp.eq.s32.totalorder %s16, 0
    %p64 = por %p62, %p63
    %s66 = sadd.s32 %s65, 1
    %p69 = scmp.eq.s32.totalorder %s10, 1
    %p70 = scmp.ne.s32.totalorder %s65, %s67
    %p71 = scmp.eq.s32.totalorder %s10, 0
    %p72 = por %p70, %p71
    %p73 = scmp.ne.s32.totalorder %s65, %s67
    %p74 = scmp.eq.s32.totalorder %s15, 1
    %p75 = por %p73, %p74
    %p76 = scmp.ne.s32.totalorder %s67, %s68
    %p77 = scmp.eq.s32.totalorder %s15, 0
    %p78 = por %p76, %p77
    %p79 = scmp.ne.s32.totalorder %s67, %s68
    %p80 = scmp.eq.s32.totalorder %s16, 1
    %p81 = por %p79, %p80
    %p83 = scmp.ne.s32.totalorder %s68, %s82
    %p84 = scmp.eq.s32.totalorder %s16, 0
    %p85 = por %p83, %p84
    %s87 = sadd.s32 %s86, 1
    %p90 = scmp.eq.s32.totalorder %s10, 1
    %p91 = scmp.ne.s32.totalorder %s86, %s88
    %p92 = scmp.eq.s32.totalorder %s10, 0
    %p93 = por %p91, %p92
    %p94 = scmp.ne.s32.totalorder %s86, %s88
    %p95 = scmp.eq.s32.totalorder %s15, 1
    %p96 = por %p94, %p95
    %p97 = scmp.ne.s32.totalorder %s88, %s89
    %p98 = scmp.eq.s32.totalorder %s15, 0
    %p99 = por %p97, %p98
    %p100 = scmp.ne.s32.totalorder %s88, %s89
    %p101 = scmp.eq.s32.totalorder %s16, 1
    %p102 = por %p100, %p101
    %p104 = scmp.ne.s32.totalorder %s89, %s103
    %p105 = scmp.eq.s32.totalorder %s16, 0
    %p106 = por %p104, %p105
    %s107 = ssub.s32 %s10, %s17
    %p108 = scmp.eq.s32.totalorder %s107, 0
    %s110 = sadd.s32 %s109, 1
    %s111 = scalar_select %p108, %s109, %s110
    %p114 = pneg %p108
    %p115 = scmp.eq.s32.totalorder %s10, 1
    %p116 = por %p114, %p115
    %p117 = scmp.ne.s32.totalorder %s109, %s112
    %p118 = scmp.eq.s32.totalorder %s10, 0
    %p119 = por %p117, %p118
    %p120 = scmp.ne.s32.totalorder %s109, %s112
    %p121 = scmp.eq.s32.totalorder %s15, 1
    %p122 = por %p120, %p121
    %p123 = scmp.ne.s32.totalorder %s112, %s113
    %p124 = scmp.eq.s32.totalorder %s15, 0
    %p125 = por %p123, %p124
    %p126 = scmp.ne.s32.totalorder %s112, %s113
    %p127 = scmp.eq.s32.totalorder %s16, 1
    %p128 = por %p126, %p127
    %p130 = scmp.ne.s32.totalorder %s113, %s129
    %p131 = scmp.eq.s32.totalorder %s16, 0
    %p132 = por %p130, %p131
    %p133 = scmp.le.s32.totalorder 1, %s10
    %p134 = scmp.lt.s32.totalorder %s10, 3
    %p135 = pnand %p133, %p134
    %p136 = pneg %p135
    // Predicated region
    $region9: #{inception_b_forward.4} parent=5 // pred_check
      _
    $region10: #{inception_b_forward.4} parent=5 // pred_check_branch
      %138 = sbr.rel (%p135) target = $region12
    $region11: #{inception_b_forward.4} parent=5 // pred_region
      %s139 = ssub.s32 %s10, 1
      // Predicated region
      $region13: #{inception_b_forward.4} parent=11 // pred_check
        %p140 = pneg %p57
      $region14: #{inception_b_forward.4} parent=11 // pred_check_branch
        %142 = sbr.rel (%p140) target = $region16
      $region15: #{inception_b_forward.4} parent=11 // pred_region
        _
      $region16: #{inception_b_forward.4} parent=11 // pred_fallthru
        _
      // Predicated region
      $region17: #{inception_b_forward.4} parent=11 // pred_check
        %p143 = pneg %p78
      $region18: #{inception_b_forward.4} parent=11 // pred_check_branch
        %145 = sbr.rel (%p143) target = $region20
      $region19: #{inception_b_forward.4} parent=11 // pred_region
        _
      $region20: #{inception_b_forward.4} parent=11 // pred_fallthru
        _
      // Predicated region
      $region21: #{inception_b_forward.4} parent=11 // pred_check
        %p146 = pneg %p99
      $region22: #{inception_b_forward.4} parent=11 // pred_check_branch
        %148 = sbr.rel (%p146) target = $region24
      $region23: #{inception_b_forward.4} parent=11 // pred_region
        _
      $region24: #{inception_b_forward.4} parent=11 // pred_fallthru
        _
    $region12: #{inception_b_forward.4} parent=5 // pred_fallthru
      _
    %p149 = scmp.lt.s32.totalorder %s10, 2
    // Predicated region
    $region25: #{inception_b_forward.4} parent=5 // pred_check
      %p150 = pneg %p149
    $region26: #{inception_b_forward.4} parent=5 // pred_check_branch
      %152 = sbr.rel (%p150) target = $region28
    $region27: #{inception_b_forward.4} parent=5 // pred_region
      // Predicated region
      $region29: #{inception_b_forward.4} parent=27 // pred_check
        %p153 = pneg %p30
      $region30: #{inception_b_forward.4} parent=27 // pred_check_branch
        %155 = sbr.rel (%p153) target = $region32
      $region31: #{inception_b_forward.4} parent=27 // pred_region
        %p156 = scmp.lt.s32.totalorder %s10, 1
        %s157 = scalar_select %p156, %s10, 1
        %s158 = smul.addr %s157, 72
        %s159 = smul.addr %s158, 4
        %s160 = scalar_lea.vmem %s0, %s159
      $region32: #{inception_b_forward.4} parent=27 // pred_fallthru
        _
    $region28: #{inception_b_forward.4} parent=5 // pred_fallthru
      _
    %p161 = scmp.le.s32.totalorder 1, %s10
    %p162 = scmp.lt.s32.totalorder %s10, 3
    %p163 = pnand %p161, %p162
    %p164 = pneg %p163
    // Predicated region
    $region33: #{inception_b_forward.4} parent=5 // pred_check
      _
    $region34: #{inception_b_forward.4} parent=5 // pred_check_branch
      %166 = sbr.rel (%p163) target = $region36
    $region35: #{inception_b_forward.4} parent=5 // pred_region
      %s167 = ssub.s32 %s10, 1
      %p168 = scmp.lt.s32.totalorder %s15, 1
      %s169 = scalar_select %p168, %s15, 1
      %s170 = smul.addr %s169, 72
      %s171 = smul.addr %s170, 4
      %s172 = scalar_lea.vmem %s0, %s171
      %p173 = pneg %p36
      %p174 = pneg %p33
      %p175 = pneg %p57
      %p176 = pneg %p54
      %p177 = pneg %p78
      %p178 = pneg %p75
      %p179 = pneg %p99
      %p180 = pneg %p96
      %p181 = pneg %p125
      %p182 = pneg %p122
      %p183 = scmp.lt.s32.totalorder %s15, 1
      %s184 = scalar_select %p183, %s15, 1
      %s185 = smul.addr %s184, 24
      %s186 = smul.addr %s185, 8
      %s187 = scalar_lea.vmem %s4, %s186
      %p188 = scmp.lt.s32.totalorder %s15, 1
      %s189 = scalar_select %p188, %s15, 1
      %s190 = smul.addr %s189, 72
      %s191 = smul.addr %s190, 4
      %s192 = scalar_lea.vmem %s0, %s191
      %p193 = scmp.lt.s32.totalorder %s15, 1
      %s194 = scalar_select %p193, %s15, 1
      %s195 = smul.addr %s194, 24
      %s196 = smul.addr %s195, 8
      %s197 = scalar_lea.vmem %s4, %s196
      %v199 = vld [vmem:[%s192] sm:$0xf]
      %v200 = vld [vmem:[%s192 + $0x8] sm:$0xf]
      %v201 = vld [vmem:[%s192 + $0x10] sm:$0xf]
      %v202 = vld [vmem:[%s192 + $0x18] sm:$0xf]
      %v203 = vld [vmem:[%s192 + $0x20] sm:$0xf]
      %v204 = vld [vmem:[%s192 + $0x28] sm:$0xf]
      %v205 = vld [vmem:[%s192 + $0x30] sm:$0xf]
      %v206 = vld [vmem:[%s192 + $0x38] sm:$0xf]
      %v207 = vld [vmem:[%s1] sm:$0x3f]
      %s208 = scalar_lea.vmem %s192, 72
      %v209 = vld [vmem:[%s208] sm:$0xf]
      %v210 = vld [vmem:[%s208 + $0x8] sm:$0xf]
      %v211 = vld [vmem:[%s208 + $0x10] sm:$0xf]
      %v212 = vld [vmem:[%s208 + $0x18] sm:$0xf]
      %v213 = vld [vmem:[%s208 + $0x20] sm:$0xf]
      %v214 = vld [vmem:[%s208 + $0x28] sm:$0xf]
      %v215 = vld [vmem:[%s208 + $0x30] sm:$0xf]
      %v216 = vld [vmem:[%s208 + $0x38] sm:$0xf]
      %s217 = scalar_lea.vmem %s1, 6
      %v218 = vld [vmem:[%s217] sm:$0x3f]
      %v227 = vunpack.c.l.b16 %v209
      %v228 = vunpack.c.l.b16 %v210
      %v229 = vunpack.c.l.b16 %v211
      %v230 = vunpack.c.l.b16 %v212
      %v231 = vunpack.c.l.b16 %v213
      %v232 = vunpack.c.l.b16 %v214
      %v233 = vunpack.c.l.b16 %v215
      %v234 = vunpack.c.l.b16 %v216
      %v235 = vpack.c.b16 %v228, %v227
      %v236 = vpack.c.b16 %v230, %v229
      %v237 = vpack.c.b16 %v232, %v231
      %v238 = vpack.c.b16 %v234, %v233
      %v240 = vcombine.high %v218, %v218
      %v242 = vunpack.c.l.s4 1983009808
      %v243 = vunpack.c.0.s8 %v242
      %v244 = vlaneseq
      %v245 = vshrl.u32 %v244, 7
      %v246 = vsub.s32 %v243, %v245
      %v247 = vrot.slane %v218, %v246
      %v249 = vunpack.c.l.s4 1983009808
      %v250 = vunpack.c.0.s8 %v249
      %v251 = vlaneseq
      %v252 = vshrl.u32 %v251, 7
      %v253 = vsub.s32 %v250, %v252
      %v254 = vrot.slane %v240, %v253
      %v255 = vcombine.high %v247, %v247
      %vm256 = vcmask 31744
      %v258 = vsel %vm256, %v235, 0
      %v261 = vsel %vm256, %v236, 0
      %v264 = vsel %vm256, %v237, 0
      %v267 = vsel %vm256, %v238, 0
      %vm269 = vcmask 1041408
      %v271 = vsel %vm269, %v247, 0
      %v274 = vsel %vm269, %v255, 0
      %v277 = vsel %vm269, %v254, 0
      %279 = vmatprep.subr.bf16.mxu0 %v274
      %280 = vmatpush1.bf16.msra.mxu0 %v271
      %281 = vmatprep.subr.bf16.mxu0 0
      %282 = vmatpush1.bf16.msra.mxu0 0
      %283 = vmatprep.subr.bf16.mxu0 0
      %284 = vmatpush1.bf16.msra.mxu0 0
      %285 = vmatprep.subr.bf16.mxu0 0
      %286 = vmatpush1.bf16.msra.mxu0 0
      %287 = vmatprep.subr.bf16.mxu0 0
      %288 = vmatpush1.bf16.msra.mxu0 0
      %289 = vmatprep.subr.bf16.mxu0 0
      %290 = vmatpush1.bf16.msra.mxu0 0
      %291 = vmatprep.subr.bf16.mxu0 0
      %292 = vmatpush1.bf16.msra.mxu0 0
      %293 = vmatprep.subr.bf16.mxu0 0
      %294 = vmatpush1.bf16.msra.mxu0 0
      %295 = vmatprep.subr.bf16.mxu0 0
      %296 = vmatpush1.bf16.msra.mxu0 0
      %297 = vmatprep.subr.bf16.mxu0 0
      %298 = vmatpush1.bf16.msra.mxu0 0
      %299 = vmatprep.subr.bf16.mxu0 0
      %300 = vmatpush1.bf16.msra.mxu0 0
      %301 = vmatprep.subr.bf16.mxu0 0
      %302 = vmatpush1.bf16.msra.mxu0 0
      %303 = vmatprep.subr.bf16.mxu0 0
      %304 = vmatpush1.bf16.msra.mxu0 0
      %305 = vmatprep.subr.bf16.mxu0 0
      %306 = vmatpush1.bf16.msra.mxu0 0
      %307 = vmatprep.subr.bf16.mxu0 0
      %308 = vmatpush1.bf16.msra.mxu0 0
      %309 = vmatprep.subr.bf16.mxu0 0
      %310 = vmatpush1.bf16.msra.mxu0 0
      %311 = vmatprep.mubr.bf16.mxu0 0
      %312 = vmatmul.mubr.bf16.gmra.mrb[0].mxu0 %v258
      %v313 = vpop.f32.mrb[0].mxu0
      %v314 = vadd.f32 0.0, %v313
      %v315 = vpop.f32.mrb[0].mxu0
      %v316 = vadd.f32 0.0, %v315
      %v317 = vpop.f32.mrb[0].mxu0
      %v318 = vadd.f32 0.0, %v317
      %v319 = vpop.f32.mrb[0].mxu0
      %v320 = vadd.f32 0.0, %v319
      %321 = vmatprep.mubr.bf16.mxu0 0
      %322 = vmatmul.mubr.bf16.gmra.mrb[0].mxu0 %v261
      %v323 = vpop.f32.mrb[0].mxu0
      %v324 = vadd.f32 0.0, %v323
      %v325 = vpop.f32.mrb[0].mxu0
      %v326 = vadd.f32 0.0, %v325
      %v327 = vpop.f32.mrb[0].mxu0
      %v328 = vadd.f32 0.0, %v327
      %v329 = vpop.f32.mrb[0].mxu0
      %v330 = vadd.f32 0.0, %v329
      %331 = vmatprep.mubr.bf16.mxu0 0
      %332 = vmatmul.mubr.bf16.gmra.mrb[0].mxu0 %v264
      %v333 = vpop.f32.mrb[0].mxu0
      %v334 = vadd.f32 0.0, %v333
      %v335 = vpop.f32.mrb[0].mxu0
      %v336 = vadd.f32 0.0, %v335
      %v337 = vpop.f32.mrb[0].mxu0
      %v338 = vadd.f32 0.0, %v337
      %v339 = vpop.f32.mrb[0].mxu0
      %v340 = vadd.f32 0.0, %v339
      %341 = vmatprep.mubr.bf16.mxu0 0
      %342 = vmatmul.mubr.bf16.gmra.mrb[0].mxu0 %v267
      %v343 = vpop.f32.mrb[0].mxu0
      %v344 = vadd.f32 0.0, %v343
      %v345 = vpop.f32.mrb[0].mxu0
      %v346 = vadd.f32 0.0, %v345
      %v347 = vpop.f32.mrb[0].mxu0
      %v348 = vadd.f32 0.0, %v347
      %v349 = vpop.f32.mrb[0].mxu0
      %v350 = vadd.f32 0.0, %v349
      %351 = vdwg.mxu0
      %352 = vmatprep.subr.bf16.mxu0 0
      %353 = vmatpush1.bf16.msra.mxu0 %v277
      %354 = vmatprep.subr.bf16.mxu0 0
      %355 = vmatpush1.bf16.msra.mxu0 0
      %356 = vmatprep.subr.bf16.mxu0 0
      %357 = vmatpush1.bf16.msra.mxu0 0
      %358 = vmatprep.subr.bf16.mxu0 0
      %359 = vmatpush1.bf16.msra.mxu0 0
      %360 = vmatprep.subr.bf16.mxu0 0
      %361 = vmatpush1.bf16.msra.mxu0 0
      %362 = vmatprep.subr.bf16.mxu0 0
      %363 = vmatpush1.bf16.msra.mxu0 0
      %364 = vmatprep.subr.bf16.mxu0 0
      %365 = vmatpush1.bf16.msra.mxu0 0
      %366 = vmatprep.subr.bf16.mxu0 0
      %367 = vmatpush1.bf16.msra.mxu0 0
      %368 = vmatprep.subr.bf16.mxu0 0
      %369 = vmatpush1.bf16.msra.mxu0 0
      %370 = vmatprep.subr.bf16.mxu0 0
      %371 = vmatpush1.bf16.msra.mxu0 0
      %372 = vmatprep.subr.bf16.mxu0 0
      %373 = vmatpush1.bf16.msra.mxu0 0
      %374 = vmatprep.subr.bf16.mxu0 0
      %375 = vmatpush1.bf16.msra.mxu0 0
      %376 = vmatprep.subr.bf16.mxu0 0
      %377 = vmatpush1.bf16.msra.mxu0 0
      %378 = vmatprep.subr.bf16.mxu0 0
      %379 = vmatpush1.bf16.msra.mxu0 0
      %380 = vmatprep.subr.bf16.mxu0 0
      %381 = vmatpush1.bf16.msra.mxu0 0
      %382 = vmatprep.subr.bf16.mxu0 0
      %383 = vmatpush1.bf16.msra.mxu0 0
      %384 = vmatprep.mubr.bf16.mxu0 0
      %385 = vmatmul.mubr.bf16.gmra.mrb[0].mxu0 %v258
      %v386 = vpop.f32.mrb[0].mxu0
      %v387 = vadd.f32 0.0, %v386
      %v388 = vpop.f32.mrb[0].mxu0
      %v389 = vpop.f32.mrb[0].mxu0
      %v390 = vadd.f32 0.0, %v389
      %v391 = vpop.f32.mrb[0].mxu0
      %392 = vmatprep.mubr.bf16.mxu0 0
      %393 = vmatmul.mubr.bf16.gmra.mrb[0].mxu0 %v261
      %v394 = vpop.f32.mrb[0].mxu0
      %v395 = vadd.f32 0.0, %v394
      %v396 = vpop.f32.mrb[0].mxu0
      %v397 = vpop.f32.mrb[0].mxu0
      %v398 = vadd.f32 0.0, %v397
      %v399 = vpop.f32.mrb[0].mxu0
      %400 = vmatprep.mubr.bf16.mxu0 0
      %401 = vmatmul.mubr.bf16.gmra.mrb[0].mxu0 %v264
      %v402 = vpop.f32.mrb[0].mxu0
      %v403 = vadd.f32 0.0, %v402
      %v404 = vpop.f32.mrb[0].mxu0
      %v405 = vpop.f32.mrb[0].mxu0
      %v406 = vadd.f32 0.0, %v405
      %v407 = vpop.f32.mrb[0].mxu0
      %408 = vmatprep.mubr.bf16.mxu0 0
      %409 = vmatmul.mubr.bf16.gmra.mrb[0].mxu0 %v267
      %v410 = vpop.f32.mrb[0].mxu0
      %v411 = vadd.f32 0.0, %v410
      %v412 = vpop.f32.mrb[0].mxu0
      %v413 = vpop.f32.mrb[0].mxu0
      %v414 = vadd.f32 0.0, %v413
      %v415 = vpop.f32.mrb[0].mxu0
      %416 = vdwg.mxu0
      %v425 = vunpack.c.l.b16 %v199
      %v426 = vunpack.c.l.b16 %v200
      %v427 = vunpack.c.l.b16 %v201
      %v428 = vunpack.c.l.b16 %v202
      %v429 = vunpack.c.l.b16 %v203
      %v430 = vunpack.c.l.b16 %v204
      %v431 = vunpack.c.l.b16 %v205
      %v432 = vunpack.c.l.b16 %v206
      %v433 = vpack.c.b16 %v426, %v425
      %v434 = vpack.c.b16 %v428, %v427
      %v435 = vpack.c.b16 %v430, %v429
      %v436 = vpack.c.b16 %v432, %v431
      %v438 = vcombine.high %v207, %v207
      %v440 = vunpack.c.l.s4 1983009808
      %v441 = vunpack.c.0.s8 %v440
      %v442 = vlaneseq
      %v443 = vshrl.u32 %v442, 7
      %v444 = vsub.s32 %v441, %v443
      %v445 = vrot.slane %v207, %v444
      %v447 = vunpack.c.l.s4 1983009808
      %v448 = vunpack.c.0.s8 %v447
      %v449 = vlaneseq
      %v450 = vshrl.u32 %v449, 7
      %v451 = vsub.s32 %v448, %v450
      %v452 = vrot.slane %v438, %v451
      %v453 = vcombine.high %v445, %v445
      %v455 = vsel %vm256, %v433, 0
      %v458 = vsel %vm256, %v434, 0
      %v461 = vsel %vm256, %v435, 0
      %v464 = vsel %vm256, %v436, 0
      %v467 = vsel %vm269, %v445, 0
      %v470 = vsel %vm269, %v453, 0
      %v473 = vsel %vm269, %v452, 0
      %475 = vmatprep.subr.bf16.mxu0 %v470
      %476 = vmatpush1.bf16.msra.mxu0 %v467
      %477 = vmatprep.subr.bf16.mxu0 0
      %478 = vmatpush1.bf16.msra.mxu0 0
      %479 = vmatprep.subr.bf16.mxu0 0
      %480 = vmatpush1.bf16.msra.mxu0 0
      %481 = vmatprep.subr.bf16.mxu0 0
      %482 = vmatpush1.bf16.msra.mxu0 0
      %483 = vmatprep.subr.bf16.mxu0 0
      %484 = vmatpush1.bf16.msra.mxu0 0
      %485 = vmatprep.subr.bf16.mxu0 0
      %486 = vmatpush1.bf16.msra.mxu0 0
      %487 = vmatprep.subr.bf16.mxu0 0
      %488 = vmatpush1.bf16.msra.mxu0 0
      %489 = vmatprep.subr.bf16.mxu0 0
      %490 = vmatpush1.bf16.msra.mxu0 0
      %491 = vmatprep.subr.bf16.mxu0 0
      %492 = vmatpush1.bf16.msra.mxu0 0
      %493 = vmatprep.subr.bf16.mxu0 0
      %494 = vmatpush1.bf16.msra.mxu0 0
      %495 = vmatprep.subr.bf16.mxu0 0
      %496 = vmatpush1.bf16.msra.mxu0 0
      %497 = vmatprep.subr.bf16.mxu0 0
      %498 = vmatpush1.bf16.msra.mxu0 0
      %499 = vmatprep.subr.bf16.mxu0 0
      %500 = vmatpush1.bf16.msra.mxu0 0
      %501 = vmatprep.subr.bf16.mxu0 0
      %502 = vmatpush1.bf16.msra.mxu0 0
      %503 = vmatprep.subr.bf16.mxu0 0
      %504 = vmatpush1.bf16.msra.mxu0 0
      %505 = vmatprep.subr.bf16.mxu0 0
      %506 = vmatpush1.bf16.msra.mxu0 0
      %507 = vmatprep.mubr.bf16.mxu0 0
      %508 = vmatmul.mubr.bf16.gmra.mrb[0].mxu0 %v455
      %v509 = vpop.f32.mrb[0].mxu0
      %v510 = vadd.f32 %v314, %v509
      %v511 = vpop.f32.mrb[0].mxu0
      %v512 = vadd.f32 %v316, %v511
      %v513 = vpop.f32.mrb[0].mxu0
      %v514 = vadd.f32 %v318, %v513
      %v515 = vpop.f32.mrb[0].mxu0
      %v516 = vadd.f32 %v320, %v515
      %517 = vmatprep.mubr.bf16.mxu0 0
      %518 = vmatmul.mubr.bf16.gmra.mrb[0].mxu0 %v458
      %v519 = vpop.f32.mrb[0].mxu0
      %v520 = vadd.f32 %v324, %v519
      %v521 = vpop.f32.mrb[0].mxu0
      %v522 = vadd.f32 %v326, %v521
      %v523 = vpop.f32.mrb[0].mxu0
      %v524 = vadd.f32 %v328, %v523
      %v525 = vpop.f32.mrb[0].mxu0
      %v526 = vadd.f32 %v330, %v525
      %527 = vmatprep.mubr.bf16.mxu0 0
      %528 = vmatmul.mubr.bf16.gmra.mrb[0].mxu0 %v461
      %v529 = vpop.f32.mrb[0].mxu0
      %v530 = vadd.f32 %v334, %v529
      %v531 = vpop.f32.mrb[0].mxu0
      %v532 = vadd.f32 %v336, %v531
      %v533 = vpop.f32.mrb[0].mxu0
      %v534 = vadd.f32 %v338, %v533
      %v535 = vpop.f32.mrb[0].mxu0
      %v536 = vadd.f32 %v340, %v535
      %537 = vmatprep.mubr.bf16.mxu0 0
      %538 = vmatmul.mubr.bf16.gmra.mrb[0].mxu0 %v464
      %v539 = vpop.f32.mrb[0].mxu0
      %v540 = vadd.f32 %v344, %v539
      %v541 = vpop.f32.mrb[0].mxu0
      %v542 = vadd.f32 %v346, %v541
      %v543 = vpop.f32.mrb[0].mxu0
      %v544 = vadd.f32 %v348, %v543
      %v545 = vpop.f32.mrb[0].mxu0
      %v546 = vadd.f32 %v350, %v545
      %547 = vdwg.mxu0
      %548 = vmatprep.subr.bf16.mxu0 0
      %549 = vmatpush1.bf16.msra.mxu0 %v473
      %550 = vmatprep.subr.bf16.mxu0 0
      %551 = vmatpush1.bf16.msra.mxu0 0
      %552 = vmatprep.subr.bf16.mxu0 0
      %553 = vmatpush1.bf16.msra.mxu0 0
      %554 = vmatprep.subr.bf16.mxu0 0
      %555 = vmatpush1.bf16.msra.mxu0 0
      %556 = vmatprep.subr.bf16.mxu0 0
      %557 = vmatpush1.bf16.msra.mxu0 0
      %558 = vmatprep.subr.bf16.mxu0 0
      %559 = vmatpush1.bf16.msra.mxu0 0
      %560 = vmatprep.subr.bf16.mxu0 0
      %561 = vmatpush1.bf16.msra.mxu0 0
      %562 = vmatprep.subr.bf16.mxu0 0
      %563 = vmatpush1.bf16.msra.mxu0 0
      %564 = vmatprep.subr.bf16.mxu0 0
      %565 = vmatpush1.bf16.msra.mxu0 0
      %566 = vmatprep.subr.bf16.mxu0 0
      %567 = vmatpush1.bf16.msra.mxu0 0
      %568 = vmatprep.subr.bf16.mxu0 0
      %569 = vmatpush1.bf16.msra.mxu0 0
      %570 = vmatprep.subr.bf16.mxu0 0
      %571 = vmatpush1.bf16.msra.mxu0 0
      %572 = vmatprep.subr.bf16.mxu0 0
      %573 = vmatpush1.bf16.msra.mxu0 0
      %574 = vmatprep.subr.bf16.mxu0 0
      %575 = vmatpush1.bf16.msra.mxu0 0
      %576 = vmatprep.subr.bf16.mxu0 0
      %577 = vmatpush1.bf16.msra.mxu0 0
      %578 = vmatprep.subr.bf16.mxu0 0
      %579 = vmatpush1.bf16.msra.mxu0 0
      %580 = vmatprep.mubr.bf16.mxu0 0
      %581 = vmatmul.mubr.bf16.gmra.mrb[0].mxu0 %v455
      %v582 = vpop.f32.mrb[0].mxu0
      %v583 = vadd.f32 %v387, %v582
      %v584 = vpop.f32.mrb[0].mxu0
      %v585 = vpop.f32.mrb[0].mxu0
      %v586 = vadd.f32 %v390, %v585
      %v587 = vpop.f32.mrb[0].mxu0
      %588 = vmatprep.mubr.bf16.mxu0 0
      %589 = vmatmul.mubr.bf16.gmra.mrb[0].mxu0 %v458
      %v590 = vpop.f32.mrb[0].mxu0
      %v591 = vadd.f32 %v395, %v590
      %v592 = vpop.f32.mrb[0].mxu0
      %v593 = vpop.f32.mrb[0].mxu0
      %v594 = vadd.f32 %v398, %v593
      %v595 = vpop.f32.mrb[0].mxu0
      %596 = vmatprep.mubr.bf16.mxu0 0
      %597 = vmatmul.mubr.bf16.gmra.mrb[0].mxu0 %v461
      %v598 = vpop.f32.mrb[0].mxu0
      %v599 = vadd.f32 %v403, %v598
      %v600 = vpop.f32.mrb[0].mxu0
      %v601 = vpop.f32.mrb[0].mxu0
      %v602 = vadd.f32 %v406, %v601
      %v603 = vpop.f32.mrb[0].mxu0
      %604 = vmatprep.mubr.bf16.mxu0 0
      %605 = vmatmul.mubr.bf16.gmra.mrb[0].mxu0 %v464
      %v606 = vpop.f32.mrb[0].mxu0
      %v607 = vadd.f32 %v411, %v606
      %v608 = vpop.f32.mrb[0].mxu0
      %v609 = vpop.f32.mrb[0].mxu0
      %v610 = vadd.f32 %v414, %v609
      %v611 = vpop.f32.mrb[0].mxu0
      %612 = vdwg.mxu0
      %v613 = vld [vmem:[%s192] sm:$0xf]
      %v614 = vld [vmem:[%s192 + $0x4] sm:$0x1]
      %v615 = vld [vmem:[%s192 + $0x8] sm:$0xf]
      %v616 = vld [vmem:[%s192 + $0xc] sm:$0x1]
      %v617 = vld [vmem:[%s192 + $0x10] sm:$0xf]
      %v618 = vld [vmem:[%s192 + $0x14] sm:$0x1]
      %v619 = vld [vmem:[%s192 + $0x18] sm:$0xf]
      %v620 = vld [vmem:[%s192 + $0x1c] sm:$0x1]
      %v621 = vld [vmem:[%s192 + $0x20] sm:$0xf]
      %v622 = vld [vmem:[%s192 + $0x24] sm:$0x1]
      %v623 = vld [vmem:[%s192 + $0x28] sm:$0xf]
      %v624 = vld [vmem:[%s192 + $0x2c] sm:$0x1]
      %v625 = vld [vmem:[%s192 + $0x30] sm:$0xf]
      %v626 = vld [vmem:[%s192 + $0x34] sm:$0x1]
      %v627 = vld [vmem:[%s192 + $0x38] sm:$0xf]
      %v628 = vld [vmem:[%s192 + $0x3c] sm:$0x1]
      %vm629 = vsmask.f32 3328
      %vm630 = vsmask.f32 7440
      %vm631 = vmor %vm629, %vm630
      %v633 = vshrl.u32 %v613, 16
      %v635 = vrot.slane %v633, 4
      %v636 = vshll.u32 %v613, 16
      %v638 = vrot.slane %v636, 5
      %v639 = vor.u32 %v635, %v638
      %v640 = vrot.slane %v639, 4
      %v642 = vshll.u32 %v614, 16
      %v644 = vrot.slane %v642, 5
      %v645 = vsel %vm631, %v640, %v644
      %v647 = vshrl.u32 %v615, 16
      %v649 = vrot.slane %v647, 4
      %v650 = vshll.u32 %v615, 16
      %v652 = vrot.slane %v650, 5
      %v653 = vor.u32 %v649, %v652
      %v654 = vrot.slane %v653, 4
      %v656 = vshll.u32 %v616, 16
      %v658 = vrot.slane %v656, 5
      %v659 = vsel %vm631, %v654, %v658
      %v661 = vshrl.u32 %v617, 16
      %v663 = vrot.slane %v661, 4
      %v664 = vshll.u32 %v617, 16
      %v666 = vrot.slane %v664, 5
      %v667 = vor.u32 %v663, %v666
      %v668 = vrot.slane %v667, 4
      %v670 = vshll.u32 %v618, 16
      %v672 = vrot.slane %v670, 5
      %v673 = vsel %vm631, %v668, %v672
      %v675 = vshrl.u32 %v619, 16
      %v677 = vrot.slane %v675, 4
      %v678 = vshll.u32 %v619, 16
      %v680 = vrot.slane %v678, 5
      %v681 = vor.u32 %v677, %v680
      %v682 = vrot.slane %v681, 4
      %v684 = vshll.u32 %v620, 16
      %v686 = vrot.slane %v684, 5
      %v687 = vsel %vm631, %v682, %v686
      %v689 = vshrl.u32 %v621, 16
      %v691 = vrot.slane %v689, 4
      %v692 = vshll.u32 %v621, 16
      %v694 = vrot.slane %v692, 5
      %v695 = vor.u32 %v691, %v694
      %v696 = vrot.slane %v695, 4
      %v698 = vshll.u32 %v622, 16
      %v700 = vrot.slane %v698, 5
      %v701 = vsel %vm631, %v696, %v700
      %v703 = vshrl.u32 %v623, 16
      %v705 = vrot.slane %v703, 4
      %v706 = vshll.u32 %v623, 16
      %v708 = vrot.slane %v706, 5
      %v709 = vor.u32 %v705, %v708
      %v710 = vrot.slane %v709, 4
      %v712 = vshll.u32 %v624, 16
      %v714 = vrot.slane %v712, 5
      %v715 = vsel %vm631, %v710, %v714
      %v717 = vshrl.u32 %v625, 16
      %v719 = vrot.slane %v717, 4
      %v720 = vshll.u32 %v625, 16
      %v722 = vrot.slane %v720, 5
      %v723 = vor.u32 %v719, %v722
      %v724 = vrot.slane %v723, 4
      %v726 = vshll.u32 %v626, 16
      %v728 = vrot.slane %v726, 5
      %v729 = vsel %vm631, %v724, %v728
      %v731 = vshrl.u32 %v627, 16
      %v733 = vrot.slane %v731, 4
      %v734 = vshll.u32 %v627, 16
      %v736 = vrot.slane %v734, 5
      %v737 = vor.u32 %v733, %v736
      %v738 = vrot.slane %v737, 4
      %v740 = vshll.u32 %v628, 16
      %v742 = vrot.slane %v740, 5
      %v743 = vsel %vm631, %v738, %v742
      %s744 = scalar_lea.vmem %s1, 12
      %v745 = vld [vmem:[%s744] sm:$0x3f]
      %v746 = vunpack.c.l.b16 %v645
      %v747 = vunpack.c.l.b16 %v659
      %v748 = vunpack.c.l.b16 %v673
      %v749 = vunpack.c.l.b16 %v687
      %v750 = vunpack.c.l.b16 %v701
      %v751 = vunpack.c.l.b16 %v715
      %v752 = vunpack.c.l.b16 %v729
      %v753 = vunpack.c.l.b16 %v743
      %v754 = vpack.c.b16 %v747, %v746
      %v755 = vpack.c.b16 %v749, %v748
      %v756 = vpack.c.b16 %v751, %v750
      %v757 = vpack.c.b16 %v753, %v752
      %v759 = vcombine.high %v745, %v745
      %v761 = vunpack.c.l.s4 1983009808
      %v762 = vunpack.c.0.s8 %v761
      %v763 = vlaneseq
      %v764 = vshrl.u32 %v763, 7
      %v765 = vsub.s32 %v762, %v764
      %v766 = vrot.slane %v745, %v765
      %v768 = vunpack.c.l.s4 1983009808
      %v769 = vunpack.c.0.s8 %v768
      %v770 = vlaneseq
      %v771 = vshrl.u32 %v770, 7
      %v772 = vsub.s32 %v769, %v771
      %v773 = vrot.slane %v759, %v772
      %v774 = vcombine.high %v766, %v766
      %v776 = vsel %vm256, %v754, 0
      %v779 = vsel %vm256, %v755, 0
      %v782 = vsel %vm256, %v756, 0
      %v785 = vsel %vm256, %v757, 0
      %v788 = vsel %vm269, %v766, 0
      %v791 = vsel %vm269, %v774, 0
      %v794 = vsel %vm269, %v773, 0
      %796 = vmatprep.subr.bf16.mxu0 %v791
      %797 = vmatpush1.bf16.msra.mxu0 %v788
      %798 = vmatprep.subr.bf16.mxu0 0
      %799 = vmatpush1.bf16.msra.mxu0 0
      %800 = vmatprep.subr.bf16.mxu0 0
      %801 = vmatpush1.bf16.msra.mxu0 0
      %802 = vmatprep.subr.bf16.mxu0 0
      %803 = vmatpush1.bf16.msra.mxu0 0
      %804 = vmatprep.subr.bf16.mxu0 0
      %805 = vmatpush1.bf16.msra.mxu0 0
      %806 = vmatprep.subr.bf16.mxu0 0
      %807 = vmatpush1.bf16.msra.mxu0 0
      %808 = vmatprep.subr.bf16.mxu0 0
      %809 = vmatpush1.bf16.msra.mxu0 0
      %810 = vmatprep.subr.bf16.mxu0 0
      %811 = vmatpush1.bf16.msra.mxu0 0
      %812 = vmatprep.subr.bf16.mxu0 0
      %813 = vmatpush1.bf16.msra.mxu0 0
      %814 = vmatprep.subr.bf16.mxu0 0
      %815 = vmatpush1.bf16.msra.mxu0 0
      %816 = vmatprep.subr.bf16.mxu0 0
      %817 = vmatpush1.bf16.msra.mxu0 0
      %818 = vmatprep.subr.bf16.mxu0 0
      %819 = vmatpush1.bf16.msra.mxu0 0
      %820 = vmatprep.subr.bf16.mxu0 0
      %821 = vmatpush1.bf16.msra.mxu0 0
      %822 = vmatprep.subr.bf16.mxu0 0
      %823 = vmatpush1.bf16.msra.mxu0 0
      %824 = vmatprep.subr.bf16.mxu0 0
      %825 = vmatpush1.bf16.msra.mxu0 0
      %826 = vmatprep.subr.bf16.mxu0 0
      %827 = vmatpush1.bf16.msra.mxu0 0
      %828 = vmatprep.mubr.bf16.mxu0 0
      %829 = vmatmul.mubr.bf16.gmra.mrb[0].mxu0 %v776
      %v830 = vpop.f32.mrb[0].mxu0
      %v831 = vadd.f32 0.0, %v830
      %v832 = vpop.f32.mrb[0].mxu0
      %v833 = vadd.f32 0.0, %v832
      %v834 = vpop.f32.mrb[0].mxu0
      %v835 = vadd.f32 0.0, %v834
      %v836 = vpop.f32.mrb[0].mxu0
      %v837 = vadd.f32 0.0, %v836
      %838 = vmatprep.mubr.bf16.mxu0 0
      %839 = vmatmul.mubr.bf16.gmra.mrb[0].mxu0 %v779
      %v840 = vpop.f32.mrb[0].mxu0
      %v841 = vadd.f32 0.0, %v840
      %v842 = vpop.f32.mrb[0].mxu0
      %v843 = vadd.f32 0.0, %v842
      %v844 = vpop.f32.mrb[0].mxu0
      %v845 = vadd.f32 0.0, %v844
      %v846 = vpop.f32.mrb[0].mxu0
      %v847 = vadd.f32 0.0, %v846
      %848 = vmatprep.mubr.bf16.mxu0 0
      %849 = vmatmul.mubr.bf16.gmra.mrb[0].mxu0 %v782
      %v850 = vpop.f32.mrb[0].mxu0
      %v851 = vadd.f32 0.0, %v850
      %v852 = vpop.f32.mrb[0].mxu0
      %v853 = vadd.f32 0.0, %v852
      %v854 = vpop.f32.mrb[0].mxu0
      %v855 = vadd.f32 0.0, %v854
      %v856 = vpop.f32.mrb[0].mxu0
      %v857 = vadd.f32 0.0, %v856
      %858 = vmatprep.mubr.bf16.mxu0 0
      %859 = vmatmul.mubr.bf16.gmra.mrb[0].mxu0 %v785
      %v860 = vpop.f32.mrb[0].mxu0
      %v861 = vadd.f32 0.0, %v860
      %v862 = vpop.f32.mrb[0].mxu0
      %v863 = vadd.f32 0.0, %v862
      %v864 = vpop.f32.mrb[0].mxu0
      %v865 = vadd.f32 0.0, %v864
      %v866 = vpop.f32.mrb[0].mxu0
      %v867 = vadd.f32 0.0, %v866
      %868 = vdwg.mxu0
      %869 = vmatprep.subr.bf16.mxu0 0
      %870 = vmatpush1.bf16.msra.mxu0 %v794
      %871 = vmatprep.subr.bf16.mxu0 0
      %872 = vmatpush1.bf16.msra.mxu0 0
      %873 = vmatprep.subr.bf16.mxu0 0
      %874 = vmatpush1.bf16.msra.mxu0 0
      %875 = vmatprep.subr.bf16.mxu0 0
      %876 = vmatpush1.bf16.msra.mxu0 0
      %877 = vmatprep.subr.bf16.mxu0 0
      %878 = vmatpush1.bf16.msra.mxu0 0
      %879 = vmatprep.subr.bf16.mxu0 0
      %880 = vmatpush1.bf16.msra.mxu0 0
      %881 = vmatprep.subr.bf16.mxu0 0
      %882 = vmatpush1.bf16.msra.mxu0 0
      %883 = vmatprep.subr.bf16.mxu0 0
      %884 = vmatpush1.bf16.msra.mxu0 0
      %885 = vmatprep.subr.bf16.mxu0 0
      %886 = vmatpush1.bf16.msra.mxu0 0
      %887 = vmatprep.subr.bf16.mxu0 0
      %888 = vmatpush1.bf16.msra.mxu0 0
      %889 = vmatprep.subr.bf16.mxu0 0
      %890 = vmatpush1.bf16.msra.mxu0 0
      %891 = vmatprep.subr.bf16.mxu0 0
      %892 = vmatpush1.bf16.msra.mxu0 0
      %893 = vmatprep.subr.bf16.mxu0 0
      %894 = vmatpush1.bf16.msra.mxu0 0
      %895 = vmatprep.subr.bf16.mxu0 0
      %896 = vmatpush1.bf16.msra.mxu0 0
      %897 = vmatprep.subr.bf16.mxu0 0
      %898 = vmatpush1.bf16.msra.mxu0 0
      %899 = vmatprep.subr.bf16.mxu0 0
      %900 = vmatpush1.bf16.msra.mxu0 0
      %901 = vmatprep.mubr.bf16.mxu0 0
      %902 = vmatmul.mubr.bf16.gmra.mrb[0].mxu0 %v776
      %v903 = vpop.f32.mrb[0].mxu0
      %v904 = vadd.f32 0.0, %v903
      %v905 = vpop.f32.mrb[0].mxu0
      %v906 = vpop.f32.mrb[0].mxu0
      %v907 = vadd.f32 0.0, %v906
      %v908 = vpop.f32.mrb[0].mxu0
      %909 = vmatprep.mubr.bf16.mxu0 0
      %910 = vmatmul.mubr.bf16.gmra.mrb[0].mxu0 %v779
      %v911 = vpop.f32.mrb[0].mxu0
      %v912 = vadd.f32 0.0, %v911
      %v913 = vpop.f32.mrb[0].mxu0
      %v914 = vpop.f32.mrb[0].mxu0
      %v915 = vadd.f32 0.0, %v914
      %v916 = vpop.f32.mrb[0].mxu0
      %917 = vmatprep.mubr.bf16.mxu0 0
      %918 = vmatmul.mubr.bf16.gmra.mrb[0].mxu0 %v782
      %v919 = vpop.f32.mrb[0].mxu0
      %v920 = vadd.f32 0.0, %v919
      %v921 = vpop.f32.mrb[0].mxu0
      %v922 = vpop.f32.mrb[0].mxu0
      %v923 = vadd.f32 0.0, %v922
      %v924 = vpop.f32.mrb[0].mxu0
      %925 = vmatprep.mubr.bf16.mxu0 0
      %926 = vmatmul.mubr.bf16.gmra.mrb[0].mxu0 %v785
      %v927 = vpop.f32.mrb[0].mxu0
      %v928 = vadd.f32 0.0, %v927
      %v929 = vpop.f32.mrb[0].mxu0
      %v930 = vpop.f32.mrb[0].mxu0
      %v931 = vadd.f32 0.0, %v930
      %v932 = vpop.f32.mrb[0].mxu0
      %933 = vdwg.mxu0
      %v934 = vadd.f32 %v510, %v831
      %v935 = vadd.f32 %v512, %v833
      %v936 = vadd.f32 %v583, %v904
      %v937 = vadd.f32 %v514, %v835
      %v938 = vadd.f32 %v516, %v837
      %v939 = vadd.f32 %v586, %v907
      %v940 = vadd.f32 %v520, %v841
      %v941 = vadd.f32 %v522, %v843
      %v942 = vadd.f32 %v591, %v912
      %v943 = vadd.f32 %v524, %v845
      %v944 = vadd.f32 %v526, %v847
      %v945 = vadd.f32 %v594, %v915
      %v946 = vadd.f32 %v530, %v851
      %v947 = vadd.f32 %v532, %v853
      %v948 = vadd.f32 %v599, %v920
      %v949 = vadd.f32 %v534, %v855
      %v950 = vadd.f32 %v536, %v857
      %v951 = vadd.f32 %v602, %v923
      %v952 = vadd.f32 %v540, %v861
      %v953 = vadd.f32 %v542, %v863
      %v954 = vadd.f32 %v607, %v928
      %v955 = vadd.f32 %v544, %v865
      %v956 = vadd.f32 %v546, %v867
      %v957 = vadd.f32 %v610, %v931
      %s958 = scalar_lea.vmem %s192, 144
      %v959 = vld [vmem:[%s958] sm:$0xf]
      %v960 = vld [vmem:[%s958 + $0x8] sm:$0xf]
      %v961 = vld [vmem:[%s958 + $0x10] sm:$0xf]
      %v962 = vld [vmem:[%s958 + $0x18] sm:$0xf]
      %v963 = vld [vmem:[%s958 + $0x20] sm:$0xf]
      %v964 = vld [vmem:[%s958 + $0x28] sm:$0xf]
      %v965 = vld [vmem:[%s958 + $0x30] sm:$0xf]
      %v966 = vld [vmem:[%s958 + $0x38] sm:$0xf]
      %s967 = scalar_lea.vmem %s1, 18
      %v968 = vld [vmem:[%s967] sm:$0x3f]
      %v977 = vunpack.c.l.b16 %v959
      %v978 = vunpack.c.l.b16 %v960
      %v979 = vunpack.c.l.b16 %v961
      %v980 = vunpack.c.l.b16 %v962
      %v981 = vunpack.c.l.b16 %v963
      %v982 = vunpack.c.l.b16 %v964
      %v983 = vunpack.c.l.b16 %v965
      %v984 = vunpack.c.l.b16 %v966
      %v985 = vpack.c.b16 %v978, %v977
      %v986 = vpack.c.b16 %v980, %v979
      %v987 = vpack.c.b16 %v982, %v981
      %v988 = vpack.c.b16 %v984, %v983
      %v990 = vcombine.high %v968, %v968
      %v992 = vunpack.c.l.s4 1983009808
      %v993 = vunpack.c.0.s8 %v992
      %v994 = vlaneseq
      %v995 = vshrl.u32 %v994, 7
      %v996 = vsub.s32 %v993, %v995
      %v997 = vrot.slane %v968, %v996
      %v999 = vunpack.c.l.s4 1983009808
      %v1000 = vunpack.c.0.s8 %v999
      %v1001 = vlaneseq
      %v1002 = vshrl.u32 %v1001, 7
      %v1003 = vsub.s32 %v1000, %v1002
      %v1004 = vrot.slane %v990, %v1003
      %v1005 = vcombine.high %v997, %v997
      %v1007 = vsel %vm256, %v985, 0
      %v1010 = vsel %vm256, %v986, 0
      %v1013 = vsel %vm256, %v987, 0
      %v1016 = vsel %vm256, %v988, 0
      %v1019 = vsel %vm269, %v997, 0
      %v1022 = vsel %vm269, %v1005, 0
      %v1025 = vsel %vm269, %v1004, 0
      %1027 = vmatprep.subr.bf16.mxu0 %v1022
      %1028 = vmatpush1.bf16.msra.mxu0 %v1019
      %1029 = vmatprep.subr.bf16.mxu0 0
      %1030 = vmatpush1.bf16.msra.mxu0 0
      %1031 = vmatprep.subr.bf16.mxu0 0
      %1032 = vmatpush1.bf16.msra.mxu0 0
      %1033 = vmatprep.subr.bf16.mxu0 0
      %1034 = vmatpush1.bf16.msra.mxu0 0
      %1035 = vmatprep.subr.bf16.mxu0 0
      %1036 = vmatpush1.bf16.msra.mxu0 0
      %1037 = vmatprep.subr.bf16.mxu0 0
      %1038 = vmatpush1.bf16.msra.mxu0 0
      %1039 = vmatprep.subr.bf16.mxu0 0
      %1040 = vmatpush1.bf16.msra.mxu0 0
      %1041 = vmatprep.subr.bf16.mxu0 0
      %1042 = vmatpush1.bf16.msra.mxu0 0
      %1043 = vmatprep.subr.bf16.mxu0 0
      %1044 = vmatpush1.bf16.msra.mxu0 0
      %1045 = vmatprep.subr.bf16.mxu0 0
      %1046 = vmatpush1.bf16.msra.mxu0 0
      %1047 = vmatprep.subr.bf16.mxu0 0
      %1048 = vmatpush1.bf16.msra.mxu0 0
      %1049 = vmatprep.subr.bf16.mxu0 0
      %1050 = vmatpush1.bf16.msra.mxu0 0
      %1051 = vmatprep.subr.bf16.mxu0 0
      %1052 = vmatpush1.bf16.msra.mxu0 0
      %1053 = vmatprep.subr.bf16.mxu0 0
      %1054 = vmatpush1.bf16.msra.mxu0 0
      %1055 = vmatprep.subr.bf16.mxu0 0
      %1056 = vmatpush1.bf16.msra.mxu0 0
      %1057 = vmatprep.subr.bf16.mxu0 0
      %1058 = vmatpush1.bf16.msra.mxu0 0
      %1059 = vmatprep.mubr.bf16.mxu0 0
      %1060 = vmatmul.mubr.bf16.gmra.mrb[0].mxu0 %v1007
      %v1061 = vpop.f32.mrb[0].mxu0
      %v1062 = vadd.f32 0.0, %v1061
      %v1063 = vpop.f32.mrb[0].mxu0
      %v1064 = vadd.f32 0.0, %v1063
      %v1065 = vpop.f32.mrb[0].mxu0
      %v1066 = vadd.f32 0.0, %v1065
      %v1067 = vpop.f32.mrb[0].mxu0
      %v1068 = vadd.f32 0.0, %v1067
      %1069 = vmatprep.mubr.bf16.mxu0 0
      %1070 = vmatmul.mubr.bf16.gmra.mrb[0].mxu0 %v1010
      %v1071 = vpop.f32.mrb[0].mxu0
      %v1072 = vadd.f32 0.0, %v1071
      %v1073 = vpop.f32.mrb[0].mxu0
      %v1074 = vadd.f32 0.0, %v1073
      %v1075 = vpop.f32.mrb[0].mxu0
      %v1076 = vadd.f32 0.0, %v1075
      %v1077 = vpop.f32.mrb[0].mxu0
      %v1078 = vadd.f32 0.0, %v1077
      %1079 = vmatprep.mubr.bf16.mxu0 0
      %1080 = vmatmul.mubr.bf16.gmra.mrb[0].mxu0 %v1013
      %v1081 = vpop.f32.mrb[0].mxu0
      %v1082 = vadd.f32 0.0, %v1081
      %v1083 = vpop.f32.mrb[0].mxu0
      %v1084 = vadd.f32 0.0, %v1083
      %v1085 = vpop.f32.mrb[0].mxu0
      %v1086 = vadd.f32 0.0, %v1085
      %v1087 = vpop.f32.mrb[0].mxu0
      %v1088 = vadd.f32 0.0, %v1087
      %1089 = vmatprep.mubr.bf16.mxu0 0
      %1090 = vmatmul.mubr.bf16.gmra.mrb[0].mxu0 %v1016
      %v1091 = vpop.f32.mrb[0].mxu0
      %v1092 = vadd.f32 0.0, %v1091
      %v1093 = vpop.f32.mrb[0].mxu0
      %v1094 = vadd.f32 0.0, %v1093
      %v1095 = vpop.f32.mrb[0].mxu0
      %v1096 = vadd.f32 0.0, %v1095
      %v1097 = vpop.f32.mrb[0].mxu0
      %v1098 = vadd.f32 0.0, %v1097
      %1099 = vdwg.mxu0
      %1100 = vmatprep.subr.bf16.mxu0 0
      %1101 = vmatpush1.bf16.msra.mxu0 %v1025
      %1102 = vmatprep.subr.bf16.mxu0 0
      %1103 = vmatpush1.bf16.msra.mxu0 0
      %1104 = vmatprep.subr.bf16.mxu0 0
      %1105 = vmatpush1.bf16.msra.mxu0 0
      %1106 = vmatprep.subr.bf16.mxu0 0
      %1107 = vmatpush1.bf16.msra.mxu0 0
      %1108 = vmatprep.subr.bf16.mxu0 0
      %1109 = vmatpush1.bf16.msra.mxu0 0
      %1110 = vmatprep.subr.bf16.mxu0 0
      %1111 = vmatpush1.bf16.msra.mxu0 0
      %1112 = vmatprep.subr.bf16.mxu0 0
      %1113 = vmatpush1.bf16.msra.mxu0 0
      %1114 = vmatprep.subr.bf16.mxu0 0
      %1115 = vmatpush1.bf16.msra.mxu0 0
      %1116 = vmatprep.subr.bf16.mxu0 0
      %1117 = vmatpush1.bf16.msra.mxu0 0
      %1118 = vmatprep.subr.bf16.mxu0 0
      %1119 = vmatpush1.bf16.msra.mxu0 0
      %1120 = vmatprep.subr.bf16.mxu0 0
      %1121 = vmatpush1.bf16.msra.mxu0 0
      %1122 = vmatprep.subr.bf16.mxu0 0
      %1123 = vmatpush1.bf16.msra.mxu0 0
      %1124 = vmatprep.subr.bf16.mxu0 0
      %1125 = vmatpush1.bf16.msra.mxu0 0
      %1126 = vmatprep.subr.bf16.mxu0 0
      %1127 = vmatpush1.bf16.msra.mxu0 0
      %1128 = vmatprep.subr.bf16.mxu0 0
      %1129 = vmatpush1.bf16.msra.mxu0 0
      %1130 = vmatprep.subr.bf16.mxu0 0
      %1131 = vmatpush1.bf16.msra.mxu0 0
      %1132 = vmatprep.mubr.bf16.mxu0 0
      %1133 = vmatmul.mubr.bf16.gmra.mrb[0].mxu0 %v1007
      %v1134 = vpop.f32.mrb[0].mxu0
      %v1135 = vadd.f32 0.0, %v1134
      %v1136 = vpop.f32.mrb[0].mxu0
      %v1137 = vpop.f32.mrb[0].mxu0
      %v1138 = vadd.f32 0.0, %v1137
      %v1139 = vpop.f32.mrb[0].mxu0
      %1140 = vmatprep.mubr.bf16.mxu0 0
      %1141 = vmatmul.mubr.bf16.gmra.mrb[0].mxu0 %v1010
      %v1142 = vpop.f32.mrb[0].mxu0
      %v1143 = vadd.f32 0.0, %v1142
      %v1144 = vpop.f32.mrb[0].mxu0
      %v1145 = vpop.f32.mrb[0].mxu0
      %v1146 = vadd.f32 0.0, %v1145
      %v1147 = vpop.f32.mrb[0].mxu0
      %1148 = vmatprep.mubr.bf16.mxu0 0
      %1149 = vmatmul.mubr.bf16.gmra.mrb[0].mxu0 %v1013
      %v1150 = vpop.f32.mrb[0].mxu0
      %v1151 = vadd.f32 0.0, %v1150
      %v1152 = vpop.f32.mrb[0].mxu0
      %v1153 = vpop.f32.mrb[0].mxu0
      %v1154 = vadd.f32 0.0, %v1153
      %v1155 = vpop.f32.mrb[0].mxu0
      %1156 = vmatprep.mubr.bf16.mxu0 0
      %1157 = vmatmul.mubr.bf16.gmra.mrb[0].mxu0 %v1016
      %v1158 = vpop.f32.mrb[0].mxu0
      %v1159 = vadd.f32 0.0, %v1158
      %v1160 = vpop.f32.mrb[0].mxu0
      %v1161 = vpop.f32.mrb[0].mxu0
      %v1162 = vadd.f32 0.0, %v1161
      %v1163 = vpop.f32.mrb[0].mxu0
      %1164 = vdwg.mxu0
      %v1165 = vadd.f32 %v934, %v1062
      %v1166 = vadd.f32 %v935, %v1064
      %v1167 = vadd.f32 %v936, %v1135
      %v1168 = vadd.f32 %v937, %v1066
      %v1169 = vadd.f32 %v938, %v1068
      %v1170 = vadd.f32 %v939, %v1138
      %v1171 = vadd.f32 %v940, %v1072
      %v1172 = vadd.f32 %v941, %v1074
      %v1173 = vadd.f32 %v942, %v1143
      %v1174 = vadd.f32 %v943, %v1076
      %v1175 = vadd.f32 %v944, %v1078
      %v1176 = vadd.f32 %v945, %v1146
      %v1177 = vadd.f32 %v946, %v1082
      %v1178 = vadd.f32 %v947, %v1084
      %v1179 = vadd.f32 %v948, %v1151
      %v1180 = vadd.f32 %v949, %v1086
      %v1181 = vadd.f32 %v950, %v1088
      %v1182 = vadd.f32 %v951, %v1154
      %v1183 = vadd.f32 %v952, %v1092
      %v1184 = vadd.f32 %v953, %v1094
      %v1185 = vadd.f32 %v954, %v1159
      %v1186 = vadd.f32 %v955, %v1096
      %v1187 = vadd.f32 %v956, %v1098
      %v1188 = vadd.f32 %v957, %v1162
      %s1189 = scalar_lea.vmem %s192, 216
      %v1190 = vld [vmem:[%s1189] sm:$0xf]
      %v1191 = vld [vmem:[%s1189 + $0x8] sm:$0xf]
      %v1192 = vld [vmem:[%s1189 + $0x10] sm:$0xf]
      %v1193 = vld [vmem:[%s1189 + $0x18] sm:$0xf]
      %v1194 = vld [vmem:[%s1189 + $0x20] sm:$0xf]
      %v1195 = vld [vmem:[%s1189 + $0x28] sm:$0xf]
      %v1196 = vld [vmem:[%s1189 + $0x30] sm:$0xf]
      %v1197 = vld [vmem:[%s1189 + $0x38] sm:$0xf]
      %s1198 = scalar_lea.vmem %s1, 24
      %v1199 = vld [vmem:[%s1198] sm:$0x3f]
      %v1208 = vunpack.c.l.b16 %v1190
      %v1209 = vunpack.c.l.b16 %v1191
      %v1210 = vunpack.c.l.b16 %v1192
      %v1211 = vunpack.c.l.b16 %v1193
      %v1212 = vunpack.c.l.b16 %v1194
      %v1213 = vunpack.c.l.b16 %v1195
      %v1214 = vunpack.c.l.b16 %v1196
      %v1215 = vunpack.c.l.b16 %v1197
      %v1216 = vpack.c.b16 %v1209, %v1208
      %v1217 = vpack.c.b16 %v1211, %v1210
      %v1218 = vpack.c.b16 %v1213, %v1212
      %v1219 = vpack.c.b16 %v1215, %v1214
      %v1221 = vcombine.high %v1199, %v1199
      %v1223 = vunpack.c.l.s4 1983009808
      %v1224 = vunpack.c.0.s8 %v1223
      %v1225 = vlaneseq
      %v1226 = vshrl.u32 %v1225, 7
      %v1227 = vsub.s32 %v1224, %v1226
      %v1228 = vrot.slane %v1199, %v1227
      %v1230 = vunpack.c.l.s4 1983009808
      %v1231 = vunpack.c.0.s8 %v1230
      %v1232 = vlaneseq
      %v1233 = vshrl.u32 %v1232, 7
      %v1234 = vsub.s32 %v1231, %v1233
      %v1235 = vrot.slane %v1221, %v1234
      %v1236 = vcombine.high %v1228, %v1228
      %v1238 = vsel %vm256, %v1216, 0
      %v1241 = vsel %vm256, %v1217, 0
      %v1244 = vsel %vm256, %v1218, 0
      %v1247 = vsel %vm256, %v1219, 0
      %v1250 = vsel %vm269, %v1228, 0
      %v1253 = vsel %vm269, %v1236, 0
      %v1256 = vsel %vm269, %v1235, 0
      %1258 = vmatprep.subr.bf16.mxu0 %v1253
      %1259 = vmatpush1.bf16.msra.mxu0 %v1250
      %1260 = vmatprep.subr.bf16.mxu0 0
      %1261 = vmatpush1.bf16.msra.mxu0 0
      %1262 = vmatprep.subr.bf16.mxu0 0
      %1263 = vmatpush1.bf16.msra.mxu0 0
      %1264 = vmatprep.subr.bf16.mxu0 0
      %1265 = vmatpush1.bf16.msra.mxu0 0
      %1266 = vmatprep.subr.bf16.mxu0 0
      %1267 = vmatpush1.bf16.msra.mxu0 0
      %1268 = vmatprep.subr.bf16.mxu0 0
      %1269 = vmatpush1.bf16.msra.mxu0 0
      %1270 = vmatprep.subr.bf16.mxu0 0
      %1271 = vmatpush1.bf16.msra.mxu0 0
      %1272 = vmatprep.subr.bf16.mxu0 0
      %1273 = vmatpush1.bf16.msra.mxu0 0
      %1274 = vmatprep.subr.bf16.mxu0 0
      %1275 = vmatpush1.bf16.msra.mxu0 0
      %1276 = vmatprep.subr.bf16.mxu0 0
      %1277 = vmatpush1.bf16.msra.mxu0 0
      %1278 = vmatprep.subr.bf16.mxu0 0
      %1279 = vmatpush1.bf16.msra.mxu0 0
      %1280 = vmatprep.subr.bf16.mxu0 0
      %1281 = vmatpush1.bf16.msra.mxu0 0
      %1282 = vmatprep.subr.bf16.mxu0 0
      %1283 = vmatpush1.bf16.msra.mxu0 0
      %1284 = vmatprep.subr.bf16.mxu0 0
      %1285 = vmatpush1.bf16.msra.mxu0 0
      %1286 = vmatprep.subr.bf16.mxu0 0
      %1287 = vmatpush1.bf16.msra.mxu0 0
      %1288 = vmatprep.subr.bf16.mxu0 0
      %1289 = vmatpush1.bf16.msra.mxu0 0
      %1290 = vmatprep.mubr.bf16.mxu0 0
      %1291 = vmatmul.mubr.bf16.gmra.mrb[0].mxu0 %v1238
      %v1292 = vpop.f32.mrb[0].mxu0
      %v1293 = vadd.f32 0.0, %v1292
      %v1294 = vpop.f32.mrb[0].mxu0
      %v1295 = vadd.f32 0.0, %v1294
      %v1296 = vpop.f32.mrb[0].mxu0
      %v1297 = vadd.f32 0.0, %v1296
      %v1298 = vpop.f32.mrb[0].mxu0
      %v1299 = vadd.f32 0.0, %v1298
      %1300 = vmatprep.mubr.bf16.mxu0 0
      %1301 = vmatmul.mubr.bf16.gmra.mrb[0].mxu0 %v1241
      %v1302 = vpop.f32.mrb[0].mxu0
      %v1303 = vadd.f32 0.0, %v1302
      %v1304 = vpop.f32.mrb[0].mxu0
      %v1305 = vadd.f32 0.0, %v1304
      %v1306 = vpop.f32.mrb[0].mxu0
      %v1307 = vadd.f32 0.0, %v1306
      %v1308 = vpop.f32.mrb[0].mxu0
      %v1309 = vadd.f32 0.0, %v1308
      %1310 = vmatprep.mubr.bf16.mxu0 0
      %1311 = vmatmul.mubr.bf16.gmra.mrb[0].mxu0 %v1244
      %v1312 = vpop.f32.mrb[0].mxu0
      %v1313 = vadd.f32 0.0, %v1312
      %v1314 = vpop.f32.mrb[0].mxu0
      %v1315 = vadd.f32 0.0, %v1314
      %v1316 = vpop.f32.mrb[0].mxu0
      %v1317 = vadd.f32 0.0, %v1316
      %v1318 = vpop.f32.mrb[0].mxu0
      %v1319 = vadd.f32 0.0, %v1318
      %1320 = vmatprep.mubr.bf16.mxu0 0
      %1321 = vmatmul.mubr.bf16.gmra.mrb[0].mxu0 %v1247
      %v1322 = vpop.f32.mrb[0].mxu0
      %v1323 = vadd.f32 0.0, %v1322
      %v1324 = vpop.f32.mrb[0].mxu0
      %v1325 = vadd.f32 0.0, %v1324
      %v1326 = vpop.f32.mrb[0].mxu0
      %v1327 = vadd.f32 0.0, %v1326
      %v1328 = vpop.f32.mrb[0].mxu0
      %v1329 = vadd.f32 0.0, %v1328
      %1330 = vdwg.mxu0
      %1331 = vmatprep.subr.bf16.mxu0 0
      %1332 = vmatpush1.bf16.msra.mxu0 %v1256
      %1333 = vmatprep.subr.bf16.mxu0 0
      %1334 = vmatpush1.bf16.msra.mxu0 0
      %1335 = vmatprep.subr.bf16.mxu0 0
      %1336 = vmatpush1.bf16.msra.mxu0 0
      %1337 = vmatprep.subr.bf16.mxu0 0
      %1338 = vmatpush1.bf16.msra.mxu0 0
      %1339 = vmatprep.subr.bf16.mxu0 0
      %1340 = vmatpush1.bf16.msra.mxu0 0
      %1341 = vmatprep.subr.bf16.mxu0 0
      %1342 = vmatpush1.bf16.msra.mxu0 0
      %1343 = vmatprep.subr.bf16.mxu0 0
      %1344 = vmatpush1.bf16.msra.mxu0 0
      %1345 = vmatprep.subr.bf16.mxu0 0
      %1346 = vmatpush1.bf16.msra.mxu0 0
      %1347 = vmatprep.subr.bf16.mxu0 0
      %1348 = vmatpush1.bf16.msra.mxu0 0
      %1349 = vmatprep.subr.bf16.mxu0 0
      %1350 = vmatpush1.bf16.msra.mxu0 0
      %1351 = vmatprep.subr.bf16.mxu0 0
      %1352 = vmatpush1.bf16.msra.mxu0 0
      %1353 = vmatprep.subr.bf16.mxu0 0
      %1354 = vmatpush1.bf16.msra.mxu0 0
      %1355 = vmatprep.subr.bf16.mxu0 0
      %1356 = vmatpush1.bf16.msra.mxu0 0
      %1357 = vmatprep.subr.bf16.mxu0 0
      %1358 = vmatpush1.bf16.msra.mxu0 0
      %1359 = vmatprep.subr.bf16.mxu0 0
      %1360 = vmatpush1.bf16.msra.mxu0 0
      %1361 = vmatprep.subr.bf16.mxu0 0
      %1362 = vmatpush1.bf16.msra.mxu0 0
      %1363 = vmatprep.mubr.bf16.mxu0 0
      %1364 = vmatmul.mubr.bf16.gmra.mrb[0].mxu0 %v1238
      %v1365 = vpop.f32.mrb[0].mxu0
      %v1366 = vadd.f32 0.0, %v1365
      %v1367 = vpop.f32.mrb[0].mxu0
      %v1368 = vpop.f32.mrb[0].mxu0
      %v1369 = vadd.f32 0.0, %v1368
      %v1370 = vpop.f32.mrb[0].mxu0
      %1371 = vmatprep.mubr.bf16.mxu0 0
      %1372 = vmatmul.mubr.bf16.gmra.mrb[0].mxu0 %v1241
      %v1373 = vpop.f32.mrb[0].mxu0
      %v1374 = vadd.f32 0.0, %v1373
      %v1375 = vpop.f32.mrb[0].mxu0
      %v1376 = vpop.f32.mrb[0].mxu0
      %v1377 = vadd.f32 0.0, %v1376
      %v1378 = vpop.f32.mrb[0].mxu0
      %1379 = vmatprep.mubr.bf16.mxu0 0
      %1380 = vmatmul.mubr.bf16.gmra.mrb[0].mxu0 %v1244
      %v1381 = vpop.f32.mrb[0].mxu0
      %v1382 = vadd.f32 0.0, %v1381
      %v1383 = vpop.f32.mrb[0].mxu0
      %v1384 = vpop.f32.mrb[0].mxu0
      %v1385 = vadd.f32 0.0, %v1384
      %v1386 = vpop.f32.mrb[0].mxu0
      %1387 = vmatprep.mubr.bf16.mxu0 0
      %1388 = vmatmul.mubr.bf16.gmra.mrb[0].mxu0 %v1247
      %v1389 = vpop.f32.mrb[0].mxu0
      %v1390 = vadd.f32 0.0, %v1389
      %v1391 = vpop.f32.mrb[0].mxu0
      %v1392 = vpop.f32.mrb[0].mxu0
      %v1393 = vadd.f32 0.0, %v1392
      %v1394 = vpop.f32.mrb[0].mxu0
      %1395 = vdwg.mxu0
      %v1396 = vadd.f32 %v1165, %v1293
      %v1397 = vadd.f32 %v1166, %v1295
      %v1398 = vadd.f32 %v1167, %v1366
      %v1399 = vadd.f32 %v1168, %v1297
      %v1400 = vadd.f32 %v1169, %v1299
      %v1401 = vadd.f32 %v1170, %v1369
      %v1402 = vadd.f32 %v1171, %v1303
      %v1403 = vadd.f32 %v1172, %v1305
      %v1404 = vadd.f32 %v1173, %v1374
      %v1405 = vadd.f32 %v1174, %v1307
      %v1406 = vadd.f32 %v1175, %v1309
      %v1407 = vadd.f32 %v1176, %v1377
      %v1408 = vadd.f32 %v1177, %v1313
      %v1409 = vadd.f32 %v1178, %v1315
      %v1410 = vadd.f32 %v1179, %v1382
      %v1411 = vadd.f32 %v1180, %v1317
      %v1412 = vadd.f32 %v1181, %v1319
      %v1413 = vadd.f32 %v1182, %v1385
      %v1414 = vadd.f32 %v1183, %v1323
      %v1415 = vadd.f32 %v1184, %v1325
      %v1416 = vadd.f32 %v1185, %v1390
      %v1417 = vadd.f32 %v1186, %v1327
      %v1418 = vadd.f32 %v1187, %v1329
      %v1419 = vadd.f32 %v1188, %v1393
      %v1420 = vld [vmem:[%s958] sm:$0xf]
      %v1421 = vld [vmem:[%s958 + $0x4] sm:$0x1]
      %v1422 = vld [vmem:[%s958 + $0x8] sm:$0xf]
      %v1423 = vld [vmem:[%s958 + $0xc] sm:$0x1]
      %v1424 = vld [vmem:[%s958 + $0x10] sm:$0xf]
      %v1425 = vld [vmem:[%s958 + $0x14] sm:$0x1]
      %v1426 = vld [vmem:[%s958 + $0x18] sm:$0xf]
      %v1427 = vld [vmem:[%s958 + $0x1c] sm:$0x1]
      %v1428 = vld [vmem:[%s958 + $0x20] sm:$0xf]
      %v1429 = vld [vmem:[%s958 + $0x24] sm:$0x1]
      %v1430 = vld [vmem:[%s958 + $0x28] sm:$0xf]
      %v1431 = vld [vmem:[%s958 + $0x2c] sm:$0x1]
      %v1432 = vld [vmem:[%s958 + $0x30] sm:$0xf]
      %v1433 = vld [vmem:[%s958 + $0x34] sm:$0x1]
      %v1434 = vld [vmem:[%s958 + $0x38] sm:$0xf]
      %v1435 = vld [vmem:[%s958 + $0x3c] sm:$0x1]
      %v1437 = vshrl.u32 %v1420, 16
      %v1439 = vrot.slane %v1437, 4
      %v1440 = vshll.u32 %v1420, 16
      %v1442 = vrot.slane %v1440, 5
      %v1443 = vor.u32 %v1439, %v1442
      %v1444 = vrot.slane %v1443, 4
      %v1446 = vshll.u32 %v1421, 16
      %v1448 = vrot.slane %v1446, 5
      %v1449 = vsel %vm631, %v1444, %v1448
      %v1451 = vshrl.u32 %v1422, 16
      %v1453 = vrot.slane %v1451, 4
      %v1454 = vshll.u32 %v1422, 16
      %v1456 = vrot.slane %v1454, 5
      %v1457 = vor.u32 %v1453, %v1456
      %v1458 = vrot.slane %v1457, 4
      %v1460 = vshll.u32 %v1423, 16
      %v1462 = vrot.slane %v1460, 5
      %v1463 = vsel %vm631, %v1458, %v1462
      %v1465 = vshrl.u32 %v1424, 16
      %v1467 = vrot.slane %v1465, 4
      %v1468 = vshll.u32 %v1424, 16
      %v1470 = vrot.slane %v1468, 5
      %v1471 = vor.u32 %v1467, %v1470
      %v1472 = vrot.slane %v1471, 4
      %v1474 = vshll.u32 %v1425, 16
      %v1476 = vrot.slane %v1474, 5
      %v1477 = vsel %vm631, %v1472, %v1476
      %v1479 = vshrl.u32 %v1426, 16
      %v1481 = vrot.slane %v1479, 4
      %v1482 = vshll.u32 %v1426, 16
      %v1484 = vrot.slane %v1482, 5
      %v1485 = vor.u32 %v1481, %v1484
      %v1486 = vrot.slane %v1485, 4
      %v1488 = vshll.u32 %v1427, 16
      %v1490 = vrot.slane %v1488, 5
      %v1491 = vsel %vm631, %v1486, %v1490
      %v1493 = vshrl.u32 %v1428, 16
      %v1495 = vrot.slane %v1493, 4
      %v1496 = vshll.u32 %v1428, 16
      %v1498 = vrot.slane %v1496, 5
      %v1499 = vor.u32 %v1495, %v1498
      %v1500 = vrot.slane %v1499, 4
      %v1502 = vshll.u32 %v1429, 16
      %v1504 = vrot.slane %v1502, 5
      %v1505 = vsel %vm631, %v1500, %v1504
      %v1507 = vshrl.u32 %v1430, 16
      %v1509 = vrot.slane %v1507, 4
      %v1510 = vshll.u32 %v1430, 16
      %v1512 = vrot.slane %v1510, 5
      %v1513 = vor.u32 %v1509, %v1512
      %v1514 = vrot.slane %v1513, 4
      %v1516 = vshll.u32 %v1431, 16
      %v1518 = vrot.slane %v1516, 5
      %v1519 = vsel %vm631, %v1514, %v1518
      %v1521 = vshrl.u32 %v1432, 16
      %v1523 = vrot.slane %v1521, 4
      %v1524 = vshll.u32 %v1432, 16
      %v1526 = vrot.slane %v1524, 5
      %v1527 = vor.u32 %v1523, %v1526
      %v1528 = vrot.slane %v1527, 4
      %v1530 = vshll.u32 %v1433, 16
      %v1532 = vrot.slane %v1530, 5
      %v1533 = vsel %vm631, %v1528, %v1532
      %v1535 = vshrl.u32 %v1434, 16
      %v1537 = vrot.slane %v1535, 4
      %v1538 = vshll.u32 %v1434, 16
      %v1540 = vrot.slane %v1538, 5
      %v1541 = vor.u32 %v1537, %v1540
      %v1542 = vrot.slane %v1541, 4
      %v1544 = vshll.u32 %v1435, 16
      %v1546 = vrot.slane %v1544, 5
      %v1547 = vsel %vm631, %v1542, %v1546
      %s1548 = scalar_lea.vmem %s1, 30
      %v1549 = vld [vmem:[%s1548] sm:$0x3f]
      %v1550 = vunpack.c.l.b16 %v1449
      %v1551 = vunpack.c.l.b16 %v1463
      %v1552 = vunpack.c.l.b16 %v1477
      %v1553 = vunpack.c.l.b16 %v1491
      %v1554 = vunpack.c.l.b16 %v1505
      %v1555 = vunpack.c.l.b16 %v1519
      %v1556 = vunpack.c.l.b16 %v1533
      %v1557 = vunpack.c.l.b16 %v1547
      %v1558 = vpack.c.b16 %v1551, %v1550
      %v1559 = vpack.c.b16 %v1553, %v1552
      %v1560 = vpack.c.b16 %v1555, %v1554
      %v1561 = vpack.c.b16 %v1557, %v1556
      %v1563 = vcombine.high %v1549, %v1549
      %v1565 = vunpack.c.l.s4 1983009808
      %v1566 = vunpack.c.0.s8 %v1565
      %v1567 = vlaneseq
      %v1568 = vshrl.u32 %v1567, 7
      %v1569 = vsub.s32 %v1566, %v1568
      %v1570 = vrot.slane %v1549, %v1569
      %v1572 = vunpack.c.l.s4 1983009808
      %v1573 = vunpack.c.0.s8 %v1572
      %v1574 = vlaneseq
      %v1575 = vshrl.u32 %v1574, 7
      %v1576 = vsub.s32 %v1573, %v1575
      %v1577 = vrot.slane %v1563, %v1576
      %v1578 = vcombine.high %v1570, %v1570
      %v1580 = vsel %vm256, %v1558, 0
      %v1583 = vsel %vm256, %v1559, 0
      %v1586 = vsel %vm256, %v1560, 0
      %v1589 = vsel %vm256, %v1561, 0
      %v1592 = vsel %vm269, %v1570, 0
      %v1595 = vsel %vm269, %v1578, 0
      %v1598 = vsel %vm269, %v1577, 0
      %1600 = vmatprep.subr.bf16.mxu0 %v1595
      %1601 = vmatpush1.bf16.msra.mxu0 %v1592
      %1602 = vmatprep.subr.bf16.mxu0 0
      %1603 = vmatpush1.bf16.msra.mxu0 0
      %1604 = vmatprep.subr.bf16.mxu0 0
      %1605 = vmatpush1.bf16.msra.mxu0 0
      %1606 = vmatprep.subr.bf16.mxu0 0
      %1607 = vmatpush1.bf16.msra.mxu0 0
      %1608 = vmatprep.subr.bf16.mxu0 0
      %1609 = vmatpush1.bf16.msra.mxu0 0
      %1610 = vmatprep.subr.bf16.mxu0 0
      %1611 = vmatpush1.bf16.msra.mxu0 0
      %1612 = vmatprep.subr.bf16.mxu0 0
      %1613 = vmatpush1.bf16.msra.mxu0 0
      %1614 = vmatprep.subr.bf16.mxu0 0
      %1615 = vmatpush1.bf16.msra.mxu0 0
      %1616 = vmatprep.subr.bf16.mxu0 0
      %1617 = vmatpush1.bf16.msra.mxu0 0
      %1618 = vmatprep.subr.bf16.mxu0 0
      %1619 = vmatpush1.bf16.msra.mxu0 0
      %1620 = vmatprep.subr.bf16.mxu0 0
      %1621 = vmatpush1.bf16.msra.mxu0 0
      %1622 = vmatprep.subr.bf16.mxu0 0
      %1623 = vmatpush1.bf16.msra.mxu0 0
      %1624 = vmatprep.subr.bf16.mxu0 0
      %1625 = vmatpush1.bf16.msra.mxu0 0
      %1626 = vmatprep.subr.bf16.mxu0 0
      %1627 = vmatpush1.bf16.msra.mxu0 0
      %1628 = vmatprep.subr.bf16.mxu0 0
      %1629 = vmatpush1.bf16.msra.mxu0 0
      %1630 = vmatprep.subr.bf16.mxu0 0
      %1631 = vmatpush1.bf16.msra.mxu0 0
      %1632 = vmatprep.mubr.bf16.mxu0 0
      %1633 = vmatmul.mubr.bf16.gmra.mrb[0].mxu0 %v1580
      %v1634 = vpop.f32.mrb[0].mxu0
      %v1635 = vadd.f32 0.0, %v1634
      %v1636 = vpop.f32.mrb[0].mxu0
      %v1637 = vadd.f32 0.0, %v1636
      %v1638 = vpop.f32.mrb[0].mxu0
      %v1639 = vadd.f32 0.0, %v1638
      %v1640 = vpop.f32.mrb[0].mxu0
      %v1641 = vadd.f32 0.0, %v1640
      %1642 = vmatprep.mubr.bf16.mxu0 0
      %1643 = vmatmul.mubr.bf16.gmra.mrb[0].mxu0 %v1583
      %v1644 = vpop.f32.mrb[0].mxu0
      %v1645 = vadd.f32 0.0, %v1644
      %v1646 = vpop.f32.mrb[0].mxu0
      %v1647 = vadd.f32 0.0, %v1646
      %v1648 = vpop.f32.mrb[0].mxu0
      %v1649 = vadd.f32 0.0, %v1648
      %v1650 = vpop.f32.mrb[0].mxu0
      %v1651 = vadd.f32 0.0, %v1650
      %1652 = vmatprep.mubr.bf16.mxu0 0
      %1653 = vmatmul.mubr.bf16.gmra.mrb[0].mxu0 %v1586
      %v1654 = vpop.f32.mrb[0].mxu0
      %v1655 = vadd.f32 0.0, %v1654
      %v1656 = vpop.f32.mrb[0].mxu0
      %v1657 = vadd.f32 0.0, %v1656
      %v1658 = vpop.f32.mrb[0].mxu0
      %v1659 = vadd.f32 0.0, %v1658
      %v1660 = vpop.f32.mrb[0].mxu0
      %v1661 = vadd.f32 0.0, %v1660
      %1662 = vmatprep.mubr.bf16.mxu0 0
      %1663 = vmatmul.mubr.bf16.gmra.mrb[0].mxu0 %v1589
      %v1664 = vpop.f32.mrb[0].mxu0
      %v1665 = vadd.f32 0.0, %v1664
      %v1666 = vpop.f32.mrb[0].mxu0
      %v1667 = vadd.f32 0.0, %v1666
      %v1668 = vpop.f32.mrb[0].mxu0
      %v1669 = vadd.f32 0.0, %v1668
      %v1670 = vpop.f32.mrb[0].mxu0
      %v1671 = vadd.f32 0.0, %v1670
      %1672 = vdwg.mxu0
      %1673 = vmatprep.subr.bf16.mxu0 0
      %1674 = vmatpush1.bf16.msra.mxu0 %v1598
      %1675 = vmatprep.subr.bf16.mxu0 0
      %1676 = vmatpush1.bf16.msra.mxu0 0
      %1677 = vmatprep.subr.bf16.mxu0 0
      %1678 = vmatpush1.bf16.msra.mxu0 0
      %1679 = vmatprep.subr.bf16.mxu0 0
      %1680 = vmatpush1.bf16.msra.mxu0 0
      %1681 = vmatprep.subr.bf16.mxu0 0
      %1682 = vmatpush1.bf16.msra.mxu0 0
      %1683 = vmatprep.subr.bf16.mxu0 0
      %1684 = vmatpush1.bf16.msra.mxu0 0
      %1685 = vmatprep.subr.bf16.mxu0 0
      %1686 = vmatpush1.bf16.msra.mxu0 0
      %1687 = vmatprep.subr.bf16.mxu0 0
      %1688 = vmatpush1.bf16.msra.mxu0 0
      %1689 = vmatprep.subr.bf16.mxu0 0
      %1690 = vmatpush1.bf16.msra.mxu0 0
      %1691 = vmatprep.subr.bf16.mxu0 0
      %1692 = vmatpush1.bf16.msra.mxu0 0
      %1693 = vmatprep.subr.bf16.mxu0 0
      %1694 = vmatpush1.bf16.msra.mxu0 0
      %1695 = vmatprep.subr.bf16.mxu0 0
      %1696 = vmatpush1.bf16.msra.mxu0 0
      %1697 = vmatprep.subr.bf16.mxu0 0
      %1698 = vmatpush1.bf16.msra.mxu0 0
      %1699 = vmatprep.subr.bf16.mxu0 0
      %1700 = vmatpush1.bf16.msra.mxu0 0
      %1701 = vmatprep.subr.bf16.mxu0 0
      %1702 = vmatpush1.bf16.msra.mxu0 0
      %1703 = vmatprep.subr.bf16.mxu0 0
      %1704 = vmatpush1.bf16.msra.mxu0 0
      %1705 = vmatprep.mubr.bf16.mxu0 0
      %1706 = vmatmul.mubr.bf16.gmra.mrb[0].mxu0 %v1580
      %v1707 = vpop.f32.mrb[0].mxu0
      %v1708 = vadd.f32 0.0, %v1707
      %v1709 = vpop.f32.mrb[0].mxu0
      %v1710 = vpop.f32.mrb[0].mxu0
      %v1711 = vadd.f32 0.0, %v1710
      %v1712 = vpop.f32.mrb[0].mxu0
      %1713 = vmatprep.mubr.bf16.mxu0 0
      %1714 = vmatmul.mubr.bf16.gmra.mrb[0].mxu0 %v1583
      %v1715 = vpop.f32.mrb[0].mxu0
      %v1716 = vadd.f32 0.0, %v1715
      %v1717 = vpop.f32.mrb[0].mxu0
      %v1718 = vpop.f32.mrb[0].mxu0
      %v1719 = vadd.f32 0.0, %v1718
      %v1720 = vpop.f32.mrb[0].mxu0
      %1721 = vmatprep.mubr.bf16.mxu0 0
      %1722 = vmatmul.mubr.bf16.gmra.mrb[0].mxu0 %v1586
      %v1723 = vpop.f32.mrb[0].mxu0
      %v1724 = vadd.f32 0.0, %v1723
      %v1725 = vpop.f32.mrb[0].mxu0
      %v1726 = vpop.f32.mrb[0].mxu0
      %v1727 = vadd.f32 0.0, %v1726
      %v1728 = vpop.f32.mrb[0].mxu0
      %1729 = vmatprep.mubr.bf16.mxu0 0
      %1730 = vmatmul.mubr.bf16.gmra.mrb[0].mxu0 %v1589
      %v1731 = vpop.f32.mrb[0].mxu0
      %v1732 = vadd.f32 0.0, %v1731
      %v1733 = vpop.f32.mrb[0].mxu0
      %v1734 = vpop.f32.mrb[0].mxu0
      %v1735 = vadd.f32 0.0, %v1734
      %v1736 = vpop.f32.mrb[0].mxu0
      %1737 = vdwg.mxu0
      %v1738 = vadd.f32 %v1396, %v1635
      %v1739 = vadd.f32 %v1397, %v1637
      %v1740 = vadd.f32 %v1398, %v1708
      %v1741 = vadd.f32 %v1399, %v1639
      %v1742 = vadd.f32 %v1400, %v1641
      %v1743 = vadd.f32 %v1401, %v1711
      %v1744 = vadd.f32 %v1402, %v1645
      %v1745 = vadd.f32 %v1403, %v1647
      %v1746 = vadd.f32 %v1404, %v1716
      %v1747 = vadd.f32 %v1405, %v1649
      %v1748 = vadd.f32 %v1406, %v1651
      %v1749 = vadd.f32 %v1407, %v1719
      %v1750 = vadd.f32 %v1408, %v1655
      %v1751 = vadd.f32 %v1409, %v1657
      %v1752 = vadd.f32 %v1410, %v1724
      %v1753 = vadd.f32 %v1411, %v1659
      %v1754 = vadd.f32 %v1412, %v1661
      %v1755 = vadd.f32 %v1413, %v1727
      %v1756 = vadd.f32 %v1414, %v1665
      %v1757 = vadd.f32 %v1415, %v1667
      %v1758 = vadd.f32 %v1416, %v1732
      %v1759 = vadd.f32 %v1417, %v1669
      %v1760 = vadd.f32 %v1418, %v1671
      %v1761 = vadd.f32 %v1419, %v1735
      %s1762 = scalar_lea.vmem %s192, 8
      %v1763 = vld [vmem:[%s1762] sm:$0xf]
      %v1764 = vld [vmem:[%s1762 + $0x8] sm:$0xf]
      %v1765 = vld [vmem:[%s1762 + $0x10] sm:$0xf]
      %v1766 = vld [vmem:[%s1762 + $0x18] sm:$0xf]
      %v1767 = vld [vmem:[%s1762 + $0x20] sm:$0xf]
      %v1768 = vld [vmem:[%s1762 + $0x28] sm:$0xf]
      %v1769 = vld [vmem:[%s1762 + $0x30] sm:$0xf]
      %v1770 = vld [vmem:[%s1762 + $0x38] sm:$0xf]
      %s1771 = scalar_lea.vmem %s1, 36
      %v1772 = vld [vmem:[%s1771] sm:$0x3f]
      %v1781 = vunpack.c.l.b16 %v1763
      %v1782 = vunpack.c.l.b16 %v1764
      %v1783 = vunpack.c.l.b16 %v1765
      %v1784 = vunpack.c.l.b16 %v1766
      %v1785 = vunpack.c.l.b16 %v1767
      %v1786 = vunpack.c.l.b16 %v1768
      %v1787 = vunpack.c.l.b16 %v1769
      %v1788 = vunpack.c.l.b16 %v1770
      %v1789 = vpack.c.b16 %v1782, %v1781
      %v1790 = vpack.c.b16 %v1784, %v1783
      %v1791 = vpack.c.b16 %v1786, %v1785
      %v1792 = vpack.c.b16 %v1788, %v1787
      %v1794 = vcombine.high %v1772, %v1772
      %v1796 = vunpack.c.l.s4 1983009808
      %v1797 = vunpack.c.0.s8 %v1796
      %v1798 = vlaneseq
      %v1799 = vshrl.u32 %v1798, 7
      %v1800 = vsub.s32 %v1797, %v1799
      %v1801 = vrot.slane %v1772, %v1800
      %v1803 = vunpack.c.l.s4 1983009808
      %v1804 = vunpack.c.0.s8 %v1803
      %v1805 = vlaneseq
      %v1806 = vshrl.u32 %v1805, 7
      %v1807 = vsub.s32 %v1804, %v1806
      %v1808 = vrot.slane %v1794, %v1807
      %v1809 = vcombine.high %v1801, %v1801
      %v1811 = vsel %vm256, %v1789, 0
      %v1814 = vsel %vm256, %v1790, 0
      %v1817 = vsel %vm256, %v1791, 0
      %v1820 = vsel %vm256, %v1792, 0
      %v1823 = vsel %vm269, %v1801, 0
      %v1826 = vsel %vm269, %v1809, 0
      %v1829 = vsel %vm269, %v1808, 0
      %1831 = vmatprep.subr.bf16.mxu0 %v1826
      %1832 = vmatpush1.bf16.msra.mxu0 %v1823
      %1833 = vmatprep.subr.bf16.mxu0 0
      %1834 = vmatpush1.bf16.msra.mxu0 0
      %1835 = vmatprep.subr.bf16.mxu0 0
      %1836 = vmatpush1.bf16.msra.mxu0 0
      %1837 = vmatprep.subr.bf16.mxu0 0
      %1838 = vmatpush1.bf16.msra.mxu0 0
      %1839 = vmatprep.subr.bf16.mxu0 0
      %1840 = vmatpush1.bf16.msra.mxu0 0
      %1841 = vmatprep.subr.bf16.mxu0 0
      %1842 = vmatpush1.bf16.msra.mxu0 0
      %1843 = vmatprep.subr.bf16.mxu0 0
      %1844 = vmatpush1.bf16.msra.mxu0 0
      %1845 = vmatprep.subr.bf16.mxu0 0
      %1846 = vmatpush1.bf16.msra.mxu0 0
      %1847 = vmatprep.subr.bf16.mxu0 0
      %1848 = vmatpush1.bf16.msra.mxu0 0
      %1849 = vmatprep.subr.bf16.mxu0 0
      %1850 = vmatpush1.bf16.msra.mxu0 0
      %1851 = vmatprep.subr.bf16.mxu0 0
      %1852 = vmatpush1.bf16.msra.mxu0 0
      %1853 = vmatprep.subr.bf16.mxu0 0
      %1854 = vmatpush1.bf16.msra.mxu0 0
      %1855 = vmatprep.subr.bf16.mxu0 0
      %1856 = vmatpush1.bf16.msra.mxu0 0
      %1857 = vmatprep.subr.bf16.mxu0 0
      %1858 = vmatpush1.bf16.msra.mxu0 0
      %1859 = vmatprep.subr.bf16.mxu0 0
      %1860 = vmatpush1.bf16.msra.mxu0 0
      %1861 = vmatprep.subr.bf16.mxu0 0
      %1862 = vmatpush1.bf16.msra.mxu0 0
      %1863 = vmatprep.mubr.bf16.mxu0 0
      %1864 = vmatmul.mubr.bf16.gmra.mrb[0].mxu0 %v1811
      %v1865 = vpop.f32.mrb[0].mxu0
      %v1866 = vadd.f32 0.0, %v1865
      %v1867 = vpop.f32.mrb[0].mxu0
      %v1868 = vadd.f32 0.0, %v1867
      %v1869 = vpop.f32.mrb[0].mxu0
      %v1870 = vadd.f32 0.0, %v1869
      %v1871 = vpop.f32.mrb[0].mxu0
      %v1872 = vadd.f32 0.0, %v1871
      %1873 = vmatprep.mubr.bf16.mxu0 0
      %1874 = vmatmul.mubr.bf16.gmra.mrb[0].mxu0 %v1814
      %v1875 = vpop.f32.mrb[0].mxu0
      %v1876 = vadd.f32 0.0, %v1875
      %v1877 = vpop.f32.mrb[0].mxu0
      %v1878 = vadd.f32 0.0, %v1877
      %v1879 = vpop.f32.mrb[0].mxu0
      %v1880 = vadd.f32 0.0, %v1879
      %v1881 = vpop.f32.mrb[0].mxu0
      %v1882 = vadd.f32 0.0, %v1881
      %1883 = vmatprep.mubr.bf16.mxu0 0
      %1884 = vmatmul.mubr.bf16.gmra.mrb[0].mxu0 %v1817
      %v1885 = vpop.f32.mrb[0].mxu0
      %v1886 = vadd.f32 0.0, %v1885
      %v1887 = vpop.f32.mrb[0].mxu0
      %v1888 = vadd.f32 0.0, %v1887
      %v1889 = vpop.f32.mrb[0].mxu0
      %v1890 = vadd.f32 0.0, %v1889
      %v1891 = vpop.f32.mrb[0].mxu0
      %v1892 = vadd.f32 0.0, %v1891
      %1893 = vmatprep.mubr.bf16.mxu0 0
      %1894 = vmatmul.mubr.bf16.gmra.mrb[0].mxu0 %v1820
      %v1895 = vpop.f32.mrb[0].mxu0
      %v1896 = vadd.f32 0.0, %v1895
      %v1897 = vpop.f32.mrb[0].mxu0
      %v1898 = vadd.f32 0.0, %v1897
      %v1899 = vpop.f32.mrb[0].mxu0
      %v1900 = vadd.f32 0.0, %v1899
      %v1901 = vpop.f32.mrb[0].mxu0
      %v1902 = vadd.f32 0.0, %v1901
      %1903 = vdwg.mxu0
      %1904 = vmatprep.subr.bf16.mxu0 0
      %1905 = vmatpush1.bf16.msra.mxu0 %v1829
      %1906 = vmatprep.subr.bf16.mxu0 0
      %1907 = vmatpush1.bf16.msra.mxu0 0
      %1908 = vmatprep.subr.bf16.mxu0 0
      %1909 = vmatpush1.bf16.msra.mxu0 0
      %1910 = vmatprep.subr.bf16.mxu0 0
      %1911 = vmatpush1.bf16.msra.mxu0 0
      %1912 = vmatprep.subr.bf16.mxu0 0
      %1913 = vmatpush1.bf16.msra.mxu0 0
      %1914 = vmatprep.subr.bf16.mxu0 0
      %1915 = vmatpush1.bf16.msra.mxu0 0
      %1916 = vmatprep.subr.bf16.mxu0 0
      %1917 = vmatpush1.bf16.msra.mxu0 0
      %1918 = vmatprep.subr.bf16.mxu0 0
      %1919 = vmatpush1.bf16.msra.mxu0 0
      %1920 = vmatprep.subr.bf16.mxu0 0
      %1921 = vmatpush1.bf16.msra.mxu0 0
      %1922 = vmatprep.subr.bf16.mxu0 0
      %1923 = vmatpush1.bf16.msra.mxu0 0
      %1924 = vmatprep.subr.bf16.mxu0 0
      %1925 = vmatpush1.bf16.msra.mxu0 0
      %1926 = vmatprep.subr.bf16.mxu0 0
      %1927 = vmatpush1.bf16.msra.mxu0 0
      %1928 = vmatprep.subr.bf16.mxu0 0
      %1929 = vmatpush1.bf16.msra.mxu0 0
      %1930 = vmatprep.subr.bf16.mxu0 0
      %1931 = vmatpush1.bf16.msra.mxu0 0
      %1932 = vmatprep.subr.bf16.mxu0 0
      %1933 = vmatpush1.bf16.msra.mxu0 0
      %1934 = vmatprep.subr.bf16.mxu0 0
      %1935 = vmatpush1.bf16.msra.mxu0 0
      %1936 = vmatprep.mubr.bf16.mxu0 0
      %1937 = vmatmul.mubr.bf16.gmra.mrb[0].mxu0 %v1811
      %v1938 = vpop.f32.mrb[0].mxu0
      %v1939 = vadd.f32 0.0, %v1938
      %v1940 = vpop.f32.mrb[0].mxu0
      %v1941 = vpop.f32.mrb[0].mxu0
      %v1942 = vadd.f32 0.0, %v1941
      %v1943 = vpop.f32.mrb[0].mxu0
      %1944 = vmatprep.mubr.bf16.mxu0 0
      %1945 = vmatmul.mubr.bf16.gmra.mrb[0].mxu0 %v1814
      %v1946 = vpop.f32.mrb[0].mxu0
      %v1947 = vadd.f32 0.0, %v1946
      %v1948 = vpop.f32.mrb[0].mxu0
      %v1949 = vpop.f32.mrb[0].mxu0
      %v1950 = vadd.f32 0.0, %v1949
      %v1951 = vpop.f32.mrb[0].mxu0
      %1952 = vmatprep.mubr.bf16.mxu0 0
      %1953 = vmatmul.mubr.bf16.gmra.mrb[0].mxu0 %v1817
      %v1954 = vpop.f32.mrb[0].mxu0
      %v1955 = vadd.f32 0.0, %v1954
      %v1956 = vpop.f32.mrb[0].mxu0
      %v1957 = vpop.f32.mrb[0].mxu0
      %v1958 = vadd.f32 0.0, %v1957
      %v1959 = vpop.f32.mrb[0].mxu0
      %1960 = vmatprep.mubr.bf16.mxu0 0
      %1961 = vmatmul.mubr.bf16.gmra.mrb[0].mxu0 %v1820
      %v1962 = vpop.f32.mrb[0].mxu0
      %v1963 = vadd.f32 0.0, %v1962
      %v1964 = vpop.f32.mrb[0].mxu0
      %v1965 = vpop.f32.mrb[0].mxu0
      %v1966 = vadd.f32 0.0, %v1965
      %v1967 = vpop.f32.mrb[0].mxu0
      %1968 = vdwg.mxu0
      %v1969 = vadd.f32 %v1738, %v1866
      %v1970 = vadd.f32 %v1739, %v1868
      %v1971 = vadd.f32 %v1740, %v1939
      %v1972 = vadd.f32 %v1741, %v1870
      %v1973 = vadd.f32 %v1742, %v1872
      %v1974 = vadd.f32 %v1743, %v1942
      %v1975 = vadd.f32 %v1744, %v1876
      %v1976 = vadd.f32 %v1745, %v1878
      %v1977 = vadd.f32 %v1746, %v1947
      %v1978 = vadd.f32 %v1747, %v1880
      %v1979 = vadd.f32 %v1748, %v1882
      %v1980 = vadd.f32 %v1749, %v1950
      %v1981 = vadd.f32 %v1750, %v1886
      %v1982 = vadd.f32 %v1751, %v1888
      %v1983 = vadd.f32 %v1752, %v1955
      %v1984 = vadd.f32 %v1753, %v1890
      %v1985 = vadd.f32 %v1754, %v1892
      %v1986 = vadd.f32 %v1755, %v1958
      %v1987 = vadd.f32 %v1756, %v1896
      %v1988 = vadd.f32 %v1757, %v1898
      %v1989 = vadd.f32 %v1758, %v1963
      %v1990 = vadd.f32 %v1759, %v1900
      %v1991 = vadd.f32 %v1760, %v1902
      %v1992 = vadd.f32 %v1761, %v1966
      %s1993 = scalar_lea.vmem %s192, 80
      %v1994 = vld [vmem:[%s1993] sm:$0xf]
      %v1995 = vld [vmem:[%s1993 + $0x8] sm:$0xf]
      %v1996 = vld [vmem:[%s1993 + $0x10] sm:$0xf]
      %v1997 = vld [vmem:[%s1993 + $0x18] sm:$0xf]
      %v1998 = vld [vmem:[%s1993 + $0x20] sm:$0xf]
      %v1999 = vld [vmem:[%s1993 + $0x28] sm:$0xf]
      %v2000 = vld [vmem:[%s1993 + $0x30] sm:$0xf]
      %v2001 = vld [vmem:[%s1993 + $0x38] sm:$0xf]
      %s2002 = scalar_lea.vmem %s1, 42
      %v2003 = vld [vmem:[%s2002] sm:$0x3f]
      %v2012 = vunpack.c.l.b16 %v1994
      %v2013 = vunpack.c.l.b16 %v1995
      %v2014 = vunpack.c.l.b16 %v1996
      %v2015 = vunpack.c.l.b16 %v1997
      %v2016 = vunpack.c.l.b16 %v1998
      %v2017 = vunpack.c.l.b16 %v1999
      %v2018 = vunpack.c.l.b16 %v2000
      %v2019 = vunpack.c.l.b16 %v2001
      %v2020 = vpack.c.b16 %v2013, %v2012
      %v2021 = vpack.c.b16 %v2015, %v2014
      %v2022 = vpack.c.b16 %v2017, %v2016
      %v2023 = vpack.c.b16 %v2019, %v2018
      %v2025 = vcombine.high %v2003, %v2003
      %v2027 = vunpack.c.l.s4 1983009808
      %v2028 = vunpack.c.0.s8 %v2027
      %v2029 = vlaneseq
      %v2030 = vshrl.u32 %v2029, 7
      %v2031 = vsub.s32 %v2028, %v2030
      %v2032 = vrot.slane %v2003, %v2031
      %v2034 = vunpack.c.l.s4 1983009808
      %v2035 = vunpack.c.0.s8 %v2034
      %v2036 = vlaneseq
      %v2037 = vshrl.u32 %v2036, 7
      %v2038 = vsub.s32 %v2035, %v2037
      %v2039 = vrot.slane %v2025, %v2038
      %v2040 = vcombine.high %v2032, %v2032
      %v2042 = vsel %vm256, %v2020, 0
      %v2045 = vsel %vm256, %v2021, 0
      %v2048 = vsel %vm256, %v2022, 0
      %v2051 = vsel %vm256, %v2023, 0
      %v2054 = vsel %vm269, %v2032, 0
      %v2057 = vsel %vm269, %v2040, 0
      %v2060 = vsel %vm269, %v2039, 0
      %2062 = vmatprep.subr.bf16.mxu0 %v2057
      %2063 = vmatpush1.bf16.msra.mxu0 %v2054
      %2064 = vmatprep.subr.bf16.mxu0 0
      %2065 = vmatpush1.bf16.msra.mxu0 0
      %2066 = vmatprep.subr.bf16.mxu0 0
      %2067 = vmatpush1.bf16.msra.mxu0 0
      %2068 = vmatprep.subr.bf16.mxu0 0
      %2069 = vmatpush1.bf16.msra.mxu0 0
      %2070 = vmatprep.subr.bf16.mxu0 0
      %2071 = vmatpush1.bf16.msra.mxu0 0
      %2072 = vmatprep.subr.bf16.mxu0 0
      %2073 = vmatpush1.bf16.msra.mxu0 0
      %2074 = vmatprep.subr.bf16.mxu0 0
      %2075 = vmatpush1.bf16.msra.mxu0 0
      %2076 = vmatprep.subr.bf16.mxu0 0
      %2077 = vmatpush1.bf16.msra.mxu0 0
      %2078 = vmatprep.subr.bf16.mxu0 0
      %2079 = vmatpush1.bf16.msra.mxu0 0
      %2080 = vmatprep.subr.bf16.mxu0 0
      %2081 = vmatpush1.bf16.msra.mxu0 0
      %2082 = vmatprep.subr.bf16.mxu0 0
      %2083 = vmatpush1.bf16.msra.mxu0 0
      %2084 = vmatprep.subr.bf16.mxu0 0
      %2085 = vmatpush1.bf16.msra.mxu0 0
      %2086 = vmatprep.subr.bf16.mxu0 0
      %2087 = vmatpush1.bf16.msra.mxu0 0
      %2088 = vmatprep.subr.bf16.mxu0 0
      %2089 = vmatpush1.bf16.msra.mxu0 0
      %2090 = vmatprep.subr.bf16.mxu0 0
      %2091 = vmatpush1.bf16.msra.mxu0 0
      %2092 = vmatprep.subr.bf16.mxu0 0
      %2093 = vmatpush1.bf16.msra.mxu0 0
      %2094 = vmatprep.mubr.bf16.mxu0 0
      %2095 = vmatmul.mubr.bf16.gmra.mrb[0].mxu0 %v2042
      %v2096 = vpop.f32.mrb[0].mxu0
      %v2097 = vadd.f32 0.0, %v2096
      %v2098 = vpop.f32.mrb[0].mxu0
      %v2099 = vadd.f32 0.0, %v2098
      %v2100 = vpop.f32.mrb[0].mxu0
      %v2101 = vadd.f32 0.0, %v2100
      %v2102 = vpop.f32.mrb[0].mxu0
      %v2103 = vadd.f32 0.0, %v2102
      %2104 = vmatprep.mubr.bf16.mxu0 0
      %2105 = vmatmul.mubr.bf16.gmra.mrb[0].mxu0 %v2045
      %v2106 = vpop.f32.mrb[0].mxu0
      %v2107 = vadd.f32 0.0, %v2106
      %v2108 = vpop.f32.mrb[0].mxu0
      %v2109 = vadd.f32 0.0, %v2108
      %v2110 = vpop.f32.mrb[0].mxu0
      %v2111 = vadd.f32 0.0, %v2110
      %v2112 = vpop.f32.mrb[0].mxu0
      %v2113 = vadd.f32 0.0, %v2112
      %2114 = vmatprep.mubr.bf16.mxu0 0
      %2115 = vmatmul.mubr.bf16.gmra.mrb[0].mxu0 %v2048
      %v2116 = vpop.f32.mrb[0].mxu0
      %v2117 = vadd.f32 0.0, %v2116
      %v2118 = vpop.f32.mrb[0].mxu0
      %v2119 = vadd.f32 0.0, %v2118
      %v2120 = vpop.f32.mrb[0].mxu0
      %v2121 = vadd.f32 0.0, %v2120
      %v2122 = vpop.f32.mrb[0].mxu0
      %v2123 = vadd.f32 0.0, %v2122
      %2124 = vmatprep.mubr.bf16.mxu0 0
      %2125 = vmatmul.mubr.bf16.gmra.mrb[0].mxu0 %v2051
      %v2126 = vpop.f32.mrb[0].mxu0
      %v2127 = vadd.f32 0.0, %v2126
      %v2128 = vpop.f32.mrb[0].mxu0
      %v2129 = vadd.f32 0.0, %v2128
      %v2130 = vpop.f32.mrb[0].mxu0
      %v2131 = vadd.f32 0.0, %v2130
      %v2132 = vpop.f32.mrb[0].mxu0
      %v2133 = vadd.f32 0.0, %v2132
      %2134 = vdwg.mxu0
      %2135 = vmatprep.subr.bf16.mxu0 0
      %2136 = vmatpush1.bf16.msra.mxu0 %v2060
      %2137 = vmatprep.subr.bf16.mxu0 0
      %2138 = vmatpush1.bf16.msra.mxu0 0
      %2139 = vmatprep.subr.bf16.mxu0 0
      %2140 = vmatpush1.bf16.msra.mxu0 0
      %2141 = vmatprep.subr.bf16.mxu0 0
      %2142 = vmatpush1.bf16.msra.mxu0 0
      %2143 = vmatprep.subr.bf16.mxu0 0
      %2144 = vmatpush1.bf16.msra.mxu0 0
      %2145 = vmatprep.subr.bf16.mxu0 0
      %2146 = vmatpush1.bf16.msra.mxu0 0
      %2147 = vmatprep.subr.bf16.mxu0 0
      %2148 = vmatpush1.bf16.msra.mxu0 0
      %2149 = vmatprep.subr.bf16.mxu0 0
      %2150 = vmatpush1.bf16.msra.mxu0 0
      %2151 = vmatprep.subr.bf16.mxu0 0
      %2152 = vmatpush1.bf16.msra.mxu0 0
      %2153 = vmatprep.subr.bf16.mxu0 0
      %2154 = vmatpush1.bf16.msra.mxu0 0
      %2155 = vmatprep.subr.bf16.mxu0 0
      %2156 = vmatpush1.bf16.msra.mxu0 0
      %2157 = vmatprep.subr.bf16.mxu0 0
      %2158 = vmatpush1.bf16.msra.mxu0 0
      %2159 = vmatprep.subr.bf16.mxu0 0
      %2160 = vmatpush1.bf16.msra.mxu0 0
      %2161 = vmatprep.subr.bf16.mxu0 0
      %2162 = vmatpush1.bf16.msra.mxu0 0
      %2163 = vmatprep.subr.bf16.mxu0 0
      %2164 = vmatpush1.bf16.msra.mxu0 0
      %2165 = vmatprep.subr.bf16.mxu0 0
      %2166 = vmatpush1.bf16.msra.mxu0 0
      %2167 = vmatprep.mubr.bf16.mxu0 0
      %2168 = vmatmul.mubr.bf16.gmra.mrb[0].mxu0 %v2042
      %v2169 = vpop.f32.mrb[0].mxu0
      %v2170 = vadd.f32 0.0, %v2169
      %v2171 = vpop.f32.mrb[0].mxu0
      %v2172 = vpop.f32.mrb[0].mxu0
      %v2173 = vadd.f32 0.0, %v2172
      %v2174 = vpop.f32.mrb[0].mxu0
      %2175 = vmatprep.mubr.bf16.mxu0 0
      %2176 = vmatmul.mubr.bf16.gmra.mrb[0].mxu0 %v2045
      %v2177 = vpop.f32.mrb[0].mxu0
      %v2178 = vadd.f32 0.0, %v2177
      %v2179 = vpop.f32.mrb[0].mxu0
      %v2180 = vpop.f32.mrb[0].mxu0
      %v2181 = vadd.f32 0.0, %v2180
      %v2182 = vpop.f32.mrb[0].mxu0
      %2183 = vmatprep.mubr.bf16.mxu0 0
      %2184 = vmatmul.mubr.bf16.gmra.mrb[0].mxu0 %v2048
      %v2185 = vpop.f32.mrb[0].mxu0
      %v2186 = vadd.f32 0.0, %v2185
      %v2187 = vpop.f32.mrb[0].mxu0
      %v2188 = vpop.f32.mrb[0].mxu0
      %v2189 = vadd.f32 0.0, %v2188
      %v2190 = vpop.f32.mrb[0].mxu0
      %2191 = vmatprep.mubr.bf16.mxu0 0
      %2192 = vmatmul.mubr.bf16.gmra.mrb[0].mxu0 %v2051
      %v2193 = vpop.f32.mrb[0].mxu0
      %v2194 = vadd.f32 0.0, %v2193
      %v2195 = vpop.f32.mrb[0].mxu0
      %v2196 = vpop.f32.mrb[0].mxu0
      %v2197 = vadd.f32 0.0, %v2196
      %v2198 = vpop.f32.mrb[0].mxu0
      %2199 = vdwg.mxu0
      %v2200 = vadd.f32 %v1969, %v2097
      %v2201 = vadd.f32 %v1970, %v2099
      %v2202 = vadd.f32 %v1971, %v2170
      %v2203 = vadd.f32 %v1972, %v2101
      %v2204 = vadd.f32 %v1973, %v2103
      %v2205 = vadd.f32 %v1974, %v2173
      %v2206 = vadd.f32 %v1975, %v2107
      %v2207 = vadd.f32 %v1976, %v2109
      %v2208 = vadd.f32 %v1977, %v2178
      %v2209 = vadd.f32 %v1978, %v2111
      %v2210 = vadd.f32 %v1979, %v2113
      %v2211 = vadd.f32 %v1980, %v2181
      %v2212 = vadd.f32 %v1981, %v2117
      %v2213 = vadd.f32 %v1982, %v2119
      %v2214 = vadd.f32 %v1983, %v2186
      %v2215 = vadd.f32 %v1984, %v2121
      %v2216 = vadd.f32 %v1985, %v2123
      %v2217 = vadd.f32 %v1986, %v2189
      %v2218 = vadd.f32 %v1987, %v2127
      %v2219 = vadd.f32 %v1988, %v2129
      %v2220 = vadd.f32 %v1989, %v2194
      %v2221 = vadd.f32 %v1990, %v2131
      %v2222 = vadd.f32 %v1991, %v2133
      %v2223 = vadd.f32 %v1992, %v2197
      %v2224 = vld [vmem:[%s1762] sm:$0xf]
      %v2225 = vld [vmem:[%s1762 + $0x4] sm:$0x1]
      %v2226 = vld [vmem:[%s1762 + $0x8] sm:$0xf]
      %v2227 = vld [vmem:[%s1762 + $0xc] sm:$0x1]
      %v2228 = vld [vmem:[%s1762 + $0x10] sm:$0xf]
      %v2229 = vld [vmem:[%s1762 + $0x14] sm:$0x1]
      %v2230 = vld [vmem:[%s1762 + $0x18] sm:$0xf]
      %v2231 = vld [vmem:[%s1762 + $0x1c] sm:$0x1]
      %v2232 = vld [vmem:[%s1762 + $0x20] sm:$0xf]
      %v2233 = vld [vmem:[%s1762 + $0x24] sm:$0x1]
      %v2234 = vld [vmem:[%s1762 + $0x28] sm:$0xf]
      %v2235 = vld [vmem:[%s1762 + $0x2c] sm:$0x1]
      %v2236 = vld [vmem:[%s1762 + $0x30] sm:$0xf]
      %v2237 = vld [vmem:[%s1762 + $0x34] sm:$0x1]
      %v2238 = vld [vmem:[%s1762 + $0x38] sm:$0xf]
      %v2239 = vld [vmem:[%s1762 + $0x3c] sm:$0x1]
      %v2241 = vshrl.u32 %v2224, 16
      %v2243 = vrot.slane %v2241, 4
      %v2244 = vshll.u32 %v2224, 16
      %v2246 = vrot.slane %v2244, 5
      %v2247 = vor.u32 %v2243, %v2246
      %v2248 = vrot.slane %v2247, 4
      %v2250 = vshll.u32 %v2225, 16
      %v2252 = vrot.slane %v2250, 5
      %v2253 = vsel %vm631, %v2248, %v2252
      %v2255 = vshrl.u32 %v2226, 16
      %v2257 = vrot.slane %v2255, 4
      %v2258 = vshll.u32 %v2226, 16
      %v2260 = vrot.slane %v2258, 5
      %v2261 = vor.u32 %v2257, %v2260
      %v2262 = vrot.slane %v2261, 4
      %v2264 = vshll.u32 %v2227, 16
      %v2266 = vrot.slane %v2264, 5
      %v2267 = vsel %vm631, %v2262, %v2266
      %v2269 = vshrl.u32 %v2228, 16
      %v2271 = vrot.slane %v2269, 4
      %v2272 = vshll.u32 %v2228, 16
      %v2274 = vrot.slane %v2272, 5
      %v2275 = vor.u32 %v2271, %v2274
      %v2276 = vrot.slane %v2275, 4
      %v2278 = vshll.u32 %v2229, 16
      %v2280 = vrot.slane %v2278, 5
      %v2281 = vsel %vm631, %v2276, %v2280
      %v2283 = vshrl.u32 %v2230, 16
      %v2285 = vrot.slane %v2283, 4
      %v2286 = vshll.u32 %v2230, 16
      %v2288 = vrot.slane %v2286, 5
      %v2289 = vor.u32 %v2285, %v2288
      %v2290 = vrot.slane %v2289, 4
      %v2292 = vshll.u32 %v2231, 16
      %v2294 = vrot.slane %v2292, 5
      %v2295 = vsel %vm631, %v2290, %v2294
      %v2297 = vshrl.u32 %v2232, 16
      %v2299 = vrot.slane %v2297, 4
      %v2300 = vshll.u32 %v2232, 16
      %v2302 = vrot.slane %v2300, 5
      %v2303 = vor.u32 %v2299, %v2302
      %v2304 = vrot.slane %v2303, 4
      %v2306 = vshll.u32 %v2233, 16
      %v2308 = vrot.slane %v2306, 5
      %v2309 = vsel %vm631, %v2304, %v2308
      %v2311 = vshrl.u32 %v2234, 16
      %v2313 = vrot.slane %v2311, 4
      %v2314 = vshll.u32 %v2234, 16
      %v2316 = vrot.slane %v2314, 5
      %v2317 = vor.u32 %v2313, %v2316
      %v2318 = vrot.slane %v2317, 4
      %v2320 = vshll.u32 %v2235, 16
      %v2322 = vrot.slane %v2320, 5
      %v2323 = vsel %vm631, %v2318, %v2322
      %v2325 = vshrl.u32 %v2236, 16
      %v2327 = vrot.slane %v2325, 4
      %v2328 = vshll.u32 %v2236, 16
      %v2330 = vrot.slane %v2328, 5
      %v2331 = vor.u32 %v2327, %v2330
      %v2332 = vrot.slane %v2331, 4
      %v2334 = vshll.u32 %v2237, 16
      %v2336 = vrot.slane %v2334, 5
      %v2337 = vsel %vm631, %v2332, %v2336
      %v2339 = vshrl.u32 %v2238, 16
      %v2341 = vrot.slane %v2339, 4
      %v2342 = vshll.u32 %v2238, 16
      %v2344 = vrot.slane %v2342, 5
      %v2345 = vor.u32 %v2341, %v2344
      %v2346 = vrot.slane %v2345, 4
      %v2348 = vshll.u32 %v2239, 16
      %v2350 = vrot.slane %v2348, 5
      %v2351 = vsel %vm631, %v2346, %v2350
      %s2352 = scalar_lea.vmem %s1, 48
      %v2353 = vld [vmem:[%s2352] sm:$0x3f]
      %v2354 = vunpack.c.l.b16 %v2253
      %v2355 = vunpack.c.l.b16 %v2267
      %v2356 = vunpack.c.l.b16 %v2281
      %v2357 = vunpack.c.l.b16 %v2295
      %v2358 = vunpack.c.l.b16 %v2309
      %v2359 = vunpack.c.l.b16 %v2323
      %v2360 = vunpack.c.l.b16 %v2337
      %v2361 = vunpack.c.l.b16 %v2351
      %v2362 = vpack.c.b16 %v2355, %v2354
      %v2363 = vpack.c.b16 %v2357, %v2356
      %v2364 = vpack.c.b16 %v2359, %v2358
      %v2365 = vpack.c.b16 %v2361, %v2360
      %v2367 = vcombine.high %v2353, %v2353
      %v2369 = vunpack.c.l.s4 1983009808
      %v2370 = vunpack.c.0.s8 %v2369
      %v2371 = vlaneseq
      %v2372 = vshrl.u32 %v2371, 7
      %v2373 = vsub.s32 %v2370, %v2372
      %v2374 = vrot.slane %v2353, %v2373
      %v2376 = vunpack.c.l.s4 1983009808
      %v2377 = vunpack.c.0.s8 %v2376
      %v2378 = vlaneseq
      %v2379 = vshrl.u32 %v2378, 7
      %v2380 = vsub.s32 %v2377, %v2379
      %v2381 = vrot.slane %v2367, %v2380
      %v2382 = vcombine.high %v2374, %v2374
      %v2384 = vsel %vm256, %v2362, 0
      %v2387 = vsel %vm256, %v2363, 0
      %v2390 = vsel %vm256, %v2364, 0
      %v2393 = vsel %vm256, %v2365, 0
      %v2396 = vsel %vm269, %v2374, 0
      %v2399 = vsel %vm269, %v2382, 0
      %v2402 = vsel %vm269, %v2381, 0
      %2404 = vmatprep.subr.bf16.mxu0 %v2399
      %2405 = vmatpush1.bf16.msra.mxu0 %v2396
      %2406 = vmatprep.subr.bf16.mxu0 0
      %2407 = vmatpush1.bf16.msra.mxu0 0
      %2408 = vmatprep.subr.bf16.mxu0 0
      %2409 = vmatpush1.bf16.msra.mxu0 0
      %2410 = vmatprep.subr.bf16.mxu0 0
      %2411 = vmatpush1.bf16.msra.mxu0 0
      %2412 = vmatprep.subr.bf16.mxu0 0
      %2413 = vmatpush1.bf16.msra.mxu0 0
      %2414 = vmatprep.subr.bf16.mxu0 0
      %2415 = vmatpush1.bf16.msra.mxu0 0
      %2416 = vmatprep.subr.bf16.mxu0 0
      %2417 = vmatpush1.bf16.msra.mxu0 0
      %2418 = vmatprep.subr.bf16.mxu0 0
      %2419 = vmatpush1.bf16.msra.mxu0 0
      %2420 = vmatprep.subr.bf16.mxu0 0
      %2421 = vmatpush1.bf16.msra.mxu0 0
      %2422 = vmatprep.subr.bf16.mxu0 0
      %2423 = vmatpush1.bf16.msra.mxu0 0
      %2424 = vmatprep.subr.bf16.mxu0 0
      %2425 = vmatpush1.bf16.msra.mxu0 0
      %2426 = vmatprep.subr.bf16.mxu0 0
      %2427 = vmatpush1.bf16.msra.mxu0 0
      %2428 = vmatprep.subr.bf16.mxu0 0
      %2429 = vmatpush1.bf16.msra.mxu0 0
      %2430 = vmatprep.subr.bf16.mxu0 0
      %2431 = vmatpush1.bf16.msra.mxu0 0
      %2432 = vmatprep.subr.bf16.mxu0 0
      %2433 = vmatpush1.bf16.msra.mxu0 0
      %2434 = vmatprep.subr.bf16.mxu0 0
      %2435 = vmatpush1.bf16.msra.mxu0 0
      %2436 = vmatprep.mubr.bf16.mxu0 0
      %2437 = vmatmul.mubr.bf16.gmra.mrb[0].mxu0 %v2384
      %v2438 = vpop.f32.mrb[0].mxu0
      %v2439 = vadd.f32 0.0, %v2438
      %v2440 = vpop.f32.mrb[0].mxu0
      %v2441 = vadd.f32 0.0, %v2440
      %v2442 = vpop.f32.mrb[0].mxu0
      %v2443 = vadd.f32 0.0, %v2442
      %v2444 = vpop.f32.mrb[0].mxu0
      %v2445 = vadd.f32 0.0, %v2444
      %2446 = vmatprep.mubr.bf16.mxu0 0
      %2447 = vmatmul.mubr.bf16.gmra.mrb[0].mxu0 %v2387
      %v2448 = vpop.f32.mrb[0].mxu0
      %v2449 = vadd.f32 0.0, %v2448
      %v2450 = vpop.f32.mrb[0].mxu0
      %v2451 = vadd.f32 0.0, %v2450
      %v2452 = vpop.f32.mrb[0].mxu0
      %v2453 = vadd.f32 0.0, %v2452
      %v2454 = vpop.f32.mrb[0].mxu0
      %v2455 = vadd.f32 0.0, %v2454
      %2456 = vmatprep.mubr.bf16.mxu0 0
      %2457 = vmatmul.mubr.bf16.gmra.mrb[0].mxu0 %v2390
      %v2458 = vpop.f32.mrb[0].mxu0
      %v2459 = vadd.f32 0.0, %v2458
      %v2460 = vpop.f32.mrb[0].mxu0
      %v2461 = vadd.f32 0.0, %v2460
      %v2462 = vpop.f32.mrb[0].mxu0
      %v2463 = vadd.f32 0.0, %v2462
      %v2464 = vpop.f32.mrb[0].mxu0
      %v2465 = vadd.f32 0.0, %v2464
      %2466 = vmatprep.mubr.bf16.mxu0 0
      %2467 = vmatmul.mubr.bf16.gmra.mrb[0].mxu0 %v2393
      %v2468 = vpop.f32.mrb[0].mxu0
      %v2469 = vadd.f32 0.0, %v2468
      %v2470 = vpop.f32.mrb[0].mxu0
      %v2471 = vadd.f32 0.0, %v2470
      %v2472 = vpop.f32.mrb[0].mxu0
      %v2473 = vadd.f32 0.0, %v2472
      %v2474 = vpop.f32.mrb[0].mxu0
      %v2475 = vadd.f32 0.0, %v2474
      %2476 = vdwg.mxu0
      %2477 = vmatprep.subr.bf16.mxu0 0
      %2478 = vmatpush1.bf16.msra.mxu0 %v2402
      %2479 = vmatprep.subr.bf16.mxu0 0
      %2480 = vmatpush1.bf16.msra.mxu0 0
      %2481 = vmatprep.subr.bf16.mxu0 0
      %2482 = vmatpush1.bf16.msra.mxu0 0
      %2483 = vmatprep.subr.bf16.mxu0 0
      %2484 = vmatpush1.bf16.msra.mxu0 0
      %2485 = vmatprep.subr.bf16.mxu0 0
      %2486 = vmatpush1.bf16.msra.mxu0 0
      %2487 = vmatprep.subr.bf16.mxu0 0
      %2488 = vmatpush1.bf16.msra.mxu0 0
      %2489 = vmatprep.subr.bf16.mxu0 0
      %2490 = vmatpush1.bf16.msra.mxu0 0
      %2491 = vmatprep.subr.bf16.mxu0 0
      %2492 = vmatpush1.bf16.msra.mxu0 0
      %2493 = vmatprep.subr.bf16.mxu0 0
      %2494 = vmatpush1.bf16.msra.mxu0 0
      %2495 = vmatprep.subr.bf16.mxu0 0
      %2496 = vmatpush1.bf16.msra.mxu0 0
      %2497 = vmatprep.subr.bf16.mxu0 0
      %2498 = vmatpush1.bf16.msra.mxu0 0
      %2499 = vmatprep.subr.bf16.mxu0 0
      %2500 = vmatpush1.bf16.msra.mxu0 0
      %2501 = vmatprep.subr.bf16.mxu0 0
      %2502 = vmatpush1.bf16.msra.mxu0 0
      %2503 = vmatprep.subr.bf16.mxu0 0
      %2504 = vmatpush1.bf16.msra.mxu0 0
      %2505 = vmatprep.subr.bf16.mxu0 0
      %2506 = vmatpush1.bf16.msra.mxu0 0
      %2507 = vmatprep.subr.bf16.mxu0 0
      %2508 = vmatpush1.bf16.msra.mxu0 0
      %2509 = vmatprep.mubr.bf16.mxu0 0
      %2510 = vmatmul.mubr.bf16.gmra.mrb[0].mxu0 %v2384
      %v2511 = vpop.f32.mrb[0].mxu0
      %v2512 = vadd.f32 0.0, %v2511
      %v2513 = vpop.f32.mrb[0].mxu0
      %v2514 = vpop.f32.mrb[0].mxu0
      %v2515 = vadd.f32 0.0, %v2514
      %v2516 = vpop.f32.mrb[0].mxu0
      %2517 = vmatprep.mubr.bf16.mxu0 0
      %2518 = vmatmul.mubr.bf16.gmra.mrb[0].mxu0 %v2387
      %v2519 = vpop.f32.mrb[0].mxu0
      %v2520 = vadd.f32 0.0, %v2519
      %v2521 = vpop.f32.mrb[0].mxu0
      %v2522 = vpop.f32.mrb[0].mxu0
      %v2523 = vadd.f32 0.0, %v2522
      %v2524 = vpop.f32.mrb[0].mxu0
      %2525 = vmatprep.mubr.bf16.mxu0 0
      %2526 = vmatmul.mubr.bf16.gmra.mrb[0].mxu0 %v2390
      %v2527 = vpop.f32.mrb[0].mxu0
      %v2528 = vadd.f32 0.0, %v2527
      %v2529 = vpop.f32.mrb[0].mxu0
      %v2530 = vpop.f32.mrb[0].mxu0
      %v2531 = vadd.f32 0.0, %v2530
      %v2532 = vpop.f32.mrb[0].mxu0
      %2533 = vmatprep.mubr.bf16.mxu0 0
      %2534 = vmatmul.mubr.bf16.gmra.mrb[0].mxu0 %v2393
      %v2535 = vpop.f32.mrb[0].mxu0
      %v2536 = vadd.f32 0.0, %v2535
      %v2537 = vpop.f32.mrb[0].mxu0
      %v2538 = vpop.f32.mrb[0].mxu0
      %v2539 = vadd.f32 0.0, %v2538
      %v2540 = vpop.f32.mrb[0].mxu0
      %2541 = vdwg.mxu0
      %v2542 = vadd.f32 %v2200, %v2439
      %v2543 = vadd.f32 %v2201, %v2441
      %v2544 = vadd.f32 %v2202, %v2512
      %v2545 = vadd.f32 %v2203, %v2443
      %v2546 = vadd.f32 %v2204, %v2445
      %v2547 = vadd.f32 %v2205, %v2515
      %v2548 = vadd.f32 %v2206, %v2449
      %v2549 = vadd.f32 %v2207, %v2451
      %v2550 = vadd.f32 %v2208, %v2520
      %v2551 = vadd.f32 %v2209, %v2453
      %v2552 = vadd.f32 %v2210, %v2455
      %v2553 = vadd.f32 %v2211, %v2523
      %v2554 = vadd.f32 %v2212, %v2459
      %v2555 = vadd.f32 %v2213, %v2461
      %v2556 = vadd.f32 %v2214, %v2528
      %v2557 = vadd.f32 %v2215, %v2463
      %v2558 = vadd.f32 %v2216, %v2465
      %v2559 = vadd.f32 %v2217, %v2531
      %v2560 = vadd.f32 %v2218, %v2469
      %v2561 = vadd.f32 %v2219, %v2471
      %v2562 = vadd.f32 %v2220, %v2536
      %v2563 = vadd.f32 %v2221, %v2473
      %v2564 = vadd.f32 %v2222, %v2475
      %v2565 = vadd.f32 %v2223, %v2539
      %v2566 = vld [vmem:[%s2] sm:$0x7]
      %v2568 = vlaneseq
      %v2569 = vshrl.u32 %v2568, 7
      %v2570 = vsub.s32 0, %v2569
      %v2571 = vrot.slane %v2566, %v2570
      %v2572 = vlaneseq
      %v2573 = vshrl.u32 %v2572, 7
      %v2574 = vsub.s32 1, %v2573
      %v2575 = vrot.slane %v2566, %v2574
      %v2576 = vlaneseq
      %v2577 = vshrl.u32 %v2576, 7
      %v2578 = vsub.s32 2, %v2577
      %v2579 = vrot.slane %v2566, %v2578
      %v2583 = vmul.f32 %v2542, %v2571
      %v2584 = vmul.f32 %v2543, %v2575
      %v2585 = vmul.f32 %v2544, %v2579
      %v2586 = vmul.f32 %v2545, %v2571
      %v2587 = vmul.f32 %v2546, %v2575
      %v2588 = vmul.f32 %v2547, %v2579
      %v2589 = vmul.f32 %v2548, %v2571
      %v2590 = vmul.f32 %v2549, %v2575
      %v2591 = vmul.f32 %v2550, %v2579
      %v2592 = vmul.f32 %v2551, %v2571
      %v2593 = vmul.f32 %v2552, %v2575
      %v2594 = vmul.f32 %v2553, %v2579
      %v2595 = vmul.f32 %v2554, %v2571
      %v2596 = vmul.f32 %v2555, %v2575
      %v2597 = vmul.f32 %v2556, %v2579
      %v2598 = vmul.f32 %v2557, %v2571
      %v2599 = vmul.f32 %v2558, %v2575
      %v2600 = vmul.f32 %v2559, %v2579
      %v2601 = vmul.f32 %v2560, %v2571
      %v2602 = vmul.f32 %v2561, %v2575
      %v2603 = vmul.f32 %v2562, %v2579
      %v2604 = vmul.f32 %v2563, %v2571
      %v2605 = vmul.f32 %v2564, %v2575
      %v2606 = vmul.f32 %v2565, %v2579
      %v2607 = vld [vmem:[%s3] sm:$0x7]
      %v2609 = vlaneseq
      %v2610 = vshrl.u32 %v2609, 7
      %v2611 = vsub.s32 0, %v2610
      %v2612 = vrot.slane %v2607, %v2611
      %v2613 = vlaneseq
      %v2614 = vshrl.u32 %v2613, 7
      %v2615 = vsub.s32 1, %v2614
      %v2616 = vrot.slane %v2607, %v2615
      %v2617 = vlaneseq
      %v2618 = vshrl.u32 %v2617, 7
      %v2619 = vsub.s32 2, %v2618
      %v2620 = vrot.slane %v2607, %v2619
      %v2624 = vadd.f32 %v2583, %v2612
      %v2625 = vadd.f32 %v2584, %v2616
      %v2626 = vadd.f32 %v2585, %v2620
      %v2627 = vadd.f32 %v2586, %v2612
      %v2628 = vadd.f32 %v2587, %v2616
      %v2629 = vadd.f32 %v2588, %v2620
      %v2630 = vadd.f32 %v2589, %v2612
      %v2631 = vadd.f32 %v2590, %v2616
      %v2632 = vadd.f32 %v2591, %v2620
      %v2633 = vadd.f32 %v2592, %v2612
      %v2634 = vadd.f32 %v2593, %v2616
      %v2635 = vadd.f32 %v2594, %v2620
      %v2636 = vadd.f32 %v2595, %v2612
      %v2637 = vadd.f32 %v2596, %v2616
      %v2638 = vadd.f32 %v2597, %v2620
      %v2639 = vadd.f32 %v2598, %v2612
      %v2640 = vadd.f32 %v2599, %v2616
      %v2641 = vadd.f32 %v2600, %v2620
      %v2642 = vadd.f32 %v2601, %v2612
      %v2643 = vadd.f32 %v2602, %v2616
      %v2644 = vadd.f32 %v2603, %v2620
      %v2645 = vadd.f32 %v2604, %v2612
      %v2646 = vadd.f32 %v2605, %v2616
      %v2647 = vadd.f32 %v2606, %v2620
      %v2648 = vmax.f32 %v2624, 0.0
      %v2649 = vmax.f32 %v2625, 0.0
      %v2650 = vmax.f32 %v2626, 0.0
      %v2651 = vmax.f32 %v2627, 0.0
      %v2652 = vmax.f32 %v2628, 0.0
      %v2653 = vmax.f32 %v2629, 0.0
      %v2654 = vmax.f32 %v2630, 0.0
      %v2655 = vmax.f32 %v2631, 0.0
      %v2656 = vmax.f32 %v2632, 0.0
      %v2657 = vmax.f32 %v2633, 0.0
      %v2658 = vmax.f32 %v2634, 0.0
      %v2659 = vmax.f32 %v2635, 0.0
      %v2660 = vmax.f32 %v2636, 0.0
      %v2661 = vmax.f32 %v2637, 0.0
      %v2662 = vmax.f32 %v2638, 0.0
      %v2663 = vmax.f32 %v2639, 0.0
      %v2664 = vmax.f32 %v2640, 0.0
      %v2665 = vmax.f32 %v2641, 0.0
      %v2666 = vmax.f32 %v2642, 0.0
      %v2667 = vmax.f32 %v2643, 0.0
      %v2668 = vmax.f32 %v2644, 0.0
      %v2669 = vmax.f32 %v2645, 0.0
      %v2670 = vmax.f32 %v2646, 0.0
      %v2671 = vmax.f32 %v2647, 0.0
      %2672 = vst [vmem:[%s197] sm:$0xff] %v2648
      %2673 = vst [vmem:[%s197 + $0x8] sm:$0xff] %v2649
      %2674 = vst [vmem:[%s197 + $0x10] sm:$0xff] %v2650
      %2675 = vst [vmem:[%s197 + $0x18] sm:$0xff] %v2651
      %2676 = vst [vmem:[%s197 + $0x20] sm:$0xff] %v2652
      %2677 = vst [vmem:[%s197 + $0x28] sm:$0xff] %v2653
      %2678 = vst [vmem:[%s197 + $0x30] sm:$0xff] %v2654
      %2679 = vst [vmem:[%s197 + $0x38] sm:$0xff] %v2655
      %2680 = vst [vmem:[%s197 + $0x40] sm:$0xff] %v2656
      %2681 = vst [vmem:[%s197 + $0x48] sm:$0xff] %v2657
      %2682 = vst [vmem:[%s197 + $0x50] sm:$0xff] %v2658
      %2683 = vst [vmem:[%s197 + $0x58] sm:$0xff] %v2659
      %2684 = vst [vmem:[%s197 + $0x60] sm:$0xff] %v2660
      %2685 = vst [vmem:[%s197 + $0x68] sm:$0xff] %v2661
      %2686 = vst [vmem:[%s197 + $0x70] sm:$0xff] %v2662
      %2687 = vst [vmem:[%s197 + $0x78] sm:$0xff] %v2663
      %2688 = vst [vmem:[%s197 + $0x80] sm:$0xff] %v2664
      %2689 = vst [vmem:[%s197 + $0x88] sm:$0xff] %v2665
      %2690 = vst [vmem:[%s197 + $0x90] sm:$0xff] %v2666
      %2691 = vst [vmem:[%s197 + $0x98] sm:$0xff] %v2667
      %2692 = vst [vmem:[%s197 + $0xa0] sm:$0xff] %v2668
      %2693 = vst [vmem:[%s197 + $0xa8] sm:$0xff] %v2669
      %2694 = vst [vmem:[%s197 + $0xb0] sm:$0xff] %v2670
      %2695 = vst [vmem:[%s197 + $0xb8] sm:$0xff] %v2671
      %p2696 = scmp.lt.s32.totalorder %s15, 1
      %s2697 = scalar_select %p2696, %s15, 1
      %s2698 = smul.addr %s2697, 24
      %s2699 = smul.addr %s2698, 8
      %s2700 = scalar_lea.vmem %s4, %s2699
      // Predicated region
      $region37: #{inception_b_forward.4} parent=35 // pred_check
        %p2701 = pneg %p122
      $region38: #{inception_b_forward.4} parent=35 // pred_check_branch
        %2703 = sbr.rel (%p2701) target = $region40
      $region39: #{inception_b_forward.4} parent=35 // pred_region
        _
      $region40: #{inception_b_forward.4} parent=35 // pred_fallthru
        _
    $region36: #{inception_b_forward.4} parent=5 // pred_fallthru
      _
    %p2704 = scmp.le.s32.totalorder 2, %s10
    // Predicated region
    $region41: #{inception_b_forward.4} parent=5 // pred_check
      %p2705 = pneg %p2704
    $region42: #{inception_b_forward.4} parent=5 // pred_check_branch
      %2707 = sbr.rel (%p2705) target = $region44
    $region43: #{inception_b_forward.4} parent=5 // pred_region
      %s2708 = ssub.s32 %s10, 2
      // Predicated region
      $region45: #{inception_b_forward.4} parent=43 // pred_check
        %p2709 = pneg %p128
      $region46: #{inception_b_forward.4} parent=43 // pred_check_branch
        %2711 = sbr.rel (%p2709) target = $region48
      $region47: #{inception_b_forward.4} parent=43 // pred_region
        %p2712 = scmp.lt.s32.totalorder %s16, 1
        %s2713 = scalar_select %p2712, %s16, 1
        %s2714 = smul.addr %s2713, 24
        %s2715 = smul.addr %s2714, 8
        %s2716 = scalar_lea.vmem %s4, %s2715
      $region48: #{inception_b_forward.4} parent=43 // pred_fallthru
        _
    $region44: #{inception_b_forward.4} parent=5 // pred_fallthru
      _
  $region6: #{inception_b_forward.4} parent=0 // loop_footer
    %s14 = sadd.s32 1, %s10
  $region7: #{inception_b_forward.4} parent=0 // loop_footer_branch
    %9 = sbr.rel target = $region3
  $region8: #{inception_b_forward.4} parent=0 // loop_exit
    _

</llo_original>
